<compile_context>
chip_gen: v7x
topology: tpu7x:2x2x1
jax: 0.10.0
libtpu: 0.0.40
codegen_flags: <defaults>
</compile_context>

<pallas_src>
import jax
import jax.numpy as jnp
from jax import lax
from jax.experimental import pallas as pl
from jax.experimental.pallas import tpu as pltpu


# ----------------------------------------------------------------------------
# In-kernel helpers
# ----------------------------------------------------------------------------
def _sel_rows(n_out, n_in, dtype):
    """(n_out, n_in) 0/1 matrix, S[a, r] = 1 iff r == 2a.  (S @ M picks even rows.)"""
    a = lax.broadcasted_iota(jnp.int32, (n_out, n_in), 0)
    r = lax.broadcasted_iota(jnp.int32, (n_out, n_in), 1)
    return jnp.where(r == 2 * a, 1.0, 0.0).astype(dtype)


def _sel_cols(n_in, n_out, dtype):
    """(n_in, n_out) 0/1 matrix, S[r, q] = 1 iff r == 2q.  (M @ S picks even cols.)"""
    r = lax.broadcasted_iota(jnp.int32, (n_in, n_out), 0)
    q = lax.broadcasted_iota(jnp.int32, (n_in, n_out), 1)
    return jnp.where(r == 2 * q, 1.0, 0.0).astype(dtype)


def _pool2x2(y, h, cw):
    """2x2 / stride-2 max-pool of an (H, C*W) slab -> (H//2, C*(W//2)) = (h//2, cw//2)."""
    mr = jnp.maximum(y[0:h - 1, :], y[1:h, :])                     # (h-1, cw)
    pr = jnp.dot(_sel_rows(h // 2, h - 1, y.dtype), mr,
                 preferred_element_type=jnp.float32)               # (h//2, cw)
    mc = jnp.maximum(pr[:, 0:cw - 1], pr[:, 1:cw])                 # (h//2, cw-1)
    return jnp.dot(mc, _sel_cols(cw - 1, cw // 2, y.dtype),
                   preferred_element_type=jnp.float32)             # (h//2, cw//2)


# ----------------------------------------------------------------------------
# Fused forward kernel: one image per grid step, everything stays in VMEM.
# ----------------------------------------------------------------------------
def _net_kernel(x_ref, c1m_ref, c1b_ref, c2m_ref, c2b_ref,
                f1w_ref, f1b_ref, f2w_ref, f2b_ref, f3w_ref, f3b_ref,
                out_ref):
    f32 = jnp.float32
    a0 = x_ref[0]                                                  # (32, 96) = (H, C*W)

    # conv1 (3->6, 5x5, valid) as 15 banded matmuls on the MXU, + bias, ReLU.
    y1 = jnp.zeros((28, 6 * 28), f32)
    for c in range(3):
        for i in range(5):
            s = a0[i:i + 28, c * 32:(c + 1) * 32]                  # (28, 32)
            y1 = y1 + jnp.dot(s, c1m_ref[c * 5 + i],
                              preferred_element_type=f32)          # (28, 168)
    y1 = jnp.maximum(y1 + c1b_ref[...], 0.0)

    p1 = _pool2x2(y1, 28, 6 * 28)                                  # (14, 84)

    # conv2 (6->16, 5x5, valid) as 30 banded matmuls, + bias, ReLU.
    y2 = jnp.zeros((10, 16 * 10), f32)
    for c in range(6):
        for i in range(5):
            s = p1[i:i + 10, c * 14:(c + 1) * 14]                  # (10, 14)
            y2 = y2 + jnp.dot(s, c2m_ref[c * 5 + i],
                              preferred_element_type=f32)          # (10, 160)
    y2 = jnp.maximum(y2 + c2b_ref[...], 0.0)

    p2 = _pool2x2(y2, 10, 16 * 10)                                 # (5, 80)

    # fc1: contract the (5, 80) activation against the (5, 80, 120) permuted weight.
    h = f1b_ref[...]                                               # (1, 120)
    for r in range(5):
        h = h + jnp.dot(p2[r:r + 1, :], f1w_ref[r],
                        preferred_element_type=f32)
    h = jnp.maximum(h, 0.0)

    h = jnp.maximum(jnp.dot(h, f2w_ref[...], preferred_element_type=f32)
                    + f2b_ref[...], 0.0)                           # (1, 84)

    out = jnp.dot(h, f3w_ref[...], preferred_element_type=f32) + f3b_ref[...]
    out_ref[0] = out                                               # (1, 128) lane-dense


# ----------------------------------------------------------------------------
# Host-side weight preprocessing (tiny, runs inside the same jit).
# ----------------------------------------------------------------------------
def _band_matrices(w, w_in, ow):
    """Conv weight (OC, C, KH, KW) -> banded matmul weights (C*KH, w_in, OC*ow).

    B[c*KH+i, win, oc*ow + owc] = w[oc, c, i, win - owc] if 0 <= win-owc < KW else 0,
    so that  slice(H, W_in block of channel c, rows i:i+OH) @ B[c*KH+i]  accumulates
    the conv contribution of kernel row i / input channel c for all output channels.
    """
    oc, c_in, kh, kw = w.shape
    win = jnp.arange(w_in)[:, None]
    owi = jnp.arange(ow)[None, :]
    j = win - owi                                                  # (w_in, ow)
    valid = (j >= 0) & (j < kw)
    jc = jnp.clip(j, 0, kw - 1)
    wt = jnp.transpose(w, (1, 2, 0, 3))                            # (C, KH, OC, KW)
    b = wt[:, :, :, jc]                                            # (C, KH, OC, w_in, ow)
    b = jnp.where(valid[None, None, None, :, :], b, 0.0)
    b = jnp.transpose(b, (0, 1, 3, 2, 4))                          # (C, KH, w_in, OC, ow)
    return b.reshape(c_in * kh, w_in, oc * ow)


def _prep_consts(params):
    c1m = _band_matrices(params["conv1_w"], 32, 28)                # (15, 32, 168)
    c1b = jnp.repeat(params["conv1_b"], 28)[None, :]               # (1, 168)
    c2m = _band_matrices(params["conv2_w"], 14, 10)                # (30, 14, 160)
    c2b = jnp.repeat(params["conv2_b"], 10)[None, :]               # (1, 160)
    f1w = params["fc1_w"].reshape(16, 5, 5, 120).transpose(1, 0, 2, 3)
    f1w = f1w.reshape(5, 80, 120)                                  # rows h, cols c*5+w
    f1b = params["fc1_b"][None, :]                                 # (1, 120)
    f2w = params["fc2_w"]                                          # (120, 84)
    f2b = params["fc2_b"][None, :]                                 # (1, 84)
    f3w = jnp.pad(params["fc3_w"], ((0, 0), (0, 118)))             # (84, 128) lane-dense
    f3b = jnp.pad(params["fc3_b"], (0, 118))[None, :]              # (1, 128)
    return (c1m, c1b, c2m, c2b, f1w, f1b, f2w, f2b, f3w, f3b)


# ----------------------------------------------------------------------------
# Forward pass (matches PyTorch Net.forward)
# ----------------------------------------------------------------------------
@jax.jit
def net_forward(params, x):
    n = x.shape[0]
    # Only XLA layout op: (N, 3, 32, 32) -> (N, 32, 96) "(H, C*W)" slabs.
    xl = jnp.transpose(x, (0, 2, 1, 3)).reshape(n, 32, 3 * 32)
    consts = _prep_consts(params)

    def const_spec(a):
        return pl.BlockSpec(a.shape, lambda b, nd=a.ndim: (0,) * nd)

    in_specs = [pl.BlockSpec((1, 32, 96), lambda b: (b, 0, 0))]
    in_specs += [const_spec(a) for a in consts]

    out = pl.pallas_call(
        _net_kernel,
        out_shape=jax.ShapeDtypeStruct((n, 1, 128), jnp.float32),
        grid_spec=pltpu.PrefetchScalarGridSpec(
            num_scalar_prefetch=0,
            grid=(n,),
            in_specs=in_specs,
            out_specs=pl.BlockSpec((1, 1, 128), lambda b: (b, 0, 0)),
        ),
        compiler_params=pltpu.CompilerParams(
            dimension_semantics=("parallel",),
            vmem_limit_bytes=32 * 1024 * 1024,
        ),
    )(xl, *consts)
    return out[:, 0, :10]


# ----------------------------------------------------------------------------
# Parameters (deterministic, PyTorch-style uniform init; weights stored (in, out))
# ----------------------------------------------------------------------------
def _uniform(key, shape, fan_in):
    bound = 1.0 / jnp.sqrt(float(fan_in))
    return jax.random.uniform(key, shape, jnp.float32, -bound, bound)


def init_params(key):
    ks = jax.random.split(key, 10)
    p = {}
    p["conv1_w"] = _uniform(ks[0], (6, 3, 5, 5), 3 * 5 * 5)
    p["conv1_b"] = _uniform(ks[1], (6,), 3 * 5 * 5)
    p["conv2_w"] = _uniform(ks[2], (16, 6, 5, 5), 6 * 5 * 5)
    p["conv2_b"] = _uniform(ks[3], (16,), 6 * 5 * 5)
    p["fc1_w"] = _uniform(ks[4], (16 * 5 * 5, 120), 16 * 5 * 5)
    p["fc1_b"] = _uniform(ks[5], (120,), 16 * 5 * 5)
    p["fc2_w"] = _uniform(ks[6], (120, 84), 120)
    p["fc2_b"] = _uniform(ks[7], (84,), 120)
    p["fc3_w"] = _uniform(ks[8], (84, 10), 84)
    p["fc3_b"] = _uniform(ks[9], (10,), 84)
    return p


# ----------------------------------------------------------------------------
# Pure-JAX reference for a correctness smoke test
# ----------------------------------------------------------------------------
def net_reference(params, x):
    dn = ("NCHW", "OIHW", "NCHW")
    y = lax.conv_general_dilated(x, params["conv1_w"], (1, 1), "VALID",
                                 dimension_numbers=dn)
    y = jax.nn.relu(y + params["conv1_b"][None, :, None, None])
    y = lax.reduce_window(y, -jnp.inf, lax.max, (1, 1, 2, 2), (1, 1, 2, 2), "VALID")
    y = lax.conv_general_dilated(y, params["conv2_w"], (1, 1), "VALID",
                                 dimension_numbers=dn)
    y = jax.nn.relu(y + params["conv2_b"][None, :, None, None])
    y = lax.reduce_window(y, -jnp.inf, lax.max, (1, 1, 2, 2), (1, 1, 2, 2), "VALID")
    y = y.reshape(y.shape[0], -1)                                  # (N, 400), (c,h,w) order
    y = jax.nn.relu(y @ params["fc1_w"] + params["fc1_b"])
    y = jax.nn.relu(y @ params["fc2_w"] + params["fc2_b"])
    return y @ params["fc3_w"] + params["fc3_b"]


if __name__ == "__main__":
    key = jax.random.PRNGKey(0)
    pkey, xkey = jax.random.split(key)
    params = init_params(pkey)
    # CIFAR-10 geometry is forced by the 16*5*5 flatten; keep batch small.
    x = jax.random.normal(xkey, (2, 3, 32, 32), dtype=jnp.float32)

    out = jax.block_until_ready(net_forward(params, x))
    assert out.shape == (2, 10)
    assert bool(jnp.all(jnp.isfinite(out)))

    # Loose tolerance: both paths use the TPU default (bf16-operand) matmul
    # precision; a real layout/index bug would produce O(1) differences.
    ref = jax.block_until_ready(jax.jit(net_reference)(params, x))
    err = float(jnp.max(jnp.abs(out - ref)))
    assert err < 5e-2, f"mismatch vs reference: max|diff|={err}"

    print("KERNEL_OK")
</pallas_src>

<mosaic_0001>
module attributes {stable_mosaic.version = 11 : i64} {
  func.func @_net_kernel(%arg0: i32, %arg1: memref<1x32x96xf32, #tpu.memory_space<vmem>>, %arg2: memref<15x32x168xf32, #tpu.memory_space<vmem>>, %arg3: memref<1x168xf32, #tpu.memory_space<vmem>>, %arg4: memref<30x14x160xf32, #tpu.memory_space<vmem>>, %arg5: memref<1x160xf32, #tpu.memory_space<vmem>>, %arg6: memref<5x80x120xf32, #tpu.memory_space<vmem>>, %arg7: memref<1x120xf32, #tpu.memory_space<vmem>>, %arg8: memref<120x84xf32, #tpu.memory_space<vmem>>, %arg9: memref<1x84xf32, #tpu.memory_space<vmem>>, %arg10: memref<84x128xf32, #tpu.memory_space<vmem>>, %arg11: memref<1x128xf32, #tpu.memory_space<vmem>>, %arg12: memref<1x1x128xf32, #tpu.memory_space<vmem>>) attributes {dimension_semantics = [#tpu.dimension_semantics<parallel>], iteration_bounds = array<i64: 2>, scalar_prefetch = 0 : i64, scratch_operands = 0 : i64, tpu.core_type = #tpu.core_type<tc>, window_params = [{transform_indices = @transform_0, window_bounds = array<i64: 1, 32, 96>}, {pipeline_mode = #tpu.pipeline_mode<synchronous>, transform_indices = @transform_1, window_bounds = array<i64: 15, 32, 168>}, {pipeline_mode = #tpu.pipeline_mode<synchronous>, transform_indices = @transform_2, window_bounds = array<i64: 1, 168>}, {pipeline_mode = #tpu.pipeline_mode<synchronous>, transform_indices = @transform_3, window_bounds = array<i64: 30, 14, 160>}, {pipeline_mode = #tpu.pipeline_mode<synchronous>, transform_indices = @transform_4, window_bounds = array<i64: 1, 160>}, {pipeline_mode = #tpu.pipeline_mode<synchronous>, transform_indices = @transform_5, window_bounds = array<i64: 5, 80, 120>}, {pipeline_mode = #tpu.pipeline_mode<synchronous>, transform_indices = @transform_6, window_bounds = array<i64: 1, 120>}, {pipeline_mode = #tpu.pipeline_mode<synchronous>, transform_indices = @transform_7, window_bounds = array<i64: 120, 84>}, {pipeline_mode = #tpu.pipeline_mode<synchronous>, transform_indices = @transform_8, window_bounds = array<i64: 1, 84>}, {pipeline_mode = #tpu.pipeline_mode<synchronous>, transform_indices = @transform_9, window_bounds = array<i64: 84, 128>}, {pipeline_mode = #tpu.pipeline_mode<synchronous>, transform_indices = @transform_10, window_bounds = array<i64: 1, 128>}, {transform_indices = @transform_11, window_bounds = array<i64: 1, 1, 128>}]} {
    %c0 = arith.constant 0 : index
    %c0_0 = arith.constant 0 : index
    %c0_1 = arith.constant 0 : index
    %0 = vector.load %arg1[%c0, %c0_0, %c0_1] : memref<1x32x96xf32, #tpu.memory_space<vmem>>, vector<1x32x96xf32>
    %1 = vector.shape_cast %0 : vector<1x32x96xf32> to vector<32x96xf32>
    %cst = arith.constant 0.000000e+00 : f32
    %2 = vector.broadcast %cst : f32 to vector<28x168xf32>
    %3 = vector.extract_strided_slice %1 {offsets = [0, 0], sizes = [28, 32], strides = [1, 1]} : vector<32x96xf32> to vector<28x32xf32>
    %c0_2 = arith.constant 0 : index
    %c0_3 = arith.constant 0 : index
    %c0_4 = arith.constant 0 : index
    %4 = vector.load %arg2[%c0_2, %c0_3, %c0_4] : memref<15x32x168xf32, #tpu.memory_space<vmem>>, vector<1x32x168xf32>
    %5 = vector.shape_cast %4 : vector<1x32x168xf32> to vector<32x168xf32>
    %cst_5 = arith.constant dense<0.000000e+00> : vector<28x168xf32>
    %6 = tpu.matmul %3, %5, %cst_5 {dimension_numbers = #tpu.dot_dimension_numbers<[1], [0], [0], [1], [0, 0, 1, 1], [], []>} : vector<28x32xf32>, vector<32x168xf32>, vector<28x168xf32> -> vector<28x168xf32>
    %7 = arith.addf %2, %6 : vector<28x168xf32>
    %8 = vector.extract_strided_slice %1 {offsets = [1, 0], sizes = [28, 32], strides = [1, 1]} : vector<32x96xf32> to vector<28x32xf32>
    %c1 = arith.constant 1 : index
    %c0_6 = arith.constant 0 : index
    %c0_7 = arith.constant 0 : index
    %9 = vector.load %arg2[%c1, %c0_6, %c0_7] : memref<15x32x168xf32, #tpu.memory_space<vmem>>, vector<1x32x168xf32>
    %10 = vector.shape_cast %9 : vector<1x32x168xf32> to vector<32x168xf32>
    %cst_8 = arith.constant dense<0.000000e+00> : vector<28x168xf32>
    %11 = tpu.matmul %8, %10, %cst_8 {dimension_numbers = #tpu.dot_dimension_numbers<[1], [0], [0], [1], [0, 0, 1, 1], [], []>} : vector<28x32xf32>, vector<32x168xf32>, vector<28x168xf32> -> vector<28x168xf32>
    %12 = arith.addf %7, %11 : vector<28x168xf32>
    %13 = vector.extract_strided_slice %1 {offsets = [2, 0], sizes = [28, 32], strides = [1, 1]} : vector<32x96xf32> to vector<28x32xf32>
    %c2 = arith.constant 2 : index
    %c0_9 = arith.constant 0 : index
    %c0_10 = arith.constant 0 : index
    %14 = vector.load %arg2[%c2, %c0_9, %c0_10] : memref<15x32x168xf32, #tpu.memory_space<vmem>>, vector<1x32x168xf32>
    %15 = vector.shape_cast %14 : vector<1x32x168xf32> to vector<32x168xf32>
    %cst_11 = arith.constant dense<0.000000e+00> : vector<28x168xf32>
    %16 = tpu.matmul %13, %15, %cst_11 {dimension_numbers = #tpu.dot_dimension_numbers<[1], [0], [0], [1], [0, 0, 1, 1], [], []>} : vector<28x32xf32>, vector<32x168xf32>, vector<28x168xf32> -> vector<28x168xf32>
    %17 = arith.addf %12, %16 : vector<28x168xf32>
    %18 = vector.extract_strided_slice %1 {offsets = [3, 0], sizes = [28, 32], strides = [1, 1]} : vector<32x96xf32> to vector<28x32xf32>
    %c3 = arith.constant 3 : index
    %c0_12 = arith.constant 0 : index
    %c0_13 = arith.constant 0 : index
    %19 = vector.load %arg2[%c3, %c0_12, %c0_13] : memref<15x32x168xf32, #tpu.memory_space<vmem>>, vector<1x32x168xf32>
    %20 = vector.shape_cast %19 : vector<1x32x168xf32> to vector<32x168xf32>
    %cst_14 = arith.constant dense<0.000000e+00> : vector<28x168xf32>
    %21 = tpu.matmul %18, %20, %cst_14 {dimension_numbers = #tpu.dot_dimension_numbers<[1], [0], [0], [1], [0, 0, 1, 1], [], []>} : vector<28x32xf32>, vector<32x168xf32>, vector<28x168xf32> -> vector<28x168xf32>
    %22 = arith.addf %17, %21 : vector<28x168xf32>
    %23 = vector.extract_strided_slice %1 {offsets = [4, 0], sizes = [28, 32], strides = [1, 1]} : vector<32x96xf32> to vector<28x32xf32>
    %c4 = arith.constant 4 : index
    %c0_15 = arith.constant 0 : index
    %c0_16 = arith.constant 0 : index
    %24 = vector.load %arg2[%c4, %c0_15, %c0_16] : memref<15x32x168xf32, #tpu.memory_space<vmem>>, vector<1x32x168xf32>
    %25 = vector.shape_cast %24 : vector<1x32x168xf32> to vector<32x168xf32>
    %cst_17 = arith.constant dense<0.000000e+00> : vector<28x168xf32>
    %26 = tpu.matmul %23, %25, %cst_17 {dimension_numbers = #tpu.dot_dimension_numbers<[1], [0], [0], [1], [0, 0, 1, 1], [], []>} : vector<28x32xf32>, vector<32x168xf32>, vector<28x168xf32> -> vector<28x168xf32>
    %27 = arith.addf %22, %26 : vector<28x168xf32>
    %28 = vector.extract_strided_slice %1 {offsets = [0, 32], sizes = [28, 32], strides = [1, 1]} : vector<32x96xf32> to vector<28x32xf32>
    %c5 = arith.constant 5 : index
    %c0_18 = arith.constant 0 : index
    %c0_19 = arith.constant 0 : index
    %29 = vector.load %arg2[%c5, %c0_18, %c0_19] : memref<15x32x168xf32, #tpu.memory_space<vmem>>, vector<1x32x168xf32>
    %30 = vector.shape_cast %29 : vector<1x32x168xf32> to vector<32x168xf32>
    %cst_20 = arith.constant dense<0.000000e+00> : vector<28x168xf32>
    %31 = tpu.matmul %28, %30, %cst_20 {dimension_numbers = #tpu.dot_dimension_numbers<[1], [0], [0], [1], [0, 0, 1, 1], [], []>} : vector<28x32xf32>, vector<32x168xf32>, vector<28x168xf32> -> vector<28x168xf32>
    %32 = arith.addf %27, %31 : vector<28x168xf32>
    %33 = vector.extract_strided_slice %1 {offsets = [1, 32], sizes = [28, 32], strides = [1, 1]} : vector<32x96xf32> to vector<28x32xf32>
    %c6 = arith.constant 6 : index
    %c0_21 = arith.constant 0 : index
    %c0_22 = arith.constant 0 : index
    %34 = vector.load %arg2[%c6, %c0_21, %c0_22] : memref<15x32x168xf32, #tpu.memory_space<vmem>>, vector<1x32x168xf32>
    %35 = vector.shape_cast %34 : vector<1x32x168xf32> to vector<32x168xf32>
    %cst_23 = arith.constant dense<0.000000e+00> : vector<28x168xf32>
    %36 = tpu.matmul %33, %35, %cst_23 {dimension_numbers = #tpu.dot_dimension_numbers<[1], [0], [0], [1], [0, 0, 1, 1], [], []>} : vector<28x32xf32>, vector<32x168xf32>, vector<28x168xf32> -> vector<28x168xf32>
    %37 = arith.addf %32, %36 : vector<28x168xf32>
    %38 = vector.extract_strided_slice %1 {offsets = [2, 32], sizes = [28, 32], strides = [1, 1]} : vector<32x96xf32> to vector<28x32xf32>
    %c7 = arith.constant 7 : index
    %c0_24 = arith.constant 0 : index
    %c0_25 = arith.constant 0 : index
    %39 = vector.load %arg2[%c7, %c0_24, %c0_25] : memref<15x32x168xf32, #tpu.memory_space<vmem>>, vector<1x32x168xf32>
    %40 = vector.shape_cast %39 : vector<1x32x168xf32> to vector<32x168xf32>
    %cst_26 = arith.constant dense<0.000000e+00> : vector<28x168xf32>
    %41 = tpu.matmul %38, %40, %cst_26 {dimension_numbers = #tpu.dot_dimension_numbers<[1], [0], [0], [1], [0, 0, 1, 1], [], []>} : vector<28x32xf32>, vector<32x168xf32>, vector<28x168xf32> -> vector<28x168xf32>
    %42 = arith.addf %37, %41 : vector<28x168xf32>
    %43 = vector.extract_strided_slice %1 {offsets = [3, 32], sizes = [28, 32], strides = [1, 1]} : vector<32x96xf32> to vector<28x32xf32>
    %c8 = arith.constant 8 : index
    %c0_27 = arith.constant 0 : index
    %c0_28 = arith.constant 0 : index
    %44 = vector.load %arg2[%c8, %c0_27, %c0_28] : memref<15x32x168xf32, #tpu.memory_space<vmem>>, vector<1x32x168xf32>
    %45 = vector.shape_cast %44 : vector<1x32x168xf32> to vector<32x168xf32>
    %cst_29 = arith.constant dense<0.000000e+00> : vector<28x168xf32>
    %46 = tpu.matmul %43, %45, %cst_29 {dimension_numbers = #tpu.dot_dimension_numbers<[1], [0], [0], [1], [0, 0, 1, 1], [], []>} : vector<28x32xf32>, vector<32x168xf32>, vector<28x168xf32> -> vector<28x168xf32>
    %47 = arith.addf %42, %46 : vector<28x168xf32>
    %48 = vector.extract_strided_slice %1 {offsets = [4, 32], sizes = [28, 32], strides = [1, 1]} : vector<32x96xf32> to vector<28x32xf32>
    %c9 = arith.constant 9 : index
    %c0_30 = arith.constant 0 : index
    %c0_31 = arith.constant 0 : index
    %49 = vector.load %arg2[%c9, %c0_30, %c0_31] : memref<15x32x168xf32, #tpu.memory_space<vmem>>, vector<1x32x168xf32>
    %50 = vector.shape_cast %49 : vector<1x32x168xf32> to vector<32x168xf32>
    %cst_32 = arith.constant dense<0.000000e+00> : vector<28x168xf32>
    %51 = tpu.matmul %48, %50, %cst_32 {dimension_numbers = #tpu.dot_dimension_numbers<[1], [0], [0], [1], [0, 0, 1, 1], [], []>} : vector<28x32xf32>, vector<32x168xf32>, vector<28x168xf32> -> vector<28x168xf32>
    %52 = arith.addf %47, %51 : vector<28x168xf32>
    %53 = vector.extract_strided_slice %1 {offsets = [0, 64], sizes = [28, 32], strides = [1, 1]} : vector<32x96xf32> to vector<28x32xf32>
    %c10 = arith.constant 10 : index
    %c0_33 = arith.constant 0 : index
    %c0_34 = arith.constant 0 : index
    %54 = vector.load %arg2[%c10, %c0_33, %c0_34] : memref<15x32x168xf32, #tpu.memory_space<vmem>>, vector<1x32x168xf32>
    %55 = vector.shape_cast %54 : vector<1x32x168xf32> to vector<32x168xf32>
    %cst_35 = arith.constant dense<0.000000e+00> : vector<28x168xf32>
    %56 = tpu.matmul %53, %55, %cst_35 {dimension_numbers = #tpu.dot_dimension_numbers<[1], [0], [0], [1], [0, 0, 1, 1], [], []>} : vector<28x32xf32>, vector<32x168xf32>, vector<28x168xf32> -> vector<28x168xf32>
    %57 = arith.addf %52, %56 : vector<28x168xf32>
    %58 = vector.extract_strided_slice %1 {offsets = [1, 64], sizes = [28, 32], strides = [1, 1]} : vector<32x96xf32> to vector<28x32xf32>
    %c11 = arith.constant 11 : index
    %c0_36 = arith.constant 0 : index
    %c0_37 = arith.constant 0 : index
    %59 = vector.load %arg2[%c11, %c0_36, %c0_37] : memref<15x32x168xf32, #tpu.memory_space<vmem>>, vector<1x32x168xf32>
    %60 = vector.shape_cast %59 : vector<1x32x168xf32> to vector<32x168xf32>
    %cst_38 = arith.constant dense<0.000000e+00> : vector<28x168xf32>
    %61 = tpu.matmul %58, %60, %cst_38 {dimension_numbers = #tpu.dot_dimension_numbers<[1], [0], [0], [1], [0, 0, 1, 1], [], []>} : vector<28x32xf32>, vector<32x168xf32>, vector<28x168xf32> -> vector<28x168xf32>
    %62 = arith.addf %57, %61 : vector<28x168xf32>
    %63 = vector.extract_strided_slice %1 {offsets = [2, 64], sizes = [28, 32], strides = [1, 1]} : vector<32x96xf32> to vector<28x32xf32>
    %c12 = arith.constant 12 : index
    %c0_39 = arith.constant 0 : index
    %c0_40 = arith.constant 0 : index
    %64 = vector.load %arg2[%c12, %c0_39, %c0_40] : memref<15x32x168xf32, #tpu.memory_space<vmem>>, vector<1x32x168xf32>
    %65 = vector.shape_cast %64 : vector<1x32x168xf32> to vector<32x168xf32>
    %cst_41 = arith.constant dense<0.000000e+00> : vector<28x168xf32>
    %66 = tpu.matmul %63, %65, %cst_41 {dimension_numbers = #tpu.dot_dimension_numbers<[1], [0], [0], [1], [0, 0, 1, 1], [], []>} : vector<28x32xf32>, vector<32x168xf32>, vector<28x168xf32> -> vector<28x168xf32>
    %67 = arith.addf %62, %66 : vector<28x168xf32>
    %68 = vector.extract_strided_slice %1 {offsets = [3, 64], sizes = [28, 32], strides = [1, 1]} : vector<32x96xf32> to vector<28x32xf32>
    %c13 = arith.constant 13 : index
    %c0_42 = arith.constant 0 : index
    %c0_43 = arith.constant 0 : index
    %69 = vector.load %arg2[%c13, %c0_42, %c0_43] : memref<15x32x168xf32, #tpu.memory_space<vmem>>, vector<1x32x168xf32>
    %70 = vector.shape_cast %69 : vector<1x32x168xf32> to vector<32x168xf32>
    %cst_44 = arith.constant dense<0.000000e+00> : vector<28x168xf32>
    %71 = tpu.matmul %68, %70, %cst_44 {dimension_numbers = #tpu.dot_dimension_numbers<[1], [0], [0], [1], [0, 0, 1, 1], [], []>} : vector<28x32xf32>, vector<32x168xf32>, vector<28x168xf32> -> vector<28x168xf32>
    %72 = arith.addf %67, %71 : vector<28x168xf32>
    %73 = vector.extract_strided_slice %1 {offsets = [4, 64], sizes = [28, 32], strides = [1, 1]} : vector<32x96xf32> to vector<28x32xf32>
    %c14 = arith.constant 14 : index
    %c0_45 = arith.constant 0 : index
    %c0_46 = arith.constant 0 : index
    %74 = vector.load %arg2[%c14, %c0_45, %c0_46] : memref<15x32x168xf32, #tpu.memory_space<vmem>>, vector<1x32x168xf32>
    %75 = vector.shape_cast %74 : vector<1x32x168xf32> to vector<32x168xf32>
    %cst_47 = arith.constant dense<0.000000e+00> : vector<28x168xf32>
    %76 = tpu.matmul %73, %75, %cst_47 {dimension_numbers = #tpu.dot_dimension_numbers<[1], [0], [0], [1], [0, 0, 1, 1], [], []>} : vector<28x32xf32>, vector<32x168xf32>, vector<28x168xf32> -> vector<28x168xf32>
    %77 = arith.addf %72, %76 : vector<28x168xf32>
    %c0_48 = arith.constant 0 : index
    %c0_49 = arith.constant 0 : index
    %78 = vector.load %arg3[%c0_48, %c0_49] : memref<1x168xf32, #tpu.memory_space<vmem>>, vector<1x168xf32>
    %79 = vector.broadcast %78 : vector<1x168xf32> to vector<28x168xf32>
    %80 = arith.addf %77, %79 : vector<28x168xf32>
    %cst_50 = arith.constant 0.000000e+00 : f32
    %81 = vector.broadcast %cst_50 : f32 to vector<28x168xf32>
    %82 = arith.maximumf %80, %81 : vector<28x168xf32>
    %83 = vector.extract_strided_slice %82 {offsets = [0, 0], sizes = [27, 168], strides = [1, 1]} : vector<28x168xf32> to vector<27x168xf32>
    %84 = vector.extract_strided_slice %82 {offsets = [1, 0], sizes = [27, 168], strides = [1, 1]} : vector<28x168xf32> to vector<27x168xf32>
    %85 = arith.maximumf %83, %84 : vector<27x168xf32>
    %86 = tpu.iota {dimensions = array<i32: 0>} : vector<14x27xi32>
    %87 = tpu.iota {dimensions = array<i32: 1>} : vector<14x27xi32>
    %c2_i32 = arith.constant 2 : i32
    %88 = vector.broadcast %c2_i32 : i32 to vector<14x27xi32>
    %89 = arith.muli %88, %86 : vector<14x27xi32>
    %90 = arith.cmpi eq, %87, %89 : vector<14x27xi32>
    %cst_51 = arith.constant 1.000000e+00 : f32
    %cst_52 = arith.constant 0.000000e+00 : f32
    %91 = vector.broadcast %cst_51 : f32 to vector<14x27xf32>
    %92 = vector.broadcast %cst_52 : f32 to vector<14x27xf32>
    %93 = arith.select %90, %91, %92 : vector<14x27xi1>, vector<14x27xf32>
    %cst_53 = arith.constant dense<0.000000e+00> : vector<14x168xf32>
    %94 = tpu.matmul %93, %85, %cst_53 {dimension_numbers = #tpu.dot_dimension_numbers<[1], [0], [0], [1], [0, 0, 1, 1], [], []>} : vector<14x27xf32>, vector<27x168xf32>, vector<14x168xf32> -> vector<14x168xf32>
    %95 = vector.extract_strided_slice %94 {offsets = [0, 0], sizes = [14, 167], strides = [1, 1]} : vector<14x168xf32> to vector<14x167xf32>
    %96 = vector.extract_strided_slice %94 {offsets = [0, 1], sizes = [14, 167], strides = [1, 1]} : vector<14x168xf32> to vector<14x167xf32>
    %97 = arith.maximumf %95, %96 : vector<14x167xf32>
    %98 = tpu.iota {dimensions = array<i32: 0>} : vector<167x84xi32>
    %99 = tpu.iota {dimensions = array<i32: 1>} : vector<167x84xi32>
    %c2_i32_54 = arith.constant 2 : i32
    %100 = vector.broadcast %c2_i32_54 : i32 to vector<167x84xi32>
    %101 = arith.muli %100, %99 : vector<167x84xi32>
    %102 = arith.cmpi eq, %98, %101 : vector<167x84xi32>
    %cst_55 = arith.constant 1.000000e+00 : f32
    %cst_56 = arith.constant 0.000000e+00 : f32
    %103 = vector.broadcast %cst_55 : f32 to vector<167x84xf32>
    %104 = vector.broadcast %cst_56 : f32 to vector<167x84xf32>
    %105 = arith.select %102, %103, %104 : vector<167x84xi1>, vector<167x84xf32>
    %cst_57 = arith.constant dense<0.000000e+00> : vector<14x84xf32>
    %106 = tpu.matmul %97, %105, %cst_57 {dimension_numbers = #tpu.dot_dimension_numbers<[1], [0], [0], [1], [0, 0, 1, 1], [], []>} : vector<14x167xf32>, vector<167x84xf32>, vector<14x84xf32> -> vector<14x84xf32>
    %cst_58 = arith.constant 0.000000e+00 : f32
    %107 = vector.broadcast %cst_58 : f32 to vector<10x160xf32>
    %108 = vector.extract_strided_slice %106 {offsets = [0, 0], sizes = [10, 14], strides = [1, 1]} : vector<14x84xf32> to vector<10x14xf32>
    %c0_59 = arith.constant 0 : index
    %c0_60 = arith.constant 0 : index
    %c0_61 = arith.constant 0 : index
    %109 = vector.load %arg4[%c0_59, %c0_60, %c0_61] : memref<30x14x160xf32, #tpu.memory_space<vmem>>, vector<1x14x160xf32>
    %110 = vector.shape_cast %109 : vector<1x14x160xf32> to vector<14x160xf32>
    %cst_62 = arith.constant dense<0.000000e+00> : vector<10x160xf32>
    %111 = tpu.matmul %108, %110, %cst_62 {dimension_numbers = #tpu.dot_dimension_numbers<[1], [0], [0], [1], [0, 0, 1, 1], [], []>} : vector<10x14xf32>, vector<14x160xf32>, vector<10x160xf32> -> vector<10x160xf32>
    %112 = arith.addf %107, %111 : vector<10x160xf32>
    %113 = vector.extract_strided_slice %106 {offsets = [1, 0], sizes = [10, 14], strides = [1, 1]} : vector<14x84xf32> to vector<10x14xf32>
    %c1_63 = arith.constant 1 : index
    %c0_64 = arith.constant 0 : index
    %c0_65 = arith.constant 0 : index
    %114 = vector.load %arg4[%c1_63, %c0_64, %c0_65] : memref<30x14x160xf32, #tpu.memory_space<vmem>>, vector<1x14x160xf32>
    %115 = vector.shape_cast %114 : vector<1x14x160xf32> to vector<14x160xf32>
    %cst_66 = arith.constant dense<0.000000e+00> : vector<10x160xf32>
    %116 = tpu.matmul %113, %115, %cst_66 {dimension_numbers = #tpu.dot_dimension_numbers<[1], [0], [0], [1], [0, 0, 1, 1], [], []>} : vector<10x14xf32>, vector<14x160xf32>, vector<10x160xf32> -> vector<10x160xf32>
    %117 = arith.addf %112, %116 : vector<10x160xf32>
    %118 = vector.extract_strided_slice %106 {offsets = [2, 0], sizes = [10, 14], strides = [1, 1]} : vector<14x84xf32> to vector<10x14xf32>
    %c2_67 = arith.constant 2 : index
    %c0_68 = arith.constant 0 : index
    %c0_69 = arith.constant 0 : index
    %119 = vector.load %arg4[%c2_67, %c0_68, %c0_69] : memref<30x14x160xf32, #tpu.memory_space<vmem>>, vector<1x14x160xf32>
    %120 = vector.shape_cast %119 : vector<1x14x160xf32> to vector<14x160xf32>
    %cst_70 = arith.constant dense<0.000000e+00> : vector<10x160xf32>
    %121 = tpu.matmul %118, %120, %cst_70 {dimension_numbers = #tpu.dot_dimension_numbers<[1], [0], [0], [1], [0, 0, 1, 1], [], []>} : vector<10x14xf32>, vector<14x160xf32>, vector<10x160xf32> -> vector<10x160xf32>
    %122 = arith.addf %117, %121 : vector<10x160xf32>
    %123 = vector.extract_strided_slice %106 {offsets = [3, 0], sizes = [10, 14], strides = [1, 1]} : vector<14x84xf32> to vector<10x14xf32>
    %c3_71 = arith.constant 3 : index
    %c0_72 = arith.constant 0 : index
    %c0_73 = arith.constant 0 : index
    %124 = vector.load %arg4[%c3_71, %c0_72, %c0_73] : memref<30x14x160xf32, #tpu.memory_space<vmem>>, vector<1x14x160xf32>
    %125 = vector.shape_cast %124 : vector<1x14x160xf32> to vector<14x160xf32>
    %cst_74 = arith.constant dense<0.000000e+00> : vector<10x160xf32>
    %126 = tpu.matmul %123, %125, %cst_74 {dimension_numbers = #tpu.dot_dimension_numbers<[1], [0], [0], [1], [0, 0, 1, 1], [], []>} : vector<10x14xf32>, vector<14x160xf32>, vector<10x160xf32> -> vector<10x160xf32>
    %127 = arith.addf %122, %126 : vector<10x160xf32>
    %128 = vector.extract_strided_slice %106 {offsets = [4, 0], sizes = [10, 14], strides = [1, 1]} : vector<14x84xf32> to vector<10x14xf32>
    %c4_75 = arith.constant 4 : index
    %c0_76 = arith.constant 0 : index
    %c0_77 = arith.constant 0 : index
    %129 = vector.load %arg4[%c4_75, %c0_76, %c0_77] : memref<30x14x160xf32, #tpu.memory_space<vmem>>, vector<1x14x160xf32>
    %130 = vector.shape_cast %129 : vector<1x14x160xf32> to vector<14x160xf32>
    %cst_78 = arith.constant dense<0.000000e+00> : vector<10x160xf32>
    %131 = tpu.matmul %128, %130, %cst_78 {dimension_numbers = #tpu.dot_dimension_numbers<[1], [0], [0], [1], [0, 0, 1, 1], [], []>} : vector<10x14xf32>, vector<14x160xf32>, vector<10x160xf32> -> vector<10x160xf32>
    %132 = arith.addf %127, %131 : vector<10x160xf32>
    %133 = vector.extract_strided_slice %106 {offsets = [0, 14], sizes = [10, 14], strides = [1, 1]} : vector<14x84xf32> to vector<10x14xf32>
    %c5_79 = arith.constant 5 : index
    %c0_80 = arith.constant 0 : index
    %c0_81 = arith.constant 0 : index
    %134 = vector.load %arg4[%c5_79, %c0_80, %c0_81] : memref<30x14x160xf32, #tpu.memory_space<vmem>>, vector<1x14x160xf32>
    %135 = vector.shape_cast %134 : vector<1x14x160xf32> to vector<14x160xf32>
    %cst_82 = arith.constant dense<0.000000e+00> : vector<10x160xf32>
    %136 = tpu.matmul %133, %135, %cst_82 {dimension_numbers = #tpu.dot_dimension_numbers<[1], [0], [0], [1], [0, 0, 1, 1], [], []>} : vector<10x14xf32>, vector<14x160xf32>, vector<10x160xf32> -> vector<10x160xf32>
    %137 = arith.addf %132, %136 : vector<10x160xf32>
    %138 = vector.extract_strided_slice %106 {offsets = [1, 14], sizes = [10, 14], strides = [1, 1]} : vector<14x84xf32> to vector<10x14xf32>
    %c6_83 = arith.constant 6 : index
    %c0_84 = arith.constant 0 : index
    %c0_85 = arith.constant 0 : index
    %139 = vector.load %arg4[%c6_83, %c0_84, %c0_85] : memref<30x14x160xf32, #tpu.memory_space<vmem>>, vector<1x14x160xf32>
    %140 = vector.shape_cast %139 : vector<1x14x160xf32> to vector<14x160xf32>
    %cst_86 = arith.constant dense<0.000000e+00> : vector<10x160xf32>
    %141 = tpu.matmul %138, %140, %cst_86 {dimension_numbers = #tpu.dot_dimension_numbers<[1], [0], [0], [1], [0, 0, 1, 1], [], []>} : vector<10x14xf32>, vector<14x160xf32>, vector<10x160xf32> -> vector<10x160xf32>
    %142 = arith.addf %137, %141 : vector<10x160xf32>
    %143 = vector.extract_strided_slice %106 {offsets = [2, 14], sizes = [10, 14], strides = [1, 1]} : vector<14x84xf32> to vector<10x14xf32>
    %c7_87 = arith.constant 7 : index
    %c0_88 = arith.constant 0 : index
    %c0_89 = arith.constant 0 : index
    %144 = vector.load %arg4[%c7_87, %c0_88, %c0_89] : memref<30x14x160xf32, #tpu.memory_space<vmem>>, vector<1x14x160xf32>
    %145 = vector.shape_cast %144 : vector<1x14x160xf32> to vector<14x160xf32>
    %cst_90 = arith.constant dense<0.000000e+00> : vector<10x160xf32>
    %146 = tpu.matmul %143, %145, %cst_90 {dimension_numbers = #tpu.dot_dimension_numbers<[1], [0], [0], [1], [0, 0, 1, 1], [], []>} : vector<10x14xf32>, vector<14x160xf32>, vector<10x160xf32> -> vector<10x160xf32>
    %147 = arith.addf %142, %146 : vector<10x160xf32>
    %148 = vector.extract_strided_slice %106 {offsets = [3, 14], sizes = [10, 14], strides = [1, 1]} : vector<14x84xf32> to vector<10x14xf32>
    %c8_91 = arith.constant 8 : index
    %c0_92 = arith.constant 0 : index
    %c0_93 = arith.constant 0 : index
    %149 = vector.load %arg4[%c8_91, %c0_92, %c0_93] : memref<30x14x160xf32, #tpu.memory_space<vmem>>, vector<1x14x160xf32>
    %150 = vector.shape_cast %149 : vector<1x14x160xf32> to vector<14x160xf32>
    %cst_94 = arith.constant dense<0.000000e+00> : vector<10x160xf32>
    %151 = tpu.matmul %148, %150, %cst_94 {dimension_numbers = #tpu.dot_dimension_numbers<[1], [0], [0], [1], [0, 0, 1, 1], [], []>} : vector<10x14xf32>, vector<14x160xf32>, vector<10x160xf32> -> vector<10x160xf32>
    %152 = arith.addf %147, %151 : vector<10x160xf32>
    %153 = vector.extract_strided_slice %106 {offsets = [4, 14], sizes = [10, 14], strides = [1, 1]} : vector<14x84xf32> to vector<10x14xf32>
    %c9_95 = arith.constant 9 : index
    %c0_96 = arith.constant 0 : index
    %c0_97 = arith.constant 0 : index
    %154 = vector.load %arg4[%c9_95, %c0_96, %c0_97] : memref<30x14x160xf32, #tpu.memory_space<vmem>>, vector<1x14x160xf32>
    %155 = vector.shape_cast %154 : vector<1x14x160xf32> to vector<14x160xf32>
    %cst_98 = arith.constant dense<0.000000e+00> : vector<10x160xf32>
    %156 = tpu.matmul %153, %155, %cst_98 {dimension_numbers = #tpu.dot_dimension_numbers<[1], [0], [0], [1], [0, 0, 1, 1], [], []>} : vector<10x14xf32>, vector<14x160xf32>, vector<10x160xf32> -> vector<10x160xf32>
    %157 = arith.addf %152, %156 : vector<10x160xf32>
    %158 = vector.extract_strided_slice %106 {offsets = [0, 28], sizes = [10, 14], strides = [1, 1]} : vector<14x84xf32> to vector<10x14xf32>
    %c10_99 = arith.constant 10 : index
    %c0_100 = arith.constant 0 : index
    %c0_101 = arith.constant 0 : index
    %159 = vector.load %arg4[%c10_99, %c0_100, %c0_101] : memref<30x14x160xf32, #tpu.memory_space<vmem>>, vector<1x14x160xf32>
    %160 = vector.shape_cast %159 : vector<1x14x160xf32> to vector<14x160xf32>
    %cst_102 = arith.constant dense<0.000000e+00> : vector<10x160xf32>
    %161 = tpu.matmul %158, %160, %cst_102 {dimension_numbers = #tpu.dot_dimension_numbers<[1], [0], [0], [1], [0, 0, 1, 1], [], []>} : vector<10x14xf32>, vector<14x160xf32>, vector<10x160xf32> -> vector<10x160xf32>
    %162 = arith.addf %157, %161 : vector<10x160xf32>
    %163 = vector.extract_strided_slice %106 {offsets = [1, 28], sizes = [10, 14], strides = [1, 1]} : vector<14x84xf32> to vector<10x14xf32>
    %c11_103 = arith.constant 11 : index
    %c0_104 = arith.constant 0 : index
    %c0_105 = arith.constant 0 : index
    %164 = vector.load %arg4[%c11_103, %c0_104, %c0_105] : memref<30x14x160xf32, #tpu.memory_space<vmem>>, vector<1x14x160xf32>
    %165 = vector.shape_cast %164 : vector<1x14x160xf32> to vector<14x160xf32>
    %cst_106 = arith.constant dense<0.000000e+00> : vector<10x160xf32>
    %166 = tpu.matmul %163, %165, %cst_106 {dimension_numbers = #tpu.dot_dimension_numbers<[1], [0], [0], [1], [0, 0, 1, 1], [], []>} : vector<10x14xf32>, vector<14x160xf32>, vector<10x160xf32> -> vector<10x160xf32>
    %167 = arith.addf %162, %166 : vector<10x160xf32>
    %168 = vector.extract_strided_slice %106 {offsets = [2, 28], sizes = [10, 14], strides = [1, 1]} : vector<14x84xf32> to vector<10x14xf32>
    %c12_107 = arith.constant 12 : index
    %c0_108 = arith.constant 0 : index
    %c0_109 = arith.constant 0 : index
    %169 = vector.load %arg4[%c12_107, %c0_108, %c0_109] : memref<30x14x160xf32, #tpu.memory_space<vmem>>, vector<1x14x160xf32>
    %170 = vector.shape_cast %169 : vector<1x14x160xf32> to vector<14x160xf32>
    %cst_110 = arith.constant dense<0.000000e+00> : vector<10x160xf32>
    %171 = tpu.matmul %168, %170, %cst_110 {dimension_numbers = #tpu.dot_dimension_numbers<[1], [0], [0], [1], [0, 0, 1, 1], [], []>} : vector<10x14xf32>, vector<14x160xf32>, vector<10x160xf32> -> vector<10x160xf32>
    %172 = arith.addf %167, %171 : vector<10x160xf32>
    %173 = vector.extract_strided_slice %106 {offsets = [3, 28], sizes = [10, 14], strides = [1, 1]} : vector<14x84xf32> to vector<10x14xf32>
    %c13_111 = arith.constant 13 : index
    %c0_112 = arith.constant 0 : index
    %c0_113 = arith.constant 0 : index
    %174 = vector.load %arg4[%c13_111, %c0_112, %c0_113] : memref<30x14x160xf32, #tpu.memory_space<vmem>>, vector<1x14x160xf32>
    %175 = vector.shape_cast %174 : vector<1x14x160xf32> to vector<14x160xf32>
    %cst_114 = arith.constant dense<0.000000e+00> : vector<10x160xf32>
    %176 = tpu.matmul %173, %175, %cst_114 {dimension_numbers = #tpu.dot_dimension_numbers<[1], [0], [0], [1], [0, 0, 1, 1], [], []>} : vector<10x14xf32>, vector<14x160xf32>, vector<10x160xf32> -> vector<10x160xf32>
    %177 = arith.addf %172, %176 : vector<10x160xf32>
    %178 = vector.extract_strided_slice %106 {offsets = [4, 28], sizes = [10, 14], strides = [1, 1]} : vector<14x84xf32> to vector<10x14xf32>
    %c14_115 = arith.constant 14 : index
    %c0_116 = arith.constant 0 : index
    %c0_117 = arith.constant 0 : index
    %179 = vector.load %arg4[%c14_115, %c0_116, %c0_117] : memref<30x14x160xf32, #tpu.memory_space<vmem>>, vector<1x14x160xf32>
    %180 = vector.shape_cast %179 : vector<1x14x160xf32> to vector<14x160xf32>
    %cst_118 = arith.constant dense<0.000000e+00> : vector<10x160xf32>
    %181 = tpu.matmul %178, %180, %cst_118 {dimension_numbers = #tpu.dot_dimension_numbers<[1], [0], [0], [1], [0, 0, 1, 1], [], []>} : vector<10x14xf32>, vector<14x160xf32>, vector<10x160xf32> -> vector<10x160xf32>
    %182 = arith.addf %177, %181 : vector<10x160xf32>
    %183 = vector.extract_strided_slice %106 {offsets = [0, 42], sizes = [10, 14], strides = [1, 1]} : vector<14x84xf32> to vector<10x14xf32>
    %c15 = arith.constant 15 : index
    %c0_119 = arith.constant 0 : index
    %c0_120 = arith.constant 0 : index
    %184 = vector.load %arg4[%c15, %c0_119, %c0_120] : memref<30x14x160xf32, #tpu.memory_space<vmem>>, vector<1x14x160xf32>
    %185 = vector.shape_cast %184 : vector<1x14x160xf32> to vector<14x160xf32>
    %cst_121 = arith.constant dense<0.000000e+00> : vector<10x160xf32>
    %186 = tpu.matmul %183, %185, %cst_121 {dimension_numbers = #tpu.dot_dimension_numbers<[1], [0], [0], [1], [0, 0, 1, 1], [], []>} : vector<10x14xf32>, vector<14x160xf32>, vector<10x160xf32> -> vector<10x160xf32>
    %187 = arith.addf %182, %186 : vector<10x160xf32>
    %188 = vector.extract_strided_slice %106 {offsets = [1, 42], sizes = [10, 14], strides = [1, 1]} : vector<14x84xf32> to vector<10x14xf32>
    %c16 = arith.constant 16 : index
    %c0_122 = arith.constant 0 : index
    %c0_123 = arith.constant 0 : index
    %189 = vector.load %arg4[%c16, %c0_122, %c0_123] : memref<30x14x160xf32, #tpu.memory_space<vmem>>, vector<1x14x160xf32>
    %190 = vector.shape_cast %189 : vector<1x14x160xf32> to vector<14x160xf32>
    %cst_124 = arith.constant dense<0.000000e+00> : vector<10x160xf32>
    %191 = tpu.matmul %188, %190, %cst_124 {dimension_numbers = #tpu.dot_dimension_numbers<[1], [0], [0], [1], [0, 0, 1, 1], [], []>} : vector<10x14xf32>, vector<14x160xf32>, vector<10x160xf32> -> vector<10x160xf32>
    %192 = arith.addf %187, %191 : vector<10x160xf32>
    %193 = vector.extract_strided_slice %106 {offsets = [2, 42], sizes = [10, 14], strides = [1, 1]} : vector<14x84xf32> to vector<10x14xf32>
    %c17 = arith.constant 17 : index
    %c0_125 = arith.constant 0 : index
    %c0_126 = arith.constant 0 : index
    %194 = vector.load %arg4[%c17, %c0_125, %c0_126] : memref<30x14x160xf32, #tpu.memory_space<vmem>>, vector<1x14x160xf32>
    %195 = vector.shape_cast %194 : vector<1x14x160xf32> to vector<14x160xf32>
    %cst_127 = arith.constant dense<0.000000e+00> : vector<10x160xf32>
    %196 = tpu.matmul %193, %195, %cst_127 {dimension_numbers = #tpu.dot_dimension_numbers<[1], [0], [0], [1], [0, 0, 1, 1], [], []>} : vector<10x14xf32>, vector<14x160xf32>, vector<10x160xf32> -> vector<10x160xf32>
    %197 = arith.addf %192, %196 : vector<10x160xf32>
    %198 = vector.extract_strided_slice %106 {offsets = [3, 42], sizes = [10, 14], strides = [1, 1]} : vector<14x84xf32> to vector<10x14xf32>
    %c18 = arith.constant 18 : index
    %c0_128 = arith.constant 0 : index
    %c0_129 = arith.constant 0 : index
    %199 = vector.load %arg4[%c18, %c0_128, %c0_129] : memref<30x14x160xf32, #tpu.memory_space<vmem>>, vector<1x14x160xf32>
    %200 = vector.shape_cast %199 : vector<1x14x160xf32> to vector<14x160xf32>
    %cst_130 = arith.constant dense<0.000000e+00> : vector<10x160xf32>
    %201 = tpu.matmul %198, %200, %cst_130 {dimension_numbers = #tpu.dot_dimension_numbers<[1], [0], [0], [1], [0, 0, 1, 1], [], []>} : vector<10x14xf32>, vector<14x160xf32>, vector<10x160xf32> -> vector<10x160xf32>
    %202 = arith.addf %197, %201 : vector<10x160xf32>
    %203 = vector.extract_strided_slice %106 {offsets = [4, 42], sizes = [10, 14], strides = [1, 1]} : vector<14x84xf32> to vector<10x14xf32>
    %c19 = arith.constant 19 : index
    %c0_131 = arith.constant 0 : index
    %c0_132 = arith.constant 0 : index
    %204 = vector.load %arg4[%c19, %c0_131, %c0_132] : memref<30x14x160xf32, #tpu.memory_space<vmem>>, vector<1x14x160xf32>
    %205 = vector.shape_cast %204 : vector<1x14x160xf32> to vector<14x160xf32>
    %cst_133 = arith.constant dense<0.000000e+00> : vector<10x160xf32>
    %206 = tpu.matmul %203, %205, %cst_133 {dimension_numbers = #tpu.dot_dimension_numbers<[1], [0], [0], [1], [0, 0, 1, 1], [], []>} : vector<10x14xf32>, vector<14x160xf32>, vector<10x160xf32> -> vector<10x160xf32>
    %207 = arith.addf %202, %206 : vector<10x160xf32>
    %208 = vector.extract_strided_slice %106 {offsets = [0, 56], sizes = [10, 14], strides = [1, 1]} : vector<14x84xf32> to vector<10x14xf32>
    %c20 = arith.constant 20 : index
    %c0_134 = arith.constant 0 : index
    %c0_135 = arith.constant 0 : index
    %209 = vector.load %arg4[%c20, %c0_134, %c0_135] : memref<30x14x160xf32, #tpu.memory_space<vmem>>, vector<1x14x160xf32>
    %210 = vector.shape_cast %209 : vector<1x14x160xf32> to vector<14x160xf32>
    %cst_136 = arith.constant dense<0.000000e+00> : vector<10x160xf32>
    %211 = tpu.matmul %208, %210, %cst_136 {dimension_numbers = #tpu.dot_dimension_numbers<[1], [0], [0], [1], [0, 0, 1, 1], [], []>} : vector<10x14xf32>, vector<14x160xf32>, vector<10x160xf32> -> vector<10x160xf32>
    %212 = arith.addf %207, %211 : vector<10x160xf32>
    %213 = vector.extract_strided_slice %106 {offsets = [1, 56], sizes = [10, 14], strides = [1, 1]} : vector<14x84xf32> to vector<10x14xf32>
    %c21 = arith.constant 21 : index
    %c0_137 = arith.constant 0 : index
    %c0_138 = arith.constant 0 : index
    %214 = vector.load %arg4[%c21, %c0_137, %c0_138] : memref<30x14x160xf32, #tpu.memory_space<vmem>>, vector<1x14x160xf32>
    %215 = vector.shape_cast %214 : vector<1x14x160xf32> to vector<14x160xf32>
    %cst_139 = arith.constant dense<0.000000e+00> : vector<10x160xf32>
    %216 = tpu.matmul %213, %215, %cst_139 {dimension_numbers = #tpu.dot_dimension_numbers<[1], [0], [0], [1], [0, 0, 1, 1], [], []>} : vector<10x14xf32>, vector<14x160xf32>, vector<10x160xf32> -> vector<10x160xf32>
    %217 = arith.addf %212, %216 : vector<10x160xf32>
    %218 = vector.extract_strided_slice %106 {offsets = [2, 56], sizes = [10, 14], strides = [1, 1]} : vector<14x84xf32> to vector<10x14xf32>
    %c22 = arith.constant 22 : index
    %c0_140 = arith.constant 0 : index
    %c0_141 = arith.constant 0 : index
    %219 = vector.load %arg4[%c22, %c0_140, %c0_141] : memref<30x14x160xf32, #tpu.memory_space<vmem>>, vector<1x14x160xf32>
    %220 = vector.shape_cast %219 : vector<1x14x160xf32> to vector<14x160xf32>
    %cst_142 = arith.constant dense<0.000000e+00> : vector<10x160xf32>
    %221 = tpu.matmul %218, %220, %cst_142 {dimension_numbers = #tpu.dot_dimension_numbers<[1], [0], [0], [1], [0, 0, 1, 1], [], []>} : vector<10x14xf32>, vector<14x160xf32>, vector<10x160xf32> -> vector<10x160xf32>
    %222 = arith.addf %217, %221 : vector<10x160xf32>
    %223 = vector.extract_strided_slice %106 {offsets = [3, 56], sizes = [10, 14], strides = [1, 1]} : vector<14x84xf32> to vector<10x14xf32>
    %c23 = arith.constant 23 : index
    %c0_143 = arith.constant 0 : index
    %c0_144 = arith.constant 0 : index
    %224 = vector.load %arg4[%c23, %c0_143, %c0_144] : memref<30x14x160xf32, #tpu.memory_space<vmem>>, vector<1x14x160xf32>
    %225 = vector.shape_cast %224 : vector<1x14x160xf32> to vector<14x160xf32>
    %cst_145 = arith.constant dense<0.000000e+00> : vector<10x160xf32>
    %226 = tpu.matmul %223, %225, %cst_145 {dimension_numbers = #tpu.dot_dimension_numbers<[1], [0], [0], [1], [0, 0, 1, 1], [], []>} : vector<10x14xf32>, vector<14x160xf32>, vector<10x160xf32> -> vector<10x160xf32>
    %227 = arith.addf %222, %226 : vector<10x160xf32>
    %228 = vector.extract_strided_slice %106 {offsets = [4, 56], sizes = [10, 14], strides = [1, 1]} : vector<14x84xf32> to vector<10x14xf32>
    %c24 = arith.constant 24 : index
    %c0_146 = arith.constant 0 : index
    %c0_147 = arith.constant 0 : index
    %229 = vector.load %arg4[%c24, %c0_146, %c0_147] : memref<30x14x160xf32, #tpu.memory_space<vmem>>, vector<1x14x160xf32>
    %230 = vector.shape_cast %229 : vector<1x14x160xf32> to vector<14x160xf32>
    %cst_148 = arith.constant dense<0.000000e+00> : vector<10x160xf32>
    %231 = tpu.matmul %228, %230, %cst_148 {dimension_numbers = #tpu.dot_dimension_numbers<[1], [0], [0], [1], [0, 0, 1, 1], [], []>} : vector<10x14xf32>, vector<14x160xf32>, vector<10x160xf32> -> vector<10x160xf32>
    %232 = arith.addf %227, %231 : vector<10x160xf32>
    %233 = vector.extract_strided_slice %106 {offsets = [0, 70], sizes = [10, 14], strides = [1, 1]} : vector<14x84xf32> to vector<10x14xf32>
    %c25 = arith.constant 25 : index
    %c0_149 = arith.constant 0 : index
    %c0_150 = arith.constant 0 : index
    %234 = vector.load %arg4[%c25, %c0_149, %c0_150] : memref<30x14x160xf32, #tpu.memory_space<vmem>>, vector<1x14x160xf32>
    %235 = vector.shape_cast %234 : vector<1x14x160xf32> to vector<14x160xf32>
    %cst_151 = arith.constant dense<0.000000e+00> : vector<10x160xf32>
    %236 = tpu.matmul %233, %235, %cst_151 {dimension_numbers = #tpu.dot_dimension_numbers<[1], [0], [0], [1], [0, 0, 1, 1], [], []>} : vector<10x14xf32>, vector<14x160xf32>, vector<10x160xf32> -> vector<10x160xf32>
    %237 = arith.addf %232, %236 : vector<10x160xf32>
    %238 = vector.extract_strided_slice %106 {offsets = [1, 70], sizes = [10, 14], strides = [1, 1]} : vector<14x84xf32> to vector<10x14xf32>
    %c26 = arith.constant 26 : index
    %c0_152 = arith.constant 0 : index
    %c0_153 = arith.constant 0 : index
    %239 = vector.load %arg4[%c26, %c0_152, %c0_153] : memref<30x14x160xf32, #tpu.memory_space<vmem>>, vector<1x14x160xf32>
    %240 = vector.shape_cast %239 : vector<1x14x160xf32> to vector<14x160xf32>
    %cst_154 = arith.constant dense<0.000000e+00> : vector<10x160xf32>
    %241 = tpu.matmul %238, %240, %cst_154 {dimension_numbers = #tpu.dot_dimension_numbers<[1], [0], [0], [1], [0, 0, 1, 1], [], []>} : vector<10x14xf32>, vector<14x160xf32>, vector<10x160xf32> -> vector<10x160xf32>
    %242 = arith.addf %237, %241 : vector<10x160xf32>
    %243 = vector.extract_strided_slice %106 {offsets = [2, 70], sizes = [10, 14], strides = [1, 1]} : vector<14x84xf32> to vector<10x14xf32>
    %c27 = arith.constant 27 : index
    %c0_155 = arith.constant 0 : index
    %c0_156 = arith.constant 0 : index
    %244 = vector.load %arg4[%c27, %c0_155, %c0_156] : memref<30x14x160xf32, #tpu.memory_space<vmem>>, vector<1x14x160xf32>
    %245 = vector.shape_cast %244 : vector<1x14x160xf32> to vector<14x160xf32>
    %cst_157 = arith.constant dense<0.000000e+00> : vector<10x160xf32>
    %246 = tpu.matmul %243, %245, %cst_157 {dimension_numbers = #tpu.dot_dimension_numbers<[1], [0], [0], [1], [0, 0, 1, 1], [], []>} : vector<10x14xf32>, vector<14x160xf32>, vector<10x160xf32> -> vector<10x160xf32>
    %247 = arith.addf %242, %246 : vector<10x160xf32>
    %248 = vector.extract_strided_slice %106 {offsets = [3, 70], sizes = [10, 14], strides = [1, 1]} : vector<14x84xf32> to vector<10x14xf32>
    %c28 = arith.constant 28 : index
    %c0_158 = arith.constant 0 : index
    %c0_159 = arith.constant 0 : index
    %249 = vector.load %arg4[%c28, %c0_158, %c0_159] : memref<30x14x160xf32, #tpu.memory_space<vmem>>, vector<1x14x160xf32>
    %250 = vector.shape_cast %249 : vector<1x14x160xf32> to vector<14x160xf32>
    %cst_160 = arith.constant dense<0.000000e+00> : vector<10x160xf32>
    %251 = tpu.matmul %248, %250, %cst_160 {dimension_numbers = #tpu.dot_dimension_numbers<[1], [0], [0], [1], [0, 0, 1, 1], [], []>} : vector<10x14xf32>, vector<14x160xf32>, vector<10x160xf32> -> vector<10x160xf32>
    %252 = arith.addf %247, %251 : vector<10x160xf32>
    %253 = vector.extract_strided_slice %106 {offsets = [4, 70], sizes = [10, 14], strides = [1, 1]} : vector<14x84xf32> to vector<10x14xf32>
    %c29 = arith.constant 29 : index
    %c0_161 = arith.constant 0 : index
    %c0_162 = arith.constant 0 : index
    %254 = vector.load %arg4[%c29, %c0_161, %c0_162] : memref<30x14x160xf32, #tpu.memory_space<vmem>>, vector<1x14x160xf32>
    %255 = vector.shape_cast %254 : vector<1x14x160xf32> to vector<14x160xf32>
    %cst_163 = arith.constant dense<0.000000e+00> : vector<10x160xf32>
    %256 = tpu.matmul %253, %255, %cst_163 {dimension_numbers = #tpu.dot_dimension_numbers<[1], [0], [0], [1], [0, 0, 1, 1], [], []>} : vector<10x14xf32>, vector<14x160xf32>, vector<10x160xf32> -> vector<10x160xf32>
    %257 = arith.addf %252, %256 : vector<10x160xf32>
    %c0_164 = arith.constant 0 : index
    %c0_165 = arith.constant 0 : index
    %258 = vector.load %arg5[%c0_164, %c0_165] : memref<1x160xf32, #tpu.memory_space<vmem>>, vector<1x160xf32>
    %259 = vector.broadcast %258 : vector<1x160xf32> to vector<10x160xf32>
    %260 = arith.addf %257, %259 : vector<10x160xf32>
    %cst_166 = arith.constant 0.000000e+00 : f32
    %261 = vector.broadcast %cst_166 : f32 to vector<10x160xf32>
    %262 = arith.maximumf %260, %261 : vector<10x160xf32>
    %263 = vector.extract_strided_slice %262 {offsets = [0, 0], sizes = [9, 160], strides = [1, 1]} : vector<10x160xf32> to vector<9x160xf32>
    %264 = vector.extract_strided_slice %262 {offsets = [1, 0], sizes = [9, 160], strides = [1, 1]} : vector<10x160xf32> to vector<9x160xf32>
    %265 = arith.maximumf %263, %264 : vector<9x160xf32>
    %266 = tpu.iota {dimensions = array<i32: 0>} : vector<5x9xi32>
    %267 = tpu.iota {dimensions = array<i32: 1>} : vector<5x9xi32>
    %c2_i32_167 = arith.constant 2 : i32
    %268 = vector.broadcast %c2_i32_167 : i32 to vector<5x9xi32>
    %269 = arith.muli %268, %266 : vector<5x9xi32>
    %270 = arith.cmpi eq, %267, %269 : vector<5x9xi32>
    %cst_168 = arith.constant 1.000000e+00 : f32
    %cst_169 = arith.constant 0.000000e+00 : f32
    %271 = vector.broadcast %cst_168 : f32 to vector<5x9xf32>
    %272 = vector.broadcast %cst_169 : f32 to vector<5x9xf32>
    %273 = arith.select %270, %271, %272 : vector<5x9xi1>, vector<5x9xf32>
    %cst_170 = arith.constant dense<0.000000e+00> : vector<5x160xf32>
    %274 = tpu.matmul %273, %265, %cst_170 {dimension_numbers = #tpu.dot_dimension_numbers<[1], [0], [0], [1], [0, 0, 1, 1], [], []>} : vector<5x9xf32>, vector<9x160xf32>, vector<5x160xf32> -> vector<5x160xf32>
    %275 = vector.extract_strided_slice %274 {offsets = [0, 0], sizes = [5, 159], strides = [1, 1]} : vector<5x160xf32> to vector<5x159xf32>
    %276 = vector.extract_strided_slice %274 {offsets = [0, 1], sizes = [5, 159], strides = [1, 1]} : vector<5x160xf32> to vector<5x159xf32>
    %277 = arith.maximumf %275, %276 : vector<5x159xf32>
    %278 = tpu.iota {dimensions = array<i32: 0>} : vector<159x80xi32>
    %279 = tpu.iota {dimensions = array<i32: 1>} : vector<159x80xi32>
    %c2_i32_171 = arith.constant 2 : i32
    %280 = vector.broadcast %c2_i32_171 : i32 to vector<159x80xi32>
    %281 = arith.muli %280, %279 : vector<159x80xi32>
    %282 = arith.cmpi eq, %278, %281 : vector<159x80xi32>
    %cst_172 = arith.constant 1.000000e+00 : f32
    %cst_173 = arith.constant 0.000000e+00 : f32
    %283 = vector.broadcast %cst_172 : f32 to vector<159x80xf32>
    %284 = vector.broadcast %cst_173 : f32 to vector<159x80xf32>
    %285 = arith.select %282, %283, %284 : vector<159x80xi1>, vector<159x80xf32>
    %cst_174 = arith.constant dense<0.000000e+00> : vector<5x80xf32>
    %286 = tpu.matmul %277, %285, %cst_174 {dimension_numbers = #tpu.dot_dimension_numbers<[1], [0], [0], [1], [0, 0, 1, 1], [], []>} : vector<5x159xf32>, vector<159x80xf32>, vector<5x80xf32> -> vector<5x80xf32>
    %c0_175 = arith.constant 0 : index
    %c0_176 = arith.constant 0 : index
    %287 = vector.load %arg7[%c0_175, %c0_176] : memref<1x120xf32, #tpu.memory_space<vmem>>, vector<1x120xf32>
    %288 = vector.extract_strided_slice %286 {offsets = [0, 0], sizes = [1, 80], strides = [1, 1]} : vector<5x80xf32> to vector<1x80xf32>
    %c0_177 = arith.constant 0 : index
    %c0_178 = arith.constant 0 : index
    %c0_179 = arith.constant 0 : index
    %289 = vector.load %arg6[%c0_177, %c0_178, %c0_179] : memref<5x80x120xf32, #tpu.memory_space<vmem>>, vector<1x80x120xf32>
    %290 = vector.shape_cast %289 : vector<1x80x120xf32> to vector<80x120xf32>
    %cst_180 = arith.constant dense<0.000000e+00> : vector<1x120xf32>
    %291 = tpu.matmul %288, %290, %cst_180 {dimension_numbers = #tpu.dot_dimension_numbers<[1], [0], [0], [1], [0, 0, 1, 1], [], []>} : vector<1x80xf32>, vector<80x120xf32>, vector<1x120xf32> -> vector<1x120xf32>
    %292 = arith.addf %287, %291 : vector<1x120xf32>
    %293 = vector.extract_strided_slice %286 {offsets = [1, 0], sizes = [1, 80], strides = [1, 1]} : vector<5x80xf32> to vector<1x80xf32>
    %c1_181 = arith.constant 1 : index
    %c0_182 = arith.constant 0 : index
    %c0_183 = arith.constant 0 : index
    %294 = vector.load %arg6[%c1_181, %c0_182, %c0_183] : memref<5x80x120xf32, #tpu.memory_space<vmem>>, vector<1x80x120xf32>
    %295 = vector.shape_cast %294 : vector<1x80x120xf32> to vector<80x120xf32>
    %cst_184 = arith.constant dense<0.000000e+00> : vector<1x120xf32>
    %296 = tpu.matmul %293, %295, %cst_184 {dimension_numbers = #tpu.dot_dimension_numbers<[1], [0], [0], [1], [0, 0, 1, 1], [], []>} : vector<1x80xf32>, vector<80x120xf32>, vector<1x120xf32> -> vector<1x120xf32>
    %297 = arith.addf %292, %296 : vector<1x120xf32>
    %298 = vector.extract_strided_slice %286 {offsets = [2, 0], sizes = [1, 80], strides = [1, 1]} : vector<5x80xf32> to vector<1x80xf32>
    %c2_185 = arith.constant 2 : index
    %c0_186 = arith.constant 0 : index
    %c0_187 = arith.constant 0 : index
    %299 = vector.load %arg6[%c2_185, %c0_186, %c0_187] : memref<5x80x120xf32, #tpu.memory_space<vmem>>, vector<1x80x120xf32>
    %300 = vector.shape_cast %299 : vector<1x80x120xf32> to vector<80x120xf32>
    %cst_188 = arith.constant dense<0.000000e+00> : vector<1x120xf32>
    %301 = tpu.matmul %298, %300, %cst_188 {dimension_numbers = #tpu.dot_dimension_numbers<[1], [0], [0], [1], [0, 0, 1, 1], [], []>} : vector<1x80xf32>, vector<80x120xf32>, vector<1x120xf32> -> vector<1x120xf32>
    %302 = arith.addf %297, %301 : vector<1x120xf32>
    %303 = vector.extract_strided_slice %286 {offsets = [3, 0], sizes = [1, 80], strides = [1, 1]} : vector<5x80xf32> to vector<1x80xf32>
    %c3_189 = arith.constant 3 : index
    %c0_190 = arith.constant 0 : index
    %c0_191 = arith.constant 0 : index
    %304 = vector.load %arg6[%c3_189, %c0_190, %c0_191] : memref<5x80x120xf32, #tpu.memory_space<vmem>>, vector<1x80x120xf32>
    %305 = vector.shape_cast %304 : vector<1x80x120xf32> to vector<80x120xf32>
    %cst_192 = arith.constant dense<0.000000e+00> : vector<1x120xf32>
    %306 = tpu.matmul %303, %305, %cst_192 {dimension_numbers = #tpu.dot_dimension_numbers<[1], [0], [0], [1], [0, 0, 1, 1], [], []>} : vector<1x80xf32>, vector<80x120xf32>, vector<1x120xf32> -> vector<1x120xf32>
    %307 = arith.addf %302, %306 : vector<1x120xf32>
    %308 = vector.extract_strided_slice %286 {offsets = [4, 0], sizes = [1, 80], strides = [1, 1]} : vector<5x80xf32> to vector<1x80xf32>
    %c4_193 = arith.constant 4 : index
    %c0_194 = arith.constant 0 : index
    %c0_195 = arith.constant 0 : index
    %309 = vector.load %arg6[%c4_193, %c0_194, %c0_195] : memref<5x80x120xf32, #tpu.memory_space<vmem>>, vector<1x80x120xf32>
    %310 = vector.shape_cast %309 : vector<1x80x120xf32> to vector<80x120xf32>
    %cst_196 = arith.constant dense<0.000000e+00> : vector<1x120xf32>
    %311 = tpu.matmul %308, %310, %cst_196 {dimension_numbers = #tpu.dot_dimension_numbers<[1], [0], [0], [1], [0, 0, 1, 1], [], []>} : vector<1x80xf32>, vector<80x120xf32>, vector<1x120xf32> -> vector<1x120xf32>
    %312 = arith.addf %307, %311 : vector<1x120xf32>
    %cst_197 = arith.constant 0.000000e+00 : f32
    %313 = vector.broadcast %cst_197 : f32 to vector<1x120xf32>
    %314 = arith.maximumf %312, %313 : vector<1x120xf32>
    %c0_198 = arith.constant 0 : index
    %c0_199 = arith.constant 0 : index
    %315 = vector.load %arg8[%c0_198, %c0_199] : memref<120x84xf32, #tpu.memory_space<vmem>>, vector<120x84xf32>
    %cst_200 = arith.constant dense<0.000000e+00> : vector<1x84xf32>
    %316 = tpu.matmul %314, %315, %cst_200 {dimension_numbers = #tpu.dot_dimension_numbers<[1], [0], [0], [1], [0, 0, 1, 1], [], []>} : vector<1x120xf32>, vector<120x84xf32>, vector<1x84xf32> -> vector<1x84xf32>
    %c0_201 = arith.constant 0 : index
    %c0_202 = arith.constant 0 : index
    %317 = vector.load %arg9[%c0_201, %c0_202] : memref<1x84xf32, #tpu.memory_space<vmem>>, vector<1x84xf32>
    %318 = arith.addf %316, %317 : vector<1x84xf32>
    %cst_203 = arith.constant 0.000000e+00 : f32
    %319 = vector.broadcast %cst_203 : f32 to vector<1x84xf32>
    %320 = arith.maximumf %318, %319 : vector<1x84xf32>
    %c0_204 = arith.constant 0 : index
    %c0_205 = arith.constant 0 : index
    %321 = vector.load %arg10[%c0_204, %c0_205] : memref<84x128xf32, #tpu.memory_space<vmem>>, vector<84x128xf32>
    %cst_206 = arith.constant dense<0.000000e+00> : vector<1x128xf32>
    %322 = tpu.matmul %320, %321, %cst_206 {dimension_numbers = #tpu.dot_dimension_numbers<[1], [0], [0], [1], [0, 0, 1, 1], [], []>} : vector<1x84xf32>, vector<84x128xf32>, vector<1x128xf32> -> vector<1x128xf32>
    %c0_207 = arith.constant 0 : index
    %c0_208 = arith.constant 0 : index
    %323 = vector.load %arg11[%c0_207, %c0_208] : memref<1x128xf32, #tpu.memory_space<vmem>>, vector<1x128xf32>
    %324 = arith.addf %322, %323 : vector<1x128xf32>
    %c0_209 = arith.constant 0 : index
    %c0_210 = arith.constant 0 : index
    %c0_211 = arith.constant 0 : index
    %325 = vector.load %arg12[%c0_209, %c0_210, %c0_211] : memref<1x1x128xf32, #tpu.memory_space<vmem>>, vector<1x1x128xf32>
    %326 = vector.shape_cast %325 : vector<1x1x128xf32> to vector<1x128xf32>
    %327 = vector.shape_cast %324 : vector<1x128xf32> to vector<1x1x128xf32>
    tpu.vector_store %arg12[%c0_209, %c0_210, %c0_211], %327 {strides = array<i32>} : memref<1x1x128xf32, #tpu.memory_space<vmem>>, vector<1x1x128xf32>,
    return
  }
  func.func @transform_0(%arg0: i32) -> (i32, i32, i32) {
    %c0_i32 = arith.constant 0 : i32
    %c0_i32_0 = arith.constant 0 : i32
    %c0_i32_1 = arith.constant 0 : i32
    return %arg0, %c0_i32, %c0_i32_0 : i32, i32, i32
  }
  func.func @transform_1(%arg0: i32) -> (i32, i32, i32) {
    %c0_i32 = arith.constant 0 : i32
    %c0_i32_0 = arith.constant 0 : i32
    %c0_i32_1 = arith.constant 0 : i32
    %c0_i32_2 = arith.constant 0 : i32
    return %c0_i32, %c0_i32_0, %c0_i32_1 : i32, i32, i32
  }
  func.func @transform_2(%arg0: i32) -> (i32, i32) {
    %c0_i32 = arith.constant 0 : i32
    %c0_i32_0 = arith.constant 0 : i32
    %c0_i32_1 = arith.constant 0 : i32
    return %c0_i32, %c0_i32_0 : i32, i32
  }
  func.func @transform_3(%arg0: i32) -> (i32, i32, i32) {
    %c0_i32 = arith.constant 0 : i32
    %c0_i32_0 = arith.constant 0 : i32
    %c0_i32_1 = arith.constant 0 : i32
    %c0_i32_2 = arith.constant 0 : i32
    return %c0_i32, %c0_i32_0, %c0_i32_1 : i32, i32, i32
  }
  func.func @transform_4(%arg0: i32) -> (i32, i32) {
    %c0_i32 = arith.constant 0 : i32
    %c0_i32_0 = arith.constant 0 : i32
    %c0_i32_1 = arith.constant 0 : i32
    return %c0_i32, %c0_i32_0 : i32, i32
  }
  func.func @transform_5(%arg0: i32) -> (i32, i32, i32) {
    %c0_i32 = arith.constant 0 : i32
    %c0_i32_0 = arith.constant 0 : i32
    %c0_i32_1 = arith.constant 0 : i32
    %c0_i32_2 = arith.constant 0 : i32
    return %c0_i32, %c0_i32_0, %c0_i32_1 : i32, i32, i32
  }
  func.func @transform_6(%arg0: i32) -> (i32, i32) {
    %c0_i32 = arith.constant 0 : i32
    %c0_i32_0 = arith.constant 0 : i32
    %c0_i32_1 = arith.constant 0 : i32
    return %c0_i32, %c0_i32_0 : i32, i32
  }
  func.func @transform_7(%arg0: i32) -> (i32, i32) {
    %c0_i32 = arith.constant 0 : i32
    %c0_i32_0 = arith.constant 0 : i32
    %c0_i32_1 = arith.constant 0 : i32
    return %c0_i32, %c0_i32_0 : i32, i32
  }
  func.func @transform_8(%arg0: i32) -> (i32, i32) {
    %c0_i32 = arith.constant 0 : i32
    %c0_i32_0 = arith.constant 0 : i32
    %c0_i32_1 = arith.constant 0 : i32
    return %c0_i32, %c0_i32_0 : i32, i32
  }
  func.func @transform_9(%arg0: i32) -> (i32, i32) {
    %c0_i32 = arith.constant 0 : i32
    %c0_i32_0 = arith.constant 0 : i32
    %c0_i32_1 = arith.constant 0 : i32
    return %c0_i32, %c0_i32_0 : i32, i32
  }
  func.func @transform_10(%arg0: i32) -> (i32, i32) {
    %c0_i32 = arith.constant 0 : i32
    %c0_i32_0 = arith.constant 0 : i32
    %c0_i32_1 = arith.constant 0 : i32
    return %c0_i32, %c0_i32_0 : i32, i32
  }
  func.func @transform_11(%arg0: i32) -> (i32, i32, i32) {
    %c0_i32 = arith.constant 0 : i32
    %c0_i32_0 = arith.constant 0 : i32
    %c0_i32_1 = arith.constant 0 : i32
    return %arg0, %c0_i32, %c0_i32_0 : i32, i32, i32
  }
}

</mosaic_0001>

<llo_original>
// kernel: net_forward.1
$region0: #{net_forward.1}
  #allocation0 [shape = 'u32[]', space=smem, size = 0x4, offset = 0x4, fixed_abs, tag = 'smem constant byte address 0x4 - core index']
  #allocation1 [shape = 'u32[144,128]{1,0:T(1,128)}', space=vmem, size = 0x12000, scoped, tag = 'internal scratch']
  %s0 = inlined_call_operand.vmem [shape: f32[2,32,96], index: 0, kind: input, shape index: {}]
  %s1 = inlined_call_operand.vmem [shape: f32[15,32,168], index: 1, kind: input, shape index: {}]
  %s2 = inlined_call_operand.vmem [shape: f32[1,168], index: 2, kind: input, shape index: {}]
  %s3 = inlined_call_operand.vmem [shape: f32[30,14,160], index: 3, kind: input, shape index: {}]
  %s4 = inlined_call_operand.vmem [shape: f32[1,160], index: 4, kind: input, shape index: {}]
  %s5 = inlined_call_operand.vmem [shape: f32[5,80,120], index: 5, kind: input, shape index: {}]
  %s6 = inlined_call_operand.vmem [shape: f32[1,120], index: 6, kind: input, shape index: {}]
  %s7 = inlined_call_operand.vmem [shape: f32[120,84], index: 7, kind: input, shape index: {}]
  %s8 = inlined_call_operand.vmem [shape: f32[1,84], index: 8, kind: input, shape index: {}]
  %s9 = inlined_call_operand.vmem [shape: f32[84,128], index: 9, kind: input, shape index: {}]
  %s10 = inlined_call_operand.vmem [shape: f32[1,128], index: 10, kind: input, shape index: {}]
  %s11 = inlined_call_operand.hbm [shape: f32[2,1,128], index: 11, kind: output, shape index: {}]
  %s12 = sld [smem:[#allocation0]]
  $region77: #{net_forward.1} parent=0
    _
  %s14 = ssub.s32 1, %s12
  %s15 = scalar_select 0, %s14, %s12
  $region1: #{net_forward.1} parent=0
    #allocation2 [shape = 'u8[1024]{0}', space=vmem, size = 0x400, scoped, tag = 'output window, operand 0']
    #allocation3 [shape = 's32[2]{0}', space=sflag, size = 0x8, scoped, tag = 'scoped memory for net_forward.1']
    %16 = vsyncpa [#allocation3], 0
    %s17 = scalar_lea.sflag [#allocation3], 1
    %18 = vsyncpa %s17, 0
    loop: start=0, step=1, limit=4
    $region2: #{net_forward.1} parent=1 // loop_pre_header
      _
    $region3: #{net_forward.1} parent=1 // loop_header
      %s20 = sphi 0, %s24
      %p21 = scmp.ge.s32.totalorder %s20, 4
      %s30 = sphi 0, %s32
      %s33 = sphi 0, %s30
      %s34 = sphi 0, %s33
      %s50 = sphi 0, %s34
      %s54 = sphi 0, %s54
      %s56 = sphi 0, %s54
      %s57 = sphi 0, %s56
      %s71 = sphi 0, %s57
      %s75 = sphi 0, %s75
      %s77 = sphi 0, %s75
      %s78 = sphi 0, %s77
      %s92 = sphi 0, %s78
      %s96 = sphi 0, %s96
      %s98 = sphi 0, %s96
      %s99 = sphi 0, %s98
      %s113 = sphi 0, %s99
      %s117 = sphi 0, %s117
      %s119 = sphi 0, %s117
      %s120 = sphi 0, %s119
      %s134 = sphi 0, %s120
      %s138 = sphi 0, %s138
      %s140 = sphi 0, %s138
      %s141 = sphi 0, %s140
      %s155 = sphi 0, %s141
      %s159 = sphi 0, %s159
      %s161 = sphi 0, %s159
      %s162 = sphi 0, %s161
      %s176 = sphi 0, %s162
      %s180 = sphi 0, %s180
      %s182 = sphi 0, %s180
      %s183 = sphi 0, %s182
      %s197 = sphi 0, %s183
      %s201 = sphi 0, %s201
      %s203 = sphi 0, %s201
      %s204 = sphi 0, %s203
      %s218 = sphi 0, %s204
      %s222 = sphi 0, %s222
      %s224 = sphi 0, %s222
      %s225 = sphi 0, %s224
      %s239 = sphi 0, %s225
      %s243 = sphi 0, %s243
      %s245 = sphi 0, %s243
      %s246 = sphi 0, %s245
      %s260 = sphi 0, %s246
      %s266 = sphi 0, %s268
      %s269 = sphi 0, %s266
      %s270 = sphi 0, %s269
      %s286 = sphi 0, %s270
    $region4: #{net_forward.1} parent=1 // loop_header_branch
      %23 = sbr.rel (%p21) target = $region8
    $region5: #{net_forward.1} parent=1 // loop_body
      %s25 = ssub.s32 %s20, 1
      %s26 = ssub.s32 %s20, 2
      %s27 = sadd.s32 %s20, 1
      %s28 = ssub.s32 %s20, %s27
      %p29 = scmp.eq.s32.totalorder %s28, 0
      %s31 = sadd.s32 %s30, 1
      %s32 = scalar_select %p29, %s30, %s31
      %p35 = pneg %p29
      %p36 = scmp.eq.s32.totalorder %s20, 1
      %p37 = por %p35, %p36
      %p38 = scmp.ne.s32.totalorder %s30, %s33
      %p39 = scmp.eq.s32.totalorder %s20, 0
      %p40 = por %p38, %p39
      %p41 = scmp.ne.s32.totalorder %s30, %s33
      %p42 = scmp.eq.s32.totalorder %s25, 1
      %p43 = por %p41, %p42
      %p44 = scmp.ne.s32.totalorder %s33, %s34
      %p45 = scmp.eq.s32.totalorder %s25, 0
      %p46 = por %p44, %p45
      %p47 = scmp.ne.s32.totalorder %s33, %s34
      %p48 = scmp.eq.s32.totalorder %s26, 1
      %p49 = por %p47, %p48
      %p51 = scmp.ne.s32.totalorder %s34, %s50
      %p52 = scmp.eq.s32.totalorder %s26, 0
      %p53 = por %p51, %p52
      %s55 = sadd.s32 %s54, 1
      %p58 = scmp.eq.s32.totalorder %s20, 1
      %p59 = scmp.ne.s32.totalorder %s54, %s56
      %p60 = scmp.eq.s32.totalorder %s20, 0
      %p61 = por %p59, %p60
      %p62 = scmp.ne.s32.totalorder %s54, %s56
      %p63 = scmp.eq.s32.totalorder %s25, 1
      %p64 = por %p62, %p63
      %p65 = scmp.ne.s32.totalorder %s56, %s57
      %p66 = scmp.eq.s32.totalorder %s25, 0
      %p67 = por %p65, %p66
      %p68 = scmp.ne.s32.totalorder %s56, %s57
      %p69 = scmp.eq.s32.totalorder %s26, 1
      %p70 = por %p68, %p69
      %p72 = scmp.ne.s32.totalorder %s57, %s71
      %p73 = scmp.eq.s32.totalorder %s26, 0
      %p74 = por %p72, %p73
      %s76 = sadd.s32 %s75, 1
      %p79 = scmp.eq.s32.totalorder %s20, 1
      %p80 = scmp.ne.s32.totalorder %s75, %s77
      %p81 = scmp.eq.s32.totalorder %s20, 0
      %p82 = por %p80, %p81
      %p83 = scmp.ne.s32.totalorder %s75, %s77
      %p84 = scmp.eq.s32.totalorder %s25, 1
      %p85 = por %p83, %p84
      %p86 = scmp.ne.s32.totalorder %s77, %s78
      %p87 = scmp.eq.s32.totalorder %s25, 0
      %p88 = por %p86, %p87
      %p89 = scmp.ne.s32.totalorder %s77, %s78
      %p90 = scmp.eq.s32.totalorder %s26, 1
      %p91 = por %p89, %p90
      %p93 = scmp.ne.s32.totalorder %s78, %s92
      %p94 = scmp.eq.s32.totalorder %s26, 0
      %p95 = por %p93, %p94
      %s97 = sadd.s32 %s96, 1
      %p100 = scmp.eq.s32.totalorder %s20, 1
      %p101 = scmp.ne.s32.totalorder %s96, %s98
      %p102 = scmp.eq.s32.totalorder %s20, 0
      %p103 = por %p101, %p102
      %p104 = scmp.ne.s32.totalorder %s96, %s98
      %p105 = scmp.eq.s32.totalorder %s25, 1
      %p106 = por %p104, %p105
      %p107 = scmp.ne.s32.totalorder %s98, %s99
      %p108 = scmp.eq.s32.totalorder %s25, 0
      %p109 = por %p107, %p108
      %p110 = scmp.ne.s32.totalorder %s98, %s99
      %p111 = scmp.eq.s32.totalorder %s26, 1
      %p112 = por %p110, %p111
      %p114 = scmp.ne.s32.totalorder %s99, %s113
      %p115 = scmp.eq.s32.totalorder %s26, 0
      %p116 = por %p114, %p115
      %s118 = sadd.s32 %s117, 1
      %p121 = scmp.eq.s32.totalorder %s20, 1
      %p122 = scmp.ne.s32.totalorder %s117, %s119
      %p123 = scmp.eq.s32.totalorder %s20, 0
      %p124 = por %p122, %p123
      %p125 = scmp.ne.s32.totalorder %s117, %s119
      %p126 = scmp.eq.s32.totalorder %s25, 1
      %p127 = por %p125, %p126
      %p128 = scmp.ne.s32.totalorder %s119, %s120
      %p129 = scmp.eq.s32.totalorder %s25, 0
      %p130 = por %p128, %p129
      %p131 = scmp.ne.s32.totalorder %s119, %s120
      %p132 = scmp.eq.s32.totalorder %s26, 1
      %p133 = por %p131, %p132
      %p135 = scmp.ne.s32.totalorder %s120, %s134
      %p136 = scmp.eq.s32.totalorder %s26, 0
      %p137 = por %p135, %p136
      %s139 = sadd.s32 %s138, 1
      %p142 = scmp.eq.s32.totalorder %s20, 1
      %p143 = scmp.ne.s32.totalorder %s138, %s140
      %p144 = scmp.eq.s32.totalorder %s20, 0
      %p145 = por %p143, %p144
      %p146 = scmp.ne.s32.totalorder %s138, %s140
      %p147 = scmp.eq.s32.totalorder %s25, 1
      %p148 = por %p146, %p147
      %p149 = scmp.ne.s32.totalorder %s140, %s141
      %p150 = scmp.eq.s32.totalorder %s25, 0
      %p151 = por %p149, %p150
      %p152 = scmp.ne.s32.totalorder %s140, %s141
      %p153 = scmp.eq.s32.totalorder %s26, 1
      %p154 = por %p152, %p153
      %p156 = scmp.ne.s32.totalorder %s141, %s155
      %p157 = scmp.eq.s32.totalorder %s26, 0
      %p158 = por %p156, %p157
      %s160 = sadd.s32 %s159, 1
      %p163 = scmp.eq.s32.totalorder %s20, 1
      %p164 = scmp.ne.s32.totalorder %s159, %s161
      %p165 = scmp.eq.s32.totalorder %s20, 0
      %p166 = por %p164, %p165
      %p167 = scmp.ne.s32.totalorder %s159, %s161
      %p168 = scmp.eq.s32.totalorder %s25, 1
      %p169 = por %p167, %p168
      %p170 = scmp.ne.s32.totalorder %s161, %s162
      %p171 = scmp.eq.s32.totalorder %s25, 0
      %p172 = por %p170, %p171
      %p173 = scmp.ne.s32.totalorder %s161, %s162
      %p174 = scmp.eq.s32.totalorder %s26, 1
      %p175 = por %p173, %p174
      %p177 = scmp.ne.s32.totalorder %s162, %s176
      %p178 = scmp.eq.s32.totalorder %s26, 0
      %p179 = por %p177, %p178
      %s181 = sadd.s32 %s180, 1
      %p184 = scmp.eq.s32.totalorder %s20, 1
      %p185 = scmp.ne.s32.totalorder %s180, %s182
      %p186 = scmp.eq.s32.totalorder %s20, 0
      %p187 = por %p185, %p186
      %p188 = scmp.ne.s32.totalorder %s180, %s182
      %p189 = scmp.eq.s32.totalorder %s25, 1
      %p190 = por %p188, %p189
      %p191 = scmp.ne.s32.totalorder %s182, %s183
      %p192 = scmp.eq.s32.totalorder %s25, 0
      %p193 = por %p191, %p192
      %p194 = scmp.ne.s32.totalorder %s182, %s183
      %p195 = scmp.eq.s32.totalorder %s26, 1
      %p196 = por %p194, %p195
      %p198 = scmp.ne.s32.totalorder %s183, %s197
      %p199 = scmp.eq.s32.totalorder %s26, 0
      %p200 = por %p198, %p199
      %s202 = sadd.s32 %s201, 1
      %p205 = scmp.eq.s32.totalorder %s20, 1
      %p206 = scmp.ne.s32.totalorder %s201, %s203
      %p207 = scmp.eq.s32.totalorder %s20, 0
      %p208 = por %p206, %p207
      %p209 = scmp.ne.s32.totalorder %s201, %s203
      %p210 = scmp.eq.s32.totalorder %s25, 1
      %p211 = por %p209, %p210
      %p212 = scmp.ne.s32.totalorder %s203, %s204
      %p213 = scmp.eq.s32.totalorder %s25, 0
      %p214 = por %p212, %p213
      %p215 = scmp.ne.s32.totalorder %s203, %s204
      %p216 = scmp.eq.s32.totalorder %s26, 1
      %p217 = por %p215, %p216
      %p219 = scmp.ne.s32.totalorder %s204, %s218
      %p220 = scmp.eq.s32.totalorder %s26, 0
      %p221 = por %p219, %p220
      %s223 = sadd.s32 %s222, 1
      %p226 = scmp.eq.s32.totalorder %s20, 1
      %p227 = scmp.ne.s32.totalorder %s222, %s224
      %p228 = scmp.eq.s32.totalorder %s20, 0
      %p229 = por %p227, %p228
      %p230 = scmp.ne.s32.totalorder %s222, %s224
      %p231 = scmp.eq.s32.totalorder %s25, 1
      %p232 = por %p230, %p231
      %p233 = scmp.ne.s32.totalorder %s224, %s225
      %p234 = scmp.eq.s32.totalorder %s25, 0
      %p235 = por %p233, %p234
      %p236 = scmp.ne.s32.totalorder %s224, %s225
      %p237 = scmp.eq.s32.totalorder %s26, 1
      %p238 = por %p236, %p237
      %p240 = scmp.ne.s32.totalorder %s225, %s239
      %p241 = scmp.eq.s32.totalorder %s26, 0
      %p242 = por %p240, %p241
      %s244 = sadd.s32 %s243, 1
      %p247 = scmp.eq.s32.totalorder %s20, 1
      %p248 = scmp.ne.s32.totalorder %s243, %s245
      %p249 = scmp.eq.s32.totalorder %s20, 0
      %p250 = por %p248, %p249
      %p251 = scmp.ne.s32.totalorder %s243, %s245
      %p252 = scmp.eq.s32.totalorder %s25, 1
      %p253 = por %p251, %p252
      %p254 = scmp.ne.s32.totalorder %s245, %s246
      %p255 = scmp.eq.s32.totalorder %s25, 0
      %p256 = por %p254, %p255
      %p257 = scmp.ne.s32.totalorder %s245, %s246
      %p258 = scmp.eq.s32.totalorder %s26, 1
      %p259 = por %p257, %p258
      %p261 = scmp.ne.s32.totalorder %s246, %s260
      %p262 = scmp.eq.s32.totalorder %s26, 0
      %p263 = por %p261, %p262
      %s264 = ssub.s32 %s20, %s27
      %p265 = scmp.eq.s32.totalorder %s264, 0
      %s267 = sadd.s32 %s266, 1
      %s268 = scalar_select %p265, %s266, %s267
      %p271 = pneg %p265
      %p272 = scmp.eq.s32.totalorder %s20, 1
      %p273 = por %p271, %p272
      %p274 = scmp.ne.s32.totalorder %s266, %s269
      %p275 = scmp.eq.s32.totalorder %s20, 0
      %p276 = por %p274, %p275
      %p277 = scmp.ne.s32.totalorder %s266, %s269
      %p278 = scmp.eq.s32.totalorder %s25, 1
      %p279 = por %p277, %p278
      %p280 = scmp.ne.s32.totalorder %s269, %s270
      %p281 = scmp.eq.s32.totalorder %s25, 0
      %p282 = por %p280, %p281
      %p283 = scmp.ne.s32.totalorder %s269, %s270
      %p284 = scmp.eq.s32.totalorder %s26, 1
      %p285 = por %p283, %p284
      %p287 = scmp.ne.s32.totalorder %s270, %s286
      %p288 = scmp.eq.s32.totalorder %s26, 0
      %p289 = por %p287, %p288
      %p290 = scmp.le.s32.totalorder 1, %s20
      %p291 = scmp.lt.s32.totalorder %s20, 3
      %p292 = pnand %p290, %p291
      %p293 = pneg %p292
      // Predicated region
      $region9: #{net_forward.1} parent=5 // pred_check
        _
      $region10: #{net_forward.1} parent=5 // pred_check_branch
        %295 = sbr.rel (%p292) target = $region12
      $region11: #{net_forward.1} parent=5 // pred_region
        %s296 = ssub.s32 %s20, 1
        // Predicated region
        $region13: #{net_forward.1} parent=11 // pred_check
          %p297 = pneg %p67
        $region14: #{net_forward.1} parent=11 // pred_check_branch
          %299 = sbr.rel (%p297) target = $region16
        $region15: #{net_forward.1} parent=11 // pred_region
          _
        $region16: #{net_forward.1} parent=11 // pred_fallthru
          _
        // Predicated region
        $region17: #{net_forward.1} parent=11 // pred_check
          %p300 = pneg %p88
        $region18: #{net_forward.1} parent=11 // pred_check_branch
          %302 = sbr.rel (%p300) target = $region20
        $region19: #{net_forward.1} parent=11 // pred_region
          _
        $region20: #{net_forward.1} parent=11 // pred_fallthru
          _
        // Predicated region
        $region21: #{net_forward.1} parent=11 // pred_check
          %p303 = pneg %p109
        $region22: #{net_forward.1} parent=11 // pred_check_branch
          %305 = sbr.rel (%p303) target = $region24
        $region23: #{net_forward.1} parent=11 // pred_region
          _
        $region24: #{net_forward.1} parent=11 // pred_fallthru
          _
        // Predicated region
        $region25: #{net_forward.1} parent=11 // pred_check
          %p306 = pneg %p130
        $region26: #{net_forward.1} parent=11 // pred_check_branch
          %308 = sbr.rel (%p306) target = $region28
        $region27: #{net_forward.1} parent=11 // pred_region
          _
        $region28: #{net_forward.1} parent=11 // pred_fallthru
          _
        // Predicated region
        $region29: #{net_forward.1} parent=11 // pred_check
          %p309 = pneg %p151
        $region30: #{net_forward.1} parent=11 // pred_check_branch
          %311 = sbr.rel (%p309) target = $region32
        $region31: #{net_forward.1} parent=11 // pred_region
          _
        $region32: #{net_forward.1} parent=11 // pred_fallthru
          _
        // Predicated region
        $region33: #{net_forward.1} parent=11 // pred_check
          %p312 = pneg %p172
        $region34: #{net_forward.1} parent=11 // pred_check_branch
          %314 = sbr.rel (%p312) target = $region36
        $region35: #{net_forward.1} parent=11 // pred_region
          _
        $region36: #{net_forward.1} parent=11 // pred_fallthru
          _
        // Predicated region
        $region37: #{net_forward.1} parent=11 // pred_check
          %p315 = pneg %p193
        $region38: #{net_forward.1} parent=11 // pred_check_branch
          %317 = sbr.rel (%p315) target = $region40
        $region39: #{net_forward.1} parent=11 // pred_region
          _
        $region40: #{net_forward.1} parent=11 // pred_fallthru
          _
        // Predicated region
        $region41: #{net_forward.1} parent=11 // pred_check
          %p318 = pneg %p214
        $region42: #{net_forward.1} parent=11 // pred_check_branch
          %320 = sbr.rel (%p318) target = $region44
        $region43: #{net_forward.1} parent=11 // pred_region
          _
        $region44: #{net_forward.1} parent=11 // pred_fallthru
          _
        // Predicated region
        $region45: #{net_forward.1} parent=11 // pred_check
          %p321 = pneg %p235
        $region46: #{net_forward.1} parent=11 // pred_check_branch
          %323 = sbr.rel (%p321) target = $region48
        $region47: #{net_forward.1} parent=11 // pred_region
          _
        $region48: #{net_forward.1} parent=11 // pred_fallthru
          _
        // Predicated region
        $region49: #{net_forward.1} parent=11 // pred_check
          %p324 = pneg %p256
        $region50: #{net_forward.1} parent=11 // pred_check_branch
          %326 = sbr.rel (%p324) target = $region52
        $region51: #{net_forward.1} parent=11 // pred_region
          _
        $region52: #{net_forward.1} parent=11 // pred_fallthru
          _
      $region12: #{net_forward.1} parent=5 // pred_fallthru
        _
      %p327 = scmp.lt.s32.totalorder %s20, 2
      // Predicated region
      $region53: #{net_forward.1} parent=5 // pred_check
        %p328 = pneg %p327
      $region54: #{net_forward.1} parent=5 // pred_check_branch
        %330 = sbr.rel (%p328) target = $region56
      $region55: #{net_forward.1} parent=5 // pred_region
        // Predicated region
        $region57: #{net_forward.1} parent=55 // pred_check
          %p331 = pneg %p40
        $region58: #{net_forward.1} parent=55 // pred_check_branch
          %333 = sbr.rel (%p331) target = $region60
        $region59: #{net_forward.1} parent=55 // pred_region
          %p334 = scmp.lt.s32.totalorder %s20, 1
          %s335 = scalar_select %p334, %s20, 1
          %s336 = smul.addr %s335, 4
          %s337 = smul.addr %s336, 8
          %s338 = scalar_lea.vmem %s0, %s337
        $region60: #{net_forward.1} parent=55 // pred_fallthru
          _
      $region56: #{net_forward.1} parent=5 // pred_fallthru
        _
      %p339 = scmp.le.s32.totalorder 1, %s20
      %p340 = scmp.lt.s32.totalorder %s20, 3
      %p341 = pnand %p339, %p340
      %p342 = pneg %p341
      // Predicated region
      $region61: #{net_forward.1} parent=5 // pred_check
        _
      $region62: #{net_forward.1} parent=5 // pred_check_branch
        %344 = sbr.rel (%p341) target = $region64
      $region63: #{net_forward.1} parent=5 // pred_region
        %s345 = ssub.s32 %s20, 1
        %p346 = scmp.lt.s32.totalorder %s25, 1
        %s347 = scalar_select %p346, %s25, 1
        %s348 = smul.addr %s347, 4
        %s349 = smul.addr %s348, 8
        %s350 = scalar_lea.vmem %s0, %s349
        %p351 = pneg %p46
        %p352 = pneg %p43
        %p353 = pneg %p67
        %p354 = pneg %p64
        %p355 = pneg %p88
        %p356 = pneg %p85
        %p357 = pneg %p109
        %p358 = pneg %p106
        %p359 = pneg %p130
        %p360 = pneg %p127
        %p361 = pneg %p151
        %p362 = pneg %p148
        %p363 = pneg %p172
        %p364 = pneg %p169
        %p365 = pneg %p193
        %p366 = pneg %p190
        %p367 = pneg %p214
        %p368 = pneg %p211
        %p369 = pneg %p235
        %p370 = pneg %p232
        %p371 = pneg %p256
        %p372 = pneg %p253
        %p373 = pneg %p282
        %p374 = pneg %p279
        %s375 = sand.u32 %s269, 1
        %s376 = scalar_lea.sflag [#allocation3], %s375
        %s377 = sand.u32 %s269, 1
        %s378 = scalar_lea.vmem [#allocation2], %s377
        %p379 = scmp.lt.s32.totalorder %s25, 1
        %s380 = scalar_select %p379, %s25, 1
        %s381 = smul.addr %s380, 4
        %s382 = smul.addr %s381, 8
        %s383 = scalar_lea.vmem %s0, %s382
        %v384 = vld [vmem:[%s383] sm:$0xff]
        %v385 = vld [vmem:[%s383 + $0x8] sm:$0xff]
        %v386 = vld [vmem:[%s383 + $0x10] sm:$0xff]
        %v387 = vld [vmem:[%s383 + $0x18] sm:$0xff]
        %v388 = vld [vmem:[%s1] sm:$0xff]
        %v389 = vld [vmem:[%s1 + $0x8] sm:$0xff]
        %v390 = vld [vmem:[%s1 + $0x10] sm:$0xff]
        %v391 = vld [vmem:[%s1 + $0x18] sm:$0xff]
        %v392 = vld [vmem:[%s1 + $0x20] sm:$0xff]
        %v393 = vld [vmem:[%s1 + $0x28] sm:$0xff]
        %v394 = vld [vmem:[%s1 + $0x30] sm:$0xff]
        %v395 = vld [vmem:[%s1 + $0x38] sm:$0xff]
        %s396 = scalar_lea.vmem %s1, 64
        %v397 = vld [vmem:[%s396] sm:$0xff]
        %v398 = vld [vmem:[%s396 + $0x8] sm:$0xff]
        %v399 = vld [vmem:[%s396 + $0x10] sm:$0xff]
        %v400 = vld [vmem:[%s396 + $0x18] sm:$0xff]
        %v401 = vld [vmem:[%s396 + $0x20] sm:$0xff]
        %v402 = vld [vmem:[%s396 + $0x28] sm:$0xff]
        %v403 = vld [vmem:[%s396 + $0x30] sm:$0xff]
        %v404 = vld [vmem:[%s396 + $0x38] sm:$0xff]
        %vm409 = vcmask 1046528
        %v410 = vrot.slane %v384, 1
        %v411 = vrot.slane %v385, 1
        %v412 = vsel %vm409, %v410, %v411
        %v413 = vrot.slane %v386, 1
        %v414 = vsel %vm409, %v411, %v413
        %v415 = vrot.slane %v387, 1
        %v416 = vsel %vm409, %v413, %v415
        %vm417 = vcmask 261120
        %v418 = vsel %vm417, %v412, 0
        %v420 = vsel %vm417, %v414, 0
        %v422 = vsel %vm417, %v416, 0
        %v424 = vsel %vm417, %v415, 0
        %426 = vmatprep.subr.mxu0 %v398
        %427 = vmatpush1.msra.mxu0 %v397
        %428 = vmatprep.subr.mxu0 %v400
        %429 = vmatpush1.msra.mxu0 %v399
        %430 = vmatprep.subr.mxu0 %v402
        %431 = vmatpush1.msra.mxu0 %v401
        %432 = vmatprep.subr.mxu0 %v404
        %433 = vmatpush1.msra.mxu0 %v403
        %434 = vmatprep.subr.mxu0 0.0
        %435 = vmatpush1.msra.mxu0 0.0
        %436 = vmatprep.subr.mxu0 0.0
        %437 = vmatpush1.msra.mxu0 0.0
        %438 = vmatprep.subr.mxu0 0.0
        %439 = vmatpush1.msra.mxu0 0.0
        %440 = vmatprep.subr.mxu0 0.0
        %441 = vmatpush1.msra.mxu0 0.0
        %442 = vmatprep.subr.mxu0 0.0
        %443 = vmatpush1.msra.mxu0 0.0
        %444 = vmatprep.subr.mxu0 0.0
        %445 = vmatpush1.msra.mxu0 0.0
        %446 = vmatprep.subr.mxu0 0.0
        %447 = vmatpush1.msra.mxu0 0.0
        %448 = vmatprep.subr.mxu0 0.0
        %449 = vmatpush1.msra.mxu0 0.0
        %450 = vmatprep.subr.mxu0 0.0
        %451 = vmatpush1.msra.mxu0 0.0
        %452 = vmatprep.subr.mxu0 0.0
        %453 = vmatpush1.msra.mxu0 0.0
        %454 = vmatprep.subr.mxu0 0.0
        %455 = vmatpush1.msra.mxu0 0.0
        %456 = vmatprep.subr.mxu0 0.0
        %457 = vmatpush1.msra.mxu0 0.0
        %458 = vmatprep.subr.mxu0 0.0
        %459 = vmatpush1.msra.mxu0 0.0
        %460 = vmatprep.subr.mxu0 0.0
        %461 = vmatpush1.msra.mxu0 0.0
        %462 = vmatprep.subr.mxu0 0.0
        %463 = vmatpush1.msra.mxu0 0.0
        %464 = vmatprep.subr.mxu0 0.0
        %465 = vmatpush1.msra.mxu0 0.0
        %466 = vmatprep.subr.mxu0 0.0
        %467 = vmatpush1.msra.mxu0 0.0
        %468 = vmatprep.subr.mxu0 0.0
        %469 = vmatpush1.msra.mxu0 0.0
        %470 = vmatprep.subr.mxu0 0.0
        %471 = vmatpush1.msra.mxu0 0.0
        %472 = vmatprep.subr.mxu0 0.0
        %473 = vmatpush1.msra.mxu0 0.0
        %474 = vmatprep.subr.mxu0 0.0
        %475 = vmatpush1.msra.mxu0 0.0
        %476 = vmatprep.subr.mxu0 0.0
        %477 = vmatpush1.msra.mxu0 0.0
        %478 = vmatprep.subr.mxu0 0.0
        %479 = vmatpush1.msra.mxu0 0.0
        %480 = vmatprep.subr.mxu0 0.0
        %481 = vmatpush1.msra.mxu0 0.0
        %482 = vmatprep.subr.mxu0 0.0
        %483 = vmatpush1.msra.mxu0 0.0
        %484 = vmatprep.subr.mxu0 0.0
        %485 = vmatpush1.msra.mxu0 0.0
        %486 = vmatprep.subr.mxu0 0.0
        %487 = vmatpush1.msra.mxu0 0.0
        %488 = vmatprep.subr.mxu0 0.0
        %489 = vmatpush1.msra.mxu0 0.0
        %490 = vmatprep.mubr.f32.mxu0 0.0
        %491 = vmatmul.mubr.f32.gmra.mrb[0].mxu0 %v418
        %v492 = vpop.f32.mrb[0].mxu0
        %v493 = vadd.f32 0.0, %v492
        %v494 = vpop.f32.mrb[0].mxu0
        %v495 = vadd.f32 0.0, %v494
        %496 = vmatprep.mubr.f32.mxu0 0.0
        %497 = vmatmul.mubr.f32.gmra.mrb[0].mxu0 %v420
        %v498 = vpop.f32.mrb[0].mxu0
        %v499 = vadd.f32 0.0, %v498
        %v500 = vpop.f32.mrb[0].mxu0
        %v501 = vadd.f32 0.0, %v500
        %502 = vmatprep.mubr.f32.mxu0 0.0
        %503 = vmatmul.mubr.f32.gmra.mrb[0].mxu0 %v422
        %v504 = vpop.f32.mrb[0].mxu0
        %v505 = vadd.f32 0.0, %v504
        %v506 = vpop.f32.mrb[0].mxu0
        %v507 = vadd.f32 0.0, %v506
        %508 = vmatprep.mubr.f32.mxu0 0.0
        %509 = vmatmul.mubr.f32.gmra.mrb[0].mxu0 %v424
        %v510 = vpop.f32.mrb[0].mxu0
        %v511 = vadd.f32 0.0, %v510
        %v512 = vpop.f32.mrb[0].mxu0
        %v513 = vadd.f32 0.0, %v512
        %514 = vdwg.mxu0
        %v515 = vsel %vm417, %v384, 0
        %v517 = vsel %vm417, %v385, 0
        %v519 = vsel %vm417, %v386, 0
        %v521 = vsel %vm417, %v387, 0
        %523 = vmatprep.subr.mxu0 %v389
        %524 = vmatpush1.msra.mxu0 %v388
        %525 = vmatprep.subr.mxu0 %v391
        %526 = vmatpush1.msra.mxu0 %v390
        %527 = vmatprep.subr.mxu0 %v393
        %528 = vmatpush1.msra.mxu0 %v392
        %529 = vmatprep.subr.mxu0 %v395
        %530 = vmatpush1.msra.mxu0 %v394
        %531 = vmatprep.subr.mxu0 0.0
        %532 = vmatpush1.msra.mxu0 0.0
        %533 = vmatprep.subr.mxu0 0.0
        %534 = vmatpush1.msra.mxu0 0.0
        %535 = vmatprep.subr.mxu0 0.0
        %536 = vmatpush1.msra.mxu0 0.0
        %537 = vmatprep.subr.mxu0 0.0
        %538 = vmatpush1.msra.mxu0 0.0
        %539 = vmatprep.subr.mxu0 0.0
        %540 = vmatpush1.msra.mxu0 0.0
        %541 = vmatprep.subr.mxu0 0.0
        %542 = vmatpush1.msra.mxu0 0.0
        %543 = vmatprep.subr.mxu0 0.0
        %544 = vmatpush1.msra.mxu0 0.0
        %545 = vmatprep.subr.mxu0 0.0
        %546 = vmatpush1.msra.mxu0 0.0
        %547 = vmatprep.subr.mxu0 0.0
        %548 = vmatpush1.msra.mxu0 0.0
        %549 = vmatprep.subr.mxu0 0.0
        %550 = vmatpush1.msra.mxu0 0.0
        %551 = vmatprep.subr.mxu0 0.0
        %552 = vmatpush1.msra.mxu0 0.0
        %553 = vmatprep.subr.mxu0 0.0
        %554 = vmatpush1.msra.mxu0 0.0
        %555 = vmatprep.subr.mxu0 0.0
        %556 = vmatpush1.msra.mxu0 0.0
        %557 = vmatprep.subr.mxu0 0.0
        %558 = vmatpush1.msra.mxu0 0.0
        %559 = vmatprep.subr.mxu0 0.0
        %560 = vmatpush1.msra.mxu0 0.0
        %561 = vmatprep.subr.mxu0 0.0
        %562 = vmatpush1.msra.mxu0 0.0
        %563 = vmatprep.subr.mxu0 0.0
        %564 = vmatpush1.msra.mxu0 0.0
        %565 = vmatprep.subr.mxu0 0.0
        %566 = vmatpush1.msra.mxu0 0.0
        %567 = vmatprep.subr.mxu0 0.0
        %568 = vmatpush1.msra.mxu0 0.0
        %569 = vmatprep.subr.mxu0 0.0
        %570 = vmatpush1.msra.mxu0 0.0
        %571 = vmatprep.subr.mxu0 0.0
        %572 = vmatpush1.msra.mxu0 0.0
        %573 = vmatprep.subr.mxu0 0.0
        %574 = vmatpush1.msra.mxu0 0.0
        %575 = vmatprep.subr.mxu0 0.0
        %576 = vmatpush1.msra.mxu0 0.0
        %577 = vmatprep.subr.mxu0 0.0
        %578 = vmatpush1.msra.mxu0 0.0
        %579 = vmatprep.subr.mxu0 0.0
        %580 = vmatpush1.msra.mxu0 0.0
        %581 = vmatprep.subr.mxu0 0.0
        %582 = vmatpush1.msra.mxu0 0.0
        %583 = vmatprep.subr.mxu0 0.0
        %584 = vmatpush1.msra.mxu0 0.0
        %585 = vmatprep.subr.mxu0 0.0
        %586 = vmatpush1.msra.mxu0 0.0
        %587 = vmatprep.mubr.f32.mxu0 0.0
        %588 = vmatmul.mubr.f32.gmra.mrb[0].mxu0 %v515
        %v589 = vpop.f32.mrb[0].mxu0
        %v590 = vadd.f32 %v493, %v589
        %v591 = vpop.f32.mrb[0].mxu0
        %v592 = vadd.f32 %v495, %v591
        %593 = vmatprep.mubr.f32.mxu0 0.0
        %594 = vmatmul.mubr.f32.gmra.mrb[0].mxu0 %v517
        %v595 = vpop.f32.mrb[0].mxu0
        %v596 = vadd.f32 %v499, %v595
        %v597 = vpop.f32.mrb[0].mxu0
        %v598 = vadd.f32 %v501, %v597
        %599 = vmatprep.mubr.f32.mxu0 0.0
        %600 = vmatmul.mubr.f32.gmra.mrb[0].mxu0 %v519
        %v601 = vpop.f32.mrb[0].mxu0
        %v602 = vadd.f32 %v505, %v601
        %v603 = vpop.f32.mrb[0].mxu0
        %v604 = vadd.f32 %v507, %v603
        %605 = vmatprep.mubr.f32.mxu0 0.0
        %606 = vmatmul.mubr.f32.gmra.mrb[0].mxu0 %v521
        %v607 = vpop.f32.mrb[0].mxu0
        %v608 = vadd.f32 %v511, %v607
        %v609 = vpop.f32.mrb[0].mxu0
        %v610 = vadd.f32 %v513, %v609
        %611 = vdwg.mxu0
        %s612 = scalar_lea.vmem %s1, 128
        %v613 = vld [vmem:[%s612] sm:$0xff]
        %v614 = vld [vmem:[%s612 + $0x8] sm:$0xff]
        %v615 = vld [vmem:[%s612 + $0x10] sm:$0xff]
        %v616 = vld [vmem:[%s612 + $0x18] sm:$0xff]
        %v617 = vld [vmem:[%s612 + $0x20] sm:$0xff]
        %v618 = vld [vmem:[%s612 + $0x28] sm:$0xff]
        %v619 = vld [vmem:[%s612 + $0x30] sm:$0xff]
        %v620 = vld [vmem:[%s612 + $0x38] sm:$0xff]
        %vm621 = vcmask 1045504
        %v622 = vrot.slane %v384, 2
        %v623 = vrot.slane %v385, 2
        %v624 = vsel %vm621, %v622, %v623
        %v625 = vrot.slane %v386, 2
        %v626 = vsel %vm621, %v623, %v625
        %v627 = vrot.slane %v387, 2
        %v628 = vsel %vm621, %v625, %v627
        %v629 = vsel %vm417, %v624, 0
        %v631 = vsel %vm417, %v626, 0
        %v633 = vsel %vm417, %v628, 0
        %v635 = vsel %vm417, %v627, 0
        %637 = vmatprep.subr.mxu0 %v614
        %638 = vmatpush1.msra.mxu0 %v613
        %639 = vmatprep.subr.mxu0 %v616
        %640 = vmatpush1.msra.mxu0 %v615
        %641 = vmatprep.subr.mxu0 %v618
        %642 = vmatpush1.msra.mxu0 %v617
        %643 = vmatprep.subr.mxu0 %v620
        %644 = vmatpush1.msra.mxu0 %v619
        %645 = vmatprep.subr.mxu0 0.0
        %646 = vmatpush1.msra.mxu0 0.0
        %647 = vmatprep.subr.mxu0 0.0
        %648 = vmatpush1.msra.mxu0 0.0
        %649 = vmatprep.subr.mxu0 0.0
        %650 = vmatpush1.msra.mxu0 0.0
        %651 = vmatprep.subr.mxu0 0.0
        %652 = vmatpush1.msra.mxu0 0.0
        %653 = vmatprep.subr.mxu0 0.0
        %654 = vmatpush1.msra.mxu0 0.0
        %655 = vmatprep.subr.mxu0 0.0
        %656 = vmatpush1.msra.mxu0 0.0
        %657 = vmatprep.subr.mxu0 0.0
        %658 = vmatpush1.msra.mxu0 0.0
        %659 = vmatprep.subr.mxu0 0.0
        %660 = vmatpush1.msra.mxu0 0.0
        %661 = vmatprep.subr.mxu0 0.0
        %662 = vmatpush1.msra.mxu0 0.0
        %663 = vmatprep.subr.mxu0 0.0
        %664 = vmatpush1.msra.mxu0 0.0
        %665 = vmatprep.subr.mxu0 0.0
        %666 = vmatpush1.msra.mxu0 0.0
        %667 = vmatprep.subr.mxu0 0.0
        %668 = vmatpush1.msra.mxu0 0.0
        %669 = vmatprep.subr.mxu0 0.0
        %670 = vmatpush1.msra.mxu0 0.0
        %671 = vmatprep.subr.mxu0 0.0
        %672 = vmatpush1.msra.mxu0 0.0
        %673 = vmatprep.subr.mxu0 0.0
        %674 = vmatpush1.msra.mxu0 0.0
        %675 = vmatprep.subr.mxu0 0.0
        %676 = vmatpush1.msra.mxu0 0.0
        %677 = vmatprep.subr.mxu0 0.0
        %678 = vmatpush1.msra.mxu0 0.0
        %679 = vmatprep.subr.mxu0 0.0
        %680 = vmatpush1.msra.mxu0 0.0
        %681 = vmatprep.subr.mxu0 0.0
        %682 = vmatpush1.msra.mxu0 0.0
        %683 = vmatprep.subr.mxu0 0.0
        %684 = vmatpush1.msra.mxu0 0.0
        %685 = vmatprep.subr.mxu0 0.0
        %686 = vmatpush1.msra.mxu0 0.0
        %687 = vmatprep.subr.mxu0 0.0
        %688 = vmatpush1.msra.mxu0 0.0
        %689 = vmatprep.subr.mxu0 0.0
        %690 = vmatpush1.msra.mxu0 0.0
        %691 = vmatprep.subr.mxu0 0.0
        %692 = vmatpush1.msra.mxu0 0.0
        %693 = vmatprep.subr.mxu0 0.0
        %694 = vmatpush1.msra.mxu0 0.0
        %695 = vmatprep.subr.mxu0 0.0
        %696 = vmatpush1.msra.mxu0 0.0
        %697 = vmatprep.subr.mxu0 0.0
        %698 = vmatpush1.msra.mxu0 0.0
        %699 = vmatprep.subr.mxu0 0.0
        %700 = vmatpush1.msra.mxu0 0.0
        %701 = vmatprep.mubr.f32.mxu0 0.0
        %702 = vmatmul.mubr.f32.gmra.mrb[0].mxu0 %v629
        %v703 = vpop.f32.mrb[0].mxu0
        %v704 = vadd.f32 0.0, %v703
        %v705 = vpop.f32.mrb[0].mxu0
        %v706 = vadd.f32 0.0, %v705
        %707 = vmatprep.mubr.f32.mxu0 0.0
        %708 = vmatmul.mubr.f32.gmra.mrb[0].mxu0 %v631
        %v709 = vpop.f32.mrb[0].mxu0
        %v710 = vadd.f32 0.0, %v709
        %v711 = vpop.f32.mrb[0].mxu0
        %v712 = vadd.f32 0.0, %v711
        %713 = vmatprep.mubr.f32.mxu0 0.0
        %714 = vmatmul.mubr.f32.gmra.mrb[0].mxu0 %v633
        %v715 = vpop.f32.mrb[0].mxu0
        %v716 = vadd.f32 0.0, %v715
        %v717 = vpop.f32.mrb[0].mxu0
        %v718 = vadd.f32 0.0, %v717
        %719 = vmatprep.mubr.f32.mxu0 0.0
        %720 = vmatmul.mubr.f32.gmra.mrb[0].mxu0 %v635
        %v721 = vpop.f32.mrb[0].mxu0
        %v722 = vadd.f32 0.0, %v721
        %v723 = vpop.f32.mrb[0].mxu0
        %v724 = vadd.f32 0.0, %v723
        %725 = vdwg.mxu0
        %v726 = vadd.f32 %v590, %v704
        %v727 = vadd.f32 %v592, %v706
        %v728 = vadd.f32 %v596, %v710
        %v729 = vadd.f32 %v598, %v712
        %v730 = vadd.f32 %v602, %v716
        %v731 = vadd.f32 %v604, %v718
        %v732 = vadd.f32 %v608, %v722
        %v733 = vadd.f32 %v610, %v724
        %s734 = scalar_lea.vmem %s1, 192
        %v735 = vld [vmem:[%s734] sm:$0xff]
        %v736 = vld [vmem:[%s734 + $0x8] sm:$0xff]
        %v737 = vld [vmem:[%s734 + $0x10] sm:$0xff]
        %v738 = vld [vmem:[%s734 + $0x18] sm:$0xff]
        %v739 = vld [vmem:[%s734 + $0x20] sm:$0xff]
        %v740 = vld [vmem:[%s734 + $0x28] sm:$0xff]
        %v741 = vld [vmem:[%s734 + $0x30] sm:$0xff]
        %v742 = vld [vmem:[%s734 + $0x38] sm:$0xff]
        %vm743 = vcmask 1044480
        %v744 = vrot.slane %v384, 3
        %v745 = vrot.slane %v385, 3
        %v746 = vsel %vm743, %v744, %v745
        %v747 = vrot.slane %v386, 3
        %v748 = vsel %vm743, %v745, %v747
        %v749 = vrot.slane %v387, 3
        %v750 = vsel %vm743, %v747, %v749
        %v751 = vsel %vm417, %v746, 0
        %v753 = vsel %vm417, %v748, 0
        %v755 = vsel %vm417, %v750, 0
        %v757 = vsel %vm417, %v749, 0
        %759 = vmatprep.subr.mxu0 %v736
        %760 = vmatpush1.msra.mxu0 %v735
        %761 = vmatprep.subr.mxu0 %v738
        %762 = vmatpush1.msra.mxu0 %v737
        %763 = vmatprep.subr.mxu0 %v740
        %764 = vmatpush1.msra.mxu0 %v739
        %765 = vmatprep.subr.mxu0 %v742
        %766 = vmatpush1.msra.mxu0 %v741
        %767 = vmatprep.subr.mxu0 0.0
        %768 = vmatpush1.msra.mxu0 0.0
        %769 = vmatprep.subr.mxu0 0.0
        %770 = vmatpush1.msra.mxu0 0.0
        %771 = vmatprep.subr.mxu0 0.0
        %772 = vmatpush1.msra.mxu0 0.0
        %773 = vmatprep.subr.mxu0 0.0
        %774 = vmatpush1.msra.mxu0 0.0
        %775 = vmatprep.subr.mxu0 0.0
        %776 = vmatpush1.msra.mxu0 0.0
        %777 = vmatprep.subr.mxu0 0.0
        %778 = vmatpush1.msra.mxu0 0.0
        %779 = vmatprep.subr.mxu0 0.0
        %780 = vmatpush1.msra.mxu0 0.0
        %781 = vmatprep.subr.mxu0 0.0
        %782 = vmatpush1.msra.mxu0 0.0
        %783 = vmatprep.subr.mxu0 0.0
        %784 = vmatpush1.msra.mxu0 0.0
        %785 = vmatprep.subr.mxu0 0.0
        %786 = vmatpush1.msra.mxu0 0.0
        %787 = vmatprep.subr.mxu0 0.0
        %788 = vmatpush1.msra.mxu0 0.0
        %789 = vmatprep.subr.mxu0 0.0
        %790 = vmatpush1.msra.mxu0 0.0
        %791 = vmatprep.subr.mxu0 0.0
        %792 = vmatpush1.msra.mxu0 0.0
        %793 = vmatprep.subr.mxu0 0.0
        %794 = vmatpush1.msra.mxu0 0.0
        %795 = vmatprep.subr.mxu0 0.0
        %796 = vmatpush1.msra.mxu0 0.0
        %797 = vmatprep.subr.mxu0 0.0
        %798 = vmatpush1.msra.mxu0 0.0
        %799 = vmatprep.subr.mxu0 0.0
        %800 = vmatpush1.msra.mxu0 0.0
        %801 = vmatprep.subr.mxu0 0.0
        %802 = vmatpush1.msra.mxu0 0.0
        %803 = vmatprep.subr.mxu0 0.0
        %804 = vmatpush1.msra.mxu0 0.0
        %805 = vmatprep.subr.mxu0 0.0
        %806 = vmatpush1.msra.mxu0 0.0
        %807 = vmatprep.subr.mxu0 0.0
        %808 = vmatpush1.msra.mxu0 0.0
        %809 = vmatprep.subr.mxu0 0.0
        %810 = vmatpush1.msra.mxu0 0.0
        %811 = vmatprep.subr.mxu0 0.0
        %812 = vmatpush1.msra.mxu0 0.0
        %813 = vmatprep.subr.mxu0 0.0
        %814 = vmatpush1.msra.mxu0 0.0
        %815 = vmatprep.subr.mxu0 0.0
        %816 = vmatpush1.msra.mxu0 0.0
        %817 = vmatprep.subr.mxu0 0.0
        %818 = vmatpush1.msra.mxu0 0.0
        %819 = vmatprep.subr.mxu0 0.0
        %820 = vmatpush1.msra.mxu0 0.0
        %821 = vmatprep.subr.mxu0 0.0
        %822 = vmatpush1.msra.mxu0 0.0
        %823 = vmatprep.mubr.f32.mxu0 0.0
        %824 = vmatmul.mubr.f32.gmra.mrb[0].mxu0 %v751
        %v825 = vpop.f32.mrb[0].mxu0
        %v826 = vadd.f32 0.0, %v825
        %v827 = vpop.f32.mrb[0].mxu0
        %v828 = vadd.f32 0.0, %v827
        %829 = vmatprep.mubr.f32.mxu0 0.0
        %830 = vmatmul.mubr.f32.gmra.mrb[0].mxu0 %v753
        %v831 = vpop.f32.mrb[0].mxu0
        %v832 = vadd.f32 0.0, %v831
        %v833 = vpop.f32.mrb[0].mxu0
        %v834 = vadd.f32 0.0, %v833
        %835 = vmatprep.mubr.f32.mxu0 0.0
        %836 = vmatmul.mubr.f32.gmra.mrb[0].mxu0 %v755
        %v837 = vpop.f32.mrb[0].mxu0
        %v838 = vadd.f32 0.0, %v837
        %v839 = vpop.f32.mrb[0].mxu0
        %v840 = vadd.f32 0.0, %v839
        %841 = vmatprep.mubr.f32.mxu0 0.0
        %842 = vmatmul.mubr.f32.gmra.mrb[0].mxu0 %v757
        %v843 = vpop.f32.mrb[0].mxu0
        %v844 = vadd.f32 0.0, %v843
        %v845 = vpop.f32.mrb[0].mxu0
        %v846 = vadd.f32 0.0, %v845
        %847 = vdwg.mxu0
        %v848 = vadd.f32 %v726, %v826
        %v849 = vadd.f32 %v727, %v828
        %v850 = vadd.f32 %v728, %v832
        %v851 = vadd.f32 %v729, %v834
        %v852 = vadd.f32 %v730, %v838
        %v853 = vadd.f32 %v731, %v840
        %v854 = vadd.f32 %v732, %v844
        %v855 = vadd.f32 %v733, %v846
        %s856 = scalar_lea.vmem %s1, 256
        %v857 = vld [vmem:[%s856] sm:$0xff]
        %v858 = vld [vmem:[%s856 + $0x8] sm:$0xff]
        %v859 = vld [vmem:[%s856 + $0x10] sm:$0xff]
        %v860 = vld [vmem:[%s856 + $0x18] sm:$0xff]
        %v861 = vld [vmem:[%s856 + $0x20] sm:$0xff]
        %v862 = vld [vmem:[%s856 + $0x28] sm:$0xff]
        %v863 = vld [vmem:[%s856 + $0x30] sm:$0xff]
        %v864 = vld [vmem:[%s856 + $0x38] sm:$0xff]
        %vm865 = vcmask 1043456
        %v866 = vrot.slane %v384, 4
        %v867 = vrot.slane %v385, 4
        %v868 = vsel %vm865, %v866, %v867
        %v869 = vrot.slane %v386, 4
        %v870 = vsel %vm865, %v867, %v869
        %v871 = vrot.slane %v387, 4
        %v872 = vsel %vm865, %v869, %v871
        %v873 = vsel %vm417, %v868, 0
        %v875 = vsel %vm417, %v870, 0
        %v877 = vsel %vm417, %v872, 0
        %v879 = vsel %vm417, %v871, 0
        %881 = vmatprep.subr.mxu0 %v858
        %882 = vmatpush1.msra.mxu0 %v857
        %883 = vmatprep.subr.mxu0 %v860
        %884 = vmatpush1.msra.mxu0 %v859
        %885 = vmatprep.subr.mxu0 %v862
        %886 = vmatpush1.msra.mxu0 %v861
        %887 = vmatprep.subr.mxu0 %v864
        %888 = vmatpush1.msra.mxu0 %v863
        %889 = vmatprep.subr.mxu0 0.0
        %890 = vmatpush1.msra.mxu0 0.0
        %891 = vmatprep.subr.mxu0 0.0
        %892 = vmatpush1.msra.mxu0 0.0
        %893 = vmatprep.subr.mxu0 0.0
        %894 = vmatpush1.msra.mxu0 0.0
        %895 = vmatprep.subr.mxu0 0.0
        %896 = vmatpush1.msra.mxu0 0.0
        %897 = vmatprep.subr.mxu0 0.0
        %898 = vmatpush1.msra.mxu0 0.0
        %899 = vmatprep.subr.mxu0 0.0
        %900 = vmatpush1.msra.mxu0 0.0
        %901 = vmatprep.subr.mxu0 0.0
        %902 = vmatpush1.msra.mxu0 0.0
        %903 = vmatprep.subr.mxu0 0.0
        %904 = vmatpush1.msra.mxu0 0.0
        %905 = vmatprep.subr.mxu0 0.0
        %906 = vmatpush1.msra.mxu0 0.0
        %907 = vmatprep.subr.mxu0 0.0
        %908 = vmatpush1.msra.mxu0 0.0
        %909 = vmatprep.subr.mxu0 0.0
        %910 = vmatpush1.msra.mxu0 0.0
        %911 = vmatprep.subr.mxu0 0.0
        %912 = vmatpush1.msra.mxu0 0.0
        %913 = vmatprep.subr.mxu0 0.0
        %914 = vmatpush1.msra.mxu0 0.0
        %915 = vmatprep.subr.mxu0 0.0
        %916 = vmatpush1.msra.mxu0 0.0
        %917 = vmatprep.subr.mxu0 0.0
        %918 = vmatpush1.msra.mxu0 0.0
        %919 = vmatprep.subr.mxu0 0.0
        %920 = vmatpush1.msra.mxu0 0.0
        %921 = vmatprep.subr.mxu0 0.0
        %922 = vmatpush1.msra.mxu0 0.0
        %923 = vmatprep.subr.mxu0 0.0
        %924 = vmatpush1.msra.mxu0 0.0
        %925 = vmatprep.subr.mxu0 0.0
        %926 = vmatpush1.msra.mxu0 0.0
        %927 = vmatprep.subr.mxu0 0.0
        %928 = vmatpush1.msra.mxu0 0.0
        %929 = vmatprep.subr.mxu0 0.0
        %930 = vmatpush1.msra.mxu0 0.0
        %931 = vmatprep.subr.mxu0 0.0
        %932 = vmatpush1.msra.mxu0 0.0
        %933 = vmatprep.subr.mxu0 0.0
        %934 = vmatpush1.msra.mxu0 0.0
        %935 = vmatprep.subr.mxu0 0.0
        %936 = vmatpush1.msra.mxu0 0.0
        %937 = vmatprep.subr.mxu0 0.0
        %938 = vmatpush1.msra.mxu0 0.0
        %939 = vmatprep.subr.mxu0 0.0
        %940 = vmatpush1.msra.mxu0 0.0
        %941 = vmatprep.subr.mxu0 0.0
        %942 = vmatpush1.msra.mxu0 0.0
        %943 = vmatprep.subr.mxu0 0.0
        %944 = vmatpush1.msra.mxu0 0.0
        %945 = vmatprep.mubr.f32.mxu0 0.0
        %946 = vmatmul.mubr.f32.gmra.mrb[0].mxu0 %v873
        %v947 = vpop.f32.mrb[0].mxu0
        %v948 = vadd.f32 0.0, %v947
        %v949 = vpop.f32.mrb[0].mxu0
        %v950 = vadd.f32 0.0, %v949
        %951 = vmatprep.mubr.f32.mxu0 0.0
        %952 = vmatmul.mubr.f32.gmra.mrb[0].mxu0 %v875
        %v953 = vpop.f32.mrb[0].mxu0
        %v954 = vadd.f32 0.0, %v953
        %v955 = vpop.f32.mrb[0].mxu0
        %v956 = vadd.f32 0.0, %v955
        %957 = vmatprep.mubr.f32.mxu0 0.0
        %958 = vmatmul.mubr.f32.gmra.mrb[0].mxu0 %v877
        %v959 = vpop.f32.mrb[0].mxu0
        %v960 = vadd.f32 0.0, %v959
        %v961 = vpop.f32.mrb[0].mxu0
        %v962 = vadd.f32 0.0, %v961
        %963 = vmatprep.mubr.f32.mxu0 0.0
        %964 = vmatmul.mubr.f32.gmra.mrb[0].mxu0 %v879
        %v965 = vpop.f32.mrb[0].mxu0
        %v966 = vadd.f32 0.0, %v965
        %v967 = vpop.f32.mrb[0].mxu0
        %v968 = vadd.f32 0.0, %v967
        %969 = vdwg.mxu0
        %v970 = vadd.f32 %v848, %v948
        %v971 = vadd.f32 %v849, %v950
        %v972 = vadd.f32 %v850, %v954
        %v973 = vadd.f32 %v851, %v956
        %v974 = vadd.f32 %v852, %v960
        %v975 = vadd.f32 %v853, %v962
        %v976 = vadd.f32 %v854, %v966
        %v977 = vadd.f32 %v855, %v968
        %s978 = scalar_lea.vmem %s1, 320
        %v979 = vld [vmem:[%s978] sm:$0xff]
        %v980 = vld [vmem:[%s978 + $0x8] sm:$0xff]
        %v981 = vld [vmem:[%s978 + $0x10] sm:$0xff]
        %v982 = vld [vmem:[%s978 + $0x18] sm:$0xff]
        %v983 = vld [vmem:[%s978 + $0x20] sm:$0xff]
        %v984 = vld [vmem:[%s978 + $0x28] sm:$0xff]
        %v985 = vld [vmem:[%s978 + $0x30] sm:$0xff]
        %v986 = vld [vmem:[%s978 + $0x38] sm:$0xff]
        %987 = vrot.lane.b32.xlu0 %v384, 96
        %v988 = vpop.permute.xlu0 %987
        %989 = vrot.lane.b32.xlu0 %v385, 96
        %v990 = vpop.permute.xlu0 %989
        %991 = vrot.lane.b32.xlu0 %v386, 96
        %v992 = vpop.permute.xlu0 %991
        %993 = vrot.lane.b32.xlu0 %v387, 96
        %v994 = vpop.permute.xlu0 %993
        %v995 = vsel %vm417, %v988, 0
        %v997 = vsel %vm417, %v990, 0
        %v999 = vsel %vm417, %v992, 0
        %v1001 = vsel %vm417, %v994, 0
        %1003 = vmatprep.subr.mxu0 %v980
        %1004 = vmatpush1.msra.mxu0 %v979
        %1005 = vmatprep.subr.mxu0 %v982
        %1006 = vmatpush1.msra.mxu0 %v981
        %1007 = vmatprep.subr.mxu0 %v984
        %1008 = vmatpush1.msra.mxu0 %v983
        %1009 = vmatprep.subr.mxu0 %v986
        %1010 = vmatpush1.msra.mxu0 %v985
        %1011 = vmatprep.subr.mxu0 0.0
        %1012 = vmatpush1.msra.mxu0 0.0
        %1013 = vmatprep.subr.mxu0 0.0
        %1014 = vmatpush1.msra.mxu0 0.0
        %1015 = vmatprep.subr.mxu0 0.0
        %1016 = vmatpush1.msra.mxu0 0.0
        %1017 = vmatprep.subr.mxu0 0.0
        %1018 = vmatpush1.msra.mxu0 0.0
        %1019 = vmatprep.subr.mxu0 0.0
        %1020 = vmatpush1.msra.mxu0 0.0
        %1021 = vmatprep.subr.mxu0 0.0
        %1022 = vmatpush1.msra.mxu0 0.0
        %1023 = vmatprep.subr.mxu0 0.0
        %1024 = vmatpush1.msra.mxu0 0.0
        %1025 = vmatprep.subr.mxu0 0.0
        %1026 = vmatpush1.msra.mxu0 0.0
        %1027 = vmatprep.subr.mxu0 0.0
        %1028 = vmatpush1.msra.mxu0 0.0
        %1029 = vmatprep.subr.mxu0 0.0
        %1030 = vmatpush1.msra.mxu0 0.0
        %1031 = vmatprep.subr.mxu0 0.0
        %1032 = vmatpush1.msra.mxu0 0.0
        %1033 = vmatprep.subr.mxu0 0.0
        %1034 = vmatpush1.msra.mxu0 0.0
        %1035 = vmatprep.subr.mxu0 0.0
        %1036 = vmatpush1.msra.mxu0 0.0
        %1037 = vmatprep.subr.mxu0 0.0
        %1038 = vmatpush1.msra.mxu0 0.0
        %1039 = vmatprep.subr.mxu0 0.0
        %1040 = vmatpush1.msra.mxu0 0.0
        %1041 = vmatprep.subr.mxu0 0.0
        %1042 = vmatpush1.msra.mxu0 0.0
        %1043 = vmatprep.subr.mxu0 0.0
        %1044 = vmatpush1.msra.mxu0 0.0
        %1045 = vmatprep.subr.mxu0 0.0
        %1046 = vmatpush1.msra.mxu0 0.0
        %1047 = vmatprep.subr.mxu0 0.0
        %1048 = vmatpush1.msra.mxu0 0.0
        %1049 = vmatprep.subr.mxu0 0.0
        %1050 = vmatpush1.msra.mxu0 0.0
        %1051 = vmatprep.subr.mxu0 0.0
        %1052 = vmatpush1.msra.mxu0 0.0
        %1053 = vmatprep.subr.mxu0 0.0
        %1054 = vmatpush1.msra.mxu0 0.0
        %1055 = vmatprep.subr.mxu0 0.0
        %1056 = vmatpush1.msra.mxu0 0.0
        %1057 = vmatprep.subr.mxu0 0.0
        %1058 = vmatpush1.msra.mxu0 0.0
        %1059 = vmatprep.subr.mxu0 0.0
        %1060 = vmatpush1.msra.mxu0 0.0
        %1061 = vmatprep.subr.mxu0 0.0
        %1062 = vmatpush1.msra.mxu0 0.0
        %1063 = vmatprep.subr.mxu0 0.0
        %1064 = vmatpush1.msra.mxu0 0.0
        %1065 = vmatprep.subr.mxu0 0.0
        %1066 = vmatpush1.msra.mxu0 0.0
        %1067 = vmatprep.mubr.f32.mxu0 0.0
        %1068 = vmatmul.mubr.f32.gmra.mrb[0].mxu0 %v995
        %v1069 = vpop.f32.mrb[0].mxu0
        %v1070 = vadd.f32 0.0, %v1069
        %v1071 = vpop.f32.mrb[0].mxu0
        %v1072 = vadd.f32 0.0, %v1071
        %1073 = vmatprep.mubr.f32.mxu0 0.0
        %1074 = vmatmul.mubr.f32.gmra.mrb[0].mxu0 %v997
        %v1075 = vpop.f32.mrb[0].mxu0
        %v1076 = vadd.f32 0.0, %v1075
        %v1077 = vpop.f32.mrb[0].mxu0
        %v1078 = vadd.f32 0.0, %v1077
        %1079 = vmatprep.mubr.f32.mxu0 0.0
        %1080 = vmatmul.mubr.f32.gmra.mrb[0].mxu0 %v999
        %v1081 = vpop.f32.mrb[0].mxu0
        %v1082 = vadd.f32 0.0, %v1081
        %v1083 = vpop.f32.mrb[0].mxu0
        %v1084 = vadd.f32 0.0, %v1083
        %1085 = vmatprep.mubr.f32.mxu0 0.0
        %1086 = vmatmul.mubr.f32.gmra.mrb[0].mxu0 %v1001
        %v1087 = vpop.f32.mrb[0].mxu0
        %v1088 = vadd.f32 0.0, %v1087
        %v1089 = vpop.f32.mrb[0].mxu0
        %v1090 = vadd.f32 0.0, %v1089
        %1091 = vdwg.mxu0
        %v1092 = vadd.f32 %v970, %v1070
        %v1093 = vadd.f32 %v971, %v1072
        %v1094 = vadd.f32 %v972, %v1076
        %v1095 = vadd.f32 %v973, %v1078
        %v1096 = vadd.f32 %v974, %v1082
        %v1097 = vadd.f32 %v975, %v1084
        %v1098 = vadd.f32 %v976, %v1088
        %v1099 = vadd.f32 %v977, %v1090
        %s1100 = scalar_lea.vmem %s1, 384
        %v1101 = vld [vmem:[%s1100] sm:$0xff]
        %v1102 = vld [vmem:[%s1100 + $0x8] sm:$0xff]
        %v1103 = vld [vmem:[%s1100 + $0x10] sm:$0xff]
        %v1104 = vld [vmem:[%s1100 + $0x18] sm:$0xff]
        %v1105 = vld [vmem:[%s1100 + $0x20] sm:$0xff]
        %v1106 = vld [vmem:[%s1100 + $0x28] sm:$0xff]
        %v1107 = vld [vmem:[%s1100 + $0x30] sm:$0xff]
        %v1108 = vld [vmem:[%s1100 + $0x38] sm:$0xff]
        %1109 = vrot.lane.b32.xlu0 %v412, 96
        %v1110 = vpop.permute.xlu0 %1109
        %1111 = vrot.lane.b32.xlu0 %v414, 96
        %v1112 = vpop.permute.xlu0 %1111
        %1113 = vrot.lane.b32.xlu0 %v416, 96
        %v1114 = vpop.permute.xlu0 %1113
        %1115 = vrot.lane.b32.xlu0 %v415, 96
        %v1116 = vpop.permute.xlu0 %1115
        %v1117 = vsel %vm417, %v1110, 0
        %v1119 = vsel %vm417, %v1112, 0
        %v1121 = vsel %vm417, %v1114, 0
        %v1123 = vsel %vm417, %v1116, 0
        %1125 = vmatprep.subr.mxu0 %v1102
        %1126 = vmatpush1.msra.mxu0 %v1101
        %1127 = vmatprep.subr.mxu0 %v1104
        %1128 = vmatpush1.msra.mxu0 %v1103
        %1129 = vmatprep.subr.mxu0 %v1106
        %1130 = vmatpush1.msra.mxu0 %v1105
        %1131 = vmatprep.subr.mxu0 %v1108
        %1132 = vmatpush1.msra.mxu0 %v1107
        %1133 = vmatprep.subr.mxu0 0.0
        %1134 = vmatpush1.msra.mxu0 0.0
        %1135 = vmatprep.subr.mxu0 0.0
        %1136 = vmatpush1.msra.mxu0 0.0
        %1137 = vmatprep.subr.mxu0 0.0
        %1138 = vmatpush1.msra.mxu0 0.0
        %1139 = vmatprep.subr.mxu0 0.0
        %1140 = vmatpush1.msra.mxu0 0.0
        %1141 = vmatprep.subr.mxu0 0.0
        %1142 = vmatpush1.msra.mxu0 0.0
        %1143 = vmatprep.subr.mxu0 0.0
        %1144 = vmatpush1.msra.mxu0 0.0
        %1145 = vmatprep.subr.mxu0 0.0
        %1146 = vmatpush1.msra.mxu0 0.0
        %1147 = vmatprep.subr.mxu0 0.0
        %1148 = vmatpush1.msra.mxu0 0.0
        %1149 = vmatprep.subr.mxu0 0.0
        %1150 = vmatpush1.msra.mxu0 0.0
        %1151 = vmatprep.subr.mxu0 0.0
        %1152 = vmatpush1.msra.mxu0 0.0
        %1153 = vmatprep.subr.mxu0 0.0
        %1154 = vmatpush1.msra.mxu0 0.0
        %1155 = vmatprep.subr.mxu0 0.0
        %1156 = vmatpush1.msra.mxu0 0.0
        %1157 = vmatprep.subr.mxu0 0.0
        %1158 = vmatpush1.msra.mxu0 0.0
        %1159 = vmatprep.subr.mxu0 0.0
        %1160 = vmatpush1.msra.mxu0 0.0
        %1161 = vmatprep.subr.mxu0 0.0
        %1162 = vmatpush1.msra.mxu0 0.0
        %1163 = vmatprep.subr.mxu0 0.0
        %1164 = vmatpush1.msra.mxu0 0.0
        %1165 = vmatprep.subr.mxu0 0.0
        %1166 = vmatpush1.msra.mxu0 0.0
        %1167 = vmatprep.subr.mxu0 0.0
        %1168 = vmatpush1.msra.mxu0 0.0
        %1169 = vmatprep.subr.mxu0 0.0
        %1170 = vmatpush1.msra.mxu0 0.0
        %1171 = vmatprep.subr.mxu0 0.0
        %1172 = vmatpush1.msra.mxu0 0.0
        %1173 = vmatprep.subr.mxu0 0.0
        %1174 = vmatpush1.msra.mxu0 0.0
        %1175 = vmatprep.subr.mxu0 0.0
        %1176 = vmatpush1.msra.mxu0 0.0
        %1177 = vmatprep.subr.mxu0 0.0
        %1178 = vmatpush1.msra.mxu0 0.0
        %1179 = vmatprep.subr.mxu0 0.0
        %1180 = vmatpush1.msra.mxu0 0.0
        %1181 = vmatprep.subr.mxu0 0.0
        %1182 = vmatpush1.msra.mxu0 0.0
        %1183 = vmatprep.subr.mxu0 0.0
        %1184 = vmatpush1.msra.mxu0 0.0
        %1185 = vmatprep.subr.mxu0 0.0
        %1186 = vmatpush1.msra.mxu0 0.0
        %1187 = vmatprep.subr.mxu0 0.0
        %1188 = vmatpush1.msra.mxu0 0.0
        %1189 = vmatprep.mubr.f32.mxu0 0.0
        %1190 = vmatmul.mubr.f32.gmra.mrb[0].mxu0 %v1117
        %v1191 = vpop.f32.mrb[0].mxu0
        %v1192 = vadd.f32 0.0, %v1191
        %v1193 = vpop.f32.mrb[0].mxu0
        %v1194 = vadd.f32 0.0, %v1193
        %1195 = vmatprep.mubr.f32.mxu0 0.0
        %1196 = vmatmul.mubr.f32.gmra.mrb[0].mxu0 %v1119
        %v1197 = vpop.f32.mrb[0].mxu0
        %v1198 = vadd.f32 0.0, %v1197
        %v1199 = vpop.f32.mrb[0].mxu0
        %v1200 = vadd.f32 0.0, %v1199
        %1201 = vmatprep.mubr.f32.mxu0 0.0
        %1202 = vmatmul.mubr.f32.gmra.mrb[0].mxu0 %v1121
        %v1203 = vpop.f32.mrb[0].mxu0
        %v1204 = vadd.f32 0.0, %v1203
        %v1205 = vpop.f32.mrb[0].mxu0
        %v1206 = vadd.f32 0.0, %v1205
        %1207 = vmatprep.mubr.f32.mxu0 0.0
        %1208 = vmatmul.mubr.f32.gmra.mrb[0].mxu0 %v1123
        %v1209 = vpop.f32.mrb[0].mxu0
        %v1210 = vadd.f32 0.0, %v1209
        %v1211 = vpop.f32.mrb[0].mxu0
        %v1212 = vadd.f32 0.0, %v1211
        %1213 = vdwg.mxu0
        %v1214 = vadd.f32 %v1092, %v1192
        %v1215 = vadd.f32 %v1093, %v1194
        %v1216 = vadd.f32 %v1094, %v1198
        %v1217 = vadd.f32 %v1095, %v1200
        %v1218 = vadd.f32 %v1096, %v1204
        %v1219 = vadd.f32 %v1097, %v1206
        %v1220 = vadd.f32 %v1098, %v1210
        %v1221 = vadd.f32 %v1099, %v1212
        %s1222 = scalar_lea.vmem %s1, 448
        %v1223 = vld [vmem:[%s1222] sm:$0xff]
        %v1224 = vld [vmem:[%s1222 + $0x8] sm:$0xff]
        %v1225 = vld [vmem:[%s1222 + $0x10] sm:$0xff]
        %v1226 = vld [vmem:[%s1222 + $0x18] sm:$0xff]
        %v1227 = vld [vmem:[%s1222 + $0x20] sm:$0xff]
        %v1228 = vld [vmem:[%s1222 + $0x28] sm:$0xff]
        %v1229 = vld [vmem:[%s1222 + $0x30] sm:$0xff]
        %v1230 = vld [vmem:[%s1222 + $0x38] sm:$0xff]
        %1231 = vrot.lane.b32.xlu0 %v624, 96
        %v1232 = vpop.permute.xlu0 %1231
        %1233 = vrot.lane.b32.xlu0 %v626, 96
        %v1234 = vpop.permute.xlu0 %1233
        %1235 = vrot.lane.b32.xlu0 %v628, 96
        %v1236 = vpop.permute.xlu0 %1235
        %1237 = vrot.lane.b32.xlu0 %v627, 96
        %v1238 = vpop.permute.xlu0 %1237
        %v1239 = vsel %vm417, %v1232, 0
        %v1241 = vsel %vm417, %v1234, 0
        %v1243 = vsel %vm417, %v1236, 0
        %v1245 = vsel %vm417, %v1238, 0
        %1247 = vmatprep.subr.mxu0 %v1224
        %1248 = vmatpush1.msra.mxu0 %v1223
        %1249 = vmatprep.subr.mxu0 %v1226
        %1250 = vmatpush1.msra.mxu0 %v1225
        %1251 = vmatprep.subr.mxu0 %v1228
        %1252 = vmatpush1.msra.mxu0 %v1227
        %1253 = vmatprep.subr.mxu0 %v1230
        %1254 = vmatpush1.msra.mxu0 %v1229
        %1255 = vmatprep.subr.mxu0 0.0
        %1256 = vmatpush1.msra.mxu0 0.0
        %1257 = vmatprep.subr.mxu0 0.0
        %1258 = vmatpush1.msra.mxu0 0.0
        %1259 = vmatprep.subr.mxu0 0.0
        %1260 = vmatpush1.msra.mxu0 0.0
        %1261 = vmatprep.subr.mxu0 0.0
        %1262 = vmatpush1.msra.mxu0 0.0
        %1263 = vmatprep.subr.mxu0 0.0
        %1264 = vmatpush1.msra.mxu0 0.0
        %1265 = vmatprep.subr.mxu0 0.0
        %1266 = vmatpush1.msra.mxu0 0.0
        %1267 = vmatprep.subr.mxu0 0.0
        %1268 = vmatpush1.msra.mxu0 0.0
        %1269 = vmatprep.subr.mxu0 0.0
        %1270 = vmatpush1.msra.mxu0 0.0
        %1271 = vmatprep.subr.mxu0 0.0
        %1272 = vmatpush1.msra.mxu0 0.0
        %1273 = vmatprep.subr.mxu0 0.0
        %1274 = vmatpush1.msra.mxu0 0.0
        %1275 = vmatprep.subr.mxu0 0.0
        %1276 = vmatpush1.msra.mxu0 0.0
        %1277 = vmatprep.subr.mxu0 0.0
        %1278 = vmatpush1.msra.mxu0 0.0
        %1279 = vmatprep.subr.mxu0 0.0
        %1280 = vmatpush1.msra.mxu0 0.0
        %1281 = vmatprep.subr.mxu0 0.0
        %1282 = vmatpush1.msra.mxu0 0.0
        %1283 = vmatprep.subr.mxu0 0.0
        %1284 = vmatpush1.msra.mxu0 0.0
        %1285 = vmatprep.subr.mxu0 0.0
        %1286 = vmatpush1.msra.mxu0 0.0
        %1287 = vmatprep.subr.mxu0 0.0
        %1288 = vmatpush1.msra.mxu0 0.0
        %1289 = vmatprep.subr.mxu0 0.0
        %1290 = vmatpush1.msra.mxu0 0.0
        %1291 = vmatprep.subr.mxu0 0.0
        %1292 = vmatpush1.msra.mxu0 0.0
        %1293 = vmatprep.subr.mxu0 0.0
        %1294 = vmatpush1.msra.mxu0 0.0
        %1295 = vmatprep.subr.mxu0 0.0
        %1296 = vmatpush1.msra.mxu0 0.0
        %1297 = vmatprep.subr.mxu0 0.0
        %1298 = vmatpush1.msra.mxu0 0.0
        %1299 = vmatprep.subr.mxu0 0.0
        %1300 = vmatpush1.msra.mxu0 0.0
        %1301 = vmatprep.subr.mxu0 0.0
        %1302 = vmatpush1.msra.mxu0 0.0
        %1303 = vmatprep.subr.mxu0 0.0
        %1304 = vmatpush1.msra.mxu0 0.0
        %1305 = vmatprep.subr.mxu0 0.0
        %1306 = vmatpush1.msra.mxu0 0.0
        %1307 = vmatprep.subr.mxu0 0.0
        %1308 = vmatpush1.msra.mxu0 0.0
        %1309 = vmatprep.subr.mxu0 0.0
        %1310 = vmatpush1.msra.mxu0 0.0
        %1311 = vmatprep.mubr.f32.mxu0 0.0
        %1312 = vmatmul.mubr.f32.gmra.mrb[0].mxu0 %v1239
        %v1313 = vpop.f32.mrb[0].mxu0
        %v1314 = vadd.f32 0.0, %v1313
        %v1315 = vpop.f32.mrb[0].mxu0
        %v1316 = vadd.f32 0.0, %v1315
        %1317 = vmatprep.mubr.f32.mxu0 0.0
        %1318 = vmatmul.mubr.f32.gmra.mrb[0].mxu0 %v1241
        %v1319 = vpop.f32.mrb[0].mxu0
        %v1320 = vadd.f32 0.0, %v1319
        %v1321 = vpop.f32.mrb[0].mxu0
        %v1322 = vadd.f32 0.0, %v1321
        %1323 = vmatprep.mubr.f32.mxu0 0.0
        %1324 = vmatmul.mubr.f32.gmra.mrb[0].mxu0 %v1243
        %v1325 = vpop.f32.mrb[0].mxu0
        %v1326 = vadd.f32 0.0, %v1325
        %v1327 = vpop.f32.mrb[0].mxu0
        %v1328 = vadd.f32 0.0, %v1327
        %1329 = vmatprep.mubr.f32.mxu0 0.0
        %1330 = vmatmul.mubr.f32.gmra.mrb[0].mxu0 %v1245
        %v1331 = vpop.f32.mrb[0].mxu0
        %v1332 = vadd.f32 0.0, %v1331
        %v1333 = vpop.f32.mrb[0].mxu0
        %v1334 = vadd.f32 0.0, %v1333
        %1335 = vdwg.mxu0
        %v1336 = vadd.f32 %v1214, %v1314
        %v1337 = vadd.f32 %v1215, %v1316
        %v1338 = vadd.f32 %v1216, %v1320
        %v1339 = vadd.f32 %v1217, %v1322
        %v1340 = vadd.f32 %v1218, %v1326
        %v1341 = vadd.f32 %v1219, %v1328
        %v1342 = vadd.f32 %v1220, %v1332
        %v1343 = vadd.f32 %v1221, %v1334
        %s1344 = scalar_lea.vmem %s1, 512
        %v1345 = vld [vmem:[%s1344] sm:$0xff]
        %v1346 = vld [vmem:[%s1344 + $0x8] sm:$0xff]
        %v1347 = vld [vmem:[%s1344 + $0x10] sm:$0xff]
        %v1348 = vld [vmem:[%s1344 + $0x18] sm:$0xff]
        %v1349 = vld [vmem:[%s1344 + $0x20] sm:$0xff]
        %v1350 = vld [vmem:[%s1344 + $0x28] sm:$0xff]
        %v1351 = vld [vmem:[%s1344 + $0x30] sm:$0xff]
        %v1352 = vld [vmem:[%s1344 + $0x38] sm:$0xff]
        %1353 = vrot.lane.b32.xlu0 %v746, 96
        %v1354 = vpop.permute.xlu0 %1353
        %1355 = vrot.lane.b32.xlu0 %v748, 96
        %v1356 = vpop.permute.xlu0 %1355
        %1357 = vrot.lane.b32.xlu0 %v750, 96
        %v1358 = vpop.permute.xlu0 %1357
        %1359 = vrot.lane.b32.xlu0 %v749, 96
        %v1360 = vpop.permute.xlu0 %1359
        %v1361 = vsel %vm417, %v1354, 0
        %v1363 = vsel %vm417, %v1356, 0
        %v1365 = vsel %vm417, %v1358, 0
        %v1367 = vsel %vm417, %v1360, 0
        %1369 = vmatprep.subr.mxu0 %v1346
        %1370 = vmatpush1.msra.mxu0 %v1345
        %1371 = vmatprep.subr.mxu0 %v1348
        %1372 = vmatpush1.msra.mxu0 %v1347
        %1373 = vmatprep.subr.mxu0 %v1350
        %1374 = vmatpush1.msra.mxu0 %v1349
        %1375 = vmatprep.subr.mxu0 %v1352
        %1376 = vmatpush1.msra.mxu0 %v1351
        %1377 = vmatprep.subr.mxu0 0.0
        %1378 = vmatpush1.msra.mxu0 0.0
        %1379 = vmatprep.subr.mxu0 0.0
        %1380 = vmatpush1.msra.mxu0 0.0
        %1381 = vmatprep.subr.mxu0 0.0
        %1382 = vmatpush1.msra.mxu0 0.0
        %1383 = vmatprep.subr.mxu0 0.0
        %1384 = vmatpush1.msra.mxu0 0.0
        %1385 = vmatprep.subr.mxu0 0.0
        %1386 = vmatpush1.msra.mxu0 0.0
        %1387 = vmatprep.subr.mxu0 0.0
        %1388 = vmatpush1.msra.mxu0 0.0
        %1389 = vmatprep.subr.mxu0 0.0
        %1390 = vmatpush1.msra.mxu0 0.0
        %1391 = vmatprep.subr.mxu0 0.0
        %1392 = vmatpush1.msra.mxu0 0.0
        %1393 = vmatprep.subr.mxu0 0.0
        %1394 = vmatpush1.msra.mxu0 0.0
        %1395 = vmatprep.subr.mxu0 0.0
        %1396 = vmatpush1.msra.mxu0 0.0
        %1397 = vmatprep.subr.mxu0 0.0
        %1398 = vmatpush1.msra.mxu0 0.0
        %1399 = vmatprep.subr.mxu0 0.0
        %1400 = vmatpush1.msra.mxu0 0.0
        %1401 = vmatprep.subr.mxu0 0.0
        %1402 = vmatpush1.msra.mxu0 0.0
        %1403 = vmatprep.subr.mxu0 0.0
        %1404 = vmatpush1.msra.mxu0 0.0
        %1405 = vmatprep.subr.mxu0 0.0
        %1406 = vmatpush1.msra.mxu0 0.0
        %1407 = vmatprep.subr.mxu0 0.0
        %1408 = vmatpush1.msra.mxu0 0.0
        %1409 = vmatprep.subr.mxu0 0.0
        %1410 = vmatpush1.msra.mxu0 0.0
        %1411 = vmatprep.subr.mxu0 0.0
        %1412 = vmatpush1.msra.mxu0 0.0
        %1413 = vmatprep.subr.mxu0 0.0
        %1414 = vmatpush1.msra.mxu0 0.0
        %1415 = vmatprep.subr.mxu0 0.0
        %1416 = vmatpush1.msra.mxu0 0.0
        %1417 = vmatprep.subr.mxu0 0.0
        %1418 = vmatpush1.msra.mxu0 0.0
        %1419 = vmatprep.subr.mxu0 0.0
        %1420 = vmatpush1.msra.mxu0 0.0
        %1421 = vmatprep.subr.mxu0 0.0
        %1422 = vmatpush1.msra.mxu0 0.0
        %1423 = vmatprep.subr.mxu0 0.0
        %1424 = vmatpush1.msra.mxu0 0.0
        %1425 = vmatprep.subr.mxu0 0.0
        %1426 = vmatpush1.msra.mxu0 0.0
        %1427 = vmatprep.subr.mxu0 0.0
        %1428 = vmatpush1.msra.mxu0 0.0
        %1429 = vmatprep.subr.mxu0 0.0
        %1430 = vmatpush1.msra.mxu0 0.0
        %1431 = vmatprep.subr.mxu0 0.0
        %1432 = vmatpush1.msra.mxu0 0.0
        %1433 = vmatprep.mubr.f32.mxu0 0.0
        %1434 = vmatmul.mubr.f32.gmra.mrb[0].mxu0 %v1361
        %v1435 = vpop.f32.mrb[0].mxu0
        %v1436 = vadd.f32 0.0, %v1435
        %v1437 = vpop.f32.mrb[0].mxu0
        %v1438 = vadd.f32 0.0, %v1437
        %1439 = vmatprep.mubr.f32.mxu0 0.0
        %1440 = vmatmul.mubr.f32.gmra.mrb[0].mxu0 %v1363
        %v1441 = vpop.f32.mrb[0].mxu0
        %v1442 = vadd.f32 0.0, %v1441
        %v1443 = vpop.f32.mrb[0].mxu0
        %v1444 = vadd.f32 0.0, %v1443
        %1445 = vmatprep.mubr.f32.mxu0 0.0
        %1446 = vmatmul.mubr.f32.gmra.mrb[0].mxu0 %v1365
        %v1447 = vpop.f32.mrb[0].mxu0
        %v1448 = vadd.f32 0.0, %v1447
        %v1449 = vpop.f32.mrb[0].mxu0
        %v1450 = vadd.f32 0.0, %v1449
        %1451 = vmatprep.mubr.f32.mxu0 0.0
        %1452 = vmatmul.mubr.f32.gmra.mrb[0].mxu0 %v1367
        %v1453 = vpop.f32.mrb[0].mxu0
        %v1454 = vadd.f32 0.0, %v1453
        %v1455 = vpop.f32.mrb[0].mxu0
        %v1456 = vadd.f32 0.0, %v1455
        %1457 = vdwg.mxu0
        %v1458 = vadd.f32 %v1336, %v1436
        %v1459 = vadd.f32 %v1337, %v1438
        %v1460 = vadd.f32 %v1338, %v1442
        %v1461 = vadd.f32 %v1339, %v1444
        %v1462 = vadd.f32 %v1340, %v1448
        %v1463 = vadd.f32 %v1341, %v1450
        %v1464 = vadd.f32 %v1342, %v1454
        %v1465 = vadd.f32 %v1343, %v1456
        %s1466 = scalar_lea.vmem %s1, 576
        %v1467 = vld [vmem:[%s1466] sm:$0xff]
        %v1468 = vld [vmem:[%s1466 + $0x8] sm:$0xff]
        %v1469 = vld [vmem:[%s1466 + $0x10] sm:$0xff]
        %v1470 = vld [vmem:[%s1466 + $0x18] sm:$0xff]
        %v1471 = vld [vmem:[%s1466 + $0x20] sm:$0xff]
        %v1472 = vld [vmem:[%s1466 + $0x28] sm:$0xff]
        %v1473 = vld [vmem:[%s1466 + $0x30] sm:$0xff]
        %v1474 = vld [vmem:[%s1466 + $0x38] sm:$0xff]
        %1475 = vrot.lane.b32.xlu0 %v868, 96
        %v1476 = vpop.permute.xlu0 %1475
        %1477 = vrot.lane.b32.xlu0 %v870, 96
        %v1478 = vpop.permute.xlu0 %1477
        %1479 = vrot.lane.b32.xlu0 %v872, 96
        %v1480 = vpop.permute.xlu0 %1479
        %1481 = vrot.lane.b32.xlu0 %v871, 96
        %v1482 = vpop.permute.xlu0 %1481
        %v1483 = vsel %vm417, %v1476, 0
        %v1485 = vsel %vm417, %v1478, 0
        %v1487 = vsel %vm417, %v1480, 0
        %v1489 = vsel %vm417, %v1482, 0
        %1491 = vmatprep.subr.mxu0 %v1468
        %1492 = vmatpush1.msra.mxu0 %v1467
        %1493 = vmatprep.subr.mxu0 %v1470
        %1494 = vmatpush1.msra.mxu0 %v1469
        %1495 = vmatprep.subr.mxu0 %v1472
        %1496 = vmatpush1.msra.mxu0 %v1471
        %1497 = vmatprep.subr.mxu0 %v1474
        %1498 = vmatpush1.msra.mxu0 %v1473
        %1499 = vmatprep.subr.mxu0 0.0
        %1500 = vmatpush1.msra.mxu0 0.0
        %1501 = vmatprep.subr.mxu0 0.0
        %1502 = vmatpush1.msra.mxu0 0.0
        %1503 = vmatprep.subr.mxu0 0.0
        %1504 = vmatpush1.msra.mxu0 0.0
        %1505 = vmatprep.subr.mxu0 0.0
        %1506 = vmatpush1.msra.mxu0 0.0
        %1507 = vmatprep.subr.mxu0 0.0
        %1508 = vmatpush1.msra.mxu0 0.0
        %1509 = vmatprep.subr.mxu0 0.0
        %1510 = vmatpush1.msra.mxu0 0.0
        %1511 = vmatprep.subr.mxu0 0.0
        %1512 = vmatpush1.msra.mxu0 0.0
        %1513 = vmatprep.subr.mxu0 0.0
        %1514 = vmatpush1.msra.mxu0 0.0
        %1515 = vmatprep.subr.mxu0 0.0
        %1516 = vmatpush1.msra.mxu0 0.0
        %1517 = vmatprep.subr.mxu0 0.0
        %1518 = vmatpush1.msra.mxu0 0.0
        %1519 = vmatprep.subr.mxu0 0.0
        %1520 = vmatpush1.msra.mxu0 0.0
        %1521 = vmatprep.subr.mxu0 0.0
        %1522 = vmatpush1.msra.mxu0 0.0
        %1523 = vmatprep.subr.mxu0 0.0
        %1524 = vmatpush1.msra.mxu0 0.0
        %1525 = vmatprep.subr.mxu0 0.0
        %1526 = vmatpush1.msra.mxu0 0.0
        %1527 = vmatprep.subr.mxu0 0.0
        %1528 = vmatpush1.msra.mxu0 0.0
        %1529 = vmatprep.subr.mxu0 0.0
        %1530 = vmatpush1.msra.mxu0 0.0
        %1531 = vmatprep.subr.mxu0 0.0
        %1532 = vmatpush1.msra.mxu0 0.0
        %1533 = vmatprep.subr.mxu0 0.0
        %1534 = vmatpush1.msra.mxu0 0.0
        %1535 = vmatprep.subr.mxu0 0.0
        %1536 = vmatpush1.msra.mxu0 0.0
        %1537 = vmatprep.subr.mxu0 0.0
        %1538 = vmatpush1.msra.mxu0 0.0
        %1539 = vmatprep.subr.mxu0 0.0
        %1540 = vmatpush1.msra.mxu0 0.0
        %1541 = vmatprep.subr.mxu0 0.0
        %1542 = vmatpush1.msra.mxu0 0.0
        %1543 = vmatprep.subr.mxu0 0.0
        %1544 = vmatpush1.msra.mxu0 0.0
        %1545 = vmatprep.subr.mxu0 0.0
        %1546 = vmatpush1.msra.mxu0 0.0
        %1547 = vmatprep.subr.mxu0 0.0
        %1548 = vmatpush1.msra.mxu0 0.0
        %1549 = vmatprep.subr.mxu0 0.0
        %1550 = vmatpush1.msra.mxu0 0.0
        %1551 = vmatprep.subr.mxu0 0.0
        %1552 = vmatpush1.msra.mxu0 0.0
        %1553 = vmatprep.subr.mxu0 0.0
        %1554 = vmatpush1.msra.mxu0 0.0
        %1555 = vmatprep.mubr.f32.mxu0 0.0
        %1556 = vmatmul.mubr.f32.gmra.mrb[0].mxu0 %v1483
        %v1557 = vpop.f32.mrb[0].mxu0
        %v1558 = vadd.f32 0.0, %v1557
        %v1559 = vpop.f32.mrb[0].mxu0
        %v1560 = vadd.f32 0.0, %v1559
        %1561 = vmatprep.mubr.f32.mxu0 0.0
        %1562 = vmatmul.mubr.f32.gmra.mrb[0].mxu0 %v1485
        %v1563 = vpop.f32.mrb[0].mxu0
        %v1564 = vadd.f32 0.0, %v1563
        %v1565 = vpop.f32.mrb[0].mxu0
        %v1566 = vadd.f32 0.0, %v1565
        %1567 = vmatprep.mubr.f32.mxu0 0.0
        %1568 = vmatmul.mubr.f32.gmra.mrb[0].mxu0 %v1487
        %v1569 = vpop.f32.mrb[0].mxu0
        %v1570 = vadd.f32 0.0, %v1569
        %v1571 = vpop.f32.mrb[0].mxu0
        %v1572 = vadd.f32 0.0, %v1571
        %1573 = vmatprep.mubr.f32.mxu0 0.0
        %1574 = vmatmul.mubr.f32.gmra.mrb[0].mxu0 %v1489
        %v1575 = vpop.f32.mrb[0].mxu0
        %v1576 = vadd.f32 0.0, %v1575
        %v1577 = vpop.f32.mrb[0].mxu0
        %v1578 = vadd.f32 0.0, %v1577
        %1579 = vdwg.mxu0
        %v1580 = vadd.f32 %v1458, %v1558
        %v1581 = vadd.f32 %v1459, %v1560
        %v1582 = vadd.f32 %v1460, %v1564
        %v1583 = vadd.f32 %v1461, %v1566
        %v1584 = vadd.f32 %v1462, %v1570
        %v1585 = vadd.f32 %v1463, %v1572
        %v1586 = vadd.f32 %v1464, %v1576
        %v1587 = vadd.f32 %v1465, %v1578
        %s1588 = scalar_lea.vmem %s1, 640
        %v1589 = vld [vmem:[%s1588] sm:$0xff]
        %v1590 = vld [vmem:[%s1588 + $0x8] sm:$0xff]
        %v1591 = vld [vmem:[%s1588 + $0x10] sm:$0xff]
        %v1592 = vld [vmem:[%s1588 + $0x18] sm:$0xff]
        %v1593 = vld [vmem:[%s1588 + $0x20] sm:$0xff]
        %v1594 = vld [vmem:[%s1588 + $0x28] sm:$0xff]
        %v1595 = vld [vmem:[%s1588 + $0x30] sm:$0xff]
        %v1596 = vld [vmem:[%s1588 + $0x38] sm:$0xff]
        %1597 = vrot.lane.b32.xlu0 %v384, 64
        %v1598 = vpop.permute.xlu0 %1597
        %1599 = vrot.lane.b32.xlu0 %v385, 64
        %v1600 = vpop.permute.xlu0 %1599
        %1601 = vrot.lane.b32.xlu0 %v386, 64
        %v1602 = vpop.permute.xlu0 %1601
        %1603 = vrot.lane.b32.xlu0 %v387, 64
        %v1604 = vpop.permute.xlu0 %1603
        %v1605 = vsel %vm417, %v1598, 0
        %v1607 = vsel %vm417, %v1600, 0
        %v1609 = vsel %vm417, %v1602, 0
        %v1611 = vsel %vm417, %v1604, 0
        %1613 = vmatprep.subr.mxu0 %v1590
        %1614 = vmatpush1.msra.mxu0 %v1589
        %1615 = vmatprep.subr.mxu0 %v1592
        %1616 = vmatpush1.msra.mxu0 %v1591
        %1617 = vmatprep.subr.mxu0 %v1594
        %1618 = vmatpush1.msra.mxu0 %v1593
        %1619 = vmatprep.subr.mxu0 %v1596
        %1620 = vmatpush1.msra.mxu0 %v1595
        %1621 = vmatprep.subr.mxu0 0.0
        %1622 = vmatpush1.msra.mxu0 0.0
        %1623 = vmatprep.subr.mxu0 0.0
        %1624 = vmatpush1.msra.mxu0 0.0
        %1625 = vmatprep.subr.mxu0 0.0
        %1626 = vmatpush1.msra.mxu0 0.0
        %1627 = vmatprep.subr.mxu0 0.0
        %1628 = vmatpush1.msra.mxu0 0.0
        %1629 = vmatprep.subr.mxu0 0.0
        %1630 = vmatpush1.msra.mxu0 0.0
        %1631 = vmatprep.subr.mxu0 0.0
        %1632 = vmatpush1.msra.mxu0 0.0
        %1633 = vmatprep.subr.mxu0 0.0
        %1634 = vmatpush1.msra.mxu0 0.0
        %1635 = vmatprep.subr.mxu0 0.0
        %1636 = vmatpush1.msra.mxu0 0.0
        %1637 = vmatprep.subr.mxu0 0.0
        %1638 = vmatpush1.msra.mxu0 0.0
        %1639 = vmatprep.subr.mxu0 0.0
        %1640 = vmatpush1.msra.mxu0 0.0
        %1641 = vmatprep.subr.mxu0 0.0
        %1642 = vmatpush1.msra.mxu0 0.0
        %1643 = vmatprep.subr.mxu0 0.0
        %1644 = vmatpush1.msra.mxu0 0.0
        %1645 = vmatprep.subr.mxu0 0.0
        %1646 = vmatpush1.msra.mxu0 0.0
        %1647 = vmatprep.subr.mxu0 0.0
        %1648 = vmatpush1.msra.mxu0 0.0
        %1649 = vmatprep.subr.mxu0 0.0
        %1650 = vmatpush1.msra.mxu0 0.0
        %1651 = vmatprep.subr.mxu0 0.0
        %1652 = vmatpush1.msra.mxu0 0.0
        %1653 = vmatprep.subr.mxu0 0.0
        %1654 = vmatpush1.msra.mxu0 0.0
        %1655 = vmatprep.subr.mxu0 0.0
        %1656 = vmatpush1.msra.mxu0 0.0
        %1657 = vmatprep.subr.mxu0 0.0
        %1658 = vmatpush1.msra.mxu0 0.0
        %1659 = vmatprep.subr.mxu0 0.0
        %1660 = vmatpush1.msra.mxu0 0.0
        %1661 = vmatprep.subr.mxu0 0.0
        %1662 = vmatpush1.msra.mxu0 0.0
        %1663 = vmatprep.subr.mxu0 0.0
        %1664 = vmatpush1.msra.mxu0 0.0
        %1665 = vmatprep.subr.mxu0 0.0
        %1666 = vmatpush1.msra.mxu0 0.0
        %1667 = vmatprep.subr.mxu0 0.0
        %1668 = vmatpush1.msra.mxu0 0.0
        %1669 = vmatprep.subr.mxu0 0.0
        %1670 = vmatpush1.msra.mxu0 0.0
        %1671 = vmatprep.subr.mxu0 0.0
        %1672 = vmatpush1.msra.mxu0 0.0
        %1673 = vmatprep.subr.mxu0 0.0
        %1674 = vmatpush1.msra.mxu0 0.0
        %1675 = vmatprep.subr.mxu0 0.0
        %1676 = vmatpush1.msra.mxu0 0.0
        %1677 = vmatprep.mubr.f32.mxu0 0.0
        %1678 = vmatmul.mubr.f32.gmra.mrb[0].mxu0 %v1605
        %v1679 = vpop.f32.mrb[0].mxu0
        %v1680 = vadd.f32 0.0, %v1679
        %v1681 = vpop.f32.mrb[0].mxu0
        %v1682 = vadd.f32 0.0, %v1681
        %1683 = vmatprep.mubr.f32.mxu0 0.0
        %1684 = vmatmul.mubr.f32.gmra.mrb[0].mxu0 %v1607
        %v1685 = vpop.f32.mrb[0].mxu0
        %v1686 = vadd.f32 0.0, %v1685
        %v1687 = vpop.f32.mrb[0].mxu0
        %v1688 = vadd.f32 0.0, %v1687
        %1689 = vmatprep.mubr.f32.mxu0 0.0
        %1690 = vmatmul.mubr.f32.gmra.mrb[0].mxu0 %v1609
        %v1691 = vpop.f32.mrb[0].mxu0
        %v1692 = vadd.f32 0.0, %v1691
        %v1693 = vpop.f32.mrb[0].mxu0
        %v1694 = vadd.f32 0.0, %v1693
        %1695 = vmatprep.mubr.f32.mxu0 0.0
        %1696 = vmatmul.mubr.f32.gmra.mrb[0].mxu0 %v1611
        %v1697 = vpop.f32.mrb[0].mxu0
        %v1698 = vadd.f32 0.0, %v1697
        %v1699 = vpop.f32.mrb[0].mxu0
        %v1700 = vadd.f32 0.0, %v1699
        %1701 = vdwg.mxu0
        %v1702 = vadd.f32 %v1580, %v1680
        %v1703 = vadd.f32 %v1581, %v1682
        %v1704 = vadd.f32 %v1582, %v1686
        %v1705 = vadd.f32 %v1583, %v1688
        %v1706 = vadd.f32 %v1584, %v1692
        %v1707 = vadd.f32 %v1585, %v1694
        %v1708 = vadd.f32 %v1586, %v1698
        %v1709 = vadd.f32 %v1587, %v1700
        %s1710 = scalar_lea.vmem %s1, 704
        %v1711 = vld [vmem:[%s1710] sm:$0xff]
        %v1712 = vld [vmem:[%s1710 + $0x8] sm:$0xff]
        %v1713 = vld [vmem:[%s1710 + $0x10] sm:$0xff]
        %v1714 = vld [vmem:[%s1710 + $0x18] sm:$0xff]
        %v1715 = vld [vmem:[%s1710 + $0x20] sm:$0xff]
        %v1716 = vld [vmem:[%s1710 + $0x28] sm:$0xff]
        %v1717 = vld [vmem:[%s1710 + $0x30] sm:$0xff]
        %v1718 = vld [vmem:[%s1710 + $0x38] sm:$0xff]
        %1719 = vrot.lane.b32.xlu0 %v412, 64
        %v1720 = vpop.permute.xlu0 %1719
        %1721 = vrot.lane.b32.xlu0 %v414, 64
        %v1722 = vpop.permute.xlu0 %1721
        %1723 = vrot.lane.b32.xlu0 %v416, 64
        %v1724 = vpop.permute.xlu0 %1723
        %1725 = vrot.lane.b32.xlu0 %v415, 64
        %v1726 = vpop.permute.xlu0 %1725
        %v1727 = vsel %vm417, %v1720, 0
        %v1729 = vsel %vm417, %v1722, 0
        %v1731 = vsel %vm417, %v1724, 0
        %v1733 = vsel %vm417, %v1726, 0
        %1735 = vmatprep.subr.mxu0 %v1712
        %1736 = vmatpush1.msra.mxu0 %v1711
        %1737 = vmatprep.subr.mxu0 %v1714
        %1738 = vmatpush1.msra.mxu0 %v1713
        %1739 = vmatprep.subr.mxu0 %v1716
        %1740 = vmatpush1.msra.mxu0 %v1715
        %1741 = vmatprep.subr.mxu0 %v1718
        %1742 = vmatpush1.msra.mxu0 %v1717
        %1743 = vmatprep.subr.mxu0 0.0
        %1744 = vmatpush1.msra.mxu0 0.0
        %1745 = vmatprep.subr.mxu0 0.0
        %1746 = vmatpush1.msra.mxu0 0.0
        %1747 = vmatprep.subr.mxu0 0.0
        %1748 = vmatpush1.msra.mxu0 0.0
        %1749 = vmatprep.subr.mxu0 0.0
        %1750 = vmatpush1.msra.mxu0 0.0
        %1751 = vmatprep.subr.mxu0 0.0
        %1752 = vmatpush1.msra.mxu0 0.0
        %1753 = vmatprep.subr.mxu0 0.0
        %1754 = vmatpush1.msra.mxu0 0.0
        %1755 = vmatprep.subr.mxu0 0.0
        %1756 = vmatpush1.msra.mxu0 0.0
        %1757 = vmatprep.subr.mxu0 0.0
        %1758 = vmatpush1.msra.mxu0 0.0
        %1759 = vmatprep.subr.mxu0 0.0
        %1760 = vmatpush1.msra.mxu0 0.0
        %1761 = vmatprep.subr.mxu0 0.0
        %1762 = vmatpush1.msra.mxu0 0.0
        %1763 = vmatprep.subr.mxu0 0.0
        %1764 = vmatpush1.msra.mxu0 0.0
        %1765 = vmatprep.subr.mxu0 0.0
        %1766 = vmatpush1.msra.mxu0 0.0
        %1767 = vmatprep.subr.mxu0 0.0
        %1768 = vmatpush1.msra.mxu0 0.0
        %1769 = vmatprep.subr.mxu0 0.0
        %1770 = vmatpush1.msra.mxu0 0.0
        %1771 = vmatprep.subr.mxu0 0.0
        %1772 = vmatpush1.msra.mxu0 0.0
        %1773 = vmatprep.subr.mxu0 0.0
        %1774 = vmatpush1.msra.mxu0 0.0
        %1775 = vmatprep.subr.mxu0 0.0
        %1776 = vmatpush1.msra.mxu0 0.0
        %1777 = vmatprep.subr.mxu0 0.0
        %1778 = vmatpush1.msra.mxu0 0.0
        %1779 = vmatprep.subr.mxu0 0.0
        %1780 = vmatpush1.msra.mxu0 0.0
        %1781 = vmatprep.subr.mxu0 0.0
        %1782 = vmatpush1.msra.mxu0 0.0
        %1783 = vmatprep.subr.mxu0 0.0
        %1784 = vmatpush1.msra.mxu0 0.0
        %1785 = vmatprep.subr.mxu0 0.0
        %1786 = vmatpush1.msra.mxu0 0.0
        %1787 = vmatprep.subr.mxu0 0.0
        %1788 = vmatpush1.msra.mxu0 0.0
        %1789 = vmatprep.subr.mxu0 0.0
        %1790 = vmatpush1.msra.mxu0 0.0
        %1791 = vmatprep.subr.mxu0 0.0
        %1792 = vmatpush1.msra.mxu0 0.0
        %1793 = vmatprep.subr.mxu0 0.0
        %1794 = vmatpush1.msra.mxu0 0.0
        %1795 = vmatprep.subr.mxu0 0.0
        %1796 = vmatpush1.msra.mxu0 0.0
        %1797 = vmatprep.subr.mxu0 0.0
        %1798 = vmatpush1.msra.mxu0 0.0
        %1799 = vmatprep.mubr.f32.mxu0 0.0
        %1800 = vmatmul.mubr.f32.gmra.mrb[0].mxu0 %v1727
        %v1801 = vpop.f32.mrb[0].mxu0
        %v1802 = vadd.f32 0.0, %v1801
        %v1803 = vpop.f32.mrb[0].mxu0
        %v1804 = vadd.f32 0.0, %v1803
        %1805 = vmatprep.mubr.f32.mxu0 0.0
        %1806 = vmatmul.mubr.f32.gmra.mrb[0].mxu0 %v1729
        %v1807 = vpop.f32.mrb[0].mxu0
        %v1808 = vadd.f32 0.0, %v1807
        %v1809 = vpop.f32.mrb[0].mxu0
        %v1810 = vadd.f32 0.0, %v1809
        %1811 = vmatprep.mubr.f32.mxu0 0.0
        %1812 = vmatmul.mubr.f32.gmra.mrb[0].mxu0 %v1731
        %v1813 = vpop.f32.mrb[0].mxu0
        %v1814 = vadd.f32 0.0, %v1813
        %v1815 = vpop.f32.mrb[0].mxu0
        %v1816 = vadd.f32 0.0, %v1815
        %1817 = vmatprep.mubr.f32.mxu0 0.0
        %1818 = vmatmul.mubr.f32.gmra.mrb[0].mxu0 %v1733
        %v1819 = vpop.f32.mrb[0].mxu0
        %v1820 = vadd.f32 0.0, %v1819
        %v1821 = vpop.f32.mrb[0].mxu0
        %v1822 = vadd.f32 0.0, %v1821
        %1823 = vdwg.mxu0
        %v1824 = vadd.f32 %v1702, %v1802
        %v1825 = vadd.f32 %v1703, %v1804
        %v1826 = vadd.f32 %v1704, %v1808
        %v1827 = vadd.f32 %v1705, %v1810
        %v1828 = vadd.f32 %v1706, %v1814
        %v1829 = vadd.f32 %v1707, %v1816
        %v1830 = vadd.f32 %v1708, %v1820
        %v1831 = vadd.f32 %v1709, %v1822
        %s1832 = scalar_lea.vmem %s1, 768
        %v1833 = vld [vmem:[%s1832] sm:$0xff]
        %v1834 = vld [vmem:[%s1832 + $0x8] sm:$0xff]
        %v1835 = vld [vmem:[%s1832 + $0x10] sm:$0xff]
        %v1836 = vld [vmem:[%s1832 + $0x18] sm:$0xff]
        %v1837 = vld [vmem:[%s1832 + $0x20] sm:$0xff]
        %v1838 = vld [vmem:[%s1832 + $0x28] sm:$0xff]
        %v1839 = vld [vmem:[%s1832 + $0x30] sm:$0xff]
        %v1840 = vld [vmem:[%s1832 + $0x38] sm:$0xff]
        %1841 = vrot.lane.b32.xlu0 %v624, 64
        %v1842 = vpop.permute.xlu0 %1841
        %1843 = vrot.lane.b32.xlu0 %v626, 64
        %v1844 = vpop.permute.xlu0 %1843
        %1845 = vrot.lane.b32.xlu0 %v628, 64
        %v1846 = vpop.permute.xlu0 %1845
        %1847 = vrot.lane.b32.xlu0 %v627, 64
        %v1848 = vpop.permute.xlu0 %1847
        %v1849 = vsel %vm417, %v1842, 0
        %v1851 = vsel %vm417, %v1844, 0
        %v1853 = vsel %vm417, %v1846, 0
        %v1855 = vsel %vm417, %v1848, 0
        %1857 = vmatprep.subr.mxu0 %v1834
        %1858 = vmatpush1.msra.mxu0 %v1833
        %1859 = vmatprep.subr.mxu0 %v1836
        %1860 = vmatpush1.msra.mxu0 %v1835
        %1861 = vmatprep.subr.mxu0 %v1838
        %1862 = vmatpush1.msra.mxu0 %v1837
        %1863 = vmatprep.subr.mxu0 %v1840
        %1864 = vmatpush1.msra.mxu0 %v1839
        %1865 = vmatprep.subr.mxu0 0.0
        %1866 = vmatpush1.msra.mxu0 0.0
        %1867 = vmatprep.subr.mxu0 0.0
        %1868 = vmatpush1.msra.mxu0 0.0
        %1869 = vmatprep.subr.mxu0 0.0
        %1870 = vmatpush1.msra.mxu0 0.0
        %1871 = vmatprep.subr.mxu0 0.0
        %1872 = vmatpush1.msra.mxu0 0.0
        %1873 = vmatprep.subr.mxu0 0.0
        %1874 = vmatpush1.msra.mxu0 0.0
        %1875 = vmatprep.subr.mxu0 0.0
        %1876 = vmatpush1.msra.mxu0 0.0
        %1877 = vmatprep.subr.mxu0 0.0
        %1878 = vmatpush1.msra.mxu0 0.0
        %1879 = vmatprep.subr.mxu0 0.0
        %1880 = vmatpush1.msra.mxu0 0.0
        %1881 = vmatprep.subr.mxu0 0.0
        %1882 = vmatpush1.msra.mxu0 0.0
        %1883 = vmatprep.subr.mxu0 0.0
        %1884 = vmatpush1.msra.mxu0 0.0
        %1885 = vmatprep.subr.mxu0 0.0
        %1886 = vmatpush1.msra.mxu0 0.0
        %1887 = vmatprep.subr.mxu0 0.0
        %1888 = vmatpush1.msra.mxu0 0.0
        %1889 = vmatprep.subr.mxu0 0.0
        %1890 = vmatpush1.msra.mxu0 0.0
        %1891 = vmatprep.subr.mxu0 0.0
        %1892 = vmatpush1.msra.mxu0 0.0
        %1893 = vmatprep.subr.mxu0 0.0
        %1894 = vmatpush1.msra.mxu0 0.0
        %1895 = vmatprep.subr.mxu0 0.0
        %1896 = vmatpush1.msra.mxu0 0.0
        %1897 = vmatprep.subr.mxu0 0.0
        %1898 = vmatpush1.msra.mxu0 0.0
        %1899 = vmatprep.subr.mxu0 0.0
        %1900 = vmatpush1.msra.mxu0 0.0
        %1901 = vmatprep.subr.mxu0 0.0
        %1902 = vmatpush1.msra.mxu0 0.0
        %1903 = vmatprep.subr.mxu0 0.0
        %1904 = vmatpush1.msra.mxu0 0.0
        %1905 = vmatprep.subr.mxu0 0.0
        %1906 = vmatpush1.msra.mxu0 0.0
        %1907 = vmatprep.subr.mxu0 0.0
        %1908 = vmatpush1.msra.mxu0 0.0
        %1909 = vmatprep.subr.mxu0 0.0
        %1910 = vmatpush1.msra.mxu0 0.0
        %1911 = vmatprep.subr.mxu0 0.0
        %1912 = vmatpush1.msra.mxu0 0.0
        %1913 = vmatprep.subr.mxu0 0.0
        %1914 = vmatpush1.msra.mxu0 0.0
        %1915 = vmatprep.subr.mxu0 0.0
        %1916 = vmatpush1.msra.mxu0 0.0
        %1917 = vmatprep.subr.mxu0 0.0
        %1918 = vmatpush1.msra.mxu0 0.0
        %1919 = vmatprep.subr.mxu0 0.0
        %1920 = vmatpush1.msra.mxu0 0.0
        %1921 = vmatprep.mubr.f32.mxu0 0.0
        %1922 = vmatmul.mubr.f32.gmra.mrb[0].mxu0 %v1849
        %v1923 = vpop.f32.mrb[0].mxu0
        %v1924 = vadd.f32 0.0, %v1923
        %v1925 = vpop.f32.mrb[0].mxu0
        %v1926 = vadd.f32 0.0, %v1925
        %1927 = vmatprep.mubr.f32.mxu0 0.0
        %1928 = vmatmul.mubr.f32.gmra.mrb[0].mxu0 %v1851
        %v1929 = vpop.f32.mrb[0].mxu0
        %v1930 = vadd.f32 0.0, %v1929
        %v1931 = vpop.f32.mrb[0].mxu0
        %v1932 = vadd.f32 0.0, %v1931
        %1933 = vmatprep.mubr.f32.mxu0 0.0
        %1934 = vmatmul.mubr.f32.gmra.mrb[0].mxu0 %v1853
        %v1935 = vpop.f32.mrb[0].mxu0
        %v1936 = vadd.f32 0.0, %v1935
        %v1937 = vpop.f32.mrb[0].mxu0
        %v1938 = vadd.f32 0.0, %v1937
        %1939 = vmatprep.mubr.f32.mxu0 0.0
        %1940 = vmatmul.mubr.f32.gmra.mrb[0].mxu0 %v1855
        %v1941 = vpop.f32.mrb[0].mxu0
        %v1942 = vadd.f32 0.0, %v1941
        %v1943 = vpop.f32.mrb[0].mxu0
        %v1944 = vadd.f32 0.0, %v1943
        %1945 = vdwg.mxu0
        %v1946 = vadd.f32 %v1824, %v1924
        %v1947 = vadd.f32 %v1825, %v1926
        %v1948 = vadd.f32 %v1826, %v1930
        %v1949 = vadd.f32 %v1827, %v1932
        %v1950 = vadd.f32 %v1828, %v1936
        %v1951 = vadd.f32 %v1829, %v1938
        %v1952 = vadd.f32 %v1830, %v1942
        %v1953 = vadd.f32 %v1831, %v1944
        %s1954 = scalar_lea.vmem %s1, 832
        %v1955 = vld [vmem:[%s1954] sm:$0xff]
        %v1956 = vld [vmem:[%s1954 + $0x8] sm:$0xff]
        %v1957 = vld [vmem:[%s1954 + $0x10] sm:$0xff]
        %v1958 = vld [vmem:[%s1954 + $0x18] sm:$0xff]
        %v1959 = vld [vmem:[%s1954 + $0x20] sm:$0xff]
        %v1960 = vld [vmem:[%s1954 + $0x28] sm:$0xff]
        %v1961 = vld [vmem:[%s1954 + $0x30] sm:$0xff]
        %v1962 = vld [vmem:[%s1954 + $0x38] sm:$0xff]
        %1963 = vrot.lane.b32.xlu0 %v746, 64
        %v1964 = vpop.permute.xlu0 %1963
        %1965 = vrot.lane.b32.xlu0 %v748, 64
        %v1966 = vpop.permute.xlu0 %1965
        %1967 = vrot.lane.b32.xlu0 %v750, 64
        %v1968 = vpop.permute.xlu0 %1967
        %1969 = vrot.lane.b32.xlu0 %v749, 64
        %v1970 = vpop.permute.xlu0 %1969
        %v1971 = vsel %vm417, %v1964, 0
        %v1973 = vsel %vm417, %v1966, 0
        %v1975 = vsel %vm417, %v1968, 0
        %v1977 = vsel %vm417, %v1970, 0
        %1979 = vmatprep.subr.mxu0 %v1956
        %1980 = vmatpush1.msra.mxu0 %v1955
        %1981 = vmatprep.subr.mxu0 %v1958
        %1982 = vmatpush1.msra.mxu0 %v1957
        %1983 = vmatprep.subr.mxu0 %v1960
        %1984 = vmatpush1.msra.mxu0 %v1959
        %1985 = vmatprep.subr.mxu0 %v1962
        %1986 = vmatpush1.msra.mxu0 %v1961
        %1987 = vmatprep.subr.mxu0 0.0
        %1988 = vmatpush1.msra.mxu0 0.0
        %1989 = vmatprep.subr.mxu0 0.0
        %1990 = vmatpush1.msra.mxu0 0.0
        %1991 = vmatprep.subr.mxu0 0.0
        %1992 = vmatpush1.msra.mxu0 0.0
        %1993 = vmatprep.subr.mxu0 0.0
        %1994 = vmatpush1.msra.mxu0 0.0
        %1995 = vmatprep.subr.mxu0 0.0
        %1996 = vmatpush1.msra.mxu0 0.0
        %1997 = vmatprep.subr.mxu0 0.0
        %1998 = vmatpush1.msra.mxu0 0.0
        %1999 = vmatprep.subr.mxu0 0.0
        %2000 = vmatpush1.msra.mxu0 0.0
        %2001 = vmatprep.subr.mxu0 0.0
        %2002 = vmatpush1.msra.mxu0 0.0
        %2003 = vmatprep.subr.mxu0 0.0
        %2004 = vmatpush1.msra.mxu0 0.0
        %2005 = vmatprep.subr.mxu0 0.0
        %2006 = vmatpush1.msra.mxu0 0.0
        %2007 = vmatprep.subr.mxu0 0.0
        %2008 = vmatpush1.msra.mxu0 0.0
        %2009 = vmatprep.subr.mxu0 0.0
        %2010 = vmatpush1.msra.mxu0 0.0
        %2011 = vmatprep.subr.mxu0 0.0
        %2012 = vmatpush1.msra.mxu0 0.0
        %2013 = vmatprep.subr.mxu0 0.0
        %2014 = vmatpush1.msra.mxu0 0.0
        %2015 = vmatprep.subr.mxu0 0.0
        %2016 = vmatpush1.msra.mxu0 0.0
        %2017 = vmatprep.subr.mxu0 0.0
        %2018 = vmatpush1.msra.mxu0 0.0
        %2019 = vmatprep.subr.mxu0 0.0
        %2020 = vmatpush1.msra.mxu0 0.0
        %2021 = vmatprep.subr.mxu0 0.0
        %2022 = vmatpush1.msra.mxu0 0.0
        %2023 = vmatprep.subr.mxu0 0.0
        %2024 = vmatpush1.msra.mxu0 0.0
        %2025 = vmatprep.subr.mxu0 0.0
        %2026 = vmatpush1.msra.mxu0 0.0
        %2027 = vmatprep.subr.mxu0 0.0
        %2028 = vmatpush1.msra.mxu0 0.0
        %2029 = vmatprep.subr.mxu0 0.0
        %2030 = vmatpush1.msra.mxu0 0.0
        %2031 = vmatprep.subr.mxu0 0.0
        %2032 = vmatpush1.msra.mxu0 0.0
        %2033 = vmatprep.subr.mxu0 0.0
        %2034 = vmatpush1.msra.mxu0 0.0
        %2035 = vmatprep.subr.mxu0 0.0
        %2036 = vmatpush1.msra.mxu0 0.0
        %2037 = vmatprep.subr.mxu0 0.0
        %2038 = vmatpush1.msra.mxu0 0.0
        %2039 = vmatprep.subr.mxu0 0.0
        %2040 = vmatpush1.msra.mxu0 0.0
        %2041 = vmatprep.subr.mxu0 0.0
        %2042 = vmatpush1.msra.mxu0 0.0
        %2043 = vmatprep.mubr.f32.mxu0 0.0
        %2044 = vmatmul.mubr.f32.gmra.mrb[0].mxu0 %v1971
        %v2045 = vpop.f32.mrb[0].mxu0
        %v2046 = vadd.f32 0.0, %v2045
        %v2047 = vpop.f32.mrb[0].mxu0
        %v2048 = vadd.f32 0.0, %v2047
        %2049 = vmatprep.mubr.f32.mxu0 0.0
        %2050 = vmatmul.mubr.f32.gmra.mrb[0].mxu0 %v1973
        %v2051 = vpop.f32.mrb[0].mxu0
        %v2052 = vadd.f32 0.0, %v2051
        %v2053 = vpop.f32.mrb[0].mxu0
        %v2054 = vadd.f32 0.0, %v2053
        %2055 = vmatprep.mubr.f32.mxu0 0.0
        %2056 = vmatmul.mubr.f32.gmra.mrb[0].mxu0 %v1975
        %v2057 = vpop.f32.mrb[0].mxu0
        %v2058 = vadd.f32 0.0, %v2057
        %v2059 = vpop.f32.mrb[0].mxu0
        %v2060 = vadd.f32 0.0, %v2059
        %2061 = vmatprep.mubr.f32.mxu0 0.0
        %2062 = vmatmul.mubr.f32.gmra.mrb[0].mxu0 %v1977
        %v2063 = vpop.f32.mrb[0].mxu0
        %v2064 = vadd.f32 0.0, %v2063
        %v2065 = vpop.f32.mrb[0].mxu0
        %v2066 = vadd.f32 0.0, %v2065
        %2067 = vdwg.mxu0
        %v2068 = vadd.f32 %v1946, %v2046
        %v2069 = vadd.f32 %v1947, %v2048
        %v2070 = vadd.f32 %v1948, %v2052
        %v2071 = vadd.f32 %v1949, %v2054
        %v2072 = vadd.f32 %v1950, %v2058
        %v2073 = vadd.f32 %v1951, %v2060
        %v2074 = vadd.f32 %v1952, %v2064
        %v2075 = vadd.f32 %v1953, %v2066
        %s2076 = scalar_lea.vmem %s1, 896
        %v2077 = vld [vmem:[%s2076] sm:$0xff]
        %v2078 = vld [vmem:[%s2076 + $0x8] sm:$0xff]
        %v2079 = vld [vmem:[%s2076 + $0x10] sm:$0xff]
        %v2080 = vld [vmem:[%s2076 + $0x18] sm:$0xff]
        %v2081 = vld [vmem:[%s2076 + $0x20] sm:$0xff]
        %v2082 = vld [vmem:[%s2076 + $0x28] sm:$0xff]
        %v2083 = vld [vmem:[%s2076 + $0x30] sm:$0xff]
        %v2084 = vld [vmem:[%s2076 + $0x38] sm:$0xff]
        %2085 = vrot.lane.b32.xlu0 %v868, 64
        %v2086 = vpop.permute.xlu0 %2085
        %2087 = vrot.lane.b32.xlu0 %v870, 64
        %v2088 = vpop.permute.xlu0 %2087
        %2089 = vrot.lane.b32.xlu0 %v872, 64
        %v2090 = vpop.permute.xlu0 %2089
        %2091 = vrot.lane.b32.xlu0 %v871, 64
        %v2092 = vpop.permute.xlu0 %2091
        %v2093 = vsel %vm417, %v2086, 0
        %v2095 = vsel %vm417, %v2088, 0
        %v2097 = vsel %vm417, %v2090, 0
        %v2099 = vsel %vm417, %v2092, 0
        %2101 = vmatprep.subr.mxu0 %v2078
        %2102 = vmatpush1.msra.mxu0 %v2077
        %2103 = vmatprep.subr.mxu0 %v2080
        %2104 = vmatpush1.msra.mxu0 %v2079
        %2105 = vmatprep.subr.mxu0 %v2082
        %2106 = vmatpush1.msra.mxu0 %v2081
        %2107 = vmatprep.subr.mxu0 %v2084
        %2108 = vmatpush1.msra.mxu0 %v2083
        %2109 = vmatprep.subr.mxu0 0.0
        %2110 = vmatpush1.msra.mxu0 0.0
        %2111 = vmatprep.subr.mxu0 0.0
        %2112 = vmatpush1.msra.mxu0 0.0
        %2113 = vmatprep.subr.mxu0 0.0
        %2114 = vmatpush1.msra.mxu0 0.0
        %2115 = vmatprep.subr.mxu0 0.0
        %2116 = vmatpush1.msra.mxu0 0.0
        %2117 = vmatprep.subr.mxu0 0.0
        %2118 = vmatpush1.msra.mxu0 0.0
        %2119 = vmatprep.subr.mxu0 0.0
        %2120 = vmatpush1.msra.mxu0 0.0
        %2121 = vmatprep.subr.mxu0 0.0
        %2122 = vmatpush1.msra.mxu0 0.0
        %2123 = vmatprep.subr.mxu0 0.0
        %2124 = vmatpush1.msra.mxu0 0.0
        %2125 = vmatprep.subr.mxu0 0.0
        %2126 = vmatpush1.msra.mxu0 0.0
        %2127 = vmatprep.subr.mxu0 0.0
        %2128 = vmatpush1.msra.mxu0 0.0
        %2129 = vmatprep.subr.mxu0 0.0
        %2130 = vmatpush1.msra.mxu0 0.0
        %2131 = vmatprep.subr.mxu0 0.0
        %2132 = vmatpush1.msra.mxu0 0.0
        %2133 = vmatprep.subr.mxu0 0.0
        %2134 = vmatpush1.msra.mxu0 0.0
        %2135 = vmatprep.subr.mxu0 0.0
        %2136 = vmatpush1.msra.mxu0 0.0
        %2137 = vmatprep.subr.mxu0 0.0
        %2138 = vmatpush1.msra.mxu0 0.0
        %2139 = vmatprep.subr.mxu0 0.0
        %2140 = vmatpush1.msra.mxu0 0.0
        %2141 = vmatprep.subr.mxu0 0.0
        %2142 = vmatpush1.msra.mxu0 0.0
        %2143 = vmatprep.subr.mxu0 0.0
        %2144 = vmatpush1.msra.mxu0 0.0
        %2145 = vmatprep.subr.mxu0 0.0
        %2146 = vmatpush1.msra.mxu0 0.0
        %2147 = vmatprep.subr.mxu0 0.0
        %2148 = vmatpush1.msra.mxu0 0.0
        %2149 = vmatprep.subr.mxu0 0.0
        %2150 = vmatpush1.msra.mxu0 0.0
        %2151 = vmatprep.subr.mxu0 0.0
        %2152 = vmatpush1.msra.mxu0 0.0
        %2153 = vmatprep.subr.mxu0 0.0
        %2154 = vmatpush1.msra.mxu0 0.0
        %2155 = vmatprep.subr.mxu0 0.0
        %2156 = vmatpush1.msra.mxu0 0.0
        %2157 = vmatprep.subr.mxu0 0.0
        %2158 = vmatpush1.msra.mxu0 0.0
        %2159 = vmatprep.subr.mxu0 0.0
        %2160 = vmatpush1.msra.mxu0 0.0
        %2161 = vmatprep.subr.mxu0 0.0
        %2162 = vmatpush1.msra.mxu0 0.0
        %2163 = vmatprep.subr.mxu0 0.0
        %2164 = vmatpush1.msra.mxu0 0.0
        %2165 = vmatprep.mubr.f32.mxu0 0.0
        %2166 = vmatmul.mubr.f32.gmra.mrb[0].mxu0 %v2093
        %v2167 = vpop.f32.mrb[0].mxu0
        %v2168 = vadd.f32 0.0, %v2167
        %v2169 = vpop.f32.mrb[0].mxu0
        %v2170 = vadd.f32 0.0, %v2169
        %2171 = vmatprep.mubr.f32.mxu0 0.0
        %2172 = vmatmul.mubr.f32.gmra.mrb[0].mxu0 %v2095
        %v2173 = vpop.f32.mrb[0].mxu0
        %v2174 = vadd.f32 0.0, %v2173
        %v2175 = vpop.f32.mrb[0].mxu0
        %v2176 = vadd.f32 0.0, %v2175
        %2177 = vmatprep.mubr.f32.mxu0 0.0
        %2178 = vmatmul.mubr.f32.gmra.mrb[0].mxu0 %v2097
        %v2179 = vpop.f32.mrb[0].mxu0
        %v2180 = vadd.f32 0.0, %v2179
        %v2181 = vpop.f32.mrb[0].mxu0
        %v2182 = vadd.f32 0.0, %v2181
        %2183 = vmatprep.mubr.f32.mxu0 0.0
        %2184 = vmatmul.mubr.f32.gmra.mrb[0].mxu0 %v2099
        %v2185 = vpop.f32.mrb[0].mxu0
        %v2186 = vadd.f32 0.0, %v2185
        %v2187 = vpop.f32.mrb[0].mxu0
        %v2188 = vadd.f32 0.0, %v2187
        %2189 = vdwg.mxu0
        %v2190 = vadd.f32 %v2068, %v2168
        %v2191 = vadd.f32 %v2069, %v2170
        %v2192 = vadd.f32 %v2070, %v2174
        %v2193 = vadd.f32 %v2071, %v2176
        %v2194 = vadd.f32 %v2072, %v2180
        %v2195 = vadd.f32 %v2073, %v2182
        %v2196 = vadd.f32 %v2074, %v2186
        %v2197 = vadd.f32 %v2075, %v2188
        %v2198 = vld [vmem:[%s2] sm:$0x3]
        %v2200 = vlaneseq
        %v2201 = vshrl.u32 %v2200, 7
        %v2202 = vsub.s32 0, %v2201
        %v2203 = vrot.slane %v2198, %v2202
        %v2204 = vlaneseq
        %v2205 = vshrl.u32 %v2204, 7
        %v2206 = vsub.s32 1, %v2205
        %v2207 = vrot.slane %v2198, %v2206
        %v2210 = vadd.f32 %v2190, %v2203
        %v2211 = vadd.f32 %v2191, %v2207
        %v2212 = vadd.f32 %v2192, %v2203
        %v2213 = vadd.f32 %v2193, %v2207
        %v2214 = vadd.f32 %v2194, %v2203
        %v2215 = vadd.f32 %v2195, %v2207
        %v2216 = vadd.f32 %v2196, %v2203
        %v2217 = vadd.f32 %v2197, %v2207
        %v2218 = vmax.f32 %v2210, 0.0
        %v2219 = vmax.f32 %v2211, 0.0
        %v2220 = vmax.f32 %v2212, 0.0
        %v2221 = vmax.f32 %v2213, 0.0
        %v2222 = vmax.f32 %v2214, 0.0
        %v2223 = vmax.f32 %v2215, 0.0
        %v2224 = vmax.f32 %v2216, 0.0
        %v2225 = vmax.f32 %v2217, 0.0
        %v2234 = vrot.slane %v2218, 1
        %v2235 = vrot.slane %v2220, 1
        %v2236 = vsel %vm409, %v2234, %v2235
        %v2237 = vrot.slane %v2219, 1
        %v2238 = vrot.slane %v2221, 1
        %v2239 = vsel %vm409, %v2237, %v2238
        %v2240 = vrot.slane %v2222, 1
        %v2241 = vsel %vm409, %v2235, %v2240
        %v2242 = vrot.slane %v2223, 1
        %v2243 = vsel %vm409, %v2238, %v2242
        %v2244 = vrot.slane %v2224, 1
        %v2245 = vsel %vm409, %v2240, %v2244
        %v2246 = vrot.slane %v2225, 1
        %v2247 = vsel %vm409, %v2242, %v2246
        %v2256 = vmax.f32 %v2218, %v2236
        %v2257 = vmax.f32 %v2219, %v2239
        %v2258 = vmax.f32 %v2220, %v2241
        %v2259 = vmax.f32 %v2221, %v2243
        %v2260 = vmax.f32 %v2222, %v2245
        %v2261 = vmax.f32 %v2223, %v2247
        %v2262 = vmax.f32 %v2224, %v2244
        %v2263 = vmax.f32 %v2225, %v2246
        %v2264 = vlaneseq
        %v2265 = vshrl.u32 %v2264, 7
        %v2266 = vadd.s32 %v2265, 8
        %v2267 = vlaneseq
        %v2268 = vand.u32 %v2267, 127
        %v2269 = vmul.u32 %v2265, 2
        %v2270 = vmul.u32 %v2266, 2
        %vm2271 = vcmp.eq.s32.totalorder %v2268, %v2269
        %vm2272 = vcmp.eq.s32.totalorder %v2268, %v2270
        %v2273 = vsel %vm2271, 1.0, 0.0
        %v2274 = vsel %vm2272, 1.0, 0.0
        %vm2275 = vcmask 220160
        %v2277 = vsel %vm2275, %v2273, 0
        %v2280 = vsel %vm2275, %v2274, 0
        %vm2282 = vcmask 1042432
        %v2284 = vsel %vm2282, %v2262, 0
        %v2287 = vsel %vm2282, %v2263, 0
        %2289 = vmatprep.subr.mxu0 %v2257
        %2290 = vmatpush1.msra.mxu0 %v2256
        %2291 = vmatprep.subr.mxu0 %v2259
        %2292 = vmatpush1.msra.mxu0 %v2258
        %2293 = vmatprep.subr.mxu0 %v2261
        %2294 = vmatpush1.msra.mxu0 %v2260
        %2295 = vmatprep.subr.mxu0 %v2287
        %2296 = vmatpush1.msra.mxu0 %v2284
        %2297 = vmatprep.subr.mxu0 0.0
        %2298 = vmatpush1.msra.mxu0 0.0
        %2299 = vmatprep.subr.mxu0 0.0
        %2300 = vmatpush1.msra.mxu0 0.0
        %2301 = vmatprep.subr.mxu0 0.0
        %2302 = vmatpush1.msra.mxu0 0.0
        %2303 = vmatprep.subr.mxu0 0.0
        %2304 = vmatpush1.msra.mxu0 0.0
        %2305 = vmatprep.subr.mxu0 0.0
        %2306 = vmatpush1.msra.mxu0 0.0
        %2307 = vmatprep.subr.mxu0 0.0
        %2308 = vmatpush1.msra.mxu0 0.0
        %2309 = vmatprep.subr.mxu0 0.0
        %2310 = vmatpush1.msra.mxu0 0.0
        %2311 = vmatprep.subr.mxu0 0.0
        %2312 = vmatpush1.msra.mxu0 0.0
        %2313 = vmatprep.subr.mxu0 0.0
        %2314 = vmatpush1.msra.mxu0 0.0
        %2315 = vmatprep.subr.mxu0 0.0
        %2316 = vmatpush1.msra.mxu0 0.0
        %2317 = vmatprep.subr.mxu0 0.0
        %2318 = vmatpush1.msra.mxu0 0.0
        %2319 = vmatprep.subr.mxu0 0.0
        %2320 = vmatpush1.msra.mxu0 0.0
        %2321 = vmatprep.subr.mxu0 0.0
        %2322 = vmatpush1.msra.mxu0 0.0
        %2323 = vmatprep.subr.mxu0 0.0
        %2324 = vmatpush1.msra.mxu0 0.0
        %2325 = vmatprep.subr.mxu0 0.0
        %2326 = vmatpush1.msra.mxu0 0.0
        %2327 = vmatprep.subr.mxu0 0.0
        %2328 = vmatpush1.msra.mxu0 0.0
        %2329 = vmatprep.subr.mxu0 0.0
        %2330 = vmatpush1.msra.mxu0 0.0
        %2331 = vmatprep.subr.mxu0 0.0
        %2332 = vmatpush1.msra.mxu0 0.0
        %2333 = vmatprep.subr.mxu0 0.0
        %2334 = vmatpush1.msra.mxu0 0.0
        %2335 = vmatprep.subr.mxu0 0.0
        %2336 = vmatpush1.msra.mxu0 0.0
        %2337 = vmatprep.subr.mxu0 0.0
        %2338 = vmatpush1.msra.mxu0 0.0
        %2339 = vmatprep.subr.mxu0 0.0
        %2340 = vmatpush1.msra.mxu0 0.0
        %2341 = vmatprep.subr.mxu0 0.0
        %2342 = vmatpush1.msra.mxu0 0.0
        %2343 = vmatprep.subr.mxu0 0.0
        %2344 = vmatpush1.msra.mxu0 0.0
        %2345 = vmatprep.subr.mxu0 0.0
        %2346 = vmatpush1.msra.mxu0 0.0
        %2347 = vmatprep.subr.mxu0 0.0
        %2348 = vmatpush1.msra.mxu0 0.0
        %2349 = vmatprep.subr.mxu0 0.0
        %2350 = vmatpush1.msra.mxu0 0.0
        %2351 = vmatprep.subr.mxu0 0.0
        %2352 = vmatpush1.msra.mxu0 0.0
        %2353 = vmatprep.mubr.f32.mxu0 0.0
        %2354 = vmatmul.mubr.f32.gmra.mrb[0].mxu0 %v2277
        %v2355 = vpop.f32.mrb[0].mxu0
        %v2356 = vadd.f32 0.0, %v2355
        %v2357 = vpop.f32.mrb[0].mxu0
        %v2358 = vadd.f32 0.0, %v2357
        %2359 = vmatprep.mubr.f32.mxu0 0.0
        %2360 = vmatmul.mubr.f32.gmra.mrb[0].mxu0 %v2280
        %v2361 = vpop.f32.mrb[0].mxu0
        %v2362 = vadd.f32 0.0, %v2361
        %v2363 = vpop.f32.mrb[0].mxu0
        %v2364 = vadd.f32 0.0, %v2363
        %2365 = vdwg.mxu0
        %2370 = vrot.lane.b32.xlu0 %v2356, 127
        %v2371 = vpop.permute.xlu0 %2370
        %2372 = vrot.lane.b32.xlu0 %v2358, 127
        %v2373 = vpop.permute.xlu0 %2372
        %2374 = vrot.lane.b32.xlu0 %v2362, 127
        %v2375 = vpop.permute.xlu0 %2374
        %2376 = vrot.lane.b32.xlu0 %v2364, 127
        %v2377 = vpop.permute.xlu0 %2376
        %vm2378 = vcmask 1039360
        %v2379 = vsel %vm2378, %v2371, %v2373
        %v2380 = vsel %vm2378, %v2375, %v2377
        %v2385 = vmax.f32 %v2356, %v2379
        %v2386 = vmax.f32 %v2358, %v2373
        %v2387 = vmax.f32 %v2362, %v2380
        %v2388 = vmax.f32 %v2364, %v2377
        %v2389 = vadd.s32 %v2265, 16
        %v2390 = vadd.s32 %v2265, 24
        %v2391 = vadd.s32 %v2265, 32
        %v2392 = vadd.s32 %v2265, 40
        %v2393 = vadd.s32 %v2265, 48
        %v2394 = vadd.s32 %v2265, 56
        %v2395 = vadd.s32 %v2265, 64
        %v2396 = vadd.s32 %v2265, 72
        %v2397 = vadd.s32 %v2265, 80
        %v2398 = vadd.s32 %v2265, 88
        %v2399 = vadd.s32 %v2265, 96
        %v2400 = vadd.s32 %v2265, 104
        %v2401 = vadd.s32 %v2265, 112
        %v2402 = vadd.s32 %v2265, 120
        %v2403 = vadd.s32 %v2265, 128
        %v2404 = vadd.s32 %v2265, 136
        %v2405 = vadd.s32 %v2265, 144
        %v2406 = vadd.s32 %v2265, 152
        %v2407 = vadd.s32 %v2265, 160
        %v2408 = vmul.u32 %v2268, 2
        %vm2409 = vcmp.eq.s32.totalorder %v2265, %v2408
        %vm2410 = vcmp.eq.s32.totalorder %v2266, %v2408
        %vm2411 = vcmp.eq.s32.totalorder %v2389, %v2408
        %vm2412 = vcmp.eq.s32.totalorder %v2390, %v2408
        %vm2413 = vcmp.eq.s32.totalorder %v2391, %v2408
        %vm2414 = vcmp.eq.s32.totalorder %v2392, %v2408
        %vm2415 = vcmp.eq.s32.totalorder %v2393, %v2408
        %vm2416 = vcmp.eq.s32.totalorder %v2394, %v2408
        %vm2417 = vcmp.eq.s32.totalorder %v2395, %v2408
        %vm2418 = vcmp.eq.s32.totalorder %v2396, %v2408
        %vm2419 = vcmp.eq.s32.totalorder %v2397, %v2408
        %vm2420 = vcmp.eq.s32.totalorder %v2398, %v2408
        %vm2421 = vcmp.eq.s32.totalorder %v2399, %v2408
        %vm2422 = vcmp.eq.s32.totalorder %v2400, %v2408
        %vm2423 = vcmp.eq.s32.totalorder %v2401, %v2408
        %vm2424 = vcmp.eq.s32.totalorder %v2402, %v2408
        %vm2425 = vcmp.eq.s32.totalorder %v2403, %v2408
        %vm2426 = vcmp.eq.s32.totalorder %v2404, %v2408
        %vm2427 = vcmp.eq.s32.totalorder %v2405, %v2408
        %vm2428 = vcmp.eq.s32.totalorder %v2406, %v2408
        %vm2429 = vcmp.eq.s32.totalorder %v2407, %v2408
        %v2430 = vsel %vm2409, 1.0, 0.0
        %v2431 = vsel %vm2410, 1.0, 0.0
        %v2432 = vsel %vm2411, 1.0, 0.0
        %v2433 = vsel %vm2412, 1.0, 0.0
        %v2434 = vsel %vm2413, 1.0, 0.0
        %v2435 = vsel %vm2414, 1.0, 0.0
        %v2436 = vsel %vm2415, 1.0, 0.0
        %v2437 = vsel %vm2416, 1.0, 0.0
        %v2438 = vsel %vm2417, 1.0, 0.0
        %v2439 = vsel %vm2418, 1.0, 0.0
        %v2440 = vsel %vm2419, 1.0, 0.0
        %v2441 = vsel %vm2420, 1.0, 0.0
        %v2442 = vsel %vm2421, 1.0, 0.0
        %v2443 = vsel %vm2422, 1.0, 0.0
        %v2444 = vsel %vm2423, 1.0, 0.0
        %v2445 = vsel %vm2424, 1.0, 0.0
        %v2446 = vsel %vm2425, 1.0, 0.0
        %v2447 = vsel %vm2426, 1.0, 0.0
        %v2448 = vsel %vm2427, 1.0, 0.0
        %v2449 = vsel %vm2428, 1.0, 0.0
        %v2450 = vsel %vm2429, 1.0, 0.0
        %vm2451 = vcmask 318464
        %v2453 = vsel %vm2451, %v2386, 0
        %v2456 = vsel %vm2451, %v2388, 0
        %v2459 = vsel %vm409, %v2450, 0
        %2461 = vmatprep.subr.mxu0 0.0
        %2462 = vmatpush1.msra.mxu0 %v2430
        %2463 = vmatprep.subr.mxu0 0.0
        %2464 = vmatpush1.msra.mxu0 %v2431
        %2465 = vmatprep.subr.mxu0 0.0
        %2466 = vmatpush1.msra.mxu0 %v2432
        %2467 = vmatprep.subr.mxu0 0.0
        %2468 = vmatpush1.msra.mxu0 %v2433
        %2469 = vmatprep.subr.mxu0 0.0
        %2470 = vmatpush1.msra.mxu0 %v2434
        %2471 = vmatprep.subr.mxu0 0.0
        %2472 = vmatpush1.msra.mxu0 %v2435
        %2473 = vmatprep.subr.mxu0 0.0
        %2474 = vmatpush1.msra.mxu0 %v2436
        %2475 = vmatprep.subr.mxu0 0.0
        %2476 = vmatpush1.msra.mxu0 %v2437
        %2477 = vmatprep.subr.mxu0 0.0
        %2478 = vmatpush1.msra.mxu0 %v2438
        %2479 = vmatprep.subr.mxu0 0.0
        %2480 = vmatpush1.msra.mxu0 %v2439
        %2481 = vmatprep.subr.mxu0 0.0
        %2482 = vmatpush1.msra.mxu0 %v2440
        %2483 = vmatprep.subr.mxu0 0.0
        %2484 = vmatpush1.msra.mxu0 %v2441
        %2485 = vmatprep.subr.mxu0 0.0
        %2486 = vmatpush1.msra.mxu0 %v2442
        %2487 = vmatprep.subr.mxu0 0.0
        %2488 = vmatpush1.msra.mxu0 %v2443
        %2489 = vmatprep.subr.mxu0 0.0
        %2490 = vmatpush1.msra.mxu0 %v2444
        %2491 = vmatprep.subr.mxu0 0.0
        %2492 = vmatpush1.msra.mxu0 %v2445
        %2493 = vmatprep.subr.mxu0 0.0
        %2494 = vmatpush1.msra.mxu0 %v2446
        %2495 = vmatprep.subr.mxu0 0.0
        %2496 = vmatpush1.msra.mxu0 %v2447
        %2497 = vmatprep.subr.mxu0 0.0
        %2498 = vmatpush1.msra.mxu0 %v2448
        %2499 = vmatprep.subr.mxu0 0.0
        %2500 = vmatpush1.msra.mxu0 %v2449
        %2501 = vmatprep.subr.mxu0 0.0
        %2502 = vmatpush1.msra.mxu0 %v2459
        %2503 = vmatprep.subr.mxu0 0.0
        %2504 = vmatpush1.msra.mxu0 0.0
        %2505 = vmatprep.subr.mxu0 0.0
        %2506 = vmatpush1.msra.mxu0 0.0
        %2507 = vmatprep.subr.mxu0 0.0
        %2508 = vmatpush1.msra.mxu0 0.0
        %2509 = vmatprep.subr.mxu0 0.0
        %2510 = vmatpush1.msra.mxu0 0.0
        %2511 = vmatprep.subr.mxu0 0.0
        %2512 = vmatpush1.msra.mxu0 0.0
        %2513 = vmatprep.subr.mxu0 0.0
        %2514 = vmatpush1.msra.mxu0 0.0
        %2515 = vmatprep.subr.mxu0 0.0
        %2516 = vmatpush1.msra.mxu0 0.0
        %2517 = vmatprep.subr.mxu0 0.0
        %2518 = vmatpush1.msra.mxu0 0.0
        %2519 = vmatprep.subr.mxu0 0.0
        %2520 = vmatpush1.msra.mxu0 0.0
        %2521 = vmatprep.subr.mxu0 0.0
        %2522 = vmatpush1.msra.mxu0 0.0
        %2523 = vmatprep.subr.mxu0 0.0
        %2524 = vmatpush1.msra.mxu0 0.0
        %2525 = vmatprep.mubr.f32.mxu0 %v2453
        %2526 = vmatmul.mubr.f32.gmra.mrb[0].mxu0 %v2385
        %v2527 = vpop.f32.mrb[0].mxu0
        %v2528 = vadd.f32 0.0, %v2527
        %v2529 = vpop.f32.mrb[0].mxu0
        %2530 = vmatprep.mubr.f32.mxu0 %v2456
        %2531 = vmatmul.mubr.f32.gmra.mrb[0].mxu0 %v2387
        %v2532 = vpop.f32.mrb[0].mxu0
        %v2533 = vadd.f32 0.0, %v2532
        %v2534 = vpop.f32.mrb[0].mxu0
        %2535 = vdwg.mxu0
        %v2536 = vld [vmem:[%s3] sm:$0xff]
        %v2537 = vld [vmem:[%s3 + $0x8] sm:$0xff]
        %v2538 = vld [vmem:[%s3 + $0x10] sm:$0x3f]
        %v2539 = vld [vmem:[%s3 + $0x18] sm:$0x3f]
        %s2540 = scalar_lea.vmem %s3, 32
        %v2541 = vld [vmem:[%s2540] sm:$0xff]
        %v2542 = vld [vmem:[%s2540 + $0x8] sm:$0xff]
        %v2543 = vld [vmem:[%s2540 + $0x10] sm:$0x3f]
        %v2544 = vld [vmem:[%s2540 + $0x18] sm:$0x3f]
        %v2547 = vrot.slane %v2528, 1
        %v2548 = vrot.slane %v2533, 1
        %v2549 = vsel %vm409, %v2547, %v2548
        %vm2550 = vcmask 113664
        %v2551 = vsel %vm2550, %v2549, 0
        %v2553 = vsel %vm2550, %v2548, 0
        %v2556 = vsel %vm621, %v2543, 0
        %v2559 = vsel %vm621, %v2544, 0
        %2561 = vmatprep.subr.mxu0 %v2542
        %2562 = vmatpush1.msra.mxu0 %v2541
        %2563 = vmatprep.subr.mxu0 %v2559
        %2564 = vmatpush1.msra.mxu0 %v2556
        %2565 = vmatprep.subr.mxu0 0.0
        %2566 = vmatpush1.msra.mxu0 0.0
        %2567 = vmatprep.subr.mxu0 0.0
        %2568 = vmatpush1.msra.mxu0 0.0
        %2569 = vmatprep.subr.mxu0 0.0
        %2570 = vmatpush1.msra.mxu0 0.0
        %2571 = vmatprep.subr.mxu0 0.0
        %2572 = vmatpush1.msra.mxu0 0.0
        %2573 = vmatprep.subr.mxu0 0.0
        %2574 = vmatpush1.msra.mxu0 0.0
        %2575 = vmatprep.subr.mxu0 0.0
        %2576 = vmatpush1.msra.mxu0 0.0
        %2577 = vmatprep.subr.mxu0 0.0
        %2578 = vmatpush1.msra.mxu0 0.0
        %2579 = vmatprep.subr.mxu0 0.0
        %2580 = vmatpush1.msra.mxu0 0.0
        %2581 = vmatprep.subr.mxu0 0.0
        %2582 = vmatpush1.msra.mxu0 0.0
        %2583 = vmatprep.subr.mxu0 0.0
        %2584 = vmatpush1.msra.mxu0 0.0
        %2585 = vmatprep.subr.mxu0 0.0
        %2586 = vmatpush1.msra.mxu0 0.0
        %2587 = vmatprep.subr.mxu0 0.0
        %2588 = vmatpush1.msra.mxu0 0.0
        %2589 = vmatprep.subr.mxu0 0.0
        %2590 = vmatpush1.msra.mxu0 0.0
        %2591 = vmatprep.subr.mxu0 0.0
        %2592 = vmatpush1.msra.mxu0 0.0
        %2593 = vmatprep.subr.mxu0 0.0
        %2594 = vmatpush1.msra.mxu0 0.0
        %2595 = vmatprep.subr.mxu0 0.0
        %2596 = vmatpush1.msra.mxu0 0.0
        %2597 = vmatprep.subr.mxu0 0.0
        %2598 = vmatpush1.msra.mxu0 0.0
        %2599 = vmatprep.subr.mxu0 0.0
        %2600 = vmatpush1.msra.mxu0 0.0
        %2601 = vmatprep.subr.mxu0 0.0
        %2602 = vmatpush1.msra.mxu0 0.0
        %2603 = vmatprep.subr.mxu0 0.0
        %2604 = vmatpush1.msra.mxu0 0.0
        %2605 = vmatprep.subr.mxu0 0.0
        %2606 = vmatpush1.msra.mxu0 0.0
        %2607 = vmatprep.subr.mxu0 0.0
        %2608 = vmatpush1.msra.mxu0 0.0
        %2609 = vmatprep.subr.mxu0 0.0
        %2610 = vmatpush1.msra.mxu0 0.0
        %2611 = vmatprep.subr.mxu0 0.0
        %2612 = vmatpush1.msra.mxu0 0.0
        %2613 = vmatprep.subr.mxu0 0.0
        %2614 = vmatpush1.msra.mxu0 0.0
        %2615 = vmatprep.subr.mxu0 0.0
        %2616 = vmatpush1.msra.mxu0 0.0
        %2617 = vmatprep.subr.mxu0 0.0
        %2618 = vmatpush1.msra.mxu0 0.0
        %2619 = vmatprep.subr.mxu0 0.0
        %2620 = vmatpush1.msra.mxu0 0.0
        %2621 = vmatprep.subr.mxu0 0.0
        %2622 = vmatpush1.msra.mxu0 0.0
        %2623 = vmatprep.subr.mxu0 0.0
        %2624 = vmatpush1.msra.mxu0 0.0
        %2625 = vmatprep.mubr.f32.mxu0 0.0
        %2626 = vmatmul.mubr.f32.gmra.mrb[0].mxu0 %v2551
        %v2627 = vpop.f32.mrb[0].mxu0
        %v2628 = vadd.f32 0.0, %v2627
        %v2629 = vpop.f32.mrb[0].mxu0
        %v2630 = vadd.f32 0.0, %v2629
        %2631 = vmatprep.mubr.f32.mxu0 0.0
        %2632 = vmatmul.mubr.f32.gmra.mrb[0].mxu0 %v2553
        %v2633 = vpop.f32.mrb[0].mxu0
        %v2634 = vadd.f32 0.0, %v2633
        %v2635 = vpop.f32.mrb[0].mxu0
        %v2636 = vadd.f32 0.0, %v2635
        %2637 = vdwg.mxu0
        %v2638 = vsel %vm2550, %v2528, 0
        %v2640 = vsel %vm2550, %v2533, 0
        %v2643 = vsel %vm621, %v2538, 0
        %v2646 = vsel %vm621, %v2539, 0
        %2648 = vmatprep.subr.mxu0 %v2537
        %2649 = vmatpush1.msra.mxu0 %v2536
        %2650 = vmatprep.subr.mxu0 %v2646
        %2651 = vmatpush1.msra.mxu0 %v2643
        %2652 = vmatprep.subr.mxu0 0.0
        %2653 = vmatpush1.msra.mxu0 0.0
        %2654 = vmatprep.subr.mxu0 0.0
        %2655 = vmatpush1.msra.mxu0 0.0
        %2656 = vmatprep.subr.mxu0 0.0
        %2657 = vmatpush1.msra.mxu0 0.0
        %2658 = vmatprep.subr.mxu0 0.0
        %2659 = vmatpush1.msra.mxu0 0.0
        %2660 = vmatprep.subr.mxu0 0.0
        %2661 = vmatpush1.msra.mxu0 0.0
        %2662 = vmatprep.subr.mxu0 0.0
        %2663 = vmatpush1.msra.mxu0 0.0
        %2664 = vmatprep.subr.mxu0 0.0
        %2665 = vmatpush1.msra.mxu0 0.0
        %2666 = vmatprep.subr.mxu0 0.0
        %2667 = vmatpush1.msra.mxu0 0.0
        %2668 = vmatprep.subr.mxu0 0.0
        %2669 = vmatpush1.msra.mxu0 0.0
        %2670 = vmatprep.subr.mxu0 0.0
        %2671 = vmatpush1.msra.mxu0 0.0
        %2672 = vmatprep.subr.mxu0 0.0
        %2673 = vmatpush1.msra.mxu0 0.0
        %2674 = vmatprep.subr.mxu0 0.0
        %2675 = vmatpush1.msra.mxu0 0.0
        %2676 = vmatprep.subr.mxu0 0.0
        %2677 = vmatpush1.msra.mxu0 0.0
        %2678 = vmatprep.subr.mxu0 0.0
        %2679 = vmatpush1.msra.mxu0 0.0
        %2680 = vmatprep.subr.mxu0 0.0
        %2681 = vmatpush1.msra.mxu0 0.0
        %2682 = vmatprep.subr.mxu0 0.0
        %2683 = vmatpush1.msra.mxu0 0.0
        %2684 = vmatprep.subr.mxu0 0.0
        %2685 = vmatpush1.msra.mxu0 0.0
        %2686 = vmatprep.subr.mxu0 0.0
        %2687 = vmatpush1.msra.mxu0 0.0
        %2688 = vmatprep.subr.mxu0 0.0
        %2689 = vmatpush1.msra.mxu0 0.0
        %2690 = vmatprep.subr.mxu0 0.0
        %2691 = vmatpush1.msra.mxu0 0.0
        %2692 = vmatprep.subr.mxu0 0.0
        %2693 = vmatpush1.msra.mxu0 0.0
        %2694 = vmatprep.subr.mxu0 0.0
        %2695 = vmatpush1.msra.mxu0 0.0
        %2696 = vmatprep.subr.mxu0 0.0
        %2697 = vmatpush1.msra.mxu0 0.0
        %2698 = vmatprep.subr.mxu0 0.0
        %2699 = vmatpush1.msra.mxu0 0.0
        %2700 = vmatprep.subr.mxu0 0.0
        %2701 = vmatpush1.msra.mxu0 0.0
        %2702 = vmatprep.subr.mxu0 0.0
        %2703 = vmatpush1.msra.mxu0 0.0
        %2704 = vmatprep.subr.mxu0 0.0
        %2705 = vmatpush1.msra.mxu0 0.0
        %2706 = vmatprep.subr.mxu0 0.0
        %2707 = vmatpush1.msra.mxu0 0.0
        %2708 = vmatprep.subr.mxu0 0.0
        %2709 = vmatpush1.msra.mxu0 0.0
        %2710 = vmatprep.subr.mxu0 0.0
        %2711 = vmatpush1.msra.mxu0 0.0
        %2712 = vmatprep.mubr.f32.mxu0 0.0
        %2713 = vmatmul.mubr.f32.gmra.mrb[0].mxu0 %v2638
        %v2714 = vpop.f32.mrb[0].mxu0
        %v2715 = vadd.f32 %v2628, %v2714
        %v2716 = vpop.f32.mrb[0].mxu0
        %v2717 = vadd.f32 %v2630, %v2716
        %2718 = vmatprep.mubr.f32.mxu0 0.0
        %2719 = vmatmul.mubr.f32.gmra.mrb[0].mxu0 %v2640
        %v2720 = vpop.f32.mrb[0].mxu0
        %v2721 = vadd.f32 %v2634, %v2720
        %v2722 = vpop.f32.mrb[0].mxu0
        %v2723 = vadd.f32 %v2636, %v2722
        %2724 = vdwg.mxu0
        %s2725 = scalar_lea.vmem %s3, 64
        %v2726 = vld [vmem:[%s2725] sm:$0xff]
        %v2727 = vld [vmem:[%s2725 + $0x8] sm:$0xff]
        %v2728 = vld [vmem:[%s2725 + $0x10] sm:$0x3f]
        %v2729 = vld [vmem:[%s2725 + $0x18] sm:$0x3f]
        %v2730 = vrot.slane %v2528, 2
        %v2731 = vrot.slane %v2533, 2
        %v2732 = vsel %vm621, %v2730, %v2731
        %v2733 = vsel %vm2550, %v2732, 0
        %v2735 = vsel %vm2550, %v2731, 0
        %v2738 = vsel %vm621, %v2728, 0
        %v2741 = vsel %vm621, %v2729, 0
        %2743 = vmatprep.subr.mxu0 %v2727
        %2744 = vmatpush1.msra.mxu0 %v2726
        %2745 = vmatprep.subr.mxu0 %v2741
        %2746 = vmatpush1.msra.mxu0 %v2738
        %2747 = vmatprep.subr.mxu0 0.0
        %2748 = vmatpush1.msra.mxu0 0.0
        %2749 = vmatprep.subr.mxu0 0.0
        %2750 = vmatpush1.msra.mxu0 0.0
        %2751 = vmatprep.subr.mxu0 0.0
        %2752 = vmatpush1.msra.mxu0 0.0
        %2753 = vmatprep.subr.mxu0 0.0
        %2754 = vmatpush1.msra.mxu0 0.0
        %2755 = vmatprep.subr.mxu0 0.0
        %2756 = vmatpush1.msra.mxu0 0.0
        %2757 = vmatprep.subr.mxu0 0.0
        %2758 = vmatpush1.msra.mxu0 0.0
        %2759 = vmatprep.subr.mxu0 0.0
        %2760 = vmatpush1.msra.mxu0 0.0
        %2761 = vmatprep.subr.mxu0 0.0
        %2762 = vmatpush1.msra.mxu0 0.0
        %2763 = vmatprep.subr.mxu0 0.0
        %2764 = vmatpush1.msra.mxu0 0.0
        %2765 = vmatprep.subr.mxu0 0.0
        %2766 = vmatpush1.msra.mxu0 0.0
        %2767 = vmatprep.subr.mxu0 0.0
        %2768 = vmatpush1.msra.mxu0 0.0
        %2769 = vmatprep.subr.mxu0 0.0
        %2770 = vmatpush1.msra.mxu0 0.0
        %2771 = vmatprep.subr.mxu0 0.0
        %2772 = vmatpush1.msra.mxu0 0.0
        %2773 = vmatprep.subr.mxu0 0.0
        %2774 = vmatpush1.msra.mxu0 0.0
        %2775 = vmatprep.subr.mxu0 0.0
        %2776 = vmatpush1.msra.mxu0 0.0
        %2777 = vmatprep.subr.mxu0 0.0
        %2778 = vmatpush1.msra.mxu0 0.0
        %2779 = vmatprep.subr.mxu0 0.0
        %2780 = vmatpush1.msra.mxu0 0.0
        %2781 = vmatprep.subr.mxu0 0.0
        %2782 = vmatpush1.msra.mxu0 0.0
        %2783 = vmatprep.subr.mxu0 0.0
        %2784 = vmatpush1.msra.mxu0 0.0
        %2785 = vmatprep.subr.mxu0 0.0
        %2786 = vmatpush1.msra.mxu0 0.0
        %2787 = vmatprep.subr.mxu0 0.0
        %2788 = vmatpush1.msra.mxu0 0.0
        %2789 = vmatprep.subr.mxu0 0.0
        %2790 = vmatpush1.msra.mxu0 0.0
        %2791 = vmatprep.subr.mxu0 0.0
        %2792 = vmatpush1.msra.mxu0 0.0
        %2793 = vmatprep.subr.mxu0 0.0
        %2794 = vmatpush1.msra.mxu0 0.0
        %2795 = vmatprep.subr.mxu0 0.0
        %2796 = vmatpush1.msra.mxu0 0.0
        %2797 = vmatprep.subr.mxu0 0.0
        %2798 = vmatpush1.msra.mxu0 0.0
        %2799 = vmatprep.subr.mxu0 0.0
        %2800 = vmatpush1.msra.mxu0 0.0
        %2801 = vmatprep.subr.mxu0 0.0
        %2802 = vmatpush1.msra.mxu0 0.0
        %2803 = vmatprep.subr.mxu0 0.0
        %2804 = vmatpush1.msra.mxu0 0.0
        %2805 = vmatprep.subr.mxu0 0.0
        %2806 = vmatpush1.msra.mxu0 0.0
        %2807 = vmatprep.mubr.f32.mxu0 0.0
        %2808 = vmatmul.mubr.f32.gmra.mrb[0].mxu0 %v2733
        %v2809 = vpop.f32.mrb[0].mxu0
        %v2810 = vadd.f32 0.0, %v2809
        %v2811 = vpop.f32.mrb[0].mxu0
        %v2812 = vadd.f32 0.0, %v2811
        %2813 = vmatprep.mubr.f32.mxu0 0.0
        %2814 = vmatmul.mubr.f32.gmra.mrb[0].mxu0 %v2735
        %v2815 = vpop.f32.mrb[0].mxu0
        %v2816 = vadd.f32 0.0, %v2815
        %v2817 = vpop.f32.mrb[0].mxu0
        %v2818 = vadd.f32 0.0, %v2817
        %2819 = vdwg.mxu0
        %v2820 = vadd.f32 %v2715, %v2810
        %v2821 = vadd.f32 %v2717, %v2812
        %v2822 = vadd.f32 %v2721, %v2816
        %v2823 = vadd.f32 %v2723, %v2818
        %s2824 = scalar_lea.vmem %s3, 96
        %v2825 = vld [vmem:[%s2824] sm:$0xff]
        %v2826 = vld [vmem:[%s2824 + $0x8] sm:$0xff]
        %v2827 = vld [vmem:[%s2824 + $0x10] sm:$0x3f]
        %v2828 = vld [vmem:[%s2824 + $0x18] sm:$0x3f]
        %v2829 = vrot.slane %v2528, 3
        %v2830 = vrot.slane %v2533, 3
        %v2831 = vsel %vm743, %v2829, %v2830
        %v2832 = vsel %vm2550, %v2831, 0
        %v2834 = vsel %vm2550, %v2830, 0
        %v2837 = vsel %vm621, %v2827, 0
        %v2840 = vsel %vm621, %v2828, 0
        %2842 = vmatprep.subr.mxu0 %v2826
        %2843 = vmatpush1.msra.mxu0 %v2825
        %2844 = vmatprep.subr.mxu0 %v2840
        %2845 = vmatpush1.msra.mxu0 %v2837
        %2846 = vmatprep.subr.mxu0 0.0
        %2847 = vmatpush1.msra.mxu0 0.0
        %2848 = vmatprep.subr.mxu0 0.0
        %2849 = vmatpush1.msra.mxu0 0.0
        %2850 = vmatprep.subr.mxu0 0.0
        %2851 = vmatpush1.msra.mxu0 0.0
        %2852 = vmatprep.subr.mxu0 0.0
        %2853 = vmatpush1.msra.mxu0 0.0
        %2854 = vmatprep.subr.mxu0 0.0
        %2855 = vmatpush1.msra.mxu0 0.0
        %2856 = vmatprep.subr.mxu0 0.0
        %2857 = vmatpush1.msra.mxu0 0.0
        %2858 = vmatprep.subr.mxu0 0.0
        %2859 = vmatpush1.msra.mxu0 0.0
        %2860 = vmatprep.subr.mxu0 0.0
        %2861 = vmatpush1.msra.mxu0 0.0
        %2862 = vmatprep.subr.mxu0 0.0
        %2863 = vmatpush1.msra.mxu0 0.0
        %2864 = vmatprep.subr.mxu0 0.0
        %2865 = vmatpush1.msra.mxu0 0.0
        %2866 = vmatprep.subr.mxu0 0.0
        %2867 = vmatpush1.msra.mxu0 0.0
        %2868 = vmatprep.subr.mxu0 0.0
        %2869 = vmatpush1.msra.mxu0 0.0
        %2870 = vmatprep.subr.mxu0 0.0
        %2871 = vmatpush1.msra.mxu0 0.0
        %2872 = vmatprep.subr.mxu0 0.0
        %2873 = vmatpush1.msra.mxu0 0.0
        %2874 = vmatprep.subr.mxu0 0.0
        %2875 = vmatpush1.msra.mxu0 0.0
        %2876 = vmatprep.subr.mxu0 0.0
        %2877 = vmatpush1.msra.mxu0 0.0
        %2878 = vmatprep.subr.mxu0 0.0
        %2879 = vmatpush1.msra.mxu0 0.0
        %2880 = vmatprep.subr.mxu0 0.0
        %2881 = vmatpush1.msra.mxu0 0.0
        %2882 = vmatprep.subr.mxu0 0.0
        %2883 = vmatpush1.msra.mxu0 0.0
        %2884 = vmatprep.subr.mxu0 0.0
        %2885 = vmatpush1.msra.mxu0 0.0
        %2886 = vmatprep.subr.mxu0 0.0
        %2887 = vmatpush1.msra.mxu0 0.0
        %2888 = vmatprep.subr.mxu0 0.0
        %2889 = vmatpush1.msra.mxu0 0.0
        %2890 = vmatprep.subr.mxu0 0.0
        %2891 = vmatpush1.msra.mxu0 0.0
        %2892 = vmatprep.subr.mxu0 0.0
        %2893 = vmatpush1.msra.mxu0 0.0
        %2894 = vmatprep.subr.mxu0 0.0
        %2895 = vmatpush1.msra.mxu0 0.0
        %2896 = vmatprep.subr.mxu0 0.0
        %2897 = vmatpush1.msra.mxu0 0.0
        %2898 = vmatprep.subr.mxu0 0.0
        %2899 = vmatpush1.msra.mxu0 0.0
        %2900 = vmatprep.subr.mxu0 0.0
        %2901 = vmatpush1.msra.mxu0 0.0
        %2902 = vmatprep.subr.mxu0 0.0
        %2903 = vmatpush1.msra.mxu0 0.0
        %2904 = vmatprep.subr.mxu0 0.0
        %2905 = vmatpush1.msra.mxu0 0.0
        %2906 = vmatprep.mubr.f32.mxu0 0.0
        %2907 = vmatmul.mubr.f32.gmra.mrb[0].mxu0 %v2832
        %v2908 = vpop.f32.mrb[0].mxu0
        %v2909 = vadd.f32 0.0, %v2908
        %v2910 = vpop.f32.mrb[0].mxu0
        %v2911 = vadd.f32 0.0, %v2910
        %2912 = vmatprep.mubr.f32.mxu0 0.0
        %2913 = vmatmul.mubr.f32.gmra.mrb[0].mxu0 %v2834
        %v2914 = vpop.f32.mrb[0].mxu0
        %v2915 = vadd.f32 0.0, %v2914
        %v2916 = vpop.f32.mrb[0].mxu0
        %v2917 = vadd.f32 0.0, %v2916
        %2918 = vdwg.mxu0
        %v2919 = vadd.f32 %v2820, %v2909
        %v2920 = vadd.f32 %v2821, %v2911
        %v2921 = vadd.f32 %v2822, %v2915
        %v2922 = vadd.f32 %v2823, %v2917
        %s2923 = scalar_lea.vmem %s3, 128
        %v2924 = vld [vmem:[%s2923] sm:$0xff]
        %v2925 = vld [vmem:[%s2923 + $0x8] sm:$0xff]
        %v2926 = vld [vmem:[%s2923 + $0x10] sm:$0x3f]
        %v2927 = vld [vmem:[%s2923 + $0x18] sm:$0x3f]
        %v2928 = vrot.slane %v2528, 4
        %v2929 = vrot.slane %v2533, 4
        %v2930 = vsel %vm865, %v2928, %v2929
        %v2931 = vsel %vm2550, %v2930, 0
        %v2933 = vsel %vm2550, %v2929, 0
        %v2936 = vsel %vm621, %v2926, 0
        %v2939 = vsel %vm621, %v2927, 0
        %2941 = vmatprep.subr.mxu0 %v2925
        %2942 = vmatpush1.msra.mxu0 %v2924
        %2943 = vmatprep.subr.mxu0 %v2939
        %2944 = vmatpush1.msra.mxu0 %v2936
        %2945 = vmatprep.subr.mxu0 0.0
        %2946 = vmatpush1.msra.mxu0 0.0
        %2947 = vmatprep.subr.mxu0 0.0
        %2948 = vmatpush1.msra.mxu0 0.0
        %2949 = vmatprep.subr.mxu0 0.0
        %2950 = vmatpush1.msra.mxu0 0.0
        %2951 = vmatprep.subr.mxu0 0.0
        %2952 = vmatpush1.msra.mxu0 0.0
        %2953 = vmatprep.subr.mxu0 0.0
        %2954 = vmatpush1.msra.mxu0 0.0
        %2955 = vmatprep.subr.mxu0 0.0
        %2956 = vmatpush1.msra.mxu0 0.0
        %2957 = vmatprep.subr.mxu0 0.0
        %2958 = vmatpush1.msra.mxu0 0.0
        %2959 = vmatprep.subr.mxu0 0.0
        %2960 = vmatpush1.msra.mxu0 0.0
        %2961 = vmatprep.subr.mxu0 0.0
        %2962 = vmatpush1.msra.mxu0 0.0
        %2963 = vmatprep.subr.mxu0 0.0
        %2964 = vmatpush1.msra.mxu0 0.0
        %2965 = vmatprep.subr.mxu0 0.0
        %2966 = vmatpush1.msra.mxu0 0.0
        %2967 = vmatprep.subr.mxu0 0.0
        %2968 = vmatpush1.msra.mxu0 0.0
        %2969 = vmatprep.subr.mxu0 0.0
        %2970 = vmatpush1.msra.mxu0 0.0
        %2971 = vmatprep.subr.mxu0 0.0
        %2972 = vmatpush1.msra.mxu0 0.0
        %2973 = vmatprep.subr.mxu0 0.0
        %2974 = vmatpush1.msra.mxu0 0.0
        %2975 = vmatprep.subr.mxu0 0.0
        %2976 = vmatpush1.msra.mxu0 0.0
        %2977 = vmatprep.subr.mxu0 0.0
        %2978 = vmatpush1.msra.mxu0 0.0
        %2979 = vmatprep.subr.mxu0 0.0
        %2980 = vmatpush1.msra.mxu0 0.0
        %2981 = vmatprep.subr.mxu0 0.0
        %2982 = vmatpush1.msra.mxu0 0.0
        %2983 = vmatprep.subr.mxu0 0.0
        %2984 = vmatpush1.msra.mxu0 0.0
        %2985 = vmatprep.subr.mxu0 0.0
        %2986 = vmatpush1.msra.mxu0 0.0
        %2987 = vmatprep.subr.mxu0 0.0
        %2988 = vmatpush1.msra.mxu0 0.0
        %2989 = vmatprep.subr.mxu0 0.0
        %2990 = vmatpush1.msra.mxu0 0.0
        %2991 = vmatprep.subr.mxu0 0.0
        %2992 = vmatpush1.msra.mxu0 0.0
        %2993 = vmatprep.subr.mxu0 0.0
        %2994 = vmatpush1.msra.mxu0 0.0
        %2995 = vmatprep.subr.mxu0 0.0
        %2996 = vmatpush1.msra.mxu0 0.0
        %2997 = vmatprep.subr.mxu0 0.0
        %2998 = vmatpush1.msra.mxu0 0.0
        %2999 = vmatprep.subr.mxu0 0.0
        %3000 = vmatpush1.msra.mxu0 0.0
        %3001 = vmatprep.subr.mxu0 0.0
        %3002 = vmatpush1.msra.mxu0 0.0
        %3003 = vmatprep.subr.mxu0 0.0
        %3004 = vmatpush1.msra.mxu0 0.0
        %3005 = vmatprep.mubr.f32.mxu0 0.0
        %3006 = vmatmul.mubr.f32.gmra.mrb[0].mxu0 %v2931
        %v3007 = vpop.f32.mrb[0].mxu0
        %v3008 = vadd.f32 0.0, %v3007
        %v3009 = vpop.f32.mrb[0].mxu0
        %v3010 = vadd.f32 0.0, %v3009
        %3011 = vmatprep.mubr.f32.mxu0 0.0
        %3012 = vmatmul.mubr.f32.gmra.mrb[0].mxu0 %v2933
        %v3013 = vpop.f32.mrb[0].mxu0
        %v3014 = vadd.f32 0.0, %v3013
        %v3015 = vpop.f32.mrb[0].mxu0
        %v3016 = vadd.f32 0.0, %v3015
        %3017 = vdwg.mxu0
        %v3018 = vadd.f32 %v2919, %v3008
        %v3019 = vadd.f32 %v2920, %v3010
        %v3020 = vadd.f32 %v2921, %v3014
        %v3021 = vadd.f32 %v2922, %v3016
        %s3022 = scalar_lea.vmem %s3, 160
        %v3023 = vld [vmem:[%s3022] sm:$0xff]
        %v3024 = vld [vmem:[%s3022 + $0x8] sm:$0xff]
        %v3025 = vld [vmem:[%s3022 + $0x10] sm:$0x3f]
        %v3026 = vld [vmem:[%s3022 + $0x18] sm:$0x3f]
        %3027 = vrot.lane.b32.xlu0 %v2528, 114
        %v3028 = vpop.permute.xlu0 %3027
        %3029 = vrot.lane.b32.xlu0 %v2533, 114
        %v3030 = vpop.permute.xlu0 %3029
        %v3031 = vsel %vm2550, %v3028, 0
        %v3033 = vsel %vm2550, %v3030, 0
        %v3036 = vsel %vm621, %v3025, 0
        %v3039 = vsel %vm621, %v3026, 0
        %3041 = vmatprep.subr.mxu0 %v3024
        %3042 = vmatpush1.msra.mxu0 %v3023
        %3043 = vmatprep.subr.mxu0 %v3039
        %3044 = vmatpush1.msra.mxu0 %v3036
        %3045 = vmatprep.subr.mxu0 0.0
        %3046 = vmatpush1.msra.mxu0 0.0
        %3047 = vmatprep.subr.mxu0 0.0
        %3048 = vmatpush1.msra.mxu0 0.0
        %3049 = vmatprep.subr.mxu0 0.0
        %3050 = vmatpush1.msra.mxu0 0.0
        %3051 = vmatprep.subr.mxu0 0.0
        %3052 = vmatpush1.msra.mxu0 0.0
        %3053 = vmatprep.subr.mxu0 0.0
        %3054 = vmatpush1.msra.mxu0 0.0
        %3055 = vmatprep.subr.mxu0 0.0
        %3056 = vmatpush1.msra.mxu0 0.0
        %3057 = vmatprep.subr.mxu0 0.0
        %3058 = vmatpush1.msra.mxu0 0.0
        %3059 = vmatprep.subr.mxu0 0.0
        %3060 = vmatpush1.msra.mxu0 0.0
        %3061 = vmatprep.subr.mxu0 0.0
        %3062 = vmatpush1.msra.mxu0 0.0
        %3063 = vmatprep.subr.mxu0 0.0
        %3064 = vmatpush1.msra.mxu0 0.0
        %3065 = vmatprep.subr.mxu0 0.0
        %3066 = vmatpush1.msra.mxu0 0.0
        %3067 = vmatprep.subr.mxu0 0.0
        %3068 = vmatpush1.msra.mxu0 0.0
        %3069 = vmatprep.subr.mxu0 0.0
        %3070 = vmatpush1.msra.mxu0 0.0
        %3071 = vmatprep.subr.mxu0 0.0
        %3072 = vmatpush1.msra.mxu0 0.0
        %3073 = vmatprep.subr.mxu0 0.0
        %3074 = vmatpush1.msra.mxu0 0.0
        %3075 = vmatprep.subr.mxu0 0.0
        %3076 = vmatpush1.msra.mxu0 0.0
        %3077 = vmatprep.subr.mxu0 0.0
        %3078 = vmatpush1.msra.mxu0 0.0
        %3079 = vmatprep.subr.mxu0 0.0
        %3080 = vmatpush1.msra.mxu0 0.0
        %3081 = vmatprep.subr.mxu0 0.0
        %3082 = vmatpush1.msra.mxu0 0.0
        %3083 = vmatprep.subr.mxu0 0.0
        %3084 = vmatpush1.msra.mxu0 0.0
        %3085 = vmatprep.subr.mxu0 0.0
        %3086 = vmatpush1.msra.mxu0 0.0
        %3087 = vmatprep.subr.mxu0 0.0
        %3088 = vmatpush1.msra.mxu0 0.0
        %3089 = vmatprep.subr.mxu0 0.0
        %3090 = vmatpush1.msra.mxu0 0.0
        %3091 = vmatprep.subr.mxu0 0.0
        %3092 = vmatpush1.msra.mxu0 0.0
        %3093 = vmatprep.subr.mxu0 0.0
        %3094 = vmatpush1.msra.mxu0 0.0
        %3095 = vmatprep.subr.mxu0 0.0
        %3096 = vmatpush1.msra.mxu0 0.0
        %3097 = vmatprep.subr.mxu0 0.0
        %3098 = vmatpush1.msra.mxu0 0.0
        %3099 = vmatprep.subr.mxu0 0.0
        %3100 = vmatpush1.msra.mxu0 0.0
        %3101 = vmatprep.subr.mxu0 0.0
        %3102 = vmatpush1.msra.mxu0 0.0
        %3103 = vmatprep.subr.mxu0 0.0
        %3104 = vmatpush1.msra.mxu0 0.0
        %3105 = vmatprep.mubr.f32.mxu0 0.0
        %3106 = vmatmul.mubr.f32.gmra.mrb[0].mxu0 %v3031
        %v3107 = vpop.f32.mrb[0].mxu0
        %v3108 = vadd.f32 0.0, %v3107
        %v3109 = vpop.f32.mrb[0].mxu0
        %v3110 = vadd.f32 0.0, %v3109
        %3111 = vmatprep.mubr.f32.mxu0 0.0
        %3112 = vmatmul.mubr.f32.gmra.mrb[0].mxu0 %v3033
        %v3113 = vpop.f32.mrb[0].mxu0
        %v3114 = vadd.f32 0.0, %v3113
        %v3115 = vpop.f32.mrb[0].mxu0
        %v3116 = vadd.f32 0.0, %v3115
        %3117 = vdwg.mxu0
        %v3118 = vadd.f32 %v3018, %v3108
        %v3119 = vadd.f32 %v3019, %v3110
        %v3120 = vadd.f32 %v3020, %v3114
        %v3121 = vadd.f32 %v3021, %v3116
        %s3122 = scalar_lea.vmem %s3, 192
        %v3123 = vld [vmem:[%s3122] sm:$0xff]
        %v3124 = vld [vmem:[%s3122 + $0x8] sm:$0xff]
        %v3125 = vld [vmem:[%s3122 + $0x10] sm:$0x3f]
        %v3126 = vld [vmem:[%s3122 + $0x18] sm:$0x3f]
        %3127 = vrot.lane.b32.xlu0 %v2549, 114
        %v3128 = vpop.permute.xlu0 %3127
        %3129 = vrot.lane.b32.xlu0 %v2548, 114
        %v3130 = vpop.permute.xlu0 %3129
        %v3131 = vsel %vm2550, %v3128, 0
        %v3133 = vsel %vm2550, %v3130, 0
        %v3136 = vsel %vm621, %v3125, 0
        %v3139 = vsel %vm621, %v3126, 0
        %3141 = vmatprep.subr.mxu0 %v3124
        %3142 = vmatpush1.msra.mxu0 %v3123
        %3143 = vmatprep.subr.mxu0 %v3139
        %3144 = vmatpush1.msra.mxu0 %v3136
        %3145 = vmatprep.subr.mxu0 0.0
        %3146 = vmatpush1.msra.mxu0 0.0
        %3147 = vmatprep.subr.mxu0 0.0
        %3148 = vmatpush1.msra.mxu0 0.0
        %3149 = vmatprep.subr.mxu0 0.0
        %3150 = vmatpush1.msra.mxu0 0.0
        %3151 = vmatprep.subr.mxu0 0.0
        %3152 = vmatpush1.msra.mxu0 0.0
        %3153 = vmatprep.subr.mxu0 0.0
        %3154 = vmatpush1.msra.mxu0 0.0
        %3155 = vmatprep.subr.mxu0 0.0
        %3156 = vmatpush1.msra.mxu0 0.0
        %3157 = vmatprep.subr.mxu0 0.0
        %3158 = vmatpush1.msra.mxu0 0.0
        %3159 = vmatprep.subr.mxu0 0.0
        %3160 = vmatpush1.msra.mxu0 0.0
        %3161 = vmatprep.subr.mxu0 0.0
        %3162 = vmatpush1.msra.mxu0 0.0
        %3163 = vmatprep.subr.mxu0 0.0
        %3164 = vmatpush1.msra.mxu0 0.0
        %3165 = vmatprep.subr.mxu0 0.0
        %3166 = vmatpush1.msra.mxu0 0.0
        %3167 = vmatprep.subr.mxu0 0.0
        %3168 = vmatpush1.msra.mxu0 0.0
        %3169 = vmatprep.subr.mxu0 0.0
        %3170 = vmatpush1.msra.mxu0 0.0
        %3171 = vmatprep.subr.mxu0 0.0
        %3172 = vmatpush1.msra.mxu0 0.0
        %3173 = vmatprep.subr.mxu0 0.0
        %3174 = vmatpush1.msra.mxu0 0.0
        %3175 = vmatprep.subr.mxu0 0.0
        %3176 = vmatpush1.msra.mxu0 0.0
        %3177 = vmatprep.subr.mxu0 0.0
        %3178 = vmatpush1.msra.mxu0 0.0
        %3179 = vmatprep.subr.mxu0 0.0
        %3180 = vmatpush1.msra.mxu0 0.0
        %3181 = vmatprep.subr.mxu0 0.0
        %3182 = vmatpush1.msra.mxu0 0.0
        %3183 = vmatprep.subr.mxu0 0.0
        %3184 = vmatpush1.msra.mxu0 0.0
        %3185 = vmatprep.subr.mxu0 0.0
        %3186 = vmatpush1.msra.mxu0 0.0
        %3187 = vmatprep.subr.mxu0 0.0
        %3188 = vmatpush1.msra.mxu0 0.0
        %3189 = vmatprep.subr.mxu0 0.0
        %3190 = vmatpush1.msra.mxu0 0.0
        %3191 = vmatprep.subr.mxu0 0.0
        %3192 = vmatpush1.msra.mxu0 0.0
        %3193 = vmatprep.subr.mxu0 0.0
        %3194 = vmatpush1.msra.mxu0 0.0
        %3195 = vmatprep.subr.mxu0 0.0
        %3196 = vmatpush1.msra.mxu0 0.0
        %3197 = vmatprep.subr.mxu0 0.0
        %3198 = vmatpush1.msra.mxu0 0.0
        %3199 = vmatprep.subr.mxu0 0.0
        %3200 = vmatpush1.msra.mxu0 0.0
        %3201 = vmatprep.subr.mxu0 0.0
        %3202 = vmatpush1.msra.mxu0 0.0
        %3203 = vmatprep.subr.mxu0 0.0
        %3204 = vmatpush1.msra.mxu0 0.0
        %3205 = vmatprep.mubr.f32.mxu0 0.0
        %3206 = vmatmul.mubr.f32.gmra.mrb[0].mxu0 %v3131
        %v3207 = vpop.f32.mrb[0].mxu0
        %v3208 = vadd.f32 0.0, %v3207
        %v3209 = vpop.f32.mrb[0].mxu0
        %v3210 = vadd.f32 0.0, %v3209
        %3211 = vmatprep.mubr.f32.mxu0 0.0
        %3212 = vmatmul.mubr.f32.gmra.mrb[0].mxu0 %v3133
        %v3213 = vpop.f32.mrb[0].mxu0
        %v3214 = vadd.f32 0.0, %v3213
        %v3215 = vpop.f32.mrb[0].mxu0
        %v3216 = vadd.f32 0.0, %v3215
        %3217 = vdwg.mxu0
        %v3218 = vadd.f32 %v3118, %v3208
        %v3219 = vadd.f32 %v3119, %v3210
        %v3220 = vadd.f32 %v3120, %v3214
        %v3221 = vadd.f32 %v3121, %v3216
        %s3222 = scalar_lea.vmem %s3, 224
        %v3223 = vld [vmem:[%s3222] sm:$0xff]
        %v3224 = vld [vmem:[%s3222 + $0x8] sm:$0xff]
        %v3225 = vld [vmem:[%s3222 + $0x10] sm:$0x3f]
        %v3226 = vld [vmem:[%s3222 + $0x18] sm:$0x3f]
        %3227 = vrot.lane.b32.xlu0 %v2732, 114
        %v3228 = vpop.permute.xlu0 %3227
        %3229 = vrot.lane.b32.xlu0 %v2731, 114
        %v3230 = vpop.permute.xlu0 %3229
        %v3231 = vsel %vm2550, %v3228, 0
        %v3233 = vsel %vm2550, %v3230, 0
        %v3236 = vsel %vm621, %v3225, 0
        %v3239 = vsel %vm621, %v3226, 0
        %3241 = vmatprep.subr.mxu0 %v3224
        %3242 = vmatpush1.msra.mxu0 %v3223
        %3243 = vmatprep.subr.mxu0 %v3239
        %3244 = vmatpush1.msra.mxu0 %v3236
        %3245 = vmatprep.subr.mxu0 0.0
        %3246 = vmatpush1.msra.mxu0 0.0
        %3247 = vmatprep.subr.mxu0 0.0
        %3248 = vmatpush1.msra.mxu0 0.0
        %3249 = vmatprep.subr.mxu0 0.0
        %3250 = vmatpush1.msra.mxu0 0.0
        %3251 = vmatprep.subr.mxu0 0.0
        %3252 = vmatpush1.msra.mxu0 0.0
        %3253 = vmatprep.subr.mxu0 0.0
        %3254 = vmatpush1.msra.mxu0 0.0
        %3255 = vmatprep.subr.mxu0 0.0
        %3256 = vmatpush1.msra.mxu0 0.0
        %3257 = vmatprep.subr.mxu0 0.0
        %3258 = vmatpush1.msra.mxu0 0.0
        %3259 = vmatprep.subr.mxu0 0.0
        %3260 = vmatpush1.msra.mxu0 0.0
        %3261 = vmatprep.subr.mxu0 0.0
        %3262 = vmatpush1.msra.mxu0 0.0
        %3263 = vmatprep.subr.mxu0 0.0
        %3264 = vmatpush1.msra.mxu0 0.0
        %3265 = vmatprep.subr.mxu0 0.0
        %3266 = vmatpush1.msra.mxu0 0.0
        %3267 = vmatprep.subr.mxu0 0.0
        %3268 = vmatpush1.msra.mxu0 0.0
        %3269 = vmatprep.subr.mxu0 0.0
        %3270 = vmatpush1.msra.mxu0 0.0
        %3271 = vmatprep.subr.mxu0 0.0
        %3272 = vmatpush1.msra.mxu0 0.0
        %3273 = vmatprep.subr.mxu0 0.0
        %3274 = vmatpush1.msra.mxu0 0.0
        %3275 = vmatprep.subr.mxu0 0.0
        %3276 = vmatpush1.msra.mxu0 0.0
        %3277 = vmatprep.subr.mxu0 0.0
        %3278 = vmatpush1.msra.mxu0 0.0
        %3279 = vmatprep.subr.mxu0 0.0
        %3280 = vmatpush1.msra.mxu0 0.0
        %3281 = vmatprep.subr.mxu0 0.0
        %3282 = vmatpush1.msra.mxu0 0.0
        %3283 = vmatprep.subr.mxu0 0.0
        %3284 = vmatpush1.msra.mxu0 0.0
        %3285 = vmatprep.subr.mxu0 0.0
        %3286 = vmatpush1.msra.mxu0 0.0
        %3287 = vmatprep.subr.mxu0 0.0
        %3288 = vmatpush1.msra.mxu0 0.0
        %3289 = vmatprep.subr.mxu0 0.0
        %3290 = vmatpush1.msra.mxu0 0.0
        %3291 = vmatprep.subr.mxu0 0.0
        %3292 = vmatpush1.msra.mxu0 0.0
        %3293 = vmatprep.subr.mxu0 0.0
        %3294 = vmatpush1.msra.mxu0 0.0
        %3295 = vmatprep.subr.mxu0 0.0
        %3296 = vmatpush1.msra.mxu0 0.0
        %3297 = vmatprep.subr.mxu0 0.0
        %3298 = vmatpush1.msra.mxu0 0.0
        %3299 = vmatprep.subr.mxu0 0.0
        %3300 = vmatpush1.msra.mxu0 0.0
        %3301 = vmatprep.subr.mxu0 0.0
        %3302 = vmatpush1.msra.mxu0 0.0
        %3303 = vmatprep.subr.mxu0 0.0
        %3304 = vmatpush1.msra.mxu0 0.0
        %3305 = vmatprep.mubr.f32.mxu0 0.0
        %3306 = vmatmul.mubr.f32.gmra.mrb[0].mxu0 %v3231
        %v3307 = vpop.f32.mrb[0].mxu0
        %v3308 = vadd.f32 0.0, %v3307
        %v3309 = vpop.f32.mrb[0].mxu0
        %v3310 = vadd.f32 0.0, %v3309
        %3311 = vmatprep.mubr.f32.mxu0 0.0
        %3312 = vmatmul.mubr.f32.gmra.mrb[0].mxu0 %v3233
        %v3313 = vpop.f32.mrb[0].mxu0
        %v3314 = vadd.f32 0.0, %v3313
        %v3315 = vpop.f32.mrb[0].mxu0
        %v3316 = vadd.f32 0.0, %v3315
        %3317 = vdwg.mxu0
        %v3318 = vadd.f32 %v3218, %v3308
        %v3319 = vadd.f32 %v3219, %v3310
        %v3320 = vadd.f32 %v3220, %v3314
        %v3321 = vadd.f32 %v3221, %v3316
        %s3322 = scalar_lea.vmem %s3, 256
        %v3323 = vld [vmem:[%s3322] sm:$0xff]
        %v3324 = vld [vmem:[%s3322 + $0x8] sm:$0xff]
        %v3325 = vld [vmem:[%s3322 + $0x10] sm:$0x3f]
        %v3326 = vld [vmem:[%s3322 + $0x18] sm:$0x3f]
        %3327 = vrot.lane.b32.xlu0 %v2831, 114
        %v3328 = vpop.permute.xlu0 %3327
        %3329 = vrot.lane.b32.xlu0 %v2830, 114
        %v3330 = vpop.permute.xlu0 %3329
        %v3331 = vsel %vm2550, %v3328, 0
        %v3333 = vsel %vm2550, %v3330, 0
        %v3336 = vsel %vm621, %v3325, 0
        %v3339 = vsel %vm621, %v3326, 0
        %3341 = vmatprep.subr.mxu0 %v3324
        %3342 = vmatpush1.msra.mxu0 %v3323
        %3343 = vmatprep.subr.mxu0 %v3339
        %3344 = vmatpush1.msra.mxu0 %v3336
        %3345 = vmatprep.subr.mxu0 0.0
        %3346 = vmatpush1.msra.mxu0 0.0
        %3347 = vmatprep.subr.mxu0 0.0
        %3348 = vmatpush1.msra.mxu0 0.0
        %3349 = vmatprep.subr.mxu0 0.0
        %3350 = vmatpush1.msra.mxu0 0.0
        %3351 = vmatprep.subr.mxu0 0.0
        %3352 = vmatpush1.msra.mxu0 0.0
        %3353 = vmatprep.subr.mxu0 0.0
        %3354 = vmatpush1.msra.mxu0 0.0
        %3355 = vmatprep.subr.mxu0 0.0
        %3356 = vmatpush1.msra.mxu0 0.0
        %3357 = vmatprep.subr.mxu0 0.0
        %3358 = vmatpush1.msra.mxu0 0.0
        %3359 = vmatprep.subr.mxu0 0.0
        %3360 = vmatpush1.msra.mxu0 0.0
        %3361 = vmatprep.subr.mxu0 0.0
        %3362 = vmatpush1.msra.mxu0 0.0
        %3363 = vmatprep.subr.mxu0 0.0
        %3364 = vmatpush1.msra.mxu0 0.0
        %3365 = vmatprep.subr.mxu0 0.0
        %3366 = vmatpush1.msra.mxu0 0.0
        %3367 = vmatprep.subr.mxu0 0.0
        %3368 = vmatpush1.msra.mxu0 0.0
        %3369 = vmatprep.subr.mxu0 0.0
        %3370 = vmatpush1.msra.mxu0 0.0
        %3371 = vmatprep.subr.mxu0 0.0
        %3372 = vmatpush1.msra.mxu0 0.0
        %3373 = vmatprep.subr.mxu0 0.0
        %3374 = vmatpush1.msra.mxu0 0.0
        %3375 = vmatprep.subr.mxu0 0.0
        %3376 = vmatpush1.msra.mxu0 0.0
        %3377 = vmatprep.subr.mxu0 0.0
        %3378 = vmatpush1.msra.mxu0 0.0
        %3379 = vmatprep.subr.mxu0 0.0
        %3380 = vmatpush1.msra.mxu0 0.0
        %3381 = vmatprep.subr.mxu0 0.0
        %3382 = vmatpush1.msra.mxu0 0.0
        %3383 = vmatprep.subr.mxu0 0.0
        %3384 = vmatpush1.msra.mxu0 0.0
        %3385 = vmatprep.subr.mxu0 0.0
        %3386 = vmatpush1.msra.mxu0 0.0
        %3387 = vmatprep.subr.mxu0 0.0
        %3388 = vmatpush1.msra.mxu0 0.0
        %3389 = vmatprep.subr.mxu0 0.0
        %3390 = vmatpush1.msra.mxu0 0.0
        %3391 = vmatprep.subr.mxu0 0.0
        %3392 = vmatpush1.msra.mxu0 0.0
        %3393 = vmatprep.subr.mxu0 0.0
        %3394 = vmatpush1.msra.mxu0 0.0
        %3395 = vmatprep.subr.mxu0 0.0
        %3396 = vmatpush1.msra.mxu0 0.0
        %3397 = vmatprep.subr.mxu0 0.0
        %3398 = vmatpush1.msra.mxu0 0.0
        %3399 = vmatprep.subr.mxu0 0.0
        %3400 = vmatpush1.msra.mxu0 0.0
        %3401 = vmatprep.subr.mxu0 0.0
        %3402 = vmatpush1.msra.mxu0 0.0
        %3403 = vmatprep.subr.mxu0 0.0
        %3404 = vmatpush1.msra.mxu0 0.0
        %3405 = vmatprep.mubr.f32.mxu0 0.0
        %3406 = vmatmul.mubr.f32.gmra.mrb[0].mxu0 %v3331
        %v3407 = vpop.f32.mrb[0].mxu0
        %v3408 = vadd.f32 0.0, %v3407
        %v3409 = vpop.f32.mrb[0].mxu0
        %v3410 = vadd.f32 0.0, %v3409
        %3411 = vmatprep.mubr.f32.mxu0 0.0
        %3412 = vmatmul.mubr.f32.gmra.mrb[0].mxu0 %v3333
        %v3413 = vpop.f32.mrb[0].mxu0
        %v3414 = vadd.f32 0.0, %v3413
        %v3415 = vpop.f32.mrb[0].mxu0
        %v3416 = vadd.f32 0.0, %v3415
        %3417 = vdwg.mxu0
        %v3418 = vadd.f32 %v3318, %v3408
        %v3419 = vadd.f32 %v3319, %v3410
        %v3420 = vadd.f32 %v3320, %v3414
        %v3421 = vadd.f32 %v3321, %v3416
        %s3422 = scalar_lea.vmem %s3, 288
        %v3423 = vld [vmem:[%s3422] sm:$0xff]
        %v3424 = vld [vmem:[%s3422 + $0x8] sm:$0xff]
        %v3425 = vld [vmem:[%s3422 + $0x10] sm:$0x3f]
        %v3426 = vld [vmem:[%s3422 + $0x18] sm:$0x3f]
        %3427 = vrot.lane.b32.xlu0 %v2930, 114
        %v3428 = vpop.permute.xlu0 %3427
        %3429 = vrot.lane.b32.xlu0 %v2929, 114
        %v3430 = vpop.permute.xlu0 %3429
        %v3431 = vsel %vm2550, %v3428, 0
        %v3433 = vsel %vm2550, %v3430, 0
        %v3436 = vsel %vm621, %v3425, 0
        %v3439 = vsel %vm621, %v3426, 0
        %3441 = vmatprep.subr.mxu0 %v3424
        %3442 = vmatpush1.msra.mxu0 %v3423
        %3443 = vmatprep.subr.mxu0 %v3439
        %3444 = vmatpush1.msra.mxu0 %v3436
        %3445 = vmatprep.subr.mxu0 0.0
        %3446 = vmatpush1.msra.mxu0 0.0
        %3447 = vmatprep.subr.mxu0 0.0
        %3448 = vmatpush1.msra.mxu0 0.0
        %3449 = vmatprep.subr.mxu0 0.0
        %3450 = vmatpush1.msra.mxu0 0.0
        %3451 = vmatprep.subr.mxu0 0.0
        %3452 = vmatpush1.msra.mxu0 0.0
        %3453 = vmatprep.subr.mxu0 0.0
        %3454 = vmatpush1.msra.mxu0 0.0
        %3455 = vmatprep.subr.mxu0 0.0
        %3456 = vmatpush1.msra.mxu0 0.0
        %3457 = vmatprep.subr.mxu0 0.0
        %3458 = vmatpush1.msra.mxu0 0.0
        %3459 = vmatprep.subr.mxu0 0.0
        %3460 = vmatpush1.msra.mxu0 0.0
        %3461 = vmatprep.subr.mxu0 0.0
        %3462 = vmatpush1.msra.mxu0 0.0
        %3463 = vmatprep.subr.mxu0 0.0
        %3464 = vmatpush1.msra.mxu0 0.0
        %3465 = vmatprep.subr.mxu0 0.0
        %3466 = vmatpush1.msra.mxu0 0.0
        %3467 = vmatprep.subr.mxu0 0.0
        %3468 = vmatpush1.msra.mxu0 0.0
        %3469 = vmatprep.subr.mxu0 0.0
        %3470 = vmatpush1.msra.mxu0 0.0
        %3471 = vmatprep.subr.mxu0 0.0
        %3472 = vmatpush1.msra.mxu0 0.0
        %3473 = vmatprep.subr.mxu0 0.0
        %3474 = vmatpush1.msra.mxu0 0.0
        %3475 = vmatprep.subr.mxu0 0.0
        %3476 = vmatpush1.msra.mxu0 0.0
        %3477 = vmatprep.subr.mxu0 0.0
        %3478 = vmatpush1.msra.mxu0 0.0
        %3479 = vmatprep.subr.mxu0 0.0
        %3480 = vmatpush1.msra.mxu0 0.0
        %3481 = vmatprep.subr.mxu0 0.0
        %3482 = vmatpush1.msra.mxu0 0.0
        %3483 = vmatprep.subr.mxu0 0.0
        %3484 = vmatpush1.msra.mxu0 0.0
        %3485 = vmatprep.subr.mxu0 0.0
        %3486 = vmatpush1.msra.mxu0 0.0
        %3487 = vmatprep.subr.mxu0 0.0
        %3488 = vmatpush1.msra.mxu0 0.0
        %3489 = vmatprep.subr.mxu0 0.0
        %3490 = vmatpush1.msra.mxu0 0.0
        %3491 = vmatprep.subr.mxu0 0.0
        %3492 = vmatpush1.msra.mxu0 0.0
        %3493 = vmatprep.subr.mxu0 0.0
        %3494 = vmatpush1.msra.mxu0 0.0
        %3495 = vmatprep.subr.mxu0 0.0
        %3496 = vmatpush1.msra.mxu0 0.0
        %3497 = vmatprep.subr.mxu0 0.0
        %3498 = vmatpush1.msra.mxu0 0.0
        %3499 = vmatprep.subr.mxu0 0.0
        %3500 = vmatpush1.msra.mxu0 0.0
        %3501 = vmatprep.subr.mxu0 0.0
        %3502 = vmatpush1.msra.mxu0 0.0
        %3503 = vmatprep.subr.mxu0 0.0
        %3504 = vmatpush1.msra.mxu0 0.0
        %3505 = vmatprep.mubr.f32.mxu0 0.0
        %3506 = vmatmul.mubr.f32.gmra.mrb[0].mxu0 %v3431
        %v3507 = vpop.f32.mrb[0].mxu0
        %v3508 = vadd.f32 0.0, %v3507
        %v3509 = vpop.f32.mrb[0].mxu0
        %v3510 = vadd.f32 0.0, %v3509
        %3511 = vmatprep.mubr.f32.mxu0 0.0
        %3512 = vmatmul.mubr.f32.gmra.mrb[0].mxu0 %v3433
        %v3513 = vpop.f32.mrb[0].mxu0
        %v3514 = vadd.f32 0.0, %v3513
        %v3515 = vpop.f32.mrb[0].mxu0
        %v3516 = vadd.f32 0.0, %v3515
        %3517 = vdwg.mxu0
        %v3518 = vadd.f32 %v3418, %v3508
        %v3519 = vadd.f32 %v3419, %v3510
        %v3520 = vadd.f32 %v3420, %v3514
        %v3521 = vadd.f32 %v3421, %v3516
        %s3522 = scalar_lea.vmem %s3, 320
        %v3523 = vld [vmem:[%s3522] sm:$0xff]
        %v3524 = vld [vmem:[%s3522 + $0x8] sm:$0xff]
        %v3525 = vld [vmem:[%s3522 + $0x10] sm:$0x3f]
        %v3526 = vld [vmem:[%s3522 + $0x18] sm:$0x3f]
        %3527 = vrot.lane.b32.xlu0 %v2528, 100
        %v3528 = vpop.permute.xlu0 %3527
        %3529 = vrot.lane.b32.xlu0 %v2533, 100
        %v3530 = vpop.permute.xlu0 %3529
        %v3531 = vsel %vm2550, %v3528, 0
        %v3533 = vsel %vm2550, %v3530, 0
        %v3536 = vsel %vm621, %v3525, 0
        %v3539 = vsel %vm621, %v3526, 0
        %3541 = vmatprep.subr.mxu0 %v3524
        %3542 = vmatpush1.msra.mxu0 %v3523
        %3543 = vmatprep.subr.mxu0 %v3539
        %3544 = vmatpush1.msra.mxu0 %v3536
        %3545 = vmatprep.subr.mxu0 0.0
        %3546 = vmatpush1.msra.mxu0 0.0
        %3547 = vmatprep.subr.mxu0 0.0
        %3548 = vmatpush1.msra.mxu0 0.0
        %3549 = vmatprep.subr.mxu0 0.0
        %3550 = vmatpush1.msra.mxu0 0.0
        %3551 = vmatprep.subr.mxu0 0.0
        %3552 = vmatpush1.msra.mxu0 0.0
        %3553 = vmatprep.subr.mxu0 0.0
        %3554 = vmatpush1.msra.mxu0 0.0
        %3555 = vmatprep.subr.mxu0 0.0
        %3556 = vmatpush1.msra.mxu0 0.0
        %3557 = vmatprep.subr.mxu0 0.0
        %3558 = vmatpush1.msra.mxu0 0.0
        %3559 = vmatprep.subr.mxu0 0.0
        %3560 = vmatpush1.msra.mxu0 0.0
        %3561 = vmatprep.subr.mxu0 0.0
        %3562 = vmatpush1.msra.mxu0 0.0
        %3563 = vmatprep.subr.mxu0 0.0
        %3564 = vmatpush1.msra.mxu0 0.0
        %3565 = vmatprep.subr.mxu0 0.0
        %3566 = vmatpush1.msra.mxu0 0.0
        %3567 = vmatprep.subr.mxu0 0.0
        %3568 = vmatpush1.msra.mxu0 0.0
        %3569 = vmatprep.subr.mxu0 0.0
        %3570 = vmatpush1.msra.mxu0 0.0
        %3571 = vmatprep.subr.mxu0 0.0
        %3572 = vmatpush1.msra.mxu0 0.0
        %3573 = vmatprep.subr.mxu0 0.0
        %3574 = vmatpush1.msra.mxu0 0.0
        %3575 = vmatprep.subr.mxu0 0.0
        %3576 = vmatpush1.msra.mxu0 0.0
        %3577 = vmatprep.subr.mxu0 0.0
        %3578 = vmatpush1.msra.mxu0 0.0
        %3579 = vmatprep.subr.mxu0 0.0
        %3580 = vmatpush1.msra.mxu0 0.0
        %3581 = vmatprep.subr.mxu0 0.0
        %3582 = vmatpush1.msra.mxu0 0.0
        %3583 = vmatprep.subr.mxu0 0.0
        %3584 = vmatpush1.msra.mxu0 0.0
        %3585 = vmatprep.subr.mxu0 0.0
        %3586 = vmatpush1.msra.mxu0 0.0
        %3587 = vmatprep.subr.mxu0 0.0
        %3588 = vmatpush1.msra.mxu0 0.0
        %3589 = vmatprep.subr.mxu0 0.0
        %3590 = vmatpush1.msra.mxu0 0.0
        %3591 = vmatprep.subr.mxu0 0.0
        %3592 = vmatpush1.msra.mxu0 0.0
        %3593 = vmatprep.subr.mxu0 0.0
        %3594 = vmatpush1.msra.mxu0 0.0
        %3595 = vmatprep.subr.mxu0 0.0
        %3596 = vmatpush1.msra.mxu0 0.0
        %3597 = vmatprep.subr.mxu0 0.0
        %3598 = vmatpush1.msra.mxu0 0.0
        %3599 = vmatprep.subr.mxu0 0.0
        %3600 = vmatpush1.msra.mxu0 0.0
        %3601 = vmatprep.subr.mxu0 0.0
        %3602 = vmatpush1.msra.mxu0 0.0
        %3603 = vmatprep.subr.mxu0 0.0
        %3604 = vmatpush1.msra.mxu0 0.0
        %3605 = vmatprep.mubr.f32.mxu0 0.0
        %3606 = vmatmul.mubr.f32.gmra.mrb[0].mxu0 %v3531
        %v3607 = vpop.f32.mrb[0].mxu0
        %v3608 = vadd.f32 0.0, %v3607
        %v3609 = vpop.f32.mrb[0].mxu0
        %v3610 = vadd.f32 0.0, %v3609
        %3611 = vmatprep.mubr.f32.mxu0 0.0
        %3612 = vmatmul.mubr.f32.gmra.mrb[0].mxu0 %v3533
        %v3613 = vpop.f32.mrb[0].mxu0
        %v3614 = vadd.f32 0.0, %v3613
        %v3615 = vpop.f32.mrb[0].mxu0
        %v3616 = vadd.f32 0.0, %v3615
        %3617 = vdwg.mxu0
        %v3618 = vadd.f32 %v3518, %v3608
        %v3619 = vadd.f32 %v3519, %v3610
        %v3620 = vadd.f32 %v3520, %v3614
        %v3621 = vadd.f32 %v3521, %v3616
        %s3622 = scalar_lea.vmem %s3, 352
        %v3623 = vld [vmem:[%s3622] sm:$0xff]
        %v3624 = vld [vmem:[%s3622 + $0x8] sm:$0xff]
        %v3625 = vld [vmem:[%s3622 + $0x10] sm:$0x3f]
        %v3626 = vld [vmem:[%s3622 + $0x18] sm:$0x3f]
        %3627 = vrot.lane.b32.xlu0 %v2549, 100
        %v3628 = vpop.permute.xlu0 %3627
        %3629 = vrot.lane.b32.xlu0 %v2548, 100
        %v3630 = vpop.permute.xlu0 %3629
        %v3631 = vsel %vm2550, %v3628, 0
        %v3633 = vsel %vm2550, %v3630, 0
        %v3636 = vsel %vm621, %v3625, 0
        %v3639 = vsel %vm621, %v3626, 0
        %3641 = vmatprep.subr.mxu0 %v3624
        %3642 = vmatpush1.msra.mxu0 %v3623
        %3643 = vmatprep.subr.mxu0 %v3639
        %3644 = vmatpush1.msra.mxu0 %v3636
        %3645 = vmatprep.subr.mxu0 0.0
        %3646 = vmatpush1.msra.mxu0 0.0
        %3647 = vmatprep.subr.mxu0 0.0
        %3648 = vmatpush1.msra.mxu0 0.0
        %3649 = vmatprep.subr.mxu0 0.0
        %3650 = vmatpush1.msra.mxu0 0.0
        %3651 = vmatprep.subr.mxu0 0.0
        %3652 = vmatpush1.msra.mxu0 0.0
        %3653 = vmatprep.subr.mxu0 0.0
        %3654 = vmatpush1.msra.mxu0 0.0
        %3655 = vmatprep.subr.mxu0 0.0
        %3656 = vmatpush1.msra.mxu0 0.0
        %3657 = vmatprep.subr.mxu0 0.0
        %3658 = vmatpush1.msra.mxu0 0.0
        %3659 = vmatprep.subr.mxu0 0.0
        %3660 = vmatpush1.msra.mxu0 0.0
        %3661 = vmatprep.subr.mxu0 0.0
        %3662 = vmatpush1.msra.mxu0 0.0
        %3663 = vmatprep.subr.mxu0 0.0
        %3664 = vmatpush1.msra.mxu0 0.0
        %3665 = vmatprep.subr.mxu0 0.0
        %3666 = vmatpush1.msra.mxu0 0.0
        %3667 = vmatprep.subr.mxu0 0.0
        %3668 = vmatpush1.msra.mxu0 0.0
        %3669 = vmatprep.subr.mxu0 0.0
        %3670 = vmatpush1.msra.mxu0 0.0
        %3671 = vmatprep.subr.mxu0 0.0
        %3672 = vmatpush1.msra.mxu0 0.0
        %3673 = vmatprep.subr.mxu0 0.0
        %3674 = vmatpush1.msra.mxu0 0.0
        %3675 = vmatprep.subr.mxu0 0.0
        %3676 = vmatpush1.msra.mxu0 0.0
        %3677 = vmatprep.subr.mxu0 0.0
        %3678 = vmatpush1.msra.mxu0 0.0
        %3679 = vmatprep.subr.mxu0 0.0
        %3680 = vmatpush1.msra.mxu0 0.0
        %3681 = vmatprep.subr.mxu0 0.0
        %3682 = vmatpush1.msra.mxu0 0.0
        %3683 = vmatprep.subr.mxu0 0.0
        %3684 = vmatpush1.msra.mxu0 0.0
        %3685 = vmatprep.subr.mxu0 0.0
        %3686 = vmatpush1.msra.mxu0 0.0
        %3687 = vmatprep.subr.mxu0 0.0
        %3688 = vmatpush1.msra.mxu0 0.0
        %3689 = vmatprep.subr.mxu0 0.0
        %3690 = vmatpush1.msra.mxu0 0.0
        %3691 = vmatprep.subr.mxu0 0.0
        %3692 = vmatpush1.msra.mxu0 0.0
        %3693 = vmatprep.subr.mxu0 0.0
        %3694 = vmatpush1.msra.mxu0 0.0
        %3695 = vmatprep.subr.mxu0 0.0
        %3696 = vmatpush1.msra.mxu0 0.0
        %3697 = vmatprep.subr.mxu0 0.0
        %3698 = vmatpush1.msra.mxu0 0.0
        %3699 = vmatprep.subr.mxu0 0.0
        %3700 = vmatpush1.msra.mxu0 0.0
        %3701 = vmatprep.subr.mxu0 0.0
        %3702 = vmatpush1.msra.mxu0 0.0
        %3703 = vmatprep.subr.mxu0 0.0
        %3704 = vmatpush1.msra.mxu0 0.0
        %3705 = vmatprep.mubr.f32.mxu0 0.0
        %3706 = vmatmul.mubr.f32.gmra.mrb[0].mxu0 %v3631
        %v3707 = vpop.f32.mrb[0].mxu0
        %v3708 = vadd.f32 0.0, %v3707
        %v3709 = vpop.f32.mrb[0].mxu0
        %v3710 = vadd.f32 0.0, %v3709
        %3711 = vmatprep.mubr.f32.mxu0 0.0
        %3712 = vmatmul.mubr.f32.gmra.mrb[0].mxu0 %v3633
        %v3713 = vpop.f32.mrb[0].mxu0
        %v3714 = vadd.f32 0.0, %v3713
        %v3715 = vpop.f32.mrb[0].mxu0
        %v3716 = vadd.f32 0.0, %v3715
        %3717 = vdwg.mxu0
        %v3718 = vadd.f32 %v3618, %v3708
        %v3719 = vadd.f32 %v3619, %v3710
        %v3720 = vadd.f32 %v3620, %v3714
        %v3721 = vadd.f32 %v3621, %v3716
        %s3722 = scalar_lea.vmem %s3, 384
        %v3723 = vld [vmem:[%s3722] sm:$0xff]
        %v3724 = vld [vmem:[%s3722 + $0x8] sm:$0xff]
        %v3725 = vld [vmem:[%s3722 + $0x10] sm:$0x3f]
        %v3726 = vld [vmem:[%s3722 + $0x18] sm:$0x3f]
        %3727 = vrot.lane.b32.xlu0 %v2732, 100
        %v3728 = vpop.permute.xlu0 %3727
        %3729 = vrot.lane.b32.xlu0 %v2731, 100
        %v3730 = vpop.permute.xlu0 %3729
        %v3731 = vsel %vm2550, %v3728, 0
        %v3733 = vsel %vm2550, %v3730, 0
        %v3736 = vsel %vm621, %v3725, 0
        %v3739 = vsel %vm621, %v3726, 0
        %3741 = vmatprep.subr.mxu0 %v3724
        %3742 = vmatpush1.msra.mxu0 %v3723
        %3743 = vmatprep.subr.mxu0 %v3739
        %3744 = vmatpush1.msra.mxu0 %v3736
        %3745 = vmatprep.subr.mxu0 0.0
        %3746 = vmatpush1.msra.mxu0 0.0
        %3747 = vmatprep.subr.mxu0 0.0
        %3748 = vmatpush1.msra.mxu0 0.0
        %3749 = vmatprep.subr.mxu0 0.0
        %3750 = vmatpush1.msra.mxu0 0.0
        %3751 = vmatprep.subr.mxu0 0.0
        %3752 = vmatpush1.msra.mxu0 0.0
        %3753 = vmatprep.subr.mxu0 0.0
        %3754 = vmatpush1.msra.mxu0 0.0
        %3755 = vmatprep.subr.mxu0 0.0
        %3756 = vmatpush1.msra.mxu0 0.0
        %3757 = vmatprep.subr.mxu0 0.0
        %3758 = vmatpush1.msra.mxu0 0.0
        %3759 = vmatprep.subr.mxu0 0.0
        %3760 = vmatpush1.msra.mxu0 0.0
        %3761 = vmatprep.subr.mxu0 0.0
        %3762 = vmatpush1.msra.mxu0 0.0
        %3763 = vmatprep.subr.mxu0 0.0
        %3764 = vmatpush1.msra.mxu0 0.0
        %3765 = vmatprep.subr.mxu0 0.0
        %3766 = vmatpush1.msra.mxu0 0.0
        %3767 = vmatprep.subr.mxu0 0.0
        %3768 = vmatpush1.msra.mxu0 0.0
        %3769 = vmatprep.subr.mxu0 0.0
        %3770 = vmatpush1.msra.mxu0 0.0
        %3771 = vmatprep.subr.mxu0 0.0
        %3772 = vmatpush1.msra.mxu0 0.0
        %3773 = vmatprep.subr.mxu0 0.0
        %3774 = vmatpush1.msra.mxu0 0.0
        %3775 = vmatprep.subr.mxu0 0.0
        %3776 = vmatpush1.msra.mxu0 0.0
        %3777 = vmatprep.subr.mxu0 0.0
        %3778 = vmatpush1.msra.mxu0 0.0
        %3779 = vmatprep.subr.mxu0 0.0
        %3780 = vmatpush1.msra.mxu0 0.0
        %3781 = vmatprep.subr.mxu0 0.0
        %3782 = vmatpush1.msra.mxu0 0.0
        %3783 = vmatprep.subr.mxu0 0.0
        %3784 = vmatpush1.msra.mxu0 0.0
        %3785 = vmatprep.subr.mxu0 0.0
        %3786 = vmatpush1.msra.mxu0 0.0
        %3787 = vmatprep.subr.mxu0 0.0
        %3788 = vmatpush1.msra.mxu0 0.0
        %3789 = vmatprep.subr.mxu0 0.0
        %3790 = vmatpush1.msra.mxu0 0.0
        %3791 = vmatprep.subr.mxu0 0.0
        %3792 = vmatpush1.msra.mxu0 0.0
        %3793 = vmatprep.subr.mxu0 0.0
        %3794 = vmatpush1.msra.mxu0 0.0
        %3795 = vmatprep.subr.mxu0 0.0
        %3796 = vmatpush1.msra.mxu0 0.0
        %3797 = vmatprep.subr.mxu0 0.0
        %3798 = vmatpush1.msra.mxu0 0.0
        %3799 = vmatprep.subr.mxu0 0.0
        %3800 = vmatpush1.msra.mxu0 0.0
        %3801 = vmatprep.subr.mxu0 0.0
        %3802 = vmatpush1.msra.mxu0 0.0
        %3803 = vmatprep.subr.mxu0 0.0
        %3804 = vmatpush1.msra.mxu0 0.0
        %3805 = vmatprep.mubr.f32.mxu0 0.0
        %3806 = vmatmul.mubr.f32.gmra.mrb[0].mxu0 %v3731
        %v3807 = vpop.f32.mrb[0].mxu0
        %v3808 = vadd.f32 0.0, %v3807
        %v3809 = vpop.f32.mrb[0].mxu0
        %v3810 = vadd.f32 0.0, %v3809
        %3811 = vmatprep.mubr.f32.mxu0 0.0
        %3812 = vmatmul.mubr.f32.gmra.mrb[0].mxu0 %v3733
        %v3813 = vpop.f32.mrb[0].mxu0
        %v3814 = vadd.f32 0.0, %v3813
        %v3815 = vpop.f32.mrb[0].mxu0
        %v3816 = vadd.f32 0.0, %v3815
        %3817 = vdwg.mxu0
        %v3818 = vadd.f32 %v3718, %v3808
        %v3819 = vadd.f32 %v3719, %v3810
        %v3820 = vadd.f32 %v3720, %v3814
        %v3821 = vadd.f32 %v3721, %v3816
        %s3822 = scalar_lea.vmem %s3, 416
        %v3823 = vld [vmem:[%s3822] sm:$0xff]
        %v3824 = vld [vmem:[%s3822 + $0x8] sm:$0xff]
        %v3825 = vld [vmem:[%s3822 + $0x10] sm:$0x3f]
        %v3826 = vld [vmem:[%s3822 + $0x18] sm:$0x3f]
        %3827 = vrot.lane.b32.xlu0 %v2831, 100
        %v3828 = vpop.permute.xlu0 %3827
        %3829 = vrot.lane.b32.xlu0 %v2830, 100
        %v3830 = vpop.permute.xlu0 %3829
        %v3831 = vsel %vm2550, %v3828, 0
        %v3833 = vsel %vm2550, %v3830, 0
        %v3836 = vsel %vm621, %v3825, 0
        %v3839 = vsel %vm621, %v3826, 0
        %3841 = vmatprep.subr.mxu0 %v3824
        %3842 = vmatpush1.msra.mxu0 %v3823
        %3843 = vmatprep.subr.mxu0 %v3839
        %3844 = vmatpush1.msra.mxu0 %v3836
        %3845 = vmatprep.subr.mxu0 0.0
        %3846 = vmatpush1.msra.mxu0 0.0
        %3847 = vmatprep.subr.mxu0 0.0
        %3848 = vmatpush1.msra.mxu0 0.0
        %3849 = vmatprep.subr.mxu0 0.0
        %3850 = vmatpush1.msra.mxu0 0.0
        %3851 = vmatprep.subr.mxu0 0.0
        %3852 = vmatpush1.msra.mxu0 0.0
        %3853 = vmatprep.subr.mxu0 0.0
        %3854 = vmatpush1.msra.mxu0 0.0
        %3855 = vmatprep.subr.mxu0 0.0
        %3856 = vmatpush1.msra.mxu0 0.0
        %3857 = vmatprep.subr.mxu0 0.0
        %3858 = vmatpush1.msra.mxu0 0.0
        %3859 = vmatprep.subr.mxu0 0.0
        %3860 = vmatpush1.msra.mxu0 0.0
        %3861 = vmatprep.subr.mxu0 0.0
        %3862 = vmatpush1.msra.mxu0 0.0
        %3863 = vmatprep.subr.mxu0 0.0
        %3864 = vmatpush1.msra.mxu0 0.0
        %3865 = vmatprep.subr.mxu0 0.0
        %3866 = vmatpush1.msra.mxu0 0.0
        %3867 = vmatprep.subr.mxu0 0.0
        %3868 = vmatpush1.msra.mxu0 0.0
        %3869 = vmatprep.subr.mxu0 0.0
        %3870 = vmatpush1.msra.mxu0 0.0
        %3871 = vmatprep.subr.mxu0 0.0
        %3872 = vmatpush1.msra.mxu0 0.0
        %3873 = vmatprep.subr.mxu0 0.0
        %3874 = vmatpush1.msra.mxu0 0.0
        %3875 = vmatprep.subr.mxu0 0.0
        %3876 = vmatpush1.msra.mxu0 0.0
        %3877 = vmatprep.subr.mxu0 0.0
        %3878 = vmatpush1.msra.mxu0 0.0
        %3879 = vmatprep.subr.mxu0 0.0
        %3880 = vmatpush1.msra.mxu0 0.0
        %3881 = vmatprep.subr.mxu0 0.0
        %3882 = vmatpush1.msra.mxu0 0.0
        %3883 = vmatprep.subr.mxu0 0.0
        %3884 = vmatpush1.msra.mxu0 0.0
        %3885 = vmatprep.subr.mxu0 0.0
        %3886 = vmatpush1.msra.mxu0 0.0
        %3887 = vmatprep.subr.mxu0 0.0
        %3888 = vmatpush1.msra.mxu0 0.0
        %3889 = vmatprep.subr.mxu0 0.0
        %3890 = vmatpush1.msra.mxu0 0.0
        %3891 = vmatprep.subr.mxu0 0.0
        %3892 = vmatpush1.msra.mxu0 0.0
        %3893 = vmatprep.subr.mxu0 0.0
        %3894 = vmatpush1.msra.mxu0 0.0
        %3895 = vmatprep.subr.mxu0 0.0
        %3896 = vmatpush1.msra.mxu0 0.0
        %3897 = vmatprep.subr.mxu0 0.0
        %3898 = vmatpush1.msra.mxu0 0.0
        %3899 = vmatprep.subr.mxu0 0.0
        %3900 = vmatpush1.msra.mxu0 0.0
        %3901 = vmatprep.subr.mxu0 0.0
        %3902 = vmatpush1.msra.mxu0 0.0
        %3903 = vmatprep.subr.mxu0 0.0
        %3904 = vmatpush1.msra.mxu0 0.0
        %3905 = vmatprep.mubr.f32.mxu0 0.0
        %3906 = vmatmul.mubr.f32.gmra.mrb[0].mxu0 %v3831
        %v3907 = vpop.f32.mrb[0].mxu0
        %v3908 = vadd.f32 0.0, %v3907
        %v3909 = vpop.f32.mrb[0].mxu0
        %v3910 = vadd.f32 0.0, %v3909
        %3911 = vmatprep.mubr.f32.mxu0 0.0
        %3912 = vmatmul.mubr.f32.gmra.mrb[0].mxu0 %v3833
        %v3913 = vpop.f32.mrb[0].mxu0
        %v3914 = vadd.f32 0.0, %v3913
        %v3915 = vpop.f32.mrb[0].mxu0
        %v3916 = vadd.f32 0.0, %v3915
        %3917 = vdwg.mxu0
        %v3918 = vadd.f32 %v3818, %v3908
        %v3919 = vadd.f32 %v3819, %v3910
        %v3920 = vadd.f32 %v3820, %v3914
        %v3921 = vadd.f32 %v3821, %v3916
        %s3922 = scalar_lea.vmem %s3, 448
        %v3923 = vld [vmem:[%s3922] sm:$0xff]
        %v3924 = vld [vmem:[%s3922 + $0x8] sm:$0xff]
        %v3925 = vld [vmem:[%s3922 + $0x10] sm:$0x3f]
        %v3926 = vld [vmem:[%s3922 + $0x18] sm:$0x3f]
        %3927 = vrot.lane.b32.xlu0 %v2930, 100
        %v3928 = vpop.permute.xlu0 %3927
        %3929 = vrot.lane.b32.xlu0 %v2929, 100
        %v3930 = vpop.permute.xlu0 %3929
        %v3931 = vsel %vm2550, %v3928, 0
        %v3933 = vsel %vm2550, %v3930, 0
        %v3936 = vsel %vm621, %v3925, 0
        %v3939 = vsel %vm621, %v3926, 0
        %3941 = vmatprep.subr.mxu0 %v3924
        %3942 = vmatpush1.msra.mxu0 %v3923
        %3943 = vmatprep.subr.mxu0 %v3939
        %3944 = vmatpush1.msra.mxu0 %v3936
        %3945 = vmatprep.subr.mxu0 0.0
        %3946 = vmatpush1.msra.mxu0 0.0
        %3947 = vmatprep.subr.mxu0 0.0
        %3948 = vmatpush1.msra.mxu0 0.0
        %3949 = vmatprep.subr.mxu0 0.0
        %3950 = vmatpush1.msra.mxu0 0.0
        %3951 = vmatprep.subr.mxu0 0.0
        %3952 = vmatpush1.msra.mxu0 0.0
        %3953 = vmatprep.subr.mxu0 0.0
        %3954 = vmatpush1.msra.mxu0 0.0
        %3955 = vmatprep.subr.mxu0 0.0
        %3956 = vmatpush1.msra.mxu0 0.0
        %3957 = vmatprep.subr.mxu0 0.0
        %3958 = vmatpush1.msra.mxu0 0.0
        %3959 = vmatprep.subr.mxu0 0.0
        %3960 = vmatpush1.msra.mxu0 0.0
        %3961 = vmatprep.subr.mxu0 0.0
        %3962 = vmatpush1.msra.mxu0 0.0
        %3963 = vmatprep.subr.mxu0 0.0
        %3964 = vmatpush1.msra.mxu0 0.0
        %3965 = vmatprep.subr.mxu0 0.0
        %3966 = vmatpush1.msra.mxu0 0.0
        %3967 = vmatprep.subr.mxu0 0.0
        %3968 = vmatpush1.msra.mxu0 0.0
        %3969 = vmatprep.subr.mxu0 0.0
        %3970 = vmatpush1.msra.mxu0 0.0
        %3971 = vmatprep.subr.mxu0 0.0
        %3972 = vmatpush1.msra.mxu0 0.0
        %3973 = vmatprep.subr.mxu0 0.0
        %3974 = vmatpush1.msra.mxu0 0.0
        %3975 = vmatprep.subr.mxu0 0.0
        %3976 = vmatpush1.msra.mxu0 0.0
        %3977 = vmatprep.subr.mxu0 0.0
        %3978 = vmatpush1.msra.mxu0 0.0
        %3979 = vmatprep.subr.mxu0 0.0
        %3980 = vmatpush1.msra.mxu0 0.0
        %3981 = vmatprep.subr.mxu0 0.0
        %3982 = vmatpush1.msra.mxu0 0.0
        %3983 = vmatprep.subr.mxu0 0.0
        %3984 = vmatpush1.msra.mxu0 0.0
        %3985 = vmatprep.subr.mxu0 0.0
        %3986 = vmatpush1.msra.mxu0 0.0
        %3987 = vmatprep.subr.mxu0 0.0
        %3988 = vmatpush1.msra.mxu0 0.0
        %3989 = vmatprep.subr.mxu0 0.0
        %3990 = vmatpush1.msra.mxu0 0.0
        %3991 = vmatprep.subr.mxu0 0.0
        %3992 = vmatpush1.msra.mxu0 0.0
        %3993 = vmatprep.subr.mxu0 0.0
        %3994 = vmatpush1.msra.mxu0 0.0
        %3995 = vmatprep.subr.mxu0 0.0
        %3996 = vmatpush1.msra.mxu0 0.0
        %3997 = vmatprep.subr.mxu0 0.0
        %3998 = vmatpush1.msra.mxu0 0.0
        %3999 = vmatprep.subr.mxu0 0.0
        %4000 = vmatpush1.msra.mxu0 0.0
        %4001 = vmatprep.subr.mxu0 0.0
        %4002 = vmatpush1.msra.mxu0 0.0
        %4003 = vmatprep.subr.mxu0 0.0
        %4004 = vmatpush1.msra.mxu0 0.0
        %4005 = vmatprep.mubr.f32.mxu0 0.0
        %4006 = vmatmul.mubr.f32.gmra.mrb[0].mxu0 %v3931
        %v4007 = vpop.f32.mrb[0].mxu0
        %v4008 = vadd.f32 0.0, %v4007
        %v4009 = vpop.f32.mrb[0].mxu0
        %v4010 = vadd.f32 0.0, %v4009
        %4011 = vmatprep.mubr.f32.mxu0 0.0
        %4012 = vmatmul.mubr.f32.gmra.mrb[0].mxu0 %v3933
        %v4013 = vpop.f32.mrb[0].mxu0
        %v4014 = vadd.f32 0.0, %v4013
        %v4015 = vpop.f32.mrb[0].mxu0
        %v4016 = vadd.f32 0.0, %v4015
        %4017 = vdwg.mxu0
        %v4018 = vadd.f32 %v3918, %v4008
        %v4019 = vadd.f32 %v3919, %v4010
        %v4020 = vadd.f32 %v3920, %v4014
        %v4021 = vadd.f32 %v3921, %v4016
        %s4022 = scalar_lea.vmem %s3, 480
        %v4023 = vld [vmem:[%s4022] sm:$0xff]
        %v4024 = vld [vmem:[%s4022 + $0x8] sm:$0xff]
        %v4025 = vld [vmem:[%s4022 + $0x10] sm:$0x3f]
        %v4026 = vld [vmem:[%s4022 + $0x18] sm:$0x3f]
        %4027 = vrot.lane.b32.xlu0 %v2528, 86
        %v4028 = vpop.permute.xlu0 %4027
        %4029 = vrot.lane.b32.xlu0 %v2533, 86
        %v4030 = vpop.permute.xlu0 %4029
        %v4031 = vsel %vm2550, %v4028, 0
        %v4033 = vsel %vm2550, %v4030, 0
        %v4036 = vsel %vm621, %v4025, 0
        %v4039 = vsel %vm621, %v4026, 0
        %4041 = vmatprep.subr.mxu0 %v4024
        %4042 = vmatpush1.msra.mxu0 %v4023
        %4043 = vmatprep.subr.mxu0 %v4039
        %4044 = vmatpush1.msra.mxu0 %v4036
        %4045 = vmatprep.subr.mxu0 0.0
        %4046 = vmatpush1.msra.mxu0 0.0
        %4047 = vmatprep.subr.mxu0 0.0
        %4048 = vmatpush1.msra.mxu0 0.0
        %4049 = vmatprep.subr.mxu0 0.0
        %4050 = vmatpush1.msra.mxu0 0.0
        %4051 = vmatprep.subr.mxu0 0.0
        %4052 = vmatpush1.msra.mxu0 0.0
        %4053 = vmatprep.subr.mxu0 0.0
        %4054 = vmatpush1.msra.mxu0 0.0
        %4055 = vmatprep.subr.mxu0 0.0
        %4056 = vmatpush1.msra.mxu0 0.0
        %4057 = vmatprep.subr.mxu0 0.0
        %4058 = vmatpush1.msra.mxu0 0.0
        %4059 = vmatprep.subr.mxu0 0.0
        %4060 = vmatpush1.msra.mxu0 0.0
        %4061 = vmatprep.subr.mxu0 0.0
        %4062 = vmatpush1.msra.mxu0 0.0
        %4063 = vmatprep.subr.mxu0 0.0
        %4064 = vmatpush1.msra.mxu0 0.0
        %4065 = vmatprep.subr.mxu0 0.0
        %4066 = vmatpush1.msra.mxu0 0.0
        %4067 = vmatprep.subr.mxu0 0.0
        %4068 = vmatpush1.msra.mxu0 0.0
        %4069 = vmatprep.subr.mxu0 0.0
        %4070 = vmatpush1.msra.mxu0 0.0
        %4071 = vmatprep.subr.mxu0 0.0
        %4072 = vmatpush1.msra.mxu0 0.0
        %4073 = vmatprep.subr.mxu0 0.0
        %4074 = vmatpush1.msra.mxu0 0.0
        %4075 = vmatprep.subr.mxu0 0.0
        %4076 = vmatpush1.msra.mxu0 0.0
        %4077 = vmatprep.subr.mxu0 0.0
        %4078 = vmatpush1.msra.mxu0 0.0
        %4079 = vmatprep.subr.mxu0 0.0
        %4080 = vmatpush1.msra.mxu0 0.0
        %4081 = vmatprep.subr.mxu0 0.0
        %4082 = vmatpush1.msra.mxu0 0.0
        %4083 = vmatprep.subr.mxu0 0.0
        %4084 = vmatpush1.msra.mxu0 0.0
        %4085 = vmatprep.subr.mxu0 0.0
        %4086 = vmatpush1.msra.mxu0 0.0
        %4087 = vmatprep.subr.mxu0 0.0
        %4088 = vmatpush1.msra.mxu0 0.0
        %4089 = vmatprep.subr.mxu0 0.0
        %4090 = vmatpush1.msra.mxu0 0.0
        %4091 = vmatprep.subr.mxu0 0.0
        %4092 = vmatpush1.msra.mxu0 0.0
        %4093 = vmatprep.subr.mxu0 0.0
        %4094 = vmatpush1.msra.mxu0 0.0
        %4095 = vmatprep.subr.mxu0 0.0
        %4096 = vmatpush1.msra.mxu0 0.0
        %4097 = vmatprep.subr.mxu0 0.0
        %4098 = vmatpush1.msra.mxu0 0.0
        %4099 = vmatprep.subr.mxu0 0.0
        %4100 = vmatpush1.msra.mxu0 0.0
        %4101 = vmatprep.subr.mxu0 0.0
        %4102 = vmatpush1.msra.mxu0 0.0
        %4103 = vmatprep.subr.mxu0 0.0
        %4104 = vmatpush1.msra.mxu0 0.0
        %4105 = vmatprep.mubr.f32.mxu0 0.0
        %4106 = vmatmul.mubr.f32.gmra.mrb[0].mxu0 %v4031
        %v4107 = vpop.f32.mrb[0].mxu0
        %v4108 = vadd.f32 0.0, %v4107
        %v4109 = vpop.f32.mrb[0].mxu0
        %v4110 = vadd.f32 0.0, %v4109
        %4111 = vmatprep.mubr.f32.mxu0 0.0
        %4112 = vmatmul.mubr.f32.gmra.mrb[0].mxu0 %v4033
        %v4113 = vpop.f32.mrb[0].mxu0
        %v4114 = vadd.f32 0.0, %v4113
        %v4115 = vpop.f32.mrb[0].mxu0
        %v4116 = vadd.f32 0.0, %v4115
        %4117 = vdwg.mxu0
        %v4118 = vadd.f32 %v4018, %v4108
        %v4119 = vadd.f32 %v4019, %v4110
        %v4120 = vadd.f32 %v4020, %v4114
        %v4121 = vadd.f32 %v4021, %v4116
        %s4122 = scalar_lea.vmem %s3, 512
        %v4123 = vld [vmem:[%s4122] sm:$0xff]
        %v4124 = vld [vmem:[%s4122 + $0x8] sm:$0xff]
        %v4125 = vld [vmem:[%s4122 + $0x10] sm:$0x3f]
        %v4126 = vld [vmem:[%s4122 + $0x18] sm:$0x3f]
        %4127 = vrot.lane.b32.xlu0 %v2549, 86
        %v4128 = vpop.permute.xlu0 %4127
        %4129 = vrot.lane.b32.xlu0 %v2548, 86
        %v4130 = vpop.permute.xlu0 %4129
        %v4131 = vsel %vm2550, %v4128, 0
        %v4133 = vsel %vm2550, %v4130, 0
        %v4136 = vsel %vm621, %v4125, 0
        %v4139 = vsel %vm621, %v4126, 0
        %4141 = vmatprep.subr.mxu0 %v4124
        %4142 = vmatpush1.msra.mxu0 %v4123
        %4143 = vmatprep.subr.mxu0 %v4139
        %4144 = vmatpush1.msra.mxu0 %v4136
        %4145 = vmatprep.subr.mxu0 0.0
        %4146 = vmatpush1.msra.mxu0 0.0
        %4147 = vmatprep.subr.mxu0 0.0
        %4148 = vmatpush1.msra.mxu0 0.0
        %4149 = vmatprep.subr.mxu0 0.0
        %4150 = vmatpush1.msra.mxu0 0.0
        %4151 = vmatprep.subr.mxu0 0.0
        %4152 = vmatpush1.msra.mxu0 0.0
        %4153 = vmatprep.subr.mxu0 0.0
        %4154 = vmatpush1.msra.mxu0 0.0
        %4155 = vmatprep.subr.mxu0 0.0
        %4156 = vmatpush1.msra.mxu0 0.0
        %4157 = vmatprep.subr.mxu0 0.0
        %4158 = vmatpush1.msra.mxu0 0.0
        %4159 = vmatprep.subr.mxu0 0.0
        %4160 = vmatpush1.msra.mxu0 0.0
        %4161 = vmatprep.subr.mxu0 0.0
        %4162 = vmatpush1.msra.mxu0 0.0
        %4163 = vmatprep.subr.mxu0 0.0
        %4164 = vmatpush1.msra.mxu0 0.0
        %4165 = vmatprep.subr.mxu0 0.0
        %4166 = vmatpush1.msra.mxu0 0.0
        %4167 = vmatprep.subr.mxu0 0.0
        %4168 = vmatpush1.msra.mxu0 0.0
        %4169 = vmatprep.subr.mxu0 0.0
        %4170 = vmatpush1.msra.mxu0 0.0
        %4171 = vmatprep.subr.mxu0 0.0
        %4172 = vmatpush1.msra.mxu0 0.0
        %4173 = vmatprep.subr.mxu0 0.0
        %4174 = vmatpush1.msra.mxu0 0.0
        %4175 = vmatprep.subr.mxu0 0.0
        %4176 = vmatpush1.msra.mxu0 0.0
        %4177 = vmatprep.subr.mxu0 0.0
        %4178 = vmatpush1.msra.mxu0 0.0
        %4179 = vmatprep.subr.mxu0 0.0
        %4180 = vmatpush1.msra.mxu0 0.0
        %4181 = vmatprep.subr.mxu0 0.0
        %4182 = vmatpush1.msra.mxu0 0.0
        %4183 = vmatprep.subr.mxu0 0.0
        %4184 = vmatpush1.msra.mxu0 0.0
        %4185 = vmatprep.subr.mxu0 0.0
        %4186 = vmatpush1.msra.mxu0 0.0
        %4187 = vmatprep.subr.mxu0 0.0
        %4188 = vmatpush1.msra.mxu0 0.0
        %4189 = vmatprep.subr.mxu0 0.0
        %4190 = vmatpush1.msra.mxu0 0.0
        %4191 = vmatprep.subr.mxu0 0.0
        %4192 = vmatpush1.msra.mxu0 0.0
        %4193 = vmatprep.subr.mxu0 0.0
        %4194 = vmatpush1.msra.mxu0 0.0
        %4195 = vmatprep.subr.mxu0 0.0
        %4196 = vmatpush1.msra.mxu0 0.0
        %4197 = vmatprep.subr.mxu0 0.0
        %4198 = vmatpush1.msra.mxu0 0.0
        %4199 = vmatprep.subr.mxu0 0.0
        %4200 = vmatpush1.msra.mxu0 0.0
        %4201 = vmatprep.subr.mxu0 0.0
        %4202 = vmatpush1.msra.mxu0 0.0
        %4203 = vmatprep.subr.mxu0 0.0
        %4204 = vmatpush1.msra.mxu0 0.0
        %4205 = vmatprep.mubr.f32.mxu0 0.0
        %4206 = vmatmul.mubr.f32.gmra.mrb[0].mxu0 %v4131
        %v4207 = vpop.f32.mrb[0].mxu0
        %v4208 = vadd.f32 0.0, %v4207
        %v4209 = vpop.f32.mrb[0].mxu0
        %v4210 = vadd.f32 0.0, %v4209
        %4211 = vmatprep.mubr.f32.mxu0 0.0
        %4212 = vmatmul.mubr.f32.gmra.mrb[0].mxu0 %v4133
        %v4213 = vpop.f32.mrb[0].mxu0
        %v4214 = vadd.f32 0.0, %v4213
        %v4215 = vpop.f32.mrb[0].mxu0
        %v4216 = vadd.f32 0.0, %v4215
        %4217 = vdwg.mxu0
        %v4218 = vadd.f32 %v4118, %v4208
        %v4219 = vadd.f32 %v4119, %v4210
        %v4220 = vadd.f32 %v4120, %v4214
        %v4221 = vadd.f32 %v4121, %v4216
        %s4222 = scalar_lea.vmem %s3, 544
        %v4223 = vld [vmem:[%s4222] sm:$0xff]
        %v4224 = vld [vmem:[%s4222 + $0x8] sm:$0xff]
        %v4225 = vld [vmem:[%s4222 + $0x10] sm:$0x3f]
        %v4226 = vld [vmem:[%s4222 + $0x18] sm:$0x3f]
        %4227 = vrot.lane.b32.xlu0 %v2732, 86
        %v4228 = vpop.permute.xlu0 %4227
        %4229 = vrot.lane.b32.xlu0 %v2731, 86
        %v4230 = vpop.permute.xlu0 %4229
        %v4231 = vsel %vm2550, %v4228, 0
        %v4233 = vsel %vm2550, %v4230, 0
        %v4236 = vsel %vm621, %v4225, 0
        %v4239 = vsel %vm621, %v4226, 0
        %4241 = vmatprep.subr.mxu0 %v4224
        %4242 = vmatpush1.msra.mxu0 %v4223
        %4243 = vmatprep.subr.mxu0 %v4239
        %4244 = vmatpush1.msra.mxu0 %v4236
        %4245 = vmatprep.subr.mxu0 0.0
        %4246 = vmatpush1.msra.mxu0 0.0
        %4247 = vmatprep.subr.mxu0 0.0
        %4248 = vmatpush1.msra.mxu0 0.0
        %4249 = vmatprep.subr.mxu0 0.0
        %4250 = vmatpush1.msra.mxu0 0.0
        %4251 = vmatprep.subr.mxu0 0.0
        %4252 = vmatpush1.msra.mxu0 0.0
        %4253 = vmatprep.subr.mxu0 0.0
        %4254 = vmatpush1.msra.mxu0 0.0
        %4255 = vmatprep.subr.mxu0 0.0
        %4256 = vmatpush1.msra.mxu0 0.0
        %4257 = vmatprep.subr.mxu0 0.0
        %4258 = vmatpush1.msra.mxu0 0.0
        %4259 = vmatprep.subr.mxu0 0.0
        %4260 = vmatpush1.msra.mxu0 0.0
        %4261 = vmatprep.subr.mxu0 0.0
        %4262 = vmatpush1.msra.mxu0 0.0
        %4263 = vmatprep.subr.mxu0 0.0
        %4264 = vmatpush1.msra.mxu0 0.0
        %4265 = vmatprep.subr.mxu0 0.0
        %4266 = vmatpush1.msra.mxu0 0.0
        %4267 = vmatprep.subr.mxu0 0.0
        %4268 = vmatpush1.msra.mxu0 0.0
        %4269 = vmatprep.subr.mxu0 0.0
        %4270 = vmatpush1.msra.mxu0 0.0
        %4271 = vmatprep.subr.mxu0 0.0
        %4272 = vmatpush1.msra.mxu0 0.0
        %4273 = vmatprep.subr.mxu0 0.0
        %4274 = vmatpush1.msra.mxu0 0.0
        %4275 = vmatprep.subr.mxu0 0.0
        %4276 = vmatpush1.msra.mxu0 0.0
        %4277 = vmatprep.subr.mxu0 0.0
        %4278 = vmatpush1.msra.mxu0 0.0
        %4279 = vmatprep.subr.mxu0 0.0
        %4280 = vmatpush1.msra.mxu0 0.0
        %4281 = vmatprep.subr.mxu0 0.0
        %4282 = vmatpush1.msra.mxu0 0.0
        %4283 = vmatprep.subr.mxu0 0.0
        %4284 = vmatpush1.msra.mxu0 0.0
        %4285 = vmatprep.subr.mxu0 0.0
        %4286 = vmatpush1.msra.mxu0 0.0
        %4287 = vmatprep.subr.mxu0 0.0
        %4288 = vmatpush1.msra.mxu0 0.0
        %4289 = vmatprep.subr.mxu0 0.0
        %4290 = vmatpush1.msra.mxu0 0.0
        %4291 = vmatprep.subr.mxu0 0.0
        %4292 = vmatpush1.msra.mxu0 0.0
        %4293 = vmatprep.subr.mxu0 0.0
        %4294 = vmatpush1.msra.mxu0 0.0
        %4295 = vmatprep.subr.mxu0 0.0
        %4296 = vmatpush1.msra.mxu0 0.0
        %4297 = vmatprep.subr.mxu0 0.0
        %4298 = vmatpush1.msra.mxu0 0.0
        %4299 = vmatprep.subr.mxu0 0.0
        %4300 = vmatpush1.msra.mxu0 0.0
        %4301 = vmatprep.subr.mxu0 0.0
        %4302 = vmatpush1.msra.mxu0 0.0
        %4303 = vmatprep.subr.mxu0 0.0
        %4304 = vmatpush1.msra.mxu0 0.0
        %4305 = vmatprep.mubr.f32.mxu0 0.0
        %4306 = vmatmul.mubr.f32.gmra.mrb[0].mxu0 %v4231
        %v4307 = vpop.f32.mrb[0].mxu0
        %v4308 = vadd.f32 0.0, %v4307
        %v4309 = vpop.f32.mrb[0].mxu0
        %v4310 = vadd.f32 0.0, %v4309
        %4311 = vmatprep.mubr.f32.mxu0 0.0
        %4312 = vmatmul.mubr.f32.gmra.mrb[0].mxu0 %v4233
        %v4313 = vpop.f32.mrb[0].mxu0
        %v4314 = vadd.f32 0.0, %v4313
        %v4315 = vpop.f32.mrb[0].mxu0
        %v4316 = vadd.f32 0.0, %v4315
        %4317 = vdwg.mxu0
        %v4318 = vadd.f32 %v4218, %v4308
        %v4319 = vadd.f32 %v4219, %v4310
        %v4320 = vadd.f32 %v4220, %v4314
        %v4321 = vadd.f32 %v4221, %v4316
        %s4322 = scalar_lea.vmem %s3, 576
        %v4323 = vld [vmem:[%s4322] sm:$0xff]
        %v4324 = vld [vmem:[%s4322 + $0x8] sm:$0xff]
        %v4325 = vld [vmem:[%s4322 + $0x10] sm:$0x3f]
        %v4326 = vld [vmem:[%s4322 + $0x18] sm:$0x3f]
        %4327 = vrot.lane.b32.xlu0 %v2831, 86
        %v4328 = vpop.permute.xlu0 %4327
        %4329 = vrot.lane.b32.xlu0 %v2830, 86
        %v4330 = vpop.permute.xlu0 %4329
        %v4331 = vsel %vm2550, %v4328, 0
        %v4333 = vsel %vm2550, %v4330, 0
        %v4336 = vsel %vm621, %v4325, 0
        %v4339 = vsel %vm621, %v4326, 0
        %4341 = vmatprep.subr.mxu0 %v4324
        %4342 = vmatpush1.msra.mxu0 %v4323
        %4343 = vmatprep.subr.mxu0 %v4339
        %4344 = vmatpush1.msra.mxu0 %v4336
        %4345 = vmatprep.subr.mxu0 0.0
        %4346 = vmatpush1.msra.mxu0 0.0
        %4347 = vmatprep.subr.mxu0 0.0
        %4348 = vmatpush1.msra.mxu0 0.0
        %4349 = vmatprep.subr.mxu0 0.0
        %4350 = vmatpush1.msra.mxu0 0.0
        %4351 = vmatprep.subr.mxu0 0.0
        %4352 = vmatpush1.msra.mxu0 0.0
        %4353 = vmatprep.subr.mxu0 0.0
        %4354 = vmatpush1.msra.mxu0 0.0
        %4355 = vmatprep.subr.mxu0 0.0
        %4356 = vmatpush1.msra.mxu0 0.0
        %4357 = vmatprep.subr.mxu0 0.0
        %4358 = vmatpush1.msra.mxu0 0.0
        %4359 = vmatprep.subr.mxu0 0.0
        %4360 = vmatpush1.msra.mxu0 0.0
        %4361 = vmatprep.subr.mxu0 0.0
        %4362 = vmatpush1.msra.mxu0 0.0
        %4363 = vmatprep.subr.mxu0 0.0
        %4364 = vmatpush1.msra.mxu0 0.0
        %4365 = vmatprep.subr.mxu0 0.0
        %4366 = vmatpush1.msra.mxu0 0.0
        %4367 = vmatprep.subr.mxu0 0.0
        %4368 = vmatpush1.msra.mxu0 0.0
        %4369 = vmatprep.subr.mxu0 0.0
        %4370 = vmatpush1.msra.mxu0 0.0
        %4371 = vmatprep.subr.mxu0 0.0
        %4372 = vmatpush1.msra.mxu0 0.0
        %4373 = vmatprep.subr.mxu0 0.0
        %4374 = vmatpush1.msra.mxu0 0.0
        %4375 = vmatprep.subr.mxu0 0.0
        %4376 = vmatpush1.msra.mxu0 0.0
        %4377 = vmatprep.subr.mxu0 0.0
        %4378 = vmatpush1.msra.mxu0 0.0
        %4379 = vmatprep.subr.mxu0 0.0
        %4380 = vmatpush1.msra.mxu0 0.0
        %4381 = vmatprep.subr.mxu0 0.0
        %4382 = vmatpush1.msra.mxu0 0.0
        %4383 = vmatprep.subr.mxu0 0.0
        %4384 = vmatpush1.msra.mxu0 0.0
        %4385 = vmatprep.subr.mxu0 0.0
        %4386 = vmatpush1.msra.mxu0 0.0
        %4387 = vmatprep.subr.mxu0 0.0
        %4388 = vmatpush1.msra.mxu0 0.0
        %4389 = vmatprep.subr.mxu0 0.0
        %4390 = vmatpush1.msra.mxu0 0.0
        %4391 = vmatprep.subr.mxu0 0.0
        %4392 = vmatpush1.msra.mxu0 0.0
        %4393 = vmatprep.subr.mxu0 0.0
        %4394 = vmatpush1.msra.mxu0 0.0
        %4395 = vmatprep.subr.mxu0 0.0
        %4396 = vmatpush1.msra.mxu0 0.0
        %4397 = vmatprep.subr.mxu0 0.0
        %4398 = vmatpush1.msra.mxu0 0.0
        %4399 = vmatprep.subr.mxu0 0.0
        %4400 = vmatpush1.msra.mxu0 0.0
        %4401 = vmatprep.subr.mxu0 0.0
        %4402 = vmatpush1.msra.mxu0 0.0
        %4403 = vmatprep.subr.mxu0 0.0
        %4404 = vmatpush1.msra.mxu0 0.0
        %4405 = vmatprep.mubr.f32.mxu0 0.0
        %4406 = vmatmul.mubr.f32.gmra.mrb[0].mxu0 %v4331
        %v4407 = vpop.f32.mrb[0].mxu0
        %v4408 = vadd.f32 0.0, %v4407
        %v4409 = vpop.f32.mrb[0].mxu0
        %v4410 = vadd.f32 0.0, %v4409
        %4411 = vmatprep.mubr.f32.mxu0 0.0
        %4412 = vmatmul.mubr.f32.gmra.mrb[0].mxu0 %v4333
        %v4413 = vpop.f32.mrb[0].mxu0
        %v4414 = vadd.f32 0.0, %v4413
        %v4415 = vpop.f32.mrb[0].mxu0
        %v4416 = vadd.f32 0.0, %v4415
        %4417 = vdwg.mxu0
        %v4418 = vadd.f32 %v4318, %v4408
        %v4419 = vadd.f32 %v4319, %v4410
        %v4420 = vadd.f32 %v4320, %v4414
        %v4421 = vadd.f32 %v4321, %v4416
        %s4422 = scalar_lea.vmem %s3, 608
        %v4423 = vld [vmem:[%s4422] sm:$0xff]
        %v4424 = vld [vmem:[%s4422 + $0x8] sm:$0xff]
        %v4425 = vld [vmem:[%s4422 + $0x10] sm:$0x3f]
        %v4426 = vld [vmem:[%s4422 + $0x18] sm:$0x3f]
        %4427 = vrot.lane.b32.xlu0 %v2930, 86
        %v4428 = vpop.permute.xlu0 %4427
        %4429 = vrot.lane.b32.xlu0 %v2929, 86
        %v4430 = vpop.permute.xlu0 %4429
        %v4431 = vsel %vm2550, %v4428, 0
        %v4433 = vsel %vm2550, %v4430, 0
        %v4436 = vsel %vm621, %v4425, 0
        %v4439 = vsel %vm621, %v4426, 0
        %4441 = vmatprep.subr.mxu0 %v4424
        %4442 = vmatpush1.msra.mxu0 %v4423
        %4443 = vmatprep.subr.mxu0 %v4439
        %4444 = vmatpush1.msra.mxu0 %v4436
        %4445 = vmatprep.subr.mxu0 0.0
        %4446 = vmatpush1.msra.mxu0 0.0
        %4447 = vmatprep.subr.mxu0 0.0
        %4448 = vmatpush1.msra.mxu0 0.0
        %4449 = vmatprep.subr.mxu0 0.0
        %4450 = vmatpush1.msra.mxu0 0.0
        %4451 = vmatprep.subr.mxu0 0.0
        %4452 = vmatpush1.msra.mxu0 0.0
        %4453 = vmatprep.subr.mxu0 0.0
        %4454 = vmatpush1.msra.mxu0 0.0
        %4455 = vmatprep.subr.mxu0 0.0
        %4456 = vmatpush1.msra.mxu0 0.0
        %4457 = vmatprep.subr.mxu0 0.0
        %4458 = vmatpush1.msra.mxu0 0.0
        %4459 = vmatprep.subr.mxu0 0.0
        %4460 = vmatpush1.msra.mxu0 0.0
        %4461 = vmatprep.subr.mxu0 0.0
        %4462 = vmatpush1.msra.mxu0 0.0
        %4463 = vmatprep.subr.mxu0 0.0
        %4464 = vmatpush1.msra.mxu0 0.0
        %4465 = vmatprep.subr.mxu0 0.0
        %4466 = vmatpush1.msra.mxu0 0.0
        %4467 = vmatprep.subr.mxu0 0.0
        %4468 = vmatpush1.msra.mxu0 0.0
        %4469 = vmatprep.subr.mxu0 0.0
        %4470 = vmatpush1.msra.mxu0 0.0
        %4471 = vmatprep.subr.mxu0 0.0
        %4472 = vmatpush1.msra.mxu0 0.0
        %4473 = vmatprep.subr.mxu0 0.0
        %4474 = vmatpush1.msra.mxu0 0.0
        %4475 = vmatprep.subr.mxu0 0.0
        %4476 = vmatpush1.msra.mxu0 0.0
        %4477 = vmatprep.subr.mxu0 0.0
        %4478 = vmatpush1.msra.mxu0 0.0
        %4479 = vmatprep.subr.mxu0 0.0
        %4480 = vmatpush1.msra.mxu0 0.0
        %4481 = vmatprep.subr.mxu0 0.0
        %4482 = vmatpush1.msra.mxu0 0.0
        %4483 = vmatprep.subr.mxu0 0.0
        %4484 = vmatpush1.msra.mxu0 0.0
        %4485 = vmatprep.subr.mxu0 0.0
        %4486 = vmatpush1.msra.mxu0 0.0
        %4487 = vmatprep.subr.mxu0 0.0
        %4488 = vmatpush1.msra.mxu0 0.0
        %4489 = vmatprep.subr.mxu0 0.0
        %4490 = vmatpush1.msra.mxu0 0.0
        %4491 = vmatprep.subr.mxu0 0.0
        %4492 = vmatpush1.msra.mxu0 0.0
        %4493 = vmatprep.subr.mxu0 0.0
        %4494 = vmatpush1.msra.mxu0 0.0
        %4495 = vmatprep.subr.mxu0 0.0
        %4496 = vmatpush1.msra.mxu0 0.0
        %4497 = vmatprep.subr.mxu0 0.0
        %4498 = vmatpush1.msra.mxu0 0.0
        %4499 = vmatprep.subr.mxu0 0.0
        %4500 = vmatpush1.msra.mxu0 0.0
        %4501 = vmatprep.subr.mxu0 0.0
        %4502 = vmatpush1.msra.mxu0 0.0
        %4503 = vmatprep.subr.mxu0 0.0
        %4504 = vmatpush1.msra.mxu0 0.0
        %4505 = vmatprep.mubr.f32.mxu0 0.0
        %4506 = vmatmul.mubr.f32.gmra.mrb[0].mxu0 %v4431
        %v4507 = vpop.f32.mrb[0].mxu0
        %v4508 = vadd.f32 0.0, %v4507
        %v4509 = vpop.f32.mrb[0].mxu0
        %v4510 = vadd.f32 0.0, %v4509
        %4511 = vmatprep.mubr.f32.mxu0 0.0
        %4512 = vmatmul.mubr.f32.gmra.mrb[0].mxu0 %v4433
        %v4513 = vpop.f32.mrb[0].mxu0
        %v4514 = vadd.f32 0.0, %v4513
        %v4515 = vpop.f32.mrb[0].mxu0
        %v4516 = vadd.f32 0.0, %v4515
        %4517 = vdwg.mxu0
        %v4518 = vadd.f32 %v4418, %v4508
        %v4519 = vadd.f32 %v4419, %v4510
        %v4520 = vadd.f32 %v4420, %v4514
        %v4521 = vadd.f32 %v4421, %v4516
        %s4522 = scalar_lea.vmem %s3, 640
        %v4523 = vld [vmem:[%s4522] sm:$0xff]
        %v4524 = vld [vmem:[%s4522 + $0x8] sm:$0xff]
        %v4525 = vld [vmem:[%s4522 + $0x10] sm:$0x3f]
        %v4526 = vld [vmem:[%s4522 + $0x18] sm:$0x3f]
        %4527 = vrot.lane.b32.xlu0 %v2528, 72
        %v4528 = vpop.permute.xlu0 %4527
        %4529 = vrot.lane.b32.xlu0 %v2533, 72
        %v4530 = vpop.permute.xlu0 %4529
        %v4531 = vsel %vm2550, %v4528, 0
        %v4533 = vsel %vm2550, %v4530, 0
        %v4536 = vsel %vm621, %v4525, 0
        %v4539 = vsel %vm621, %v4526, 0
        %4541 = vmatprep.subr.mxu0 %v4524
        %4542 = vmatpush1.msra.mxu0 %v4523
        %4543 = vmatprep.subr.mxu0 %v4539
        %4544 = vmatpush1.msra.mxu0 %v4536
        %4545 = vmatprep.subr.mxu0 0.0
        %4546 = vmatpush1.msra.mxu0 0.0
        %4547 = vmatprep.subr.mxu0 0.0
        %4548 = vmatpush1.msra.mxu0 0.0
        %4549 = vmatprep.subr.mxu0 0.0
        %4550 = vmatpush1.msra.mxu0 0.0
        %4551 = vmatprep.subr.mxu0 0.0
        %4552 = vmatpush1.msra.mxu0 0.0
        %4553 = vmatprep.subr.mxu0 0.0
        %4554 = vmatpush1.msra.mxu0 0.0
        %4555 = vmatprep.subr.mxu0 0.0
        %4556 = vmatpush1.msra.mxu0 0.0
        %4557 = vmatprep.subr.mxu0 0.0
        %4558 = vmatpush1.msra.mxu0 0.0
        %4559 = vmatprep.subr.mxu0 0.0
        %4560 = vmatpush1.msra.mxu0 0.0
        %4561 = vmatprep.subr.mxu0 0.0
        %4562 = vmatpush1.msra.mxu0 0.0
        %4563 = vmatprep.subr.mxu0 0.0
        %4564 = vmatpush1.msra.mxu0 0.0
        %4565 = vmatprep.subr.mxu0 0.0
        %4566 = vmatpush1.msra.mxu0 0.0
        %4567 = vmatprep.subr.mxu0 0.0
        %4568 = vmatpush1.msra.mxu0 0.0
        %4569 = vmatprep.subr.mxu0 0.0
        %4570 = vmatpush1.msra.mxu0 0.0
        %4571 = vmatprep.subr.mxu0 0.0
        %4572 = vmatpush1.msra.mxu0 0.0
        %4573 = vmatprep.subr.mxu0 0.0
        %4574 = vmatpush1.msra.mxu0 0.0
        %4575 = vmatprep.subr.mxu0 0.0
        %4576 = vmatpush1.msra.mxu0 0.0
        %4577 = vmatprep.subr.mxu0 0.0
        %4578 = vmatpush1.msra.mxu0 0.0
        %4579 = vmatprep.subr.mxu0 0.0
        %4580 = vmatpush1.msra.mxu0 0.0
        %4581 = vmatprep.subr.mxu0 0.0
        %4582 = vmatpush1.msra.mxu0 0.0
        %4583 = vmatprep.subr.mxu0 0.0
        %4584 = vmatpush1.msra.mxu0 0.0
        %4585 = vmatprep.subr.mxu0 0.0
        %4586 = vmatpush1.msra.mxu0 0.0
        %4587 = vmatprep.subr.mxu0 0.0
        %4588 = vmatpush1.msra.mxu0 0.0
        %4589 = vmatprep.subr.mxu0 0.0
        %4590 = vmatpush1.msra.mxu0 0.0
        %4591 = vmatprep.subr.mxu0 0.0
        %4592 = vmatpush1.msra.mxu0 0.0
        %4593 = vmatprep.subr.mxu0 0.0
        %4594 = vmatpush1.msra.mxu0 0.0
        %4595 = vmatprep.subr.mxu0 0.0
        %4596 = vmatpush1.msra.mxu0 0.0
        %4597 = vmatprep.subr.mxu0 0.0
        %4598 = vmatpush1.msra.mxu0 0.0
        %4599 = vmatprep.subr.mxu0 0.0
        %4600 = vmatpush1.msra.mxu0 0.0
        %4601 = vmatprep.subr.mxu0 0.0
        %4602 = vmatpush1.msra.mxu0 0.0
        %4603 = vmatprep.subr.mxu0 0.0
        %4604 = vmatpush1.msra.mxu0 0.0
        %4605 = vmatprep.mubr.f32.mxu0 0.0
        %4606 = vmatmul.mubr.f32.gmra.mrb[0].mxu0 %v4531
        %v4607 = vpop.f32.mrb[0].mxu0
        %v4608 = vadd.f32 0.0, %v4607
        %v4609 = vpop.f32.mrb[0].mxu0
        %v4610 = vadd.f32 0.0, %v4609
        %4611 = vmatprep.mubr.f32.mxu0 0.0
        %4612 = vmatmul.mubr.f32.gmra.mrb[0].mxu0 %v4533
        %v4613 = vpop.f32.mrb[0].mxu0
        %v4614 = vadd.f32 0.0, %v4613
        %v4615 = vpop.f32.mrb[0].mxu0
        %v4616 = vadd.f32 0.0, %v4615
        %4617 = vdwg.mxu0
        %v4618 = vadd.f32 %v4518, %v4608
        %v4619 = vadd.f32 %v4519, %v4610
        %v4620 = vadd.f32 %v4520, %v4614
        %v4621 = vadd.f32 %v4521, %v4616
        %s4622 = scalar_lea.vmem %s3, 672
        %v4623 = vld [vmem:[%s4622] sm:$0xff]
        %v4624 = vld [vmem:[%s4622 + $0x8] sm:$0xff]
        %v4625 = vld [vmem:[%s4622 + $0x10] sm:$0x3f]
        %v4626 = vld [vmem:[%s4622 + $0x18] sm:$0x3f]
        %4627 = vrot.lane.b32.xlu0 %v2549, 72
        %v4628 = vpop.permute.xlu0 %4627
        %4629 = vrot.lane.b32.xlu0 %v2548, 72
        %v4630 = vpop.permute.xlu0 %4629
        %v4631 = vsel %vm2550, %v4628, 0
        %v4633 = vsel %vm2550, %v4630, 0
        %v4636 = vsel %vm621, %v4625, 0
        %v4639 = vsel %vm621, %v4626, 0
        %4641 = vmatprep.subr.mxu0 %v4624
        %4642 = vmatpush1.msra.mxu0 %v4623
        %4643 = vmatprep.subr.mxu0 %v4639
        %4644 = vmatpush1.msra.mxu0 %v4636
        %4645 = vmatprep.subr.mxu0 0.0
        %4646 = vmatpush1.msra.mxu0 0.0
        %4647 = vmatprep.subr.mxu0 0.0
        %4648 = vmatpush1.msra.mxu0 0.0
        %4649 = vmatprep.subr.mxu0 0.0
        %4650 = vmatpush1.msra.mxu0 0.0
        %4651 = vmatprep.subr.mxu0 0.0
        %4652 = vmatpush1.msra.mxu0 0.0
        %4653 = vmatprep.subr.mxu0 0.0
        %4654 = vmatpush1.msra.mxu0 0.0
        %4655 = vmatprep.subr.mxu0 0.0
        %4656 = vmatpush1.msra.mxu0 0.0
        %4657 = vmatprep.subr.mxu0 0.0
        %4658 = vmatpush1.msra.mxu0 0.0
        %4659 = vmatprep.subr.mxu0 0.0
        %4660 = vmatpush1.msra.mxu0 0.0
        %4661 = vmatprep.subr.mxu0 0.0
        %4662 = vmatpush1.msra.mxu0 0.0
        %4663 = vmatprep.subr.mxu0 0.0
        %4664 = vmatpush1.msra.mxu0 0.0
        %4665 = vmatprep.subr.mxu0 0.0
        %4666 = vmatpush1.msra.mxu0 0.0
        %4667 = vmatprep.subr.mxu0 0.0
        %4668 = vmatpush1.msra.mxu0 0.0
        %4669 = vmatprep.subr.mxu0 0.0
        %4670 = vmatpush1.msra.mxu0 0.0
        %4671 = vmatprep.subr.mxu0 0.0
        %4672 = vmatpush1.msra.mxu0 0.0
        %4673 = vmatprep.subr.mxu0 0.0
        %4674 = vmatpush1.msra.mxu0 0.0
        %4675 = vmatprep.subr.mxu0 0.0
        %4676 = vmatpush1.msra.mxu0 0.0
        %4677 = vmatprep.subr.mxu0 0.0
        %4678 = vmatpush1.msra.mxu0 0.0
        %4679 = vmatprep.subr.mxu0 0.0
        %4680 = vmatpush1.msra.mxu0 0.0
        %4681 = vmatprep.subr.mxu0 0.0
        %4682 = vmatpush1.msra.mxu0 0.0
        %4683 = vmatprep.subr.mxu0 0.0
        %4684 = vmatpush1.msra.mxu0 0.0
        %4685 = vmatprep.subr.mxu0 0.0
        %4686 = vmatpush1.msra.mxu0 0.0
        %4687 = vmatprep.subr.mxu0 0.0
        %4688 = vmatpush1.msra.mxu0 0.0
        %4689 = vmatprep.subr.mxu0 0.0
        %4690 = vmatpush1.msra.mxu0 0.0
        %4691 = vmatprep.subr.mxu0 0.0
        %4692 = vmatpush1.msra.mxu0 0.0
        %4693 = vmatprep.subr.mxu0 0.0
        %4694 = vmatpush1.msra.mxu0 0.0
        %4695 = vmatprep.subr.mxu0 0.0
        %4696 = vmatpush1.msra.mxu0 0.0
        %4697 = vmatprep.subr.mxu0 0.0
        %4698 = vmatpush1.msra.mxu0 0.0
        %4699 = vmatprep.subr.mxu0 0.0
        %4700 = vmatpush1.msra.mxu0 0.0
        %4701 = vmatprep.subr.mxu0 0.0
        %4702 = vmatpush1.msra.mxu0 0.0
        %4703 = vmatprep.subr.mxu0 0.0
        %4704 = vmatpush1.msra.mxu0 0.0
        %4705 = vmatprep.mubr.f32.mxu0 0.0
        %4706 = vmatmul.mubr.f32.gmra.mrb[0].mxu0 %v4631
        %v4707 = vpop.f32.mrb[0].mxu0
        %v4708 = vadd.f32 0.0, %v4707
        %v4709 = vpop.f32.mrb[0].mxu0
        %v4710 = vadd.f32 0.0, %v4709
        %4711 = vmatprep.mubr.f32.mxu0 0.0
        %4712 = vmatmul.mubr.f32.gmra.mrb[0].mxu0 %v4633
        %v4713 = vpop.f32.mrb[0].mxu0
        %v4714 = vadd.f32 0.0, %v4713
        %v4715 = vpop.f32.mrb[0].mxu0
        %v4716 = vadd.f32 0.0, %v4715
        %4717 = vdwg.mxu0
        %v4718 = vadd.f32 %v4618, %v4708
        %v4719 = vadd.f32 %v4619, %v4710
        %v4720 = vadd.f32 %v4620, %v4714
        %v4721 = vadd.f32 %v4621, %v4716
        %s4722 = scalar_lea.vmem %s3, 704
        %v4723 = vld [vmem:[%s4722] sm:$0xff]
        %v4724 = vld [vmem:[%s4722 + $0x8] sm:$0xff]
        %v4725 = vld [vmem:[%s4722 + $0x10] sm:$0x3f]
        %v4726 = vld [vmem:[%s4722 + $0x18] sm:$0x3f]
        %4727 = vrot.lane.b32.xlu0 %v2732, 72
        %v4728 = vpop.permute.xlu0 %4727
        %4729 = vrot.lane.b32.xlu0 %v2731, 72
        %v4730 = vpop.permute.xlu0 %4729
        %v4731 = vsel %vm2550, %v4728, 0
        %v4733 = vsel %vm2550, %v4730, 0
        %v4736 = vsel %vm621, %v4725, 0
        %v4739 = vsel %vm621, %v4726, 0
        %4741 = vmatprep.subr.mxu0 %v4724
        %4742 = vmatpush1.msra.mxu0 %v4723
        %4743 = vmatprep.subr.mxu0 %v4739
        %4744 = vmatpush1.msra.mxu0 %v4736
        %4745 = vmatprep.subr.mxu0 0.0
        %4746 = vmatpush1.msra.mxu0 0.0
        %4747 = vmatprep.subr.mxu0 0.0
        %4748 = vmatpush1.msra.mxu0 0.0
        %4749 = vmatprep.subr.mxu0 0.0
        %4750 = vmatpush1.msra.mxu0 0.0
        %4751 = vmatprep.subr.mxu0 0.0
        %4752 = vmatpush1.msra.mxu0 0.0
        %4753 = vmatprep.subr.mxu0 0.0
        %4754 = vmatpush1.msra.mxu0 0.0
        %4755 = vmatprep.subr.mxu0 0.0
        %4756 = vmatpush1.msra.mxu0 0.0
        %4757 = vmatprep.subr.mxu0 0.0
        %4758 = vmatpush1.msra.mxu0 0.0
        %4759 = vmatprep.subr.mxu0 0.0
        %4760 = vmatpush1.msra.mxu0 0.0
        %4761 = vmatprep.subr.mxu0 0.0
        %4762 = vmatpush1.msra.mxu0 0.0
        %4763 = vmatprep.subr.mxu0 0.0
        %4764 = vmatpush1.msra.mxu0 0.0
        %4765 = vmatprep.subr.mxu0 0.0
        %4766 = vmatpush1.msra.mxu0 0.0
        %4767 = vmatprep.subr.mxu0 0.0
        %4768 = vmatpush1.msra.mxu0 0.0
        %4769 = vmatprep.subr.mxu0 0.0
        %4770 = vmatpush1.msra.mxu0 0.0
        %4771 = vmatprep.subr.mxu0 0.0
        %4772 = vmatpush1.msra.mxu0 0.0
        %4773 = vmatprep.subr.mxu0 0.0
        %4774 = vmatpush1.msra.mxu0 0.0
        %4775 = vmatprep.subr.mxu0 0.0
        %4776 = vmatpush1.msra.mxu0 0.0
        %4777 = vmatprep.subr.mxu0 0.0
        %4778 = vmatpush1.msra.mxu0 0.0
        %4779 = vmatprep.subr.mxu0 0.0
        %4780 = vmatpush1.msra.mxu0 0.0
        %4781 = vmatprep.subr.mxu0 0.0
        %4782 = vmatpush1.msra.mxu0 0.0
        %4783 = vmatprep.subr.mxu0 0.0
        %4784 = vmatpush1.msra.mxu0 0.0
        %4785 = vmatprep.subr.mxu0 0.0
        %4786 = vmatpush1.msra.mxu0 0.0
        %4787 = vmatprep.subr.mxu0 0.0
        %4788 = vmatpush1.msra.mxu0 0.0
        %4789 = vmatprep.subr.mxu0 0.0
        %4790 = vmatpush1.msra.mxu0 0.0
        %4791 = vmatprep.subr.mxu0 0.0
        %4792 = vmatpush1.msra.mxu0 0.0
        %4793 = vmatprep.subr.mxu0 0.0
        %4794 = vmatpush1.msra.mxu0 0.0
        %4795 = vmatprep.subr.mxu0 0.0
        %4796 = vmatpush1.msra.mxu0 0.0
        %4797 = vmatprep.subr.mxu0 0.0
        %4798 = vmatpush1.msra.mxu0 0.0
        %4799 = vmatprep.subr.mxu0 0.0
        %4800 = vmatpush1.msra.mxu0 0.0
        %4801 = vmatprep.subr.mxu0 0.0
        %4802 = vmatpush1.msra.mxu0 0.0
        %4803 = vmatprep.subr.mxu0 0.0
        %4804 = vmatpush1.msra.mxu0 0.0
        %4805 = vmatprep.mubr.f32.mxu0 0.0
        %4806 = vmatmul.mubr.f32.gmra.mrb[0].mxu0 %v4731
        %v4807 = vpop.f32.mrb[0].mxu0
        %v4808 = vadd.f32 0.0, %v4807
        %v4809 = vpop.f32.mrb[0].mxu0
        %v4810 = vadd.f32 0.0, %v4809
        %4811 = vmatprep.mubr.f32.mxu0 0.0
        %4812 = vmatmul.mubr.f32.gmra.mrb[0].mxu0 %v4733
        %v4813 = vpop.f32.mrb[0].mxu0
        %v4814 = vadd.f32 0.0, %v4813
        %v4815 = vpop.f32.mrb[0].mxu0
        %v4816 = vadd.f32 0.0, %v4815
        %4817 = vdwg.mxu0
        %v4818 = vadd.f32 %v4718, %v4808
        %v4819 = vadd.f32 %v4719, %v4810
        %v4820 = vadd.f32 %v4720, %v4814
        %v4821 = vadd.f32 %v4721, %v4816
        %s4822 = scalar_lea.vmem %s3, 736
        %v4823 = vld [vmem:[%s4822] sm:$0xff]
        %v4824 = vld [vmem:[%s4822 + $0x8] sm:$0xff]
        %v4825 = vld [vmem:[%s4822 + $0x10] sm:$0x3f]
        %v4826 = vld [vmem:[%s4822 + $0x18] sm:$0x3f]
        %4827 = vrot.lane.b32.xlu0 %v2831, 72
        %v4828 = vpop.permute.xlu0 %4827
        %4829 = vrot.lane.b32.xlu0 %v2830, 72
        %v4830 = vpop.permute.xlu0 %4829
        %v4831 = vsel %vm2550, %v4828, 0
        %v4833 = vsel %vm2550, %v4830, 0
        %v4836 = vsel %vm621, %v4825, 0
        %v4839 = vsel %vm621, %v4826, 0
        %4841 = vmatprep.subr.mxu0 %v4824
        %4842 = vmatpush1.msra.mxu0 %v4823
        %4843 = vmatprep.subr.mxu0 %v4839
        %4844 = vmatpush1.msra.mxu0 %v4836
        %4845 = vmatprep.subr.mxu0 0.0
        %4846 = vmatpush1.msra.mxu0 0.0
        %4847 = vmatprep.subr.mxu0 0.0
        %4848 = vmatpush1.msra.mxu0 0.0
        %4849 = vmatprep.subr.mxu0 0.0
        %4850 = vmatpush1.msra.mxu0 0.0
        %4851 = vmatprep.subr.mxu0 0.0
        %4852 = vmatpush1.msra.mxu0 0.0
        %4853 = vmatprep.subr.mxu0 0.0
        %4854 = vmatpush1.msra.mxu0 0.0
        %4855 = vmatprep.subr.mxu0 0.0
        %4856 = vmatpush1.msra.mxu0 0.0
        %4857 = vmatprep.subr.mxu0 0.0
        %4858 = vmatpush1.msra.mxu0 0.0
        %4859 = vmatprep.subr.mxu0 0.0
        %4860 = vmatpush1.msra.mxu0 0.0
        %4861 = vmatprep.subr.mxu0 0.0
        %4862 = vmatpush1.msra.mxu0 0.0
        %4863 = vmatprep.subr.mxu0 0.0
        %4864 = vmatpush1.msra.mxu0 0.0
        %4865 = vmatprep.subr.mxu0 0.0
        %4866 = vmatpush1.msra.mxu0 0.0
        %4867 = vmatprep.subr.mxu0 0.0
        %4868 = vmatpush1.msra.mxu0 0.0
        %4869 = vmatprep.subr.mxu0 0.0
        %4870 = vmatpush1.msra.mxu0 0.0
        %4871 = vmatprep.subr.mxu0 0.0
        %4872 = vmatpush1.msra.mxu0 0.0
        %4873 = vmatprep.subr.mxu0 0.0
        %4874 = vmatpush1.msra.mxu0 0.0
        %4875 = vmatprep.subr.mxu0 0.0
        %4876 = vmatpush1.msra.mxu0 0.0
        %4877 = vmatprep.subr.mxu0 0.0
        %4878 = vmatpush1.msra.mxu0 0.0
        %4879 = vmatprep.subr.mxu0 0.0
        %4880 = vmatpush1.msra.mxu0 0.0
        %4881 = vmatprep.subr.mxu0 0.0
        %4882 = vmatpush1.msra.mxu0 0.0
        %4883 = vmatprep.subr.mxu0 0.0
        %4884 = vmatpush1.msra.mxu0 0.0
        %4885 = vmatprep.subr.mxu0 0.0
        %4886 = vmatpush1.msra.mxu0 0.0
        %4887 = vmatprep.subr.mxu0 0.0
        %4888 = vmatpush1.msra.mxu0 0.0
        %4889 = vmatprep.subr.mxu0 0.0
        %4890 = vmatpush1.msra.mxu0 0.0
        %4891 = vmatprep.subr.mxu0 0.0
        %4892 = vmatpush1.msra.mxu0 0.0
        %4893 = vmatprep.subr.mxu0 0.0
        %4894 = vmatpush1.msra.mxu0 0.0
        %4895 = vmatprep.subr.mxu0 0.0
        %4896 = vmatpush1.msra.mxu0 0.0
        %4897 = vmatprep.subr.mxu0 0.0
        %4898 = vmatpush1.msra.mxu0 0.0
        %4899 = vmatprep.subr.mxu0 0.0
        %4900 = vmatpush1.msra.mxu0 0.0
        %4901 = vmatprep.subr.mxu0 0.0
        %4902 = vmatpush1.msra.mxu0 0.0
        %4903 = vmatprep.subr.mxu0 0.0
        %4904 = vmatpush1.msra.mxu0 0.0
        %4905 = vmatprep.mubr.f32.mxu0 0.0
        %4906 = vmatmul.mubr.f32.gmra.mrb[0].mxu0 %v4831
        %v4907 = vpop.f32.mrb[0].mxu0
        %v4908 = vadd.f32 0.0, %v4907
        %v4909 = vpop.f32.mrb[0].mxu0
        %v4910 = vadd.f32 0.0, %v4909
        %4911 = vmatprep.mubr.f32.mxu0 0.0
        %4912 = vmatmul.mubr.f32.gmra.mrb[0].mxu0 %v4833
        %v4913 = vpop.f32.mrb[0].mxu0
        %v4914 = vadd.f32 0.0, %v4913
        %v4915 = vpop.f32.mrb[0].mxu0
        %v4916 = vadd.f32 0.0, %v4915
        %4917 = vdwg.mxu0
        %v4918 = vadd.f32 %v4818, %v4908
        %v4919 = vadd.f32 %v4819, %v4910
        %v4920 = vadd.f32 %v4820, %v4914
        %v4921 = vadd.f32 %v4821, %v4916
        %s4922 = scalar_lea.vmem %s3, 768
        %v4923 = vld [vmem:[%s4922] sm:$0xff]
        %v4924 = vld [vmem:[%s4922 + $0x8] sm:$0xff]
        %v4925 = vld [vmem:[%s4922 + $0x10] sm:$0x3f]
        %v4926 = vld [vmem:[%s4922 + $0x18] sm:$0x3f]
        %4927 = vrot.lane.b32.xlu0 %v2930, 72
        %v4928 = vpop.permute.xlu0 %4927
        %4929 = vrot.lane.b32.xlu0 %v2929, 72
        %v4930 = vpop.permute.xlu0 %4929
        %v4931 = vsel %vm2550, %v4928, 0
        %v4933 = vsel %vm2550, %v4930, 0
        %v4936 = vsel %vm621, %v4925, 0
        %v4939 = vsel %vm621, %v4926, 0
        %4941 = vmatprep.subr.mxu0 %v4924
        %4942 = vmatpush1.msra.mxu0 %v4923
        %4943 = vmatprep.subr.mxu0 %v4939
        %4944 = vmatpush1.msra.mxu0 %v4936
        %4945 = vmatprep.subr.mxu0 0.0
        %4946 = vmatpush1.msra.mxu0 0.0
        %4947 = vmatprep.subr.mxu0 0.0
        %4948 = vmatpush1.msra.mxu0 0.0
        %4949 = vmatprep.subr.mxu0 0.0
        %4950 = vmatpush1.msra.mxu0 0.0
        %4951 = vmatprep.subr.mxu0 0.0
        %4952 = vmatpush1.msra.mxu0 0.0
        %4953 = vmatprep.subr.mxu0 0.0
        %4954 = vmatpush1.msra.mxu0 0.0
        %4955 = vmatprep.subr.mxu0 0.0
        %4956 = vmatpush1.msra.mxu0 0.0
        %4957 = vmatprep.subr.mxu0 0.0
        %4958 = vmatpush1.msra.mxu0 0.0
        %4959 = vmatprep.subr.mxu0 0.0
        %4960 = vmatpush1.msra.mxu0 0.0
        %4961 = vmatprep.subr.mxu0 0.0
        %4962 = vmatpush1.msra.mxu0 0.0
        %4963 = vmatprep.subr.mxu0 0.0
        %4964 = vmatpush1.msra.mxu0 0.0
        %4965 = vmatprep.subr.mxu0 0.0
        %4966 = vmatpush1.msra.mxu0 0.0
        %4967 = vmatprep.subr.mxu0 0.0
        %4968 = vmatpush1.msra.mxu0 0.0
        %4969 = vmatprep.subr.mxu0 0.0
        %4970 = vmatpush1.msra.mxu0 0.0
        %4971 = vmatprep.subr.mxu0 0.0
        %4972 = vmatpush1.msra.mxu0 0.0
        %4973 = vmatprep.subr.mxu0 0.0
        %4974 = vmatpush1.msra.mxu0 0.0
        %4975 = vmatprep.subr.mxu0 0.0
        %4976 = vmatpush1.msra.mxu0 0.0
        %4977 = vmatprep.subr.mxu0 0.0
        %4978 = vmatpush1.msra.mxu0 0.0
        %4979 = vmatprep.subr.mxu0 0.0
        %4980 = vmatpush1.msra.mxu0 0.0
        %4981 = vmatprep.subr.mxu0 0.0
        %4982 = vmatpush1.msra.mxu0 0.0
        %4983 = vmatprep.subr.mxu0 0.0
        %4984 = vmatpush1.msra.mxu0 0.0
        %4985 = vmatprep.subr.mxu0 0.0
        %4986 = vmatpush1.msra.mxu0 0.0
        %4987 = vmatprep.subr.mxu0 0.0
        %4988 = vmatpush1.msra.mxu0 0.0
        %4989 = vmatprep.subr.mxu0 0.0
        %4990 = vmatpush1.msra.mxu0 0.0
        %4991 = vmatprep.subr.mxu0 0.0
        %4992 = vmatpush1.msra.mxu0 0.0
        %4993 = vmatprep.subr.mxu0 0.0
        %4994 = vmatpush1.msra.mxu0 0.0
        %4995 = vmatprep.subr.mxu0 0.0
        %4996 = vmatpush1.msra.mxu0 0.0
        %4997 = vmatprep.subr.mxu0 0.0
        %4998 = vmatpush1.msra.mxu0 0.0
        %4999 = vmatprep.subr.mxu0 0.0
        %5000 = vmatpush1.msra.mxu0 0.0
        %5001 = vmatprep.subr.mxu0 0.0
        %5002 = vmatpush1.msra.mxu0 0.0
        %5003 = vmatprep.subr.mxu0 0.0
        %5004 = vmatpush1.msra.mxu0 0.0
        %5005 = vmatprep.mubr.f32.mxu0 0.0
        %5006 = vmatmul.mubr.f32.gmra.mrb[0].mxu0 %v4931
        %v5007 = vpop.f32.mrb[0].mxu0
        %v5008 = vadd.f32 0.0, %v5007
        %v5009 = vpop.f32.mrb[0].mxu0
        %v5010 = vadd.f32 0.0, %v5009
        %5011 = vmatprep.mubr.f32.mxu0 0.0
        %5012 = vmatmul.mubr.f32.gmra.mrb[0].mxu0 %v4933
        %v5013 = vpop.f32.mrb[0].mxu0
        %v5014 = vadd.f32 0.0, %v5013
        %v5015 = vpop.f32.mrb[0].mxu0
        %v5016 = vadd.f32 0.0, %v5015
        %5017 = vdwg.mxu0
        %v5018 = vadd.f32 %v4918, %v5008
        %v5019 = vadd.f32 %v4919, %v5010
        %v5020 = vadd.f32 %v4920, %v5014
        %v5021 = vadd.f32 %v4921, %v5016
        %s5022 = scalar_lea.vmem %s3, 800
        %v5023 = vld [vmem:[%s5022] sm:$0xff]
        %v5024 = vld [vmem:[%s5022 + $0x8] sm:$0xff]
        %v5025 = vld [vmem:[%s5022 + $0x10] sm:$0x3f]
        %v5026 = vld [vmem:[%s5022 + $0x18] sm:$0x3f]
        %5027 = vrot.lane.b32.xlu0 %v2528, 58
        %v5028 = vpop.permute.xlu0 %5027
        %5029 = vrot.lane.b32.xlu0 %v2533, 58
        %v5030 = vpop.permute.xlu0 %5029
        %v5031 = vsel %vm2550, %v5028, 0
        %v5033 = vsel %vm2550, %v5030, 0
        %v5036 = vsel %vm621, %v5025, 0
        %v5039 = vsel %vm621, %v5026, 0
        %5041 = vmatprep.subr.mxu0 %v5024
        %5042 = vmatpush1.msra.mxu0 %v5023
        %5043 = vmatprep.subr.mxu0 %v5039
        %5044 = vmatpush1.msra.mxu0 %v5036
        %5045 = vmatprep.subr.mxu0 0.0
        %5046 = vmatpush1.msra.mxu0 0.0
        %5047 = vmatprep.subr.mxu0 0.0
        %5048 = vmatpush1.msra.mxu0 0.0
        %5049 = vmatprep.subr.mxu0 0.0
        %5050 = vmatpush1.msra.mxu0 0.0
        %5051 = vmatprep.subr.mxu0 0.0
        %5052 = vmatpush1.msra.mxu0 0.0
        %5053 = vmatprep.subr.mxu0 0.0
        %5054 = vmatpush1.msra.mxu0 0.0
        %5055 = vmatprep.subr.mxu0 0.0
        %5056 = vmatpush1.msra.mxu0 0.0
        %5057 = vmatprep.subr.mxu0 0.0
        %5058 = vmatpush1.msra.mxu0 0.0
        %5059 = vmatprep.subr.mxu0 0.0
        %5060 = vmatpush1.msra.mxu0 0.0
        %5061 = vmatprep.subr.mxu0 0.0
        %5062 = vmatpush1.msra.mxu0 0.0
        %5063 = vmatprep.subr.mxu0 0.0
        %5064 = vmatpush1.msra.mxu0 0.0
        %5065 = vmatprep.subr.mxu0 0.0
        %5066 = vmatpush1.msra.mxu0 0.0
        %5067 = vmatprep.subr.mxu0 0.0
        %5068 = vmatpush1.msra.mxu0 0.0
        %5069 = vmatprep.subr.mxu0 0.0
        %5070 = vmatpush1.msra.mxu0 0.0
        %5071 = vmatprep.subr.mxu0 0.0
        %5072 = vmatpush1.msra.mxu0 0.0
        %5073 = vmatprep.subr.mxu0 0.0
        %5074 = vmatpush1.msra.mxu0 0.0
        %5075 = vmatprep.subr.mxu0 0.0
        %5076 = vmatpush1.msra.mxu0 0.0
        %5077 = vmatprep.subr.mxu0 0.0
        %5078 = vmatpush1.msra.mxu0 0.0
        %5079 = vmatprep.subr.mxu0 0.0
        %5080 = vmatpush1.msra.mxu0 0.0
        %5081 = vmatprep.subr.mxu0 0.0
        %5082 = vmatpush1.msra.mxu0 0.0
        %5083 = vmatprep.subr.mxu0 0.0
        %5084 = vmatpush1.msra.mxu0 0.0
        %5085 = vmatprep.subr.mxu0 0.0
        %5086 = vmatpush1.msra.mxu0 0.0
        %5087 = vmatprep.subr.mxu0 0.0
        %5088 = vmatpush1.msra.mxu0 0.0
        %5089 = vmatprep.subr.mxu0 0.0
        %5090 = vmatpush1.msra.mxu0 0.0
        %5091 = vmatprep.subr.mxu0 0.0
        %5092 = vmatpush1.msra.mxu0 0.0
        %5093 = vmatprep.subr.mxu0 0.0
        %5094 = vmatpush1.msra.mxu0 0.0
        %5095 = vmatprep.subr.mxu0 0.0
        %5096 = vmatpush1.msra.mxu0 0.0
        %5097 = vmatprep.subr.mxu0 0.0
        %5098 = vmatpush1.msra.mxu0 0.0
        %5099 = vmatprep.subr.mxu0 0.0
        %5100 = vmatpush1.msra.mxu0 0.0
        %5101 = vmatprep.subr.mxu0 0.0
        %5102 = vmatpush1.msra.mxu0 0.0
        %5103 = vmatprep.subr.mxu0 0.0
        %5104 = vmatpush1.msra.mxu0 0.0
        %5105 = vmatprep.mubr.f32.mxu0 0.0
        %5106 = vmatmul.mubr.f32.gmra.mrb[0].mxu0 %v5031
        %v5107 = vpop.f32.mrb[0].mxu0
        %v5108 = vadd.f32 0.0, %v5107
        %v5109 = vpop.f32.mrb[0].mxu0
        %v5110 = vadd.f32 0.0, %v5109
        %5111 = vmatprep.mubr.f32.mxu0 0.0
        %5112 = vmatmul.mubr.f32.gmra.mrb[0].mxu0 %v5033
        %v5113 = vpop.f32.mrb[0].mxu0
        %v5114 = vadd.f32 0.0, %v5113
        %v5115 = vpop.f32.mrb[0].mxu0
        %v5116 = vadd.f32 0.0, %v5115
        %5117 = vdwg.mxu0
        %v5118 = vadd.f32 %v5018, %v5108
        %v5119 = vadd.f32 %v5019, %v5110
        %v5120 = vadd.f32 %v5020, %v5114
        %v5121 = vadd.f32 %v5021, %v5116
        %s5122 = scalar_lea.vmem %s3, 832
        %v5123 = vld [vmem:[%s5122] sm:$0xff]
        %v5124 = vld [vmem:[%s5122 + $0x8] sm:$0xff]
        %v5125 = vld [vmem:[%s5122 + $0x10] sm:$0x3f]
        %v5126 = vld [vmem:[%s5122 + $0x18] sm:$0x3f]
        %5127 = vrot.lane.b32.xlu0 %v2549, 58
        %v5128 = vpop.permute.xlu0 %5127
        %5129 = vrot.lane.b32.xlu0 %v2548, 58
        %v5130 = vpop.permute.xlu0 %5129
        %v5131 = vsel %vm2550, %v5128, 0
        %v5133 = vsel %vm2550, %v5130, 0
        %v5136 = vsel %vm621, %v5125, 0
        %v5139 = vsel %vm621, %v5126, 0
        %5141 = vmatprep.subr.mxu0 %v5124
        %5142 = vmatpush1.msra.mxu0 %v5123
        %5143 = vmatprep.subr.mxu0 %v5139
        %5144 = vmatpush1.msra.mxu0 %v5136
        %5145 = vmatprep.subr.mxu0 0.0
        %5146 = vmatpush1.msra.mxu0 0.0
        %5147 = vmatprep.subr.mxu0 0.0
        %5148 = vmatpush1.msra.mxu0 0.0
        %5149 = vmatprep.subr.mxu0 0.0
        %5150 = vmatpush1.msra.mxu0 0.0
        %5151 = vmatprep.subr.mxu0 0.0
        %5152 = vmatpush1.msra.mxu0 0.0
        %5153 = vmatprep.subr.mxu0 0.0
        %5154 = vmatpush1.msra.mxu0 0.0
        %5155 = vmatprep.subr.mxu0 0.0
        %5156 = vmatpush1.msra.mxu0 0.0
        %5157 = vmatprep.subr.mxu0 0.0
        %5158 = vmatpush1.msra.mxu0 0.0
        %5159 = vmatprep.subr.mxu0 0.0
        %5160 = vmatpush1.msra.mxu0 0.0
        %5161 = vmatprep.subr.mxu0 0.0
        %5162 = vmatpush1.msra.mxu0 0.0
        %5163 = vmatprep.subr.mxu0 0.0
        %5164 = vmatpush1.msra.mxu0 0.0
        %5165 = vmatprep.subr.mxu0 0.0
        %5166 = vmatpush1.msra.mxu0 0.0
        %5167 = vmatprep.subr.mxu0 0.0
        %5168 = vmatpush1.msra.mxu0 0.0
        %5169 = vmatprep.subr.mxu0 0.0
        %5170 = vmatpush1.msra.mxu0 0.0
        %5171 = vmatprep.subr.mxu0 0.0
        %5172 = vmatpush1.msra.mxu0 0.0
        %5173 = vmatprep.subr.mxu0 0.0
        %5174 = vmatpush1.msra.mxu0 0.0
        %5175 = vmatprep.subr.mxu0 0.0
        %5176 = vmatpush1.msra.mxu0 0.0
        %5177 = vmatprep.subr.mxu0 0.0
        %5178 = vmatpush1.msra.mxu0 0.0
        %5179 = vmatprep.subr.mxu0 0.0
        %5180 = vmatpush1.msra.mxu0 0.0
        %5181 = vmatprep.subr.mxu0 0.0
        %5182 = vmatpush1.msra.mxu0 0.0
        %5183 = vmatprep.subr.mxu0 0.0
        %5184 = vmatpush1.msra.mxu0 0.0
        %5185 = vmatprep.subr.mxu0 0.0
        %5186 = vmatpush1.msra.mxu0 0.0
        %5187 = vmatprep.subr.mxu0 0.0
        %5188 = vmatpush1.msra.mxu0 0.0
        %5189 = vmatprep.subr.mxu0 0.0
        %5190 = vmatpush1.msra.mxu0 0.0
        %5191 = vmatprep.subr.mxu0 0.0
        %5192 = vmatpush1.msra.mxu0 0.0
        %5193 = vmatprep.subr.mxu0 0.0
        %5194 = vmatpush1.msra.mxu0 0.0
        %5195 = vmatprep.subr.mxu0 0.0
        %5196 = vmatpush1.msra.mxu0 0.0
        %5197 = vmatprep.subr.mxu0 0.0
        %5198 = vmatpush1.msra.mxu0 0.0
        %5199 = vmatprep.subr.mxu0 0.0
        %5200 = vmatpush1.msra.mxu0 0.0
        %5201 = vmatprep.subr.mxu0 0.0
        %5202 = vmatpush1.msra.mxu0 0.0
        %5203 = vmatprep.subr.mxu0 0.0
        %5204 = vmatpush1.msra.mxu0 0.0
        %5205 = vmatprep.mubr.f32.mxu0 0.0
        %5206 = vmatmul.mubr.f32.gmra.mrb[0].mxu0 %v5131
        %v5207 = vpop.f32.mrb[0].mxu0
        %v5208 = vadd.f32 0.0, %v5207
        %v5209 = vpop.f32.mrb[0].mxu0
        %v5210 = vadd.f32 0.0, %v5209
        %5211 = vmatprep.mubr.f32.mxu0 0.0
        %5212 = vmatmul.mubr.f32.gmra.mrb[0].mxu0 %v5133
        %v5213 = vpop.f32.mrb[0].mxu0
        %v5214 = vadd.f32 0.0, %v5213
        %v5215 = vpop.f32.mrb[0].mxu0
        %v5216 = vadd.f32 0.0, %v5215
        %5217 = vdwg.mxu0
        %v5218 = vadd.f32 %v5118, %v5208
        %v5219 = vadd.f32 %v5119, %v5210
        %v5220 = vadd.f32 %v5120, %v5214
        %v5221 = vadd.f32 %v5121, %v5216
        %s5222 = scalar_lea.vmem %s3, 864
        %v5223 = vld [vmem:[%s5222] sm:$0xff]
        %v5224 = vld [vmem:[%s5222 + $0x8] sm:$0xff]
        %v5225 = vld [vmem:[%s5222 + $0x10] sm:$0x3f]
        %v5226 = vld [vmem:[%s5222 + $0x18] sm:$0x3f]
        %5227 = vrot.lane.b32.xlu0 %v2732, 58
        %v5228 = vpop.permute.xlu0 %5227
        %5229 = vrot.lane.b32.xlu0 %v2731, 58
        %v5230 = vpop.permute.xlu0 %5229
        %v5231 = vsel %vm2550, %v5228, 0
        %v5233 = vsel %vm2550, %v5230, 0
        %v5236 = vsel %vm621, %v5225, 0
        %v5239 = vsel %vm621, %v5226, 0
        %5241 = vmatprep.subr.mxu0 %v5224
        %5242 = vmatpush1.msra.mxu0 %v5223
        %5243 = vmatprep.subr.mxu0 %v5239
        %5244 = vmatpush1.msra.mxu0 %v5236
        %5245 = vmatprep.subr.mxu0 0.0
        %5246 = vmatpush1.msra.mxu0 0.0
        %5247 = vmatprep.subr.mxu0 0.0
        %5248 = vmatpush1.msra.mxu0 0.0
        %5249 = vmatprep.subr.mxu0 0.0
        %5250 = vmatpush1.msra.mxu0 0.0
        %5251 = vmatprep.subr.mxu0 0.0
        %5252 = vmatpush1.msra.mxu0 0.0
        %5253 = vmatprep.subr.mxu0 0.0
        %5254 = vmatpush1.msra.mxu0 0.0
        %5255 = vmatprep.subr.mxu0 0.0
        %5256 = vmatpush1.msra.mxu0 0.0
        %5257 = vmatprep.subr.mxu0 0.0
        %5258 = vmatpush1.msra.mxu0 0.0
        %5259 = vmatprep.subr.mxu0 0.0
        %5260 = vmatpush1.msra.mxu0 0.0
        %5261 = vmatprep.subr.mxu0 0.0
        %5262 = vmatpush1.msra.mxu0 0.0
        %5263 = vmatprep.subr.mxu0 0.0
        %5264 = vmatpush1.msra.mxu0 0.0
        %5265 = vmatprep.subr.mxu0 0.0
        %5266 = vmatpush1.msra.mxu0 0.0
        %5267 = vmatprep.subr.mxu0 0.0
        %5268 = vmatpush1.msra.mxu0 0.0
        %5269 = vmatprep.subr.mxu0 0.0
        %5270 = vmatpush1.msra.mxu0 0.0
        %5271 = vmatprep.subr.mxu0 0.0
        %5272 = vmatpush1.msra.mxu0 0.0
        %5273 = vmatprep.subr.mxu0 0.0
        %5274 = vmatpush1.msra.mxu0 0.0
        %5275 = vmatprep.subr.mxu0 0.0
        %5276 = vmatpush1.msra.mxu0 0.0
        %5277 = vmatprep.subr.mxu0 0.0
        %5278 = vmatpush1.msra.mxu0 0.0
        %5279 = vmatprep.subr.mxu0 0.0
        %5280 = vmatpush1.msra.mxu0 0.0
        %5281 = vmatprep.subr.mxu0 0.0
        %5282 = vmatpush1.msra.mxu0 0.0
        %5283 = vmatprep.subr.mxu0 0.0
        %5284 = vmatpush1.msra.mxu0 0.0
        %5285 = vmatprep.subr.mxu0 0.0
        %5286 = vmatpush1.msra.mxu0 0.0
        %5287 = vmatprep.subr.mxu0 0.0
        %5288 = vmatpush1.msra.mxu0 0.0
        %5289 = vmatprep.subr.mxu0 0.0
        %5290 = vmatpush1.msra.mxu0 0.0
        %5291 = vmatprep.subr.mxu0 0.0
        %5292 = vmatpush1.msra.mxu0 0.0
        %5293 = vmatprep.subr.mxu0 0.0
        %5294 = vmatpush1.msra.mxu0 0.0
        %5295 = vmatprep.subr.mxu0 0.0
        %5296 = vmatpush1.msra.mxu0 0.0
        %5297 = vmatprep.subr.mxu0 0.0
        %5298 = vmatpush1.msra.mxu0 0.0
        %5299 = vmatprep.subr.mxu0 0.0
        %5300 = vmatpush1.msra.mxu0 0.0
        %5301 = vmatprep.subr.mxu0 0.0
        %5302 = vmatpush1.msra.mxu0 0.0
        %5303 = vmatprep.subr.mxu0 0.0
        %5304 = vmatpush1.msra.mxu0 0.0
        %5305 = vmatprep.mubr.f32.mxu0 0.0
        %5306 = vmatmul.mubr.f32.gmra.mrb[0].mxu0 %v5231
        %v5307 = vpop.f32.mrb[0].mxu0
        %v5308 = vadd.f32 0.0, %v5307
        %v5309 = vpop.f32.mrb[0].mxu0
        %v5310 = vadd.f32 0.0, %v5309
        %5311 = vmatprep.mubr.f32.mxu0 0.0
        %5312 = vmatmul.mubr.f32.gmra.mrb[0].mxu0 %v5233
        %v5313 = vpop.f32.mrb[0].mxu0
        %v5314 = vadd.f32 0.0, %v5313
        %v5315 = vpop.f32.mrb[0].mxu0
        %v5316 = vadd.f32 0.0, %v5315
        %5317 = vdwg.mxu0
        %v5318 = vadd.f32 %v5218, %v5308
        %v5319 = vadd.f32 %v5219, %v5310
        %v5320 = vadd.f32 %v5220, %v5314
        %v5321 = vadd.f32 %v5221, %v5316
        %s5322 = scalar_lea.vmem %s3, 896
        %v5323 = vld [vmem:[%s5322] sm:$0xff]
        %v5324 = vld [vmem:[%s5322 + $0x8] sm:$0xff]
        %v5325 = vld [vmem:[%s5322 + $0x10] sm:$0x3f]
        %v5326 = vld [vmem:[%s5322 + $0x18] sm:$0x3f]
        %5327 = vrot.lane.b32.xlu0 %v2831, 58
        %v5328 = vpop.permute.xlu0 %5327
        %5329 = vrot.lane.b32.xlu0 %v2830, 58
        %v5330 = vpop.permute.xlu0 %5329
        %v5331 = vsel %vm2550, %v5328, 0
        %v5333 = vsel %vm2550, %v5330, 0
        %v5336 = vsel %vm621, %v5325, 0
        %v5339 = vsel %vm621, %v5326, 0
        %5341 = vmatprep.subr.mxu0 %v5324
        %5342 = vmatpush1.msra.mxu0 %v5323
        %5343 = vmatprep.subr.mxu0 %v5339
        %5344 = vmatpush1.msra.mxu0 %v5336
        %5345 = vmatprep.subr.mxu0 0.0
        %5346 = vmatpush1.msra.mxu0 0.0
        %5347 = vmatprep.subr.mxu0 0.0
        %5348 = vmatpush1.msra.mxu0 0.0
        %5349 = vmatprep.subr.mxu0 0.0
        %5350 = vmatpush1.msra.mxu0 0.0
        %5351 = vmatprep.subr.mxu0 0.0
        %5352 = vmatpush1.msra.mxu0 0.0
        %5353 = vmatprep.subr.mxu0 0.0
        %5354 = vmatpush1.msra.mxu0 0.0
        %5355 = vmatprep.subr.mxu0 0.0
        %5356 = vmatpush1.msra.mxu0 0.0
        %5357 = vmatprep.subr.mxu0 0.0
        %5358 = vmatpush1.msra.mxu0 0.0
        %5359 = vmatprep.subr.mxu0 0.0
        %5360 = vmatpush1.msra.mxu0 0.0
        %5361 = vmatprep.subr.mxu0 0.0
        %5362 = vmatpush1.msra.mxu0 0.0
        %5363 = vmatprep.subr.mxu0 0.0
        %5364 = vmatpush1.msra.mxu0 0.0
        %5365 = vmatprep.subr.mxu0 0.0
        %5366 = vmatpush1.msra.mxu0 0.0
        %5367 = vmatprep.subr.mxu0 0.0
        %5368 = vmatpush1.msra.mxu0 0.0
        %5369 = vmatprep.subr.mxu0 0.0
        %5370 = vmatpush1.msra.mxu0 0.0
        %5371 = vmatprep.subr.mxu0 0.0
        %5372 = vmatpush1.msra.mxu0 0.0
        %5373 = vmatprep.subr.mxu0 0.0
        %5374 = vmatpush1.msra.mxu0 0.0
        %5375 = vmatprep.subr.mxu0 0.0
        %5376 = vmatpush1.msra.mxu0 0.0
        %5377 = vmatprep.subr.mxu0 0.0
        %5378 = vmatpush1.msra.mxu0 0.0
        %5379 = vmatprep.subr.mxu0 0.0
        %5380 = vmatpush1.msra.mxu0 0.0
        %5381 = vmatprep.subr.mxu0 0.0
        %5382 = vmatpush1.msra.mxu0 0.0
        %5383 = vmatprep.subr.mxu0 0.0
        %5384 = vmatpush1.msra.mxu0 0.0
        %5385 = vmatprep.subr.mxu0 0.0
        %5386 = vmatpush1.msra.mxu0 0.0
        %5387 = vmatprep.subr.mxu0 0.0
        %5388 = vmatpush1.msra.mxu0 0.0
        %5389 = vmatprep.subr.mxu0 0.0
        %5390 = vmatpush1.msra.mxu0 0.0
        %5391 = vmatprep.subr.mxu0 0.0
        %5392 = vmatpush1.msra.mxu0 0.0
        %5393 = vmatprep.subr.mxu0 0.0
        %5394 = vmatpush1.msra.mxu0 0.0
        %5395 = vmatprep.subr.mxu0 0.0
        %5396 = vmatpush1.msra.mxu0 0.0
        %5397 = vmatprep.subr.mxu0 0.0
        %5398 = vmatpush1.msra.mxu0 0.0
        %5399 = vmatprep.subr.mxu0 0.0
        %5400 = vmatpush1.msra.mxu0 0.0
        %5401 = vmatprep.subr.mxu0 0.0
        %5402 = vmatpush1.msra.mxu0 0.0
        %5403 = vmatprep.subr.mxu0 0.0
        %5404 = vmatpush1.msra.mxu0 0.0
        %5405 = vmatprep.mubr.f32.mxu0 0.0
        %5406 = vmatmul.mubr.f32.gmra.mrb[0].mxu0 %v5331
        %v5407 = vpop.f32.mrb[0].mxu0
        %v5408 = vadd.f32 0.0, %v5407
        %v5409 = vpop.f32.mrb[0].mxu0
        %v5410 = vadd.f32 0.0, %v5409
        %5411 = vmatprep.mubr.f32.mxu0 0.0
        %5412 = vmatmul.mubr.f32.gmra.mrb[0].mxu0 %v5333
        %v5413 = vpop.f32.mrb[0].mxu0
        %v5414 = vadd.f32 0.0, %v5413
        %v5415 = vpop.f32.mrb[0].mxu0
        %v5416 = vadd.f32 0.0, %v5415
        %5417 = vdwg.mxu0
        %v5418 = vadd.f32 %v5318, %v5408
        %v5419 = vadd.f32 %v5319, %v5410
        %v5420 = vadd.f32 %v5320, %v5414
        %v5421 = vadd.f32 %v5321, %v5416
        %s5422 = scalar_lea.vmem %s3, 928
        %v5423 = vld [vmem:[%s5422] sm:$0xff]
        %v5424 = vld [vmem:[%s5422 + $0x8] sm:$0xff]
        %v5425 = vld [vmem:[%s5422 + $0x10] sm:$0x3f]
        %v5426 = vld [vmem:[%s5422 + $0x18] sm:$0x3f]
        %5427 = vrot.lane.b32.xlu0 %v2930, 58
        %v5428 = vpop.permute.xlu0 %5427
        %5429 = vrot.lane.b32.xlu0 %v2929, 58
        %v5430 = vpop.permute.xlu0 %5429
        %v5431 = vsel %vm2550, %v5428, 0
        %v5433 = vsel %vm2550, %v5430, 0
        %v5436 = vsel %vm621, %v5425, 0
        %v5439 = vsel %vm621, %v5426, 0
        %5441 = vmatprep.subr.mxu0 %v5424
        %5442 = vmatpush1.msra.mxu0 %v5423
        %5443 = vmatprep.subr.mxu0 %v5439
        %5444 = vmatpush1.msra.mxu0 %v5436
        %5445 = vmatprep.subr.mxu0 0.0
        %5446 = vmatpush1.msra.mxu0 0.0
        %5447 = vmatprep.subr.mxu0 0.0
        %5448 = vmatpush1.msra.mxu0 0.0
        %5449 = vmatprep.subr.mxu0 0.0
        %5450 = vmatpush1.msra.mxu0 0.0
        %5451 = vmatprep.subr.mxu0 0.0
        %5452 = vmatpush1.msra.mxu0 0.0
        %5453 = vmatprep.subr.mxu0 0.0
        %5454 = vmatpush1.msra.mxu0 0.0
        %5455 = vmatprep.subr.mxu0 0.0
        %5456 = vmatpush1.msra.mxu0 0.0
        %5457 = vmatprep.subr.mxu0 0.0
        %5458 = vmatpush1.msra.mxu0 0.0
        %5459 = vmatprep.subr.mxu0 0.0
        %5460 = vmatpush1.msra.mxu0 0.0
        %5461 = vmatprep.subr.mxu0 0.0
        %5462 = vmatpush1.msra.mxu0 0.0
        %5463 = vmatprep.subr.mxu0 0.0
        %5464 = vmatpush1.msra.mxu0 0.0
        %5465 = vmatprep.subr.mxu0 0.0
        %5466 = vmatpush1.msra.mxu0 0.0
        %5467 = vmatprep.subr.mxu0 0.0
        %5468 = vmatpush1.msra.mxu0 0.0
        %5469 = vmatprep.subr.mxu0 0.0
        %5470 = vmatpush1.msra.mxu0 0.0
        %5471 = vmatprep.subr.mxu0 0.0
        %5472 = vmatpush1.msra.mxu0 0.0
        %5473 = vmatprep.subr.mxu0 0.0
        %5474 = vmatpush1.msra.mxu0 0.0
        %5475 = vmatprep.subr.mxu0 0.0
        %5476 = vmatpush1.msra.mxu0 0.0
        %5477 = vmatprep.subr.mxu0 0.0
        %5478 = vmatpush1.msra.mxu0 0.0
        %5479 = vmatprep.subr.mxu0 0.0
        %5480 = vmatpush1.msra.mxu0 0.0
        %5481 = vmatprep.subr.mxu0 0.0
        %5482 = vmatpush1.msra.mxu0 0.0
        %5483 = vmatprep.subr.mxu0 0.0
        %5484 = vmatpush1.msra.mxu0 0.0
        %5485 = vmatprep.subr.mxu0 0.0
        %5486 = vmatpush1.msra.mxu0 0.0
        %5487 = vmatprep.subr.mxu0 0.0
        %5488 = vmatpush1.msra.mxu0 0.0
        %5489 = vmatprep.subr.mxu0 0.0
        %5490 = vmatpush1.msra.mxu0 0.0
        %5491 = vmatprep.subr.mxu0 0.0
        %5492 = vmatpush1.msra.mxu0 0.0
        %5493 = vmatprep.subr.mxu0 0.0
        %5494 = vmatpush1.msra.mxu0 0.0
        %5495 = vmatprep.subr.mxu0 0.0
        %5496 = vmatpush1.msra.mxu0 0.0
        %5497 = vmatprep.subr.mxu0 0.0
        %5498 = vmatpush1.msra.mxu0 0.0
        %5499 = vmatprep.subr.mxu0 0.0
        %5500 = vmatpush1.msra.mxu0 0.0
        %5501 = vmatprep.subr.mxu0 0.0
        %5502 = vmatpush1.msra.mxu0 0.0
        %5503 = vmatprep.subr.mxu0 0.0
        %5504 = vmatpush1.msra.mxu0 0.0
        %5505 = vmatprep.mubr.f32.mxu0 0.0
        %5506 = vmatmul.mubr.f32.gmra.mrb[0].mxu0 %v5431
        %v5507 = vpop.f32.mrb[0].mxu0
        %v5508 = vadd.f32 0.0, %v5507
        %v5509 = vpop.f32.mrb[0].mxu0
        %v5510 = vadd.f32 0.0, %v5509
        %5511 = vmatprep.mubr.f32.mxu0 0.0
        %5512 = vmatmul.mubr.f32.gmra.mrb[0].mxu0 %v5433
        %v5513 = vpop.f32.mrb[0].mxu0
        %v5514 = vadd.f32 0.0, %v5513
        %v5515 = vpop.f32.mrb[0].mxu0
        %v5516 = vadd.f32 0.0, %v5515
        %5517 = vdwg.mxu0
        %v5518 = vadd.f32 %v5418, %v5508
        %v5519 = vadd.f32 %v5419, %v5510
        %v5520 = vadd.f32 %v5420, %v5514
        %v5521 = vadd.f32 %v5421, %v5516
        %v5522 = vld [vmem:[%s4] sm:$0x3]
        %v5524 = vlaneseq
        %v5525 = vshrl.u32 %v5524, 7
        %v5526 = vsub.s32 0, %v5525
        %v5527 = vrot.slane %v5522, %v5526
        %v5528 = vlaneseq
        %v5529 = vshrl.u32 %v5528, 7
        %v5530 = vsub.s32 1, %v5529
        %v5531 = vrot.slane %v5522, %v5530
        %v5534 = vadd.f32 %v5518, %v5527
        %v5535 = vadd.f32 %v5519, %v5531
        %v5536 = vadd.f32 %v5520, %v5527
        %v5537 = vadd.f32 %v5521, %v5531
        %v5538 = vmax.f32 %v5534, 0.0
        %v5539 = vmax.f32 %v5535, 0.0
        %v5540 = vmax.f32 %v5536, 0.0
        %v5541 = vmax.f32 %v5537, 0.0
        %v5546 = vrot.slane %v5538, 1
        %v5547 = vrot.slane %v5540, 1
        %v5548 = vsel %vm409, %v5546, %v5547
        %v5549 = vrot.slane %v5539, 1
        %v5550 = vrot.slane %v5541, 1
        %v5551 = vsel %vm409, %v5549, %v5550
        %v5556 = vmax.f32 %v5538, %v5548
        %v5557 = vmax.f32 %v5539, %v5551
        %v5558 = vmax.f32 %v5540, %v5547
        %v5559 = vmax.f32 %v5541, %v5550
        %vm5560 = vcmask 72704
        %v5561 = vsel %vm5560, %v2273, 0
        %vm5563 = vcmask 1040384
        %v5565 = vsel %vm5563, %v5558, 0
        %v5568 = vsel %vm5563, %v5559, 0
        %5570 = vmatprep.subr.mxu0 %v5557
        %5571 = vmatpush1.msra.mxu0 %v5556
        %5572 = vmatprep.subr.mxu0 %v5568
        %5573 = vmatpush1.msra.mxu0 %v5565
        %5574 = vmatprep.subr.mxu0 0.0
        %5575 = vmatpush1.msra.mxu0 0.0
        %5576 = vmatprep.subr.mxu0 0.0
        %5577 = vmatpush1.msra.mxu0 0.0
        %5578 = vmatprep.subr.mxu0 0.0
        %5579 = vmatpush1.msra.mxu0 0.0
        %5580 = vmatprep.subr.mxu0 0.0
        %5581 = vmatpush1.msra.mxu0 0.0
        %5582 = vmatprep.subr.mxu0 0.0
        %5583 = vmatpush1.msra.mxu0 0.0
        %5584 = vmatprep.subr.mxu0 0.0
        %5585 = vmatpush1.msra.mxu0 0.0
        %5586 = vmatprep.subr.mxu0 0.0
        %5587 = vmatpush1.msra.mxu0 0.0
        %5588 = vmatprep.subr.mxu0 0.0
        %5589 = vmatpush1.msra.mxu0 0.0
        %5590 = vmatprep.subr.mxu0 0.0
        %5591 = vmatpush1.msra.mxu0 0.0
        %5592 = vmatprep.subr.mxu0 0.0
        %5593 = vmatpush1.msra.mxu0 0.0
        %5594 = vmatprep.subr.mxu0 0.0
        %5595 = vmatpush1.msra.mxu0 0.0
        %5596 = vmatprep.subr.mxu0 0.0
        %5597 = vmatpush1.msra.mxu0 0.0
        %5598 = vmatprep.subr.mxu0 0.0
        %5599 = vmatpush1.msra.mxu0 0.0
        %5600 = vmatprep.subr.mxu0 0.0
        %5601 = vmatpush1.msra.mxu0 0.0
        %5602 = vmatprep.subr.mxu0 0.0
        %5603 = vmatpush1.msra.mxu0 0.0
        %5604 = vmatprep.subr.mxu0 0.0
        %5605 = vmatpush1.msra.mxu0 0.0
        %5606 = vmatprep.subr.mxu0 0.0
        %5607 = vmatpush1.msra.mxu0 0.0
        %5608 = vmatprep.subr.mxu0 0.0
        %5609 = vmatpush1.msra.mxu0 0.0
        %5610 = vmatprep.subr.mxu0 0.0
        %5611 = vmatpush1.msra.mxu0 0.0
        %5612 = vmatprep.subr.mxu0 0.0
        %5613 = vmatpush1.msra.mxu0 0.0
        %5614 = vmatprep.subr.mxu0 0.0
        %5615 = vmatpush1.msra.mxu0 0.0
        %5616 = vmatprep.subr.mxu0 0.0
        %5617 = vmatpush1.msra.mxu0 0.0
        %5618 = vmatprep.subr.mxu0 0.0
        %5619 = vmatpush1.msra.mxu0 0.0
        %5620 = vmatprep.subr.mxu0 0.0
        %5621 = vmatpush1.msra.mxu0 0.0
        %5622 = vmatprep.subr.mxu0 0.0
        %5623 = vmatpush1.msra.mxu0 0.0
        %5624 = vmatprep.subr.mxu0 0.0
        %5625 = vmatpush1.msra.mxu0 0.0
        %5626 = vmatprep.subr.mxu0 0.0
        %5627 = vmatpush1.msra.mxu0 0.0
        %5628 = vmatprep.subr.mxu0 0.0
        %5629 = vmatpush1.msra.mxu0 0.0
        %5630 = vmatprep.subr.mxu0 0.0
        %5631 = vmatpush1.msra.mxu0 0.0
        %5632 = vmatprep.subr.mxu0 0.0
        %5633 = vmatpush1.msra.mxu0 0.0
        %5634 = vmatprep.mubr.f32.mxu0 0.0
        %5635 = vmatmul.mubr.f32.gmra.mrb[0].mxu0 %v5561
        %v5636 = vpop.f32.mrb[0].mxu0
        %v5637 = vadd.f32 0.0, %v5636
        %v5638 = vpop.f32.mrb[0].mxu0
        %v5639 = vadd.f32 0.0, %v5638
        %5640 = vdwg.mxu0
        %5643 = vrot.lane.b32.xlu0 %v5637, 127
        %v5644 = vpop.permute.xlu0 %5643
        %5645 = vrot.lane.b32.xlu0 %v5639, 127
        %v5646 = vpop.permute.xlu0 %5645
        %v5647 = vsel %vm2378, %v5644, %v5646
        %v5650 = vmax.f32 %v5637, %v5647
        %v5651 = vmax.f32 %v5639, %v5646
        %vm5652 = vcmask 252928
        %v5654 = vsel %vm5652, %v5651, 0
        %v5657 = vsel %vm409, %v2449, 0
        %5659 = vmatprep.subr.mxu0 0.0
        %5660 = vmatpush1.msra.mxu0 %v2430
        %5661 = vmatprep.subr.mxu0 0.0
        %5662 = vmatpush1.msra.mxu0 %v2431
        %5663 = vmatprep.subr.mxu0 0.0
        %5664 = vmatpush1.msra.mxu0 %v2432
        %5665 = vmatprep.subr.mxu0 0.0
        %5666 = vmatpush1.msra.mxu0 %v2433
        %5667 = vmatprep.subr.mxu0 0.0
        %5668 = vmatpush1.msra.mxu0 %v2434
        %5669 = vmatprep.subr.mxu0 0.0
        %5670 = vmatpush1.msra.mxu0 %v2435
        %5671 = vmatprep.subr.mxu0 0.0
        %5672 = vmatpush1.msra.mxu0 %v2436
        %5673 = vmatprep.subr.mxu0 0.0
        %5674 = vmatpush1.msra.mxu0 %v2437
        %5675 = vmatprep.subr.mxu0 0.0
        %5676 = vmatpush1.msra.mxu0 %v2438
        %5677 = vmatprep.subr.mxu0 0.0
        %5678 = vmatpush1.msra.mxu0 %v2439
        %5679 = vmatprep.subr.mxu0 0.0
        %5680 = vmatpush1.msra.mxu0 %v2440
        %5681 = vmatprep.subr.mxu0 0.0
        %5682 = vmatpush1.msra.mxu0 %v2441
        %5683 = vmatprep.subr.mxu0 0.0
        %5684 = vmatpush1.msra.mxu0 %v2442
        %5685 = vmatprep.subr.mxu0 0.0
        %5686 = vmatpush1.msra.mxu0 %v2443
        %5687 = vmatprep.subr.mxu0 0.0
        %5688 = vmatpush1.msra.mxu0 %v2444
        %5689 = vmatprep.subr.mxu0 0.0
        %5690 = vmatpush1.msra.mxu0 %v2445
        %5691 = vmatprep.subr.mxu0 0.0
        %5692 = vmatpush1.msra.mxu0 %v2446
        %5693 = vmatprep.subr.mxu0 0.0
        %5694 = vmatpush1.msra.mxu0 %v2447
        %5695 = vmatprep.subr.mxu0 0.0
        %5696 = vmatpush1.msra.mxu0 %v2448
        %5697 = vmatprep.subr.mxu0 0.0
        %5698 = vmatpush1.msra.mxu0 %v5657
        %5699 = vmatprep.subr.mxu0 0.0
        %5700 = vmatpush1.msra.mxu0 0.0
        %5701 = vmatprep.subr.mxu0 0.0
        %5702 = vmatpush1.msra.mxu0 0.0
        %5703 = vmatprep.subr.mxu0 0.0
        %5704 = vmatpush1.msra.mxu0 0.0
        %5705 = vmatprep.subr.mxu0 0.0
        %5706 = vmatpush1.msra.mxu0 0.0
        %5707 = vmatprep.subr.mxu0 0.0
        %5708 = vmatpush1.msra.mxu0 0.0
        %5709 = vmatprep.subr.mxu0 0.0
        %5710 = vmatpush1.msra.mxu0 0.0
        %5711 = vmatprep.subr.mxu0 0.0
        %5712 = vmatpush1.msra.mxu0 0.0
        %5713 = vmatprep.subr.mxu0 0.0
        %5714 = vmatpush1.msra.mxu0 0.0
        %5715 = vmatprep.subr.mxu0 0.0
        %5716 = vmatpush1.msra.mxu0 0.0
        %5717 = vmatprep.subr.mxu0 0.0
        %5718 = vmatpush1.msra.mxu0 0.0
        %5719 = vmatprep.subr.mxu0 0.0
        %5720 = vmatpush1.msra.mxu0 0.0
        %5721 = vmatprep.subr.mxu0 0.0
        %5722 = vmatpush1.msra.mxu0 0.0
        %5723 = vmatprep.mubr.f32.mxu0 %v5654
        %5724 = vmatmul.mubr.f32.gmra.mrb[0].mxu0 %v5650
        %v5725 = vpop.f32.mrb[0].mxu0
        %v5726 = vadd.f32 0.0, %v5725
        %v5727 = vpop.f32.mrb[0].mxu0
        %5728 = vdwg.mxu0
        %v5729 = vld [vmem:[%s6] sm:$0x1]
        %v5730 = vld [vmem:[%s5] sm:$0xff]
        %v5731 = vld [vmem:[%s5 + $0x8] sm:$0xff]
        %v5732 = vld [vmem:[%s5 + $0x10] sm:$0xff]
        %v5733 = vld [vmem:[%s5 + $0x18] sm:$0xff]
        %v5734 = vld [vmem:[%s5 + $0x20] sm:$0xff]
        %v5735 = vld [vmem:[%s5 + $0x28] sm:$0xff]
        %v5736 = vld [vmem:[%s5 + $0x30] sm:$0xff]
        %v5737 = vld [vmem:[%s5 + $0x38] sm:$0xff]
        %v5738 = vld [vmem:[%s5 + $0x40] sm:$0xff]
        %v5739 = vld [vmem:[%s5 + $0x48] sm:$0xff]
        %vm5740 = vcmask 654336
        %v5742 = vsel %vm5740, %v5726, 0
        %5744 = vmatprep.subr.mxu0 0.0
        %5745 = vmatpush1.msra.mxu0 %v5730
        %5746 = vmatprep.subr.mxu0 0.0
        %5747 = vmatpush1.msra.mxu0 %v5731
        %5748 = vmatprep.subr.mxu0 0.0
        %5749 = vmatpush1.msra.mxu0 %v5732
        %5750 = vmatprep.subr.mxu0 0.0
        %5751 = vmatpush1.msra.mxu0 %v5733
        %5752 = vmatprep.subr.mxu0 0.0
        %5753 = vmatpush1.msra.mxu0 %v5734
        %5754 = vmatprep.subr.mxu0 0.0
        %5755 = vmatpush1.msra.mxu0 %v5735
        %5756 = vmatprep.subr.mxu0 0.0
        %5757 = vmatpush1.msra.mxu0 %v5736
        %5758 = vmatprep.subr.mxu0 0.0
        %5759 = vmatpush1.msra.mxu0 %v5737
        %5760 = vmatprep.subr.mxu0 0.0
        %5761 = vmatpush1.msra.mxu0 %v5738
        %5762 = vmatprep.subr.mxu0 0.0
        %5763 = vmatpush1.msra.mxu0 %v5739
        %5764 = vmatprep.subr.mxu0 0.0
        %5765 = vmatpush1.msra.mxu0 0.0
        %5766 = vmatprep.subr.mxu0 0.0
        %5767 = vmatpush1.msra.mxu0 0.0
        %5768 = vmatprep.subr.mxu0 0.0
        %5769 = vmatpush1.msra.mxu0 0.0
        %5770 = vmatprep.subr.mxu0 0.0
        %5771 = vmatpush1.msra.mxu0 0.0
        %5772 = vmatprep.subr.mxu0 0.0
        %5773 = vmatpush1.msra.mxu0 0.0
        %5774 = vmatprep.subr.mxu0 0.0
        %5775 = vmatpush1.msra.mxu0 0.0
        %5776 = vmatprep.subr.mxu0 0.0
        %5777 = vmatpush1.msra.mxu0 0.0
        %5778 = vmatprep.subr.mxu0 0.0
        %5779 = vmatpush1.msra.mxu0 0.0
        %5780 = vmatprep.subr.mxu0 0.0
        %5781 = vmatpush1.msra.mxu0 0.0
        %5782 = vmatprep.subr.mxu0 0.0
        %5783 = vmatpush1.msra.mxu0 0.0
        %5784 = vmatprep.subr.mxu0 0.0
        %5785 = vmatpush1.msra.mxu0 0.0
        %5786 = vmatprep.subr.mxu0 0.0
        %5787 = vmatpush1.msra.mxu0 0.0
        %5788 = vmatprep.subr.mxu0 0.0
        %5789 = vmatpush1.msra.mxu0 0.0
        %5790 = vmatprep.subr.mxu0 0.0
        %5791 = vmatpush1.msra.mxu0 0.0
        %5792 = vmatprep.subr.mxu0 0.0
        %5793 = vmatpush1.msra.mxu0 0.0
        %5794 = vmatprep.subr.mxu0 0.0
        %5795 = vmatpush1.msra.mxu0 0.0
        %5796 = vmatprep.subr.mxu0 0.0
        %5797 = vmatpush1.msra.mxu0 0.0
        %5798 = vmatprep.subr.mxu0 0.0
        %5799 = vmatpush1.msra.mxu0 0.0
        %5800 = vmatprep.subr.mxu0 0.0
        %5801 = vmatpush1.msra.mxu0 0.0
        %5802 = vmatprep.subr.mxu0 0.0
        %5803 = vmatpush1.msra.mxu0 0.0
        %5804 = vmatprep.subr.mxu0 0.0
        %5805 = vmatpush1.msra.mxu0 0.0
        %5806 = vmatprep.subr.mxu0 0.0
        %5807 = vmatpush1.msra.mxu0 0.0
        %5808 = vmatprep.mubr.f32.mxu0 0.0
        %5809 = vmatmul.mubr.f32.gmra.mrb[0].mxu0 %v5742
        %v5810 = vpop.f32.mrb[0].mxu0
        %v5811 = vadd.f32 0.0, %v5810
        %v5812 = vpop.f32.mrb[0].mxu0
        %5813 = vdwg.mxu0
        %v5814 = vadd.f32 %v5729, %v5811
        %s5815 = scalar_lea.vmem %s5, 80
        %v5816 = vld [vmem:[%s5815] sm:$0xff]
        %v5817 = vld [vmem:[%s5815 + $0x8] sm:$0xff]
        %v5818 = vld [vmem:[%s5815 + $0x10] sm:$0xff]
        %v5819 = vld [vmem:[%s5815 + $0x18] sm:$0xff]
        %v5820 = vld [vmem:[%s5815 + $0x20] sm:$0xff]
        %v5821 = vld [vmem:[%s5815 + $0x28] sm:$0xff]
        %v5822 = vld [vmem:[%s5815 + $0x30] sm:$0xff]
        %v5823 = vld [vmem:[%s5815 + $0x38] sm:$0xff]
        %v5824 = vld [vmem:[%s5815 + $0x40] sm:$0xff]
        %v5825 = vld [vmem:[%s5815 + $0x48] sm:$0xff]
        %v5826 = vrot.slane %v5726, 1
        %v5827 = vsel %vm5740, %v5826, 0
        %5829 = vmatprep.subr.mxu0 0.0
        %5830 = vmatpush1.msra.mxu0 %v5816
        %5831 = vmatprep.subr.mxu0 0.0
        %5832 = vmatpush1.msra.mxu0 %v5817
        %5833 = vmatprep.subr.mxu0 0.0
        %5834 = vmatpush1.msra.mxu0 %v5818
        %5835 = vmatprep.subr.mxu0 0.0
        %5836 = vmatpush1.msra.mxu0 %v5819
        %5837 = vmatprep.subr.mxu0 0.0
        %5838 = vmatpush1.msra.mxu0 %v5820
        %5839 = vmatprep.subr.mxu0 0.0
        %5840 = vmatpush1.msra.mxu0 %v5821
        %5841 = vmatprep.subr.mxu0 0.0
        %5842 = vmatpush1.msra.mxu0 %v5822
        %5843 = vmatprep.subr.mxu0 0.0
        %5844 = vmatpush1.msra.mxu0 %v5823
        %5845 = vmatprep.subr.mxu0 0.0
        %5846 = vmatpush1.msra.mxu0 %v5824
        %5847 = vmatprep.subr.mxu0 0.0
        %5848 = vmatpush1.msra.mxu0 %v5825
        %5849 = vmatprep.subr.mxu0 0.0
        %5850 = vmatpush1.msra.mxu0 0.0
        %5851 = vmatprep.subr.mxu0 0.0
        %5852 = vmatpush1.msra.mxu0 0.0
        %5853 = vmatprep.subr.mxu0 0.0
        %5854 = vmatpush1.msra.mxu0 0.0
        %5855 = vmatprep.subr.mxu0 0.0
        %5856 = vmatpush1.msra.mxu0 0.0
        %5857 = vmatprep.subr.mxu0 0.0
        %5858 = vmatpush1.msra.mxu0 0.0
        %5859 = vmatprep.subr.mxu0 0.0
        %5860 = vmatpush1.msra.mxu0 0.0
        %5861 = vmatprep.subr.mxu0 0.0
        %5862 = vmatpush1.msra.mxu0 0.0
        %5863 = vmatprep.subr.mxu0 0.0
        %5864 = vmatpush1.msra.mxu0 0.0
        %5865 = vmatprep.subr.mxu0 0.0
        %5866 = vmatpush1.msra.mxu0 0.0
        %5867 = vmatprep.subr.mxu0 0.0
        %5868 = vmatpush1.msra.mxu0 0.0
        %5869 = vmatprep.subr.mxu0 0.0
        %5870 = vmatpush1.msra.mxu0 0.0
        %5871 = vmatprep.subr.mxu0 0.0
        %5872 = vmatpush1.msra.mxu0 0.0
        %5873 = vmatprep.subr.mxu0 0.0
        %5874 = vmatpush1.msra.mxu0 0.0
        %5875 = vmatprep.subr.mxu0 0.0
        %5876 = vmatpush1.msra.mxu0 0.0
        %5877 = vmatprep.subr.mxu0 0.0
        %5878 = vmatpush1.msra.mxu0 0.0
        %5879 = vmatprep.subr.mxu0 0.0
        %5880 = vmatpush1.msra.mxu0 0.0
        %5881 = vmatprep.subr.mxu0 0.0
        %5882 = vmatpush1.msra.mxu0 0.0
        %5883 = vmatprep.subr.mxu0 0.0
        %5884 = vmatpush1.msra.mxu0 0.0
        %5885 = vmatprep.subr.mxu0 0.0
        %5886 = vmatpush1.msra.mxu0 0.0
        %5887 = vmatprep.subr.mxu0 0.0
        %5888 = vmatpush1.msra.mxu0 0.0
        %5889 = vmatprep.subr.mxu0 0.0
        %5890 = vmatpush1.msra.mxu0 0.0
        %5891 = vmatprep.subr.mxu0 0.0
        %5892 = vmatpush1.msra.mxu0 0.0
        %5893 = vmatprep.mubr.f32.mxu0 0.0
        %5894 = vmatmul.mubr.f32.gmra.mrb[0].mxu0 %v5827
        %v5895 = vpop.f32.mrb[0].mxu0
        %v5896 = vadd.f32 0.0, %v5895
        %v5897 = vpop.f32.mrb[0].mxu0
        %5898 = vdwg.mxu0
        %v5899 = vadd.f32 %v5814, %v5896
        %s5900 = scalar_lea.vmem %s5, 160
        %v5901 = vld [vmem:[%s5900] sm:$0xff]
        %v5902 = vld [vmem:[%s5900 + $0x8] sm:$0xff]
        %v5903 = vld [vmem:[%s5900 + $0x10] sm:$0xff]
        %v5904 = vld [vmem:[%s5900 + $0x18] sm:$0xff]
        %v5905 = vld [vmem:[%s5900 + $0x20] sm:$0xff]
        %v5906 = vld [vmem:[%s5900 + $0x28] sm:$0xff]
        %v5907 = vld [vmem:[%s5900 + $0x30] sm:$0xff]
        %v5908 = vld [vmem:[%s5900 + $0x38] sm:$0xff]
        %v5909 = vld [vmem:[%s5900 + $0x40] sm:$0xff]
        %v5910 = vld [vmem:[%s5900 + $0x48] sm:$0xff]
        %v5911 = vrot.slane %v5726, 2
        %v5912 = vsel %vm5740, %v5911, 0
        %5914 = vmatprep.subr.mxu0 0.0
        %5915 = vmatpush1.msra.mxu0 %v5901
        %5916 = vmatprep.subr.mxu0 0.0
        %5917 = vmatpush1.msra.mxu0 %v5902
        %5918 = vmatprep.subr.mxu0 0.0
        %5919 = vmatpush1.msra.mxu0 %v5903
        %5920 = vmatprep.subr.mxu0 0.0
        %5921 = vmatpush1.msra.mxu0 %v5904
        %5922 = vmatprep.subr.mxu0 0.0
        %5923 = vmatpush1.msra.mxu0 %v5905
        %5924 = vmatprep.subr.mxu0 0.0
        %5925 = vmatpush1.msra.mxu0 %v5906
        %5926 = vmatprep.subr.mxu0 0.0
        %5927 = vmatpush1.msra.mxu0 %v5907
        %5928 = vmatprep.subr.mxu0 0.0
        %5929 = vmatpush1.msra.mxu0 %v5908
        %5930 = vmatprep.subr.mxu0 0.0
        %5931 = vmatpush1.msra.mxu0 %v5909
        %5932 = vmatprep.subr.mxu0 0.0
        %5933 = vmatpush1.msra.mxu0 %v5910
        %5934 = vmatprep.subr.mxu0 0.0
        %5935 = vmatpush1.msra.mxu0 0.0
        %5936 = vmatprep.subr.mxu0 0.0
        %5937 = vmatpush1.msra.mxu0 0.0
        %5938 = vmatprep.subr.mxu0 0.0
        %5939 = vmatpush1.msra.mxu0 0.0
        %5940 = vmatprep.subr.mxu0 0.0
        %5941 = vmatpush1.msra.mxu0 0.0
        %5942 = vmatprep.subr.mxu0 0.0
        %5943 = vmatpush1.msra.mxu0 0.0
        %5944 = vmatprep.subr.mxu0 0.0
        %5945 = vmatpush1.msra.mxu0 0.0
        %5946 = vmatprep.subr.mxu0 0.0
        %5947 = vmatpush1.msra.mxu0 0.0
        %5948 = vmatprep.subr.mxu0 0.0
        %5949 = vmatpush1.msra.mxu0 0.0
        %5950 = vmatprep.subr.mxu0 0.0
        %5951 = vmatpush1.msra.mxu0 0.0
        %5952 = vmatprep.subr.mxu0 0.0
        %5953 = vmatpush1.msra.mxu0 0.0
        %5954 = vmatprep.subr.mxu0 0.0
        %5955 = vmatpush1.msra.mxu0 0.0
        %5956 = vmatprep.subr.mxu0 0.0
        %5957 = vmatpush1.msra.mxu0 0.0
        %5958 = vmatprep.subr.mxu0 0.0
        %5959 = vmatpush1.msra.mxu0 0.0
        %5960 = vmatprep.subr.mxu0 0.0
        %5961 = vmatpush1.msra.mxu0 0.0
        %5962 = vmatprep.subr.mxu0 0.0
        %5963 = vmatpush1.msra.mxu0 0.0
        %5964 = vmatprep.subr.mxu0 0.0
        %5965 = vmatpush1.msra.mxu0 0.0
        %5966 = vmatprep.subr.mxu0 0.0
        %5967 = vmatpush1.msra.mxu0 0.0
        %5968 = vmatprep.subr.mxu0 0.0
        %5969 = vmatpush1.msra.mxu0 0.0
        %5970 = vmatprep.subr.mxu0 0.0
        %5971 = vmatpush1.msra.mxu0 0.0
        %5972 = vmatprep.subr.mxu0 0.0
        %5973 = vmatpush1.msra.mxu0 0.0
        %5974 = vmatprep.subr.mxu0 0.0
        %5975 = vmatpush1.msra.mxu0 0.0
        %5976 = vmatprep.subr.mxu0 0.0
        %5977 = vmatpush1.msra.mxu0 0.0
        %5978 = vmatprep.mubr.f32.mxu0 0.0
        %5979 = vmatmul.mubr.f32.gmra.mrb[0].mxu0 %v5912
        %v5980 = vpop.f32.mrb[0].mxu0
        %v5981 = vadd.f32 0.0, %v5980
        %v5982 = vpop.f32.mrb[0].mxu0
        %5983 = vdwg.mxu0
        %v5984 = vadd.f32 %v5899, %v5981
        %s5985 = scalar_lea.vmem %s5, 240
        %v5986 = vld [vmem:[%s5985] sm:$0xff]
        %v5987 = vld [vmem:[%s5985 + $0x8] sm:$0xff]
        %v5988 = vld [vmem:[%s5985 + $0x10] sm:$0xff]
        %v5989 = vld [vmem:[%s5985 + $0x18] sm:$0xff]
        %v5990 = vld [vmem:[%s5985 + $0x20] sm:$0xff]
        %v5991 = vld [vmem:[%s5985 + $0x28] sm:$0xff]
        %v5992 = vld [vmem:[%s5985 + $0x30] sm:$0xff]
        %v5993 = vld [vmem:[%s5985 + $0x38] sm:$0xff]
        %v5994 = vld [vmem:[%s5985 + $0x40] sm:$0xff]
        %v5995 = vld [vmem:[%s5985 + $0x48] sm:$0xff]
        %v5996 = vrot.slane %v5726, 3
        %v5997 = vsel %vm5740, %v5996, 0
        %5999 = vmatprep.subr.mxu0 0.0
        %6000 = vmatpush1.msra.mxu0 %v5986
        %6001 = vmatprep.subr.mxu0 0.0
        %6002 = vmatpush1.msra.mxu0 %v5987
        %6003 = vmatprep.subr.mxu0 0.0
        %6004 = vmatpush1.msra.mxu0 %v5988
        %6005 = vmatprep.subr.mxu0 0.0
        %6006 = vmatpush1.msra.mxu0 %v5989
        %6007 = vmatprep.subr.mxu0 0.0
        %6008 = vmatpush1.msra.mxu0 %v5990
        %6009 = vmatprep.subr.mxu0 0.0
        %6010 = vmatpush1.msra.mxu0 %v5991
        %6011 = vmatprep.subr.mxu0 0.0
        %6012 = vmatpush1.msra.mxu0 %v5992
        %6013 = vmatprep.subr.mxu0 0.0
        %6014 = vmatpush1.msra.mxu0 %v5993
        %6015 = vmatprep.subr.mxu0 0.0
        %6016 = vmatpush1.msra.mxu0 %v5994
        %6017 = vmatprep.subr.mxu0 0.0
        %6018 = vmatpush1.msra.mxu0 %v5995
        %6019 = vmatprep.subr.mxu0 0.0
        %6020 = vmatpush1.msra.mxu0 0.0
        %6021 = vmatprep.subr.mxu0 0.0
        %6022 = vmatpush1.msra.mxu0 0.0
        %6023 = vmatprep.subr.mxu0 0.0
        %6024 = vmatpush1.msra.mxu0 0.0
        %6025 = vmatprep.subr.mxu0 0.0
        %6026 = vmatpush1.msra.mxu0 0.0
        %6027 = vmatprep.subr.mxu0 0.0
        %6028 = vmatpush1.msra.mxu0 0.0
        %6029 = vmatprep.subr.mxu0 0.0
        %6030 = vmatpush1.msra.mxu0 0.0
        %6031 = vmatprep.subr.mxu0 0.0
        %6032 = vmatpush1.msra.mxu0 0.0
        %6033 = vmatprep.subr.mxu0 0.0
        %6034 = vmatpush1.msra.mxu0 0.0
        %6035 = vmatprep.subr.mxu0 0.0
        %6036 = vmatpush1.msra.mxu0 0.0
        %6037 = vmatprep.subr.mxu0 0.0
        %6038 = vmatpush1.msra.mxu0 0.0
        %6039 = vmatprep.subr.mxu0 0.0
        %6040 = vmatpush1.msra.mxu0 0.0
        %6041 = vmatprep.subr.mxu0 0.0
        %6042 = vmatpush1.msra.mxu0 0.0
        %6043 = vmatprep.subr.mxu0 0.0
        %6044 = vmatpush1.msra.mxu0 0.0
        %6045 = vmatprep.subr.mxu0 0.0
        %6046 = vmatpush1.msra.mxu0 0.0
        %6047 = vmatprep.subr.mxu0 0.0
        %6048 = vmatpush1.msra.mxu0 0.0
        %6049 = vmatprep.subr.mxu0 0.0
        %6050 = vmatpush1.msra.mxu0 0.0
        %6051 = vmatprep.subr.mxu0 0.0
        %6052 = vmatpush1.msra.mxu0 0.0
        %6053 = vmatprep.subr.mxu0 0.0
        %6054 = vmatpush1.msra.mxu0 0.0
        %6055 = vmatprep.subr.mxu0 0.0
        %6056 = vmatpush1.msra.mxu0 0.0
        %6057 = vmatprep.subr.mxu0 0.0
        %6058 = vmatpush1.msra.mxu0 0.0
        %6059 = vmatprep.subr.mxu0 0.0
        %6060 = vmatpush1.msra.mxu0 0.0
        %6061 = vmatprep.subr.mxu0 0.0
        %6062 = vmatpush1.msra.mxu0 0.0
        %6063 = vmatprep.mubr.f32.mxu0 0.0
        %6064 = vmatmul.mubr.f32.gmra.mrb[0].mxu0 %v5997
        %v6065 = vpop.f32.mrb[0].mxu0
        %v6066 = vadd.f32 0.0, %v6065
        %v6067 = vpop.f32.mrb[0].mxu0
        %6068 = vdwg.mxu0
        %v6069 = vadd.f32 %v5984, %v6066
        %s6070 = scalar_lea.vmem %s5, 320
        %v6071 = vld [vmem:[%s6070] sm:$0xff]
        %v6072 = vld [vmem:[%s6070 + $0x8] sm:$0xff]
        %v6073 = vld [vmem:[%s6070 + $0x10] sm:$0xff]
        %v6074 = vld [vmem:[%s6070 + $0x18] sm:$0xff]
        %v6075 = vld [vmem:[%s6070 + $0x20] sm:$0xff]
        %v6076 = vld [vmem:[%s6070 + $0x28] sm:$0xff]
        %v6077 = vld [vmem:[%s6070 + $0x30] sm:$0xff]
        %v6078 = vld [vmem:[%s6070 + $0x38] sm:$0xff]
        %v6079 = vld [vmem:[%s6070 + $0x40] sm:$0xff]
        %v6080 = vld [vmem:[%s6070 + $0x48] sm:$0xff]
        %v6081 = vrot.slane %v5726, 4
        %v6082 = vsel %vm5740, %v6081, 0
        %6084 = vmatprep.subr.mxu0 0.0
        %6085 = vmatpush1.msra.mxu0 %v6071
        %6086 = vmatprep.subr.mxu0 0.0
        %6087 = vmatpush1.msra.mxu0 %v6072
        %6088 = vmatprep.subr.mxu0 0.0
        %6089 = vmatpush1.msra.mxu0 %v6073
        %6090 = vmatprep.subr.mxu0 0.0
        %6091 = vmatpush1.msra.mxu0 %v6074
        %6092 = vmatprep.subr.mxu0 0.0
        %6093 = vmatpush1.msra.mxu0 %v6075
        %6094 = vmatprep.subr.mxu0 0.0
        %6095 = vmatpush1.msra.mxu0 %v6076
        %6096 = vmatprep.subr.mxu0 0.0
        %6097 = vmatpush1.msra.mxu0 %v6077
        %6098 = vmatprep.subr.mxu0 0.0
        %6099 = vmatpush1.msra.mxu0 %v6078
        %6100 = vmatprep.subr.mxu0 0.0
        %6101 = vmatpush1.msra.mxu0 %v6079
        %6102 = vmatprep.subr.mxu0 0.0
        %6103 = vmatpush1.msra.mxu0 %v6080
        %6104 = vmatprep.subr.mxu0 0.0
        %6105 = vmatpush1.msra.mxu0 0.0
        %6106 = vmatprep.subr.mxu0 0.0
        %6107 = vmatpush1.msra.mxu0 0.0
        %6108 = vmatprep.subr.mxu0 0.0
        %6109 = vmatpush1.msra.mxu0 0.0
        %6110 = vmatprep.subr.mxu0 0.0
        %6111 = vmatpush1.msra.mxu0 0.0
        %6112 = vmatprep.subr.mxu0 0.0
        %6113 = vmatpush1.msra.mxu0 0.0
        %6114 = vmatprep.subr.mxu0 0.0
        %6115 = vmatpush1.msra.mxu0 0.0
        %6116 = vmatprep.subr.mxu0 0.0
        %6117 = vmatpush1.msra.mxu0 0.0
        %6118 = vmatprep.subr.mxu0 0.0
        %6119 = vmatpush1.msra.mxu0 0.0
        %6120 = vmatprep.subr.mxu0 0.0
        %6121 = vmatpush1.msra.mxu0 0.0
        %6122 = vmatprep.subr.mxu0 0.0
        %6123 = vmatpush1.msra.mxu0 0.0
        %6124 = vmatprep.subr.mxu0 0.0
        %6125 = vmatpush1.msra.mxu0 0.0
        %6126 = vmatprep.subr.mxu0 0.0
        %6127 = vmatpush1.msra.mxu0 0.0
        %6128 = vmatprep.subr.mxu0 0.0
        %6129 = vmatpush1.msra.mxu0 0.0
        %6130 = vmatprep.subr.mxu0 0.0
        %6131 = vmatpush1.msra.mxu0 0.0
        %6132 = vmatprep.subr.mxu0 0.0
        %6133 = vmatpush1.msra.mxu0 0.0
        %6134 = vmatprep.subr.mxu0 0.0
        %6135 = vmatpush1.msra.mxu0 0.0
        %6136 = vmatprep.subr.mxu0 0.0
        %6137 = vmatpush1.msra.mxu0 0.0
        %6138 = vmatprep.subr.mxu0 0.0
        %6139 = vmatpush1.msra.mxu0 0.0
        %6140 = vmatprep.subr.mxu0 0.0
        %6141 = vmatpush1.msra.mxu0 0.0
        %6142 = vmatprep.subr.mxu0 0.0
        %6143 = vmatpush1.msra.mxu0 0.0
        %6144 = vmatprep.subr.mxu0 0.0
        %6145 = vmatpush1.msra.mxu0 0.0
        %6146 = vmatprep.subr.mxu0 0.0
        %6147 = vmatpush1.msra.mxu0 0.0
        %6148 = vmatprep.mubr.f32.mxu0 0.0
        %6149 = vmatmul.mubr.f32.gmra.mrb[0].mxu0 %v6082
        %v6150 = vpop.f32.mrb[0].mxu0
        %v6151 = vadd.f32 0.0, %v6150
        %v6152 = vpop.f32.mrb[0].mxu0
        %6153 = vdwg.mxu0
        %v6154 = vadd.f32 %v6069, %v6151
        %v6155 = vmax.f32 %v6154, 0.0
        %v6156 = vld [vmem:[%s7] sm:$0xff]
        %v6157 = vld [vmem:[%s7 + $0x8] sm:$0xff]
        %v6158 = vld [vmem:[%s7 + $0x10] sm:$0xff]
        %v6159 = vld [vmem:[%s7 + $0x18] sm:$0xff]
        %v6160 = vld [vmem:[%s7 + $0x20] sm:$0xff]
        %v6161 = vld [vmem:[%s7 + $0x28] sm:$0xff]
        %v6162 = vld [vmem:[%s7 + $0x30] sm:$0xff]
        %v6163 = vld [vmem:[%s7 + $0x38] sm:$0xff]
        %v6164 = vld [vmem:[%s7 + $0x40] sm:$0xff]
        %v6165 = vld [vmem:[%s7 + $0x48] sm:$0xff]
        %v6166 = vld [vmem:[%s7 + $0x50] sm:$0xff]
        %v6167 = vld [vmem:[%s7 + $0x58] sm:$0xff]
        %v6168 = vld [vmem:[%s7 + $0x60] sm:$0xff]
        %v6169 = vld [vmem:[%s7 + $0x68] sm:$0xff]
        %v6170 = vld [vmem:[%s7 + $0x70] sm:$0xff]
        %v6171 = vld [vmem:[%s8] sm:$0x1]
        %vm6172 = vcmask 982016
        %v6174 = vsel %vm6172, %v6155, 0
        %6176 = vmatprep.subr.mxu0 0.0
        %6177 = vmatpush1.msra.mxu0 %v6156
        %6178 = vmatprep.subr.mxu0 0.0
        %6179 = vmatpush1.msra.mxu0 %v6157
        %6180 = vmatprep.subr.mxu0 0.0
        %6181 = vmatpush1.msra.mxu0 %v6158
        %6182 = vmatprep.subr.mxu0 0.0
        %6183 = vmatpush1.msra.mxu0 %v6159
        %6184 = vmatprep.subr.mxu0 0.0
        %6185 = vmatpush1.msra.mxu0 %v6160
        %6186 = vmatprep.subr.mxu0 0.0
        %6187 = vmatpush1.msra.mxu0 %v6161
        %6188 = vmatprep.subr.mxu0 0.0
        %6189 = vmatpush1.msra.mxu0 %v6162
        %6190 = vmatprep.subr.mxu0 0.0
        %6191 = vmatpush1.msra.mxu0 %v6163
        %6192 = vmatprep.subr.mxu0 0.0
        %6193 = vmatpush1.msra.mxu0 %v6164
        %6194 = vmatprep.subr.mxu0 0.0
        %6195 = vmatpush1.msra.mxu0 %v6165
        %6196 = vmatprep.subr.mxu0 0.0
        %6197 = vmatpush1.msra.mxu0 %v6166
        %6198 = vmatprep.subr.mxu0 0.0
        %6199 = vmatpush1.msra.mxu0 %v6167
        %6200 = vmatprep.subr.mxu0 0.0
        %6201 = vmatpush1.msra.mxu0 %v6168
        %6202 = vmatprep.subr.mxu0 0.0
        %6203 = vmatpush1.msra.mxu0 %v6169
        %6204 = vmatprep.subr.mxu0 0.0
        %6205 = vmatpush1.msra.mxu0 %v6170
        %6206 = vmatprep.subr.mxu0 0.0
        %6207 = vmatpush1.msra.mxu0 0.0
        %6208 = vmatprep.subr.mxu0 0.0
        %6209 = vmatpush1.msra.mxu0 0.0
        %6210 = vmatprep.subr.mxu0 0.0
        %6211 = vmatpush1.msra.mxu0 0.0
        %6212 = vmatprep.subr.mxu0 0.0
        %6213 = vmatpush1.msra.mxu0 0.0
        %6214 = vmatprep.subr.mxu0 0.0
        %6215 = vmatpush1.msra.mxu0 0.0
        %6216 = vmatprep.subr.mxu0 0.0
        %6217 = vmatpush1.msra.mxu0 0.0
        %6218 = vmatprep.subr.mxu0 0.0
        %6219 = vmatpush1.msra.mxu0 0.0
        %6220 = vmatprep.subr.mxu0 0.0
        %6221 = vmatpush1.msra.mxu0 0.0
        %6222 = vmatprep.subr.mxu0 0.0
        %6223 = vmatpush1.msra.mxu0 0.0
        %6224 = vmatprep.subr.mxu0 0.0
        %6225 = vmatpush1.msra.mxu0 0.0
        %6226 = vmatprep.subr.mxu0 0.0
        %6227 = vmatpush1.msra.mxu0 0.0
        %6228 = vmatprep.subr.mxu0 0.0
        %6229 = vmatpush1.msra.mxu0 0.0
        %6230 = vmatprep.subr.mxu0 0.0
        %6231 = vmatpush1.msra.mxu0 0.0
        %6232 = vmatprep.subr.mxu0 0.0
        %6233 = vmatpush1.msra.mxu0 0.0
        %6234 = vmatprep.subr.mxu0 0.0
        %6235 = vmatpush1.msra.mxu0 0.0
        %6236 = vmatprep.subr.mxu0 0.0
        %6237 = vmatpush1.msra.mxu0 0.0
        %6238 = vmatprep.subr.mxu0 0.0
        %6239 = vmatpush1.msra.mxu0 0.0
        %6240 = vmatprep.mubr.f32.mxu0 0.0
        %6241 = vmatmul.mubr.f32.gmra.mrb[0].mxu0 %v6174
        %v6242 = vpop.f32.mrb[0].mxu0
        %v6243 = vadd.f32 %v6171, %v6242
        %v6244 = vpop.f32.mrb[0].mxu0
        %6245 = vdwg.mxu0
        %v6246 = vmax.f32 %v6243, 0.0
        %v6247 = vld [vmem:[%s9] sm:$0xff]
        %v6248 = vld [vmem:[%s9 + $0x8] sm:$0xff]
        %v6249 = vld [vmem:[%s9 + $0x10] sm:$0xff]
        %v6250 = vld [vmem:[%s9 + $0x18] sm:$0xff]
        %v6251 = vld [vmem:[%s9 + $0x20] sm:$0xff]
        %v6252 = vld [vmem:[%s9 + $0x28] sm:$0xff]
        %v6253 = vld [vmem:[%s9 + $0x30] sm:$0xff]
        %v6254 = vld [vmem:[%s9 + $0x38] sm:$0xff]
        %v6255 = vld [vmem:[%s9 + $0x40] sm:$0xff]
        %v6256 = vld [vmem:[%s9 + $0x48] sm:$0xff]
        %v6257 = vld [vmem:[%s9 + $0x50] sm:$0xf]
        %v6258 = vld [vmem:[%s10] sm:$0x1]
        %vm6259 = vcmask 687104
        %v6261 = vsel %vm6259, %v6246, 0
        %v6264 = vsel %vm865, %v6257, 0
        %6266 = vmatprep.subr.mxu0 0.0
        %6267 = vmatpush1.msra.mxu0 %v6247
        %6268 = vmatprep.subr.mxu0 0.0
        %6269 = vmatpush1.msra.mxu0 %v6248
        %6270 = vmatprep.subr.mxu0 0.0
        %6271 = vmatpush1.msra.mxu0 %v6249
        %6272 = vmatprep.subr.mxu0 0.0
        %6273 = vmatpush1.msra.mxu0 %v6250
        %6274 = vmatprep.subr.mxu0 0.0
        %6275 = vmatpush1.msra.mxu0 %v6251
        %6276 = vmatprep.subr.mxu0 0.0
        %6277 = vmatpush1.msra.mxu0 %v6252
        %6278 = vmatprep.subr.mxu0 0.0
        %6279 = vmatpush1.msra.mxu0 %v6253
        %6280 = vmatprep.subr.mxu0 0.0
        %6281 = vmatpush1.msra.mxu0 %v6254
        %6282 = vmatprep.subr.mxu0 0.0
        %6283 = vmatpush1.msra.mxu0 %v6255
        %6284 = vmatprep.subr.mxu0 0.0
        %6285 = vmatpush1.msra.mxu0 %v6256
        %6286 = vmatprep.subr.mxu0 0.0
        %6287 = vmatpush1.msra.mxu0 %v6264
        %6288 = vmatprep.subr.mxu0 0.0
        %6289 = vmatpush1.msra.mxu0 0.0
        %6290 = vmatprep.subr.mxu0 0.0
        %6291 = vmatpush1.msra.mxu0 0.0
        %6292 = vmatprep.subr.mxu0 0.0
        %6293 = vmatpush1.msra.mxu0 0.0
        %6294 = vmatprep.subr.mxu0 0.0
        %6295 = vmatpush1.msra.mxu0 0.0
        %6296 = vmatprep.subr.mxu0 0.0
        %6297 = vmatpush1.msra.mxu0 0.0
        %6298 = vmatprep.subr.mxu0 0.0
        %6299 = vmatpush1.msra.mxu0 0.0
        %6300 = vmatprep.subr.mxu0 0.0
        %6301 = vmatpush1.msra.mxu0 0.0
        %6302 = vmatprep.subr.mxu0 0.0
        %6303 = vmatpush1.msra.mxu0 0.0
        %6304 = vmatprep.subr.mxu0 0.0
        %6305 = vmatpush1.msra.mxu0 0.0
        %6306 = vmatprep.subr.mxu0 0.0
        %6307 = vmatpush1.msra.mxu0 0.0
        %6308 = vmatprep.subr.mxu0 0.0
        %6309 = vmatpush1.msra.mxu0 0.0
        %6310 = vmatprep.subr.mxu0 0.0
        %6311 = vmatpush1.msra.mxu0 0.0
        %6312 = vmatprep.subr.mxu0 0.0
        %6313 = vmatpush1.msra.mxu0 0.0
        %6314 = vmatprep.subr.mxu0 0.0
        %6315 = vmatpush1.msra.mxu0 0.0
        %6316 = vmatprep.subr.mxu0 0.0
        %6317 = vmatpush1.msra.mxu0 0.0
        %6318 = vmatprep.subr.mxu0 0.0
        %6319 = vmatpush1.msra.mxu0 0.0
        %6320 = vmatprep.subr.mxu0 0.0
        %6321 = vmatpush1.msra.mxu0 0.0
        %6322 = vmatprep.subr.mxu0 0.0
        %6323 = vmatpush1.msra.mxu0 0.0
        %6324 = vmatprep.subr.mxu0 0.0
        %6325 = vmatpush1.msra.mxu0 0.0
        %6326 = vmatprep.subr.mxu0 0.0
        %6327 = vmatpush1.msra.mxu0 0.0
        %6328 = vmatprep.subr.mxu0 0.0
        %6329 = vmatpush1.msra.mxu0 0.0
        %6330 = vmatprep.mubr.f32.mxu0 0.0
        %6331 = vmatmul.mubr.f32.gmra.mrb[0].mxu0 %v6261
        %v6332 = vpop.f32.mrb[0].mxu0
        %v6333 = vadd.f32 %v6258, %v6332
        %v6334 = vpop.f32.mrb[0].mxu0
        %6335 = vdwg.mxu0
        %6336 = vst [vmem:[%s378] sm:$0x1] %v6333
        %s6337 = sand.u32 %s269, 1
        %s6338 = scalar_lea.sflag [#allocation3], %s6337
        %s6339 = sand.u32 %s269, 1
        %s6340 = scalar_lea.vmem [#allocation2], %s6339
        // Predicated region
        $region65: #{net_forward.1} parent=63 // pred_check
          %p6341 = pneg %p279
        $region66: #{net_forward.1} parent=63 // pred_check_branch
          %6343 = sbr.rel (%p6341) target = $region68
        $region67: #{net_forward.1} parent=63 // pred_region
          %s6345 = ssub.s32 16, 16
          %6346 = vsyncadd %s6338, %s6345
          %s6347 = smul.addr %s25, 16
          %s6348 = scalar_lea.hbm %s11, %s6347
          %s6350 = sshll.u32 %s6340, 4
          %s6351 = int_to_ptr.vmem [resolvable:$true] %s6350
          %6353 = dma.vmem_to_hbm [thread:$0]  %s6351, 16, %s6348, %s6338
        $region68: #{net_forward.1} parent=63 // pred_fallthru
          _
      $region64: #{net_forward.1} parent=5 // pred_fallthru
        _
      %p6354 = scmp.le.s32.totalorder 2, %s20
      // Predicated region
      $region69: #{net_forward.1} parent=5 // pred_check
        %p6355 = pneg %p6354
      $region70: #{net_forward.1} parent=5 // pred_check_branch
        %6357 = sbr.rel (%p6355) target = $region72
      $region71: #{net_forward.1} parent=5 // pred_region
        %s6358 = ssub.s32 %s20, 2
        // Predicated region
        $region73: #{net_forward.1} parent=71 // pred_check
          %p6359 = pneg %p285
        $region74: #{net_forward.1} parent=71 // pred_check_branch
          %6361 = sbr.rel (%p6359) target = $region76
        $region75: #{net_forward.1} parent=71 // pred_region
          %s6362 = sand.u32 %s270, 1
          %s6363 = scalar_lea.sflag [#allocation3], %s6362
          %s6364 = sand.u32 %s270, 1
          %s6365 = scalar_lea.vmem [#allocation2], %s6364
          %6366 = dma.done %s6363, 16
        $region76: #{net_forward.1} parent=71 // pred_fallthru
          _
      $region72: #{net_forward.1} parent=5 // pred_fallthru
        _
    $region6: #{net_forward.1} parent=1 // loop_footer
      %s24 = sadd.s32 1, %s20
    $region7: #{net_forward.1} parent=1 // loop_footer_branch
      %19 = sbr.rel target = $region3
    $region8: #{net_forward.1} parent=1 // loop_exit
      _
    %6367 = vsyncpa [#allocation3], 1
    %s6368 = scalar_lea.sflag [#allocation3], 1
    %6369 = vsyncpa %s6368, 1

</llo_original>
